<compile_context>
chip_gen: v6e
topology: v6e:2x2x1
jax: 0.10.0
libtpu: 0.0.40
codegen_flags: <defaults>
</compile_context>

<pallas_src>
import math
import functools

import jax
import jax.numpy as jnp
from jax.experimental import pallas as pl
from jax.experimental.pallas import tpu as pltpu


PER_LAYER = 12  # wqkv, bqkv, wo, bo, g1, be1, w1, b1, w2, b2, g2, be2


# ----------------------------------------------------------------------------
# Pallas kernel
# ----------------------------------------------------------------------------
def _layernorm(x, gamma, beta, eps=1e-5):
    mu = jnp.mean(x, axis=-1, keepdims=True)
    var = jnp.mean((x - mu) ** 2, axis=-1, keepdims=True)
    return (x - mu) * jax.lax.rsqrt(var + eps) * gamma + beta


def fused_transformer_kernel(num_layers, num_heads, block_batch,
                             ids_ref, emb_ref, pe_ref, *refs):
    """Forward pass for `block_batch` sequences per grid step (whole model)."""
    layer_refs = refs[:num_layers * PER_LAYER]
    wc_ref, bc_ref = refs[num_layers * PER_LAYER:num_layers * PER_LAYER + 2]
    o_ref = refs[-1]

    T, E = pe_ref.shape
    Bb = block_batch
    M = Bb * T                                  # rows per MXU push (batch-blocked)
    Vp = emb_ref.shape[0]                       # vocab padded to a multiple of 128
    D = E // num_heads
    scale = 1.0 / math.sqrt(D)

    # --- token embedding (exact one-hot gather on the MXU) + positional encoding
    ids = ids_ref[...]                                              # (M, 1) int32
    onehot = (jax.lax.broadcasted_iota(jnp.int32, (M, Vp), 1) == ids
              ).astype(jnp.float32)                                 # (M, Vp)
    x = jnp.dot(onehot, emb_ref[...],
                preferred_element_type=jnp.float32)                 # (M, E)
    x = (x.reshape(Bb, T, E) + pe_ref[...]).reshape(M, E)           # add PE per pos

    for l in range(num_layers):                                     # static unroll
        (wqkv, bqkv, wo, bo, g1, be1,
         w1, b1, w2, b2, g2, be2) = layer_refs[l * PER_LAYER:(l + 1) * PER_LAYER]

        # fused Q/K/V projection: one wide (M,E)@(E,3E) MXU matmul
        qkv = jnp.dot(x, wqkv[...], preferred_element_type=jnp.float32) + bqkv[...]
        qkv = qkv.reshape(Bb, T, 3 * E)                             # per-sequence view

        # multi-head attention, batched over the Bb sequences per head.
        # Contractions are last-with-last (no explicit .T / XLU transpose).
        head_ctx = []
        for h in range(num_heads):                                  # static unroll
            qh = qkv[:, :, h * D:(h + 1) * D]                       # (Bb, T, D)
            kh = qkv[:, :, E + h * D:E + (h + 1) * D]
            vh = qkv[:, :, 2 * E + h * D:2 * E + (h + 1) * D]
            s = jnp.einsum("btd,bsd->bts", qh, kh,
                           preferred_element_type=jnp.float32) * scale   # (Bb, T, T)
            s = s - jnp.max(s, axis=-1, keepdims=True)
            p = jnp.exp(s)
            p = p / jnp.sum(p, axis=-1, keepdims=True)              # exact softmax
            head_ctx.append(jnp.einsum("bts,bsd->btd", p, vh,
                                       preferred_element_type=jnp.float32))

        # lane-concat heads -> one wide K=E output-projection matmul
        ctx = jnp.concatenate(head_ctx, axis=-1).reshape(M, E)      # (M, E)
        attn = jnp.dot(ctx, wo[...], preferred_element_type=jnp.float32) + bo[...]

        # residual + layernorm 1
        x = _layernorm(x + attn, g1[...], be1[...])

        # feed-forward (dropout = identity in eval mode)
        h1 = jnp.maximum(
            jnp.dot(x, w1[...], preferred_element_type=jnp.float32) + b1[...], 0.0)
        ff = jnp.dot(h1, w2[...], preferred_element_type=jnp.float32) + b2[...]

        # residual + layernorm 2
        x = _layernorm(x + ff, g2[...], be2[...])

    # --- mean pooling over the sequence + classifier, batched over Bb sequences
    pooled = jnp.mean(x.reshape(Bb, T, E), axis=1)                  # (Bb, E)
    o_ref[0] = jnp.dot(pooled, wc_ref[...],
                       preferred_element_type=jnp.float32) + bc_ref[...]   # (Bb, C)


# ----------------------------------------------------------------------------
# Wrapper
# ----------------------------------------------------------------------------
def _pick_block_batch(B, T, target_rows=256):
    """Largest divisor of B with Bb*T <= target_rows (128 is enough on v5e),
    preferring >= 2 grid steps so v7x megacore still gets both TensorCores."""
    cands = [bb for bb in range(1, B + 1) if B % bb == 0 and bb * T <= target_rows]
    if not cands:
        cands = [1]
    bb = max(cands)
    if B // bb < 2:
        two_step = [c for c in cands if B // c >= 2]
        if two_step:
            bb = max(two_step)
    return bb


def transformer_classifier_forward(tokens, params, num_heads):
    B, T = tokens.shape
    emb = params["embedding"]
    V, E = emb.shape
    pe = params["pe"][:T]                                           # (T, E)
    layers = params["layers"]
    num_layers = len(layers)
    C = params["wc"].shape[0]

    Bb = _pick_block_batch(B, T)                                    # sequences per step
    n_steps = B // Bb

    # pad vocab to a multiple of 128 with zero rows (exact; keeps the one-hot
    # matmul lane-dense and the contraction dim tile-aligned)
    Vp = ((V + 127) // 128) * 128
    emb_p = jnp.zeros((Vp, E), emb.dtype).at[:V].set(emb)

    def inv(a):  # grid-invariant, fully-resident block (never re-fetched)
        return pl.BlockSpec(a.shape, lambda b, _n=a.ndim: (0,) * _n)

    # one-time wrapper-side weight prep: pre-transpose to (in, out), fuse Q/K/V.
    flat_weights, weight_specs = [], []
    for lp in layers:
        wqkv = jnp.concatenate([lp["wq"].T, lp["wk"].T, lp["wv"].T], axis=1)  # (E, 3E)
        bqkv = jnp.concatenate([lp["bq"], lp["bk"], lp["bv"]], axis=1)        # (1, 3E)
        arrs = [wqkv, bqkv, lp["wo"].T, lp["bo"], lp["g1"], lp["be1"],
                lp["w1"].T, lp["b1"], lp["w2"].T, lp["b2"], lp["g2"], lp["be2"]]
        flat_weights += arrs
        weight_specs += [inv(a) for a in arrs]

    wc_t = params["wc"].T                                           # (E, C)
    bc = params["bc"]                                               # (1, C)
    ids = tokens.reshape(B * T, 1).astype(jnp.int32)                # (B*T, 1)

    in_specs = ([pl.BlockSpec((Bb * T, 1), lambda b: (b, 0)),       # this step's ids
                 inv(emb_p), inv(pe)]                               # emb table, PE
                + weight_specs
                + [inv(wc_t), inv(bc)])

    kernel = functools.partial(fused_transformer_kernel, num_layers, num_heads, Bb)
    out = pl.pallas_call(
        kernel,
        out_shape=jax.ShapeDtypeStruct((n_steps, Bb, C), jnp.float32),
        grid=(n_steps,),
        in_specs=in_specs,
        out_specs=pl.BlockSpec((1, Bb, C), lambda b: (b, 0, 0)),
        compiler_params=pltpu.CompilerParams(dimension_semantics=("parallel",)),
    )(ids, emb_p, pe, *flat_weights, wc_t, bc)
    return out.reshape(B, C)                                        # (B, C)


# ----------------------------------------------------------------------------
# Pure-JAX reference (mirrors the PyTorch module, eval mode)
# ----------------------------------------------------------------------------
def _ref_block(x, p, num_heads):
    B, T, E = x.shape
    D = E // num_heads
    lin = lambda z, w, b: z @ w.T + b
    q = lin(x, p["wq"], p["bq"]).reshape(B, T, num_heads, D).transpose(0, 2, 1, 3)
    k = lin(x, p["wk"], p["bk"]).reshape(B, T, num_heads, D).transpose(0, 2, 1, 3)
    v = lin(x, p["wv"], p["bv"]).reshape(B, T, num_heads, D).transpose(0, 2, 1, 3)
    s = jnp.einsum("bhtd,bhsd->bhts", q, k) / math.sqrt(D)
    a = jax.nn.softmax(s, axis=-1)
    o = jnp.einsum("bhts,bhsd->bhtd", a, v).transpose(0, 2, 1, 3).reshape(B, T, E)
    o = lin(o, p["wo"], p["bo"])
    ln = lambda z, g, b: ((z - z.mean(-1, keepdims=True))
                          * jax.lax.rsqrt(z.var(-1, keepdims=True) + 1e-5) * g + b)
    x1 = ln(x + o, p["g1"], p["be1"])
    ff = lin(jnp.maximum(lin(x1, p["w1"], p["b1"]), 0.0), p["w2"], p["b2"])
    return ln(x1 + ff, p["g2"], p["be2"])


def _ref_forward(tokens, params, num_heads):
    x = params["embedding"][tokens]
    x = x + params["pe"][None, :tokens.shape[1], :]
    for lp in params["layers"]:
        x = _ref_block(x, lp, num_heads)
    return x.mean(axis=1) @ params["wc"].T + params["bc"]


# ----------------------------------------------------------------------------
# Parameter construction
# ----------------------------------------------------------------------------
def make_params(key, vocab_size, max_len, num_classes, embed_size, ff_hidden_dim,
                num_layers):
    keys = iter(jax.random.split(key, 8 + num_layers * 16))
    nk = lambda: next(keys)

    def linear(out_f, in_f):
        bound = 1.0 / math.sqrt(in_f)
        w = jax.random.uniform(nk(), (out_f, in_f), jnp.float32, -bound, bound)
        b = jax.random.uniform(nk(), (1, out_f), jnp.float32, -bound, bound)
        return w, b

    layers = []
    for _ in range(num_layers):
        wq, bq = linear(embed_size, embed_size)
        wk, bk = linear(embed_size, embed_size)
        wv, bv = linear(embed_size, embed_size)
        wo, bo = linear(embed_size, embed_size)
        w1, b1 = linear(ff_hidden_dim, embed_size)
        w2, b2 = linear(embed_size, ff_hidden_dim)
        layers.append(dict(
            wq=wq, bq=bq, wk=wk, bk=bk, wv=wv, bv=bv, wo=wo, bo=bo,
            g1=jnp.ones((1, embed_size), jnp.float32),
            be1=jnp.zeros((1, embed_size), jnp.float32),
            w1=w1, b1=b1, w2=w2, b2=b2,
            g2=jnp.ones((1, embed_size), jnp.float32),
            be2=jnp.zeros((1, embed_size), jnp.float32),
        ))

    # sinusoidal positional encoding (same construction as the PyTorch module)
    position = jnp.arange(max_len, dtype=jnp.float32)[:, None]
    div_term = jnp.exp(jnp.arange(0, embed_size, 2, dtype=jnp.float32)
                       * (-math.log(10000.0) / embed_size))
    pe = jnp.zeros((max_len, embed_size), jnp.float32)
    pe = pe.at[:, 0::2].set(jnp.sin(position * div_term))
    pe = pe.at[:, 1::2].set(jnp.cos(position * div_term))

    wc, bc = linear(num_classes, embed_size)
    return dict(
        embedding=jax.random.normal(nk(), (vocab_size, embed_size), jnp.float32),
        pe=pe,
        layers=layers,
        wc=wc, bc=bc,
    )


# ----------------------------------------------------------------------------
if __name__ == "__main__":
    VOCAB, MAX_LEN, NUM_CLASSES = 50, 16, 4
    EMBED, HEADS, FF_HID, LAYERS = 32, 4, 64, 2
    B, T = 8, 8                     # B=8 so batch-blocking (Bb=4, 2 grid steps) kicks in

    key = jax.random.PRNGKey(0)
    pkey, tkey = jax.random.split(key)
    params = make_params(pkey, VOCAB, MAX_LEN, NUM_CLASSES, EMBED, FF_HID, LAYERS)
    tokens = jax.random.randint(tkey, (B, T), 0, VOCAB, dtype=jnp.int32)

    logits = transformer_classifier_forward(tokens, params, HEADS)
    logits = jax.block_until_ready(logits)

    ref = _ref_forward(tokens, params, HEADS)
    assert logits.shape == (B, NUM_CLASSES)
    assert jnp.allclose(logits, ref, rtol=1e-2, atol=1e-2), (logits, ref)

    # TODO(synk): dropout layers are identity here (eval-mode semantics).
    print("KERNEL_OK")
</pallas_src>

<mosaic_0001>
module attributes {stable_mosaic.version = 11 : i64} {
  func.func @fused_transformer_kernel(%arg0: i32, %arg1: memref<32x1xi32, #tpu.memory_space<vmem>>, %arg2: memref<128x32xf32, #tpu.memory_space<vmem>>, %arg3: memref<8x32xf32, #tpu.memory_space<vmem>>, %arg4: memref<32x96xf32, #tpu.memory_space<vmem>>, %arg5: memref<1x96xf32, #tpu.memory_space<vmem>>, %arg6: memref<32x32xf32, #tpu.memory_space<vmem>>, %arg7: memref<1x32xf32, #tpu.memory_space<vmem>>, %arg8: memref<1x32xf32, #tpu.memory_space<vmem>>, %arg9: memref<1x32xf32, #tpu.memory_space<vmem>>, %arg10: memref<32x64xf32, #tpu.memory_space<vmem>>, %arg11: memref<1x64xf32, #tpu.memory_space<vmem>>, %arg12: memref<64x32xf32, #tpu.memory_space<vmem>>, %arg13: memref<1x32xf32, #tpu.memory_space<vmem>>, %arg14: memref<1x32xf32, #tpu.memory_space<vmem>>, %arg15: memref<1x32xf32, #tpu.memory_space<vmem>>, %arg16: memref<32x96xf32, #tpu.memory_space<vmem>>, %arg17: memref<1x96xf32, #tpu.memory_space<vmem>>, %arg18: memref<32x32xf32, #tpu.memory_space<vmem>>, %arg19: memref<1x32xf32, #tpu.memory_space<vmem>>, %arg20: memref<1x32xf32, #tpu.memory_space<vmem>>, %arg21: memref<1x32xf32, #tpu.memory_space<vmem>>, %arg22: memref<32x64xf32, #tpu.memory_space<vmem>>, %arg23: memref<1x64xf32, #tpu.memory_space<vmem>>, %arg24: memref<64x32xf32, #tpu.memory_space<vmem>>, %arg25: memref<1x32xf32, #tpu.memory_space<vmem>>, %arg26: memref<1x32xf32, #tpu.memory_space<vmem>>, %arg27: memref<1x32xf32, #tpu.memory_space<vmem>>, %arg28: memref<32x4xf32, #tpu.memory_space<vmem>>, %arg29: memref<1x4xf32, #tpu.memory_space<vmem>>, %arg30: memref<1x4x4xf32, #tpu.memory_space<vmem>>) attributes {dimension_semantics = [#tpu.dimension_semantics<parallel>], iteration_bounds = array<i64: 2>, scalar_prefetch = 0 : i64, scratch_operands = 0 : i64, tpu.core_type = #tpu.core_type<tc>, window_params = [{transform_indices = @transform_0, window_bounds = array<i64: 32, 1>}, {pipeline_mode = #tpu.pipeline_mode<synchronous>, transform_indices = @transform_1, window_bounds = array<i64: 128, 32>}, {pipeline_mode = #tpu.pipeline_mode<synchronous>, transform_indices = @transform_2, window_bounds = array<i64: 8, 32>}, {pipeline_mode = #tpu.pipeline_mode<synchronous>, transform_indices = @transform_3, window_bounds = array<i64: 32, 96>}, {pipeline_mode = #tpu.pipeline_mode<synchronous>, transform_indices = @transform_4, window_bounds = array<i64: 1, 96>}, {pipeline_mode = #tpu.pipeline_mode<synchronous>, transform_indices = @transform_5, window_bounds = array<i64: 32, 32>}, {pipeline_mode = #tpu.pipeline_mode<synchronous>, transform_indices = @transform_6, window_bounds = array<i64: 1, 32>}, {pipeline_mode = #tpu.pipeline_mode<synchronous>, transform_indices = @transform_7, window_bounds = array<i64: 1, 32>}, {pipeline_mode = #tpu.pipeline_mode<synchronous>, transform_indices = @transform_8, window_bounds = array<i64: 1, 32>}, {pipeline_mode = #tpu.pipeline_mode<synchronous>, transform_indices = @transform_9, window_bounds = array<i64: 32, 64>}, {pipeline_mode = #tpu.pipeline_mode<synchronous>, transform_indices = @transform_10, window_bounds = array<i64: 1, 64>}, {pipeline_mode = #tpu.pipeline_mode<synchronous>, transform_indices = @transform_11, window_bounds = array<i64: 64, 32>}, {pipeline_mode = #tpu.pipeline_mode<synchronous>, transform_indices = @transform_12, window_bounds = array<i64: 1, 32>}, {pipeline_mode = #tpu.pipeline_mode<synchronous>, transform_indices = @transform_13, window_bounds = array<i64: 1, 32>}, {pipeline_mode = #tpu.pipeline_mode<synchronous>, transform_indices = @transform_14, window_bounds = array<i64: 1, 32>}, {pipeline_mode = #tpu.pipeline_mode<synchronous>, transform_indices = @transform_15, window_bounds = array<i64: 32, 96>}, {pipeline_mode = #tpu.pipeline_mode<synchronous>, transform_indices = @transform_16, window_bounds = array<i64: 1, 96>}, {pipeline_mode = #tpu.pipeline_mode<synchronous>, transform_indices = @transform_17, window_bounds = array<i64: 32, 32>}, {pipeline_mode = #tpu.pipeline_mode<synchronous>, transform_indices = @transform_18, window_bounds = array<i64: 1, 32>}, {pipeline_mode = #tpu.pipeline_mode<synchronous>, transform_indices = @transform_19, window_bounds = array<i64: 1, 32>}, {pipeline_mode = #tpu.pipeline_mode<synchronous>, transform_indices = @transform_20, window_bounds = array<i64: 1, 32>}, {pipeline_mode = #tpu.pipeline_mode<synchronous>, transform_indices = @transform_21, window_bounds = array<i64: 32, 64>}, {pipeline_mode = #tpu.pipeline_mode<synchronous>, transform_indices = @transform_22, window_bounds = array<i64: 1, 64>}, {pipeline_mode = #tpu.pipeline_mode<synchronous>, transform_indices = @transform_23, window_bounds = array<i64: 64, 32>}, {pipeline_mode = #tpu.pipeline_mode<synchronous>, transform_indices = @transform_24, window_bounds = array<i64: 1, 32>}, {pipeline_mode = #tpu.pipeline_mode<synchronous>, transform_indices = @transform_25, window_bounds = array<i64: 1, 32>}, {pipeline_mode = #tpu.pipeline_mode<synchronous>, transform_indices = @transform_26, window_bounds = array<i64: 1, 32>}, {pipeline_mode = #tpu.pipeline_mode<synchronous>, transform_indices = @transform_27, window_bounds = array<i64: 32, 4>}, {pipeline_mode = #tpu.pipeline_mode<synchronous>, transform_indices = @transform_28, window_bounds = array<i64: 1, 4>}, {transform_indices = @transform_29, window_bounds = array<i64: 1, 4, 4>}]} {
    %c0 = arith.constant 0 : index
    %c0_0 = arith.constant 0 : index
    %0 = vector.load %arg1[%c0, %c0_0] : memref<32x1xi32, #tpu.memory_space<vmem>>, vector<32x1xi32>
    %1 = tpu.iota {dimensions = array<i32: 1>} : vector<32x128xi32>
    %2 = vector.broadcast %0 : vector<32x1xi32> to vector<32x128xi32>
    %3 = arith.cmpi eq, %1, %2 : vector<32x128xi32>
    %4 = arith.extui %3 : vector<32x128xi1> to vector<32x128xi32>
    %5 = arith.sitofp %4 : vector<32x128xi32> to vector<32x128xf32>
    %c0_1 = arith.constant 0 : index
    %c0_2 = arith.constant 0 : index
    %6 = vector.load %arg2[%c0_1, %c0_2] : memref<128x32xf32, #tpu.memory_space<vmem>>, vector<128x32xf32>
    %cst = arith.constant dense<0.000000e+00> : vector<32x32xf32>
    %7 = tpu.matmul %5, %6, %cst {dimension_numbers = #tpu.dot_dimension_numbers<[1], [0], [0], [1], [0, 0, 1, 1], [], []>} : vector<32x128xf32>, vector<128x32xf32>, vector<32x32xf32> -> vector<32x32xf32>
    %8 = vector.shape_cast %7 : vector<32x32xf32> to vector<4x8x32xf32>
    %c0_3 = arith.constant 0 : index
    %c0_4 = arith.constant 0 : index
    %9 = vector.load %arg3[%c0_3, %c0_4] : memref<8x32xf32, #tpu.memory_space<vmem>>, vector<8x32xf32>
    %10 = vector.shape_cast %9 : vector<8x32xf32> to vector<1x8x32xf32>
    %11 = vector.broadcast %10 : vector<1x8x32xf32> to vector<4x8x32xf32>
    %12 = arith.addf %8, %11 : vector<4x8x32xf32>
    %13 = vector.shape_cast %12 : vector<4x8x32xf32> to vector<32x32xf32>
    %c0_5 = arith.constant 0 : index
    %c0_6 = arith.constant 0 : index
    %14 = vector.load %arg4[%c0_5, %c0_6] : memref<32x96xf32, #tpu.memory_space<vmem>>, vector<32x96xf32>
    %cst_7 = arith.constant dense<0.000000e+00> : vector<32x96xf32>
    %15 = tpu.matmul %13, %14, %cst_7 {dimension_numbers = #tpu.dot_dimension_numbers<[1], [0], [0], [1], [0, 0, 1, 1], [], []>} : vector<32x32xf32>, vector<32x96xf32>, vector<32x96xf32> -> vector<32x96xf32>
    %c0_8 = arith.constant 0 : index
    %c0_9 = arith.constant 0 : index
    %16 = vector.load %arg5[%c0_8, %c0_9] : memref<1x96xf32, #tpu.memory_space<vmem>>, vector<1x96xf32>
    %17 = vector.broadcast %16 : vector<1x96xf32> to vector<32x96xf32>
    %18 = arith.addf %15, %17 : vector<32x96xf32>
    %19 = vector.shape_cast %18 : vector<32x96xf32> to vector<4x8x96xf32>
    %20 = vector.extract_strided_slice %19 {offsets = [0, 0, 0], sizes = [4, 8, 8], strides = [1, 1, 1]} : vector<4x8x96xf32> to vector<4x8x8xf32>
    %21 = vector.extract_strided_slice %19 {offsets = [0, 0, 32], sizes = [4, 8, 8], strides = [1, 1, 1]} : vector<4x8x96xf32> to vector<4x8x8xf32>
    %22 = vector.extract_strided_slice %19 {offsets = [0, 0, 64], sizes = [4, 8, 8], strides = [1, 1, 1]} : vector<4x8x96xf32> to vector<4x8x8xf32>
    "tpu.trace_start"() <{level = 10 : i32, message = "btd,bsd->bts"}> : () -> ()
    %cst_10 = arith.constant dense<0.000000e+00> : vector<4x8x8xf32>
    %23 = tpu.matmul %20, %21, %cst_10 {dimension_numbers = #tpu.dot_dimension_numbers<[2], [2], [1], [1], [0, 0, 0, 1, 1, 1], [0], [0]>} : vector<4x8x8xf32>, vector<4x8x8xf32>, vector<4x8x8xf32> -> vector<4x8x8xf32>
    "tpu.trace_stop"() : () -> ()
    %cst_11 = arith.constant 0.353553385 : f32
    %24 = vector.broadcast %cst_11 : f32 to vector<4x8x8xf32>
    %25 = arith.mulf %23, %24 : vector<4x8x8xf32>
    %cst_12 = arith.constant dense<0xFF800000> : vector<4x8xf32>
    %26 = vector.multi_reduction <maximumf>, %25, %cst_12 [2] : vector<4x8x8xf32> to vector<4x8xf32>
    %27 = vector.shape_cast %26 : vector<4x8xf32> to vector<4x8x1xf32>
    %28 = vector.broadcast %27 : vector<4x8x1xf32> to vector<4x8x8xf32>
    %29 = arith.subf %25, %28 : vector<4x8x8xf32>
    %30 = math.exp %29 : vector<4x8x8xf32>
    %cst_13 = arith.constant dense<0.000000e+00> : vector<4x8xf32>
    %31 = vector.multi_reduction <add>, %30, %cst_13 [2] : vector<4x8x8xf32> to vector<4x8xf32>
    %32 = vector.shape_cast %31 : vector<4x8xf32> to vector<4x8x1xf32>
    %33 = vector.broadcast %32 : vector<4x8x1xf32> to vector<4x8x8xf32>
    %34 = arith.divf %30, %33 : vector<4x8x8xf32>
    "tpu.trace_start"() <{level = 10 : i32, message = "bts,bsd->btd"}> : () -> ()
    %cst_14 = arith.constant dense<0.000000e+00> : vector<4x8x8xf32>
    %35 = tpu.matmul %34, %22, %cst_14 {dimension_numbers = #tpu.dot_dimension_numbers<[2], [1], [1], [2], [0, 0, 0, 1, 1, 2], [0], [0]>} : vector<4x8x8xf32>, vector<4x8x8xf32>, vector<4x8x8xf32> -> vector<4x8x8xf32>
    "tpu.trace_stop"() : () -> ()
    %36 = vector.extract_strided_slice %19 {offsets = [0, 0, 8], sizes = [4, 8, 8], strides = [1, 1, 1]} : vector<4x8x96xf32> to vector<4x8x8xf32>
    %37 = vector.extract_strided_slice %19 {offsets = [0, 0, 40], sizes = [4, 8, 8], strides = [1, 1, 1]} : vector<4x8x96xf32> to vector<4x8x8xf32>
    %38 = vector.extract_strided_slice %19 {offsets = [0, 0, 72], sizes = [4, 8, 8], strides = [1, 1, 1]} : vector<4x8x96xf32> to vector<4x8x8xf32>
    "tpu.trace_start"() <{level = 10 : i32, message = "btd,bsd->bts"}> : () -> ()
    %cst_15 = arith.constant dense<0.000000e+00> : vector<4x8x8xf32>
    %39 = tpu.matmul %36, %37, %cst_15 {dimension_numbers = #tpu.dot_dimension_numbers<[2], [2], [1], [1], [0, 0, 0, 1, 1, 1], [0], [0]>} : vector<4x8x8xf32>, vector<4x8x8xf32>, vector<4x8x8xf32> -> vector<4x8x8xf32>
    "tpu.trace_stop"() : () -> ()
    %cst_16 = arith.constant 0.353553385 : f32
    %40 = vector.broadcast %cst_16 : f32 to vector<4x8x8xf32>
    %41 = arith.mulf %39, %40 : vector<4x8x8xf32>
    %cst_17 = arith.constant dense<0xFF800000> : vector<4x8xf32>
    %42 = vector.multi_reduction <maximumf>, %41, %cst_17 [2] : vector<4x8x8xf32> to vector<4x8xf32>
    %43 = vector.shape_cast %42 : vector<4x8xf32> to vector<4x8x1xf32>
    %44 = vector.broadcast %43 : vector<4x8x1xf32> to vector<4x8x8xf32>
    %45 = arith.subf %41, %44 : vector<4x8x8xf32>
    %46 = math.exp %45 : vector<4x8x8xf32>
    %cst_18 = arith.constant dense<0.000000e+00> : vector<4x8xf32>
    %47 = vector.multi_reduction <add>, %46, %cst_18 [2] : vector<4x8x8xf32> to vector<4x8xf32>
    %48 = vector.shape_cast %47 : vector<4x8xf32> to vector<4x8x1xf32>
    %49 = vector.broadcast %48 : vector<4x8x1xf32> to vector<4x8x8xf32>
    %50 = arith.divf %46, %49 : vector<4x8x8xf32>
    "tpu.trace_start"() <{level = 10 : i32, message = "bts,bsd->btd"}> : () -> ()
    %cst_19 = arith.constant dense<0.000000e+00> : vector<4x8x8xf32>
    %51 = tpu.matmul %50, %38, %cst_19 {dimension_numbers = #tpu.dot_dimension_numbers<[2], [1], [1], [2], [0, 0, 0, 1, 1, 2], [0], [0]>} : vector<4x8x8xf32>, vector<4x8x8xf32>, vector<4x8x8xf32> -> vector<4x8x8xf32>
    "tpu.trace_stop"() : () -> ()
    %52 = vector.extract_strided_slice %19 {offsets = [0, 0, 16], sizes = [4, 8, 8], strides = [1, 1, 1]} : vector<4x8x96xf32> to vector<4x8x8xf32>
    %53 = vector.extract_strided_slice %19 {offsets = [0, 0, 48], sizes = [4, 8, 8], strides = [1, 1, 1]} : vector<4x8x96xf32> to vector<4x8x8xf32>
    %54 = vector.extract_strided_slice %19 {offsets = [0, 0, 80], sizes = [4, 8, 8], strides = [1, 1, 1]} : vector<4x8x96xf32> to vector<4x8x8xf32>
    "tpu.trace_start"() <{level = 10 : i32, message = "btd,bsd->bts"}> : () -> ()
    %cst_20 = arith.constant dense<0.000000e+00> : vector<4x8x8xf32>
    %55 = tpu.matmul %52, %53, %cst_20 {dimension_numbers = #tpu.dot_dimension_numbers<[2], [2], [1], [1], [0, 0, 0, 1, 1, 1], [0], [0]>} : vector<4x8x8xf32>, vector<4x8x8xf32>, vector<4x8x8xf32> -> vector<4x8x8xf32>
    "tpu.trace_stop"() : () -> ()
    %cst_21 = arith.constant 0.353553385 : f32
    %56 = vector.broadcast %cst_21 : f32 to vector<4x8x8xf32>
    %57 = arith.mulf %55, %56 : vector<4x8x8xf32>
    %cst_22 = arith.constant dense<0xFF800000> : vector<4x8xf32>
    %58 = vector.multi_reduction <maximumf>, %57, %cst_22 [2] : vector<4x8x8xf32> to vector<4x8xf32>
    %59 = vector.shape_cast %58 : vector<4x8xf32> to vector<4x8x1xf32>
    %60 = vector.broadcast %59 : vector<4x8x1xf32> to vector<4x8x8xf32>
    %61 = arith.subf %57, %60 : vector<4x8x8xf32>
    %62 = math.exp %61 : vector<4x8x8xf32>
    %cst_23 = arith.constant dense<0.000000e+00> : vector<4x8xf32>
    %63 = vector.multi_reduction <add>, %62, %cst_23 [2] : vector<4x8x8xf32> to vector<4x8xf32>
    %64 = vector.shape_cast %63 : vector<4x8xf32> to vector<4x8x1xf32>
    %65 = vector.broadcast %64 : vector<4x8x1xf32> to vector<4x8x8xf32>
    %66 = arith.divf %62, %65 : vector<4x8x8xf32>
    "tpu.trace_start"() <{level = 10 : i32, message = "bts,bsd->btd"}> : () -> ()
    %cst_24 = arith.constant dense<0.000000e+00> : vector<4x8x8xf32>
    %67 = tpu.matmul %66, %54, %cst_24 {dimension_numbers = #tpu.dot_dimension_numbers<[2], [1], [1], [2], [0, 0, 0, 1, 1, 2], [0], [0]>} : vector<4x8x8xf32>, vector<4x8x8xf32>, vector<4x8x8xf32> -> vector<4x8x8xf32>
    "tpu.trace_stop"() : () -> ()
    %68 = vector.extract_strided_slice %19 {offsets = [0, 0, 24], sizes = [4, 8, 8], strides = [1, 1, 1]} : vector<4x8x96xf32> to vector<4x8x8xf32>
    %69 = vector.extract_strided_slice %19 {offsets = [0, 0, 56], sizes = [4, 8, 8], strides = [1, 1, 1]} : vector<4x8x96xf32> to vector<4x8x8xf32>
    %70 = vector.extract_strided_slice %19 {offsets = [0, 0, 88], sizes = [4, 8, 8], strides = [1, 1, 1]} : vector<4x8x96xf32> to vector<4x8x8xf32>
    "tpu.trace_start"() <{level = 10 : i32, message = "btd,bsd->bts"}> : () -> ()
    %cst_25 = arith.constant dense<0.000000e+00> : vector<4x8x8xf32>
    %71 = tpu.matmul %68, %69, %cst_25 {dimension_numbers = #tpu.dot_dimension_numbers<[2], [2], [1], [1], [0, 0, 0, 1, 1, 1], [0], [0]>} : vector<4x8x8xf32>, vector<4x8x8xf32>, vector<4x8x8xf32> -> vector<4x8x8xf32>
    "tpu.trace_stop"() : () -> ()
    %cst_26 = arith.constant 0.353553385 : f32
    %72 = vector.broadcast %cst_26 : f32 to vector<4x8x8xf32>
    %73 = arith.mulf %71, %72 : vector<4x8x8xf32>
    %cst_27 = arith.constant dense<0xFF800000> : vector<4x8xf32>
    %74 = vector.multi_reduction <maximumf>, %73, %cst_27 [2] : vector<4x8x8xf32> to vector<4x8xf32>
    %75 = vector.shape_cast %74 : vector<4x8xf32> to vector<4x8x1xf32>
    %76 = vector.broadcast %75 : vector<4x8x1xf32> to vector<4x8x8xf32>
    %77 = arith.subf %73, %76 : vector<4x8x8xf32>
    %78 = math.exp %77 : vector<4x8x8xf32>
    %cst_28 = arith.constant dense<0.000000e+00> : vector<4x8xf32>
    %79 = vector.multi_reduction <add>, %78, %cst_28 [2] : vector<4x8x8xf32> to vector<4x8xf32>
    %80 = vector.shape_cast %79 : vector<4x8xf32> to vector<4x8x1xf32>
    %81 = vector.broadcast %80 : vector<4x8x1xf32> to vector<4x8x8xf32>
    %82 = arith.divf %78, %81 : vector<4x8x8xf32>
    "tpu.trace_start"() <{level = 10 : i32, message = "bts,bsd->btd"}> : () -> ()
    %cst_29 = arith.constant dense<0.000000e+00> : vector<4x8x8xf32>
    %83 = tpu.matmul %82, %70, %cst_29 {dimension_numbers = #tpu.dot_dimension_numbers<[2], [1], [1], [2], [0, 0, 0, 1, 1, 2], [0], [0]>} : vector<4x8x8xf32>, vector<4x8x8xf32>, vector<4x8x8xf32> -> vector<4x8x8xf32>
    "tpu.trace_stop"() : () -> ()
    %84 = tpu.concatenate %35, %51, %67, %83 in 2 : vector<4x8x8xf32>, vector<4x8x8xf32>, vector<4x8x8xf32>, vector<4x8x8xf32> -> vector<4x8x32xf32>
    %85 = vector.shape_cast %84 : vector<4x8x32xf32> to vector<32x32xf32>
    %c0_30 = arith.constant 0 : index
    %c0_31 = arith.constant 0 : index
    %86 = vector.load %arg6[%c0_30, %c0_31] : memref<32x32xf32, #tpu.memory_space<vmem>>, vector<32x32xf32>
    %cst_32 = arith.constant dense<0.000000e+00> : vector<32x32xf32>
    %87 = tpu.matmul %85, %86, %cst_32 {dimension_numbers = #tpu.dot_dimension_numbers<[1], [0], [0], [1], [0, 0, 1, 1], [], []>} : vector<32x32xf32>, vector<32x32xf32>, vector<32x32xf32> -> vector<32x32xf32>
    %c0_33 = arith.constant 0 : index
    %c0_34 = arith.constant 0 : index
    %88 = vector.load %arg7[%c0_33, %c0_34] : memref<1x32xf32, #tpu.memory_space<vmem>>, vector<1x32xf32>
    %89 = vector.broadcast %88 : vector<1x32xf32> to vector<32x32xf32>
    %90 = arith.addf %87, %89 : vector<32x32xf32>
    %91 = arith.addf %13, %90 : vector<32x32xf32>
    %c0_35 = arith.constant 0 : index
    %c0_36 = arith.constant 0 : index
    %92 = vector.load %arg8[%c0_35, %c0_36] : memref<1x32xf32, #tpu.memory_space<vmem>>, vector<1x32xf32>
    %c0_37 = arith.constant 0 : index
    %c0_38 = arith.constant 0 : index
    %93 = vector.load %arg9[%c0_37, %c0_38] : memref<1x32xf32, #tpu.memory_space<vmem>>, vector<1x32xf32>
    %cst_39 = arith.constant dense<0.000000e+00> : vector<32xf32>
    %94 = vector.multi_reduction <add>, %91, %cst_39 [1] : vector<32x32xf32> to vector<32xf32>
    %95 = vector.shape_cast %94 : vector<32xf32> to vector<32x1xf32>
    %cst_40 = arith.constant 3.200000e+01 : f32
    %96 = vector.broadcast %cst_40 : f32 to vector<32x1xf32>
    %97 = arith.divf %95, %96 : vector<32x1xf32>
    %98 = vector.broadcast %97 : vector<32x1xf32> to vector<32x32xf32>
    %99 = arith.subf %91, %98 : vector<32x32xf32>
    %100 = arith.mulf %99, %99 : vector<32x32xf32>
    %cst_41 = arith.constant dense<0.000000e+00> : vector<32xf32>
    %101 = vector.multi_reduction <add>, %100, %cst_41 [1] : vector<32x32xf32> to vector<32xf32>
    %102 = vector.shape_cast %101 : vector<32xf32> to vector<32x1xf32>
    %cst_42 = arith.constant 3.200000e+01 : f32
    %103 = vector.broadcast %cst_42 : f32 to vector<32x1xf32>
    %104 = arith.divf %102, %103 : vector<32x1xf32>
    %105 = vector.broadcast %97 : vector<32x1xf32> to vector<32x32xf32>
    %106 = arith.subf %91, %105 : vector<32x32xf32>
    %cst_43 = arith.constant 9.99999974E-6 : f32
    %107 = vector.broadcast %cst_43 : f32 to vector<32x1xf32>
    %108 = arith.addf %104, %107 : vector<32x1xf32>
    %109 = math.rsqrt %108 : vector<32x1xf32>
    %110 = vector.broadcast %109 : vector<32x1xf32> to vector<32x32xf32>
    %111 = arith.mulf %106, %110 : vector<32x32xf32>
    %112 = vector.broadcast %92 : vector<1x32xf32> to vector<32x32xf32>
    %113 = arith.mulf %111, %112 : vector<32x32xf32>
    %114 = vector.broadcast %93 : vector<1x32xf32> to vector<32x32xf32>
    %115 = arith.addf %113, %114 : vector<32x32xf32>
    %c0_44 = arith.constant 0 : index
    %c0_45 = arith.constant 0 : index
    %116 = vector.load %arg10[%c0_44, %c0_45] : memref<32x64xf32, #tpu.memory_space<vmem>>, vector<32x64xf32>
    %cst_46 = arith.constant dense<0.000000e+00> : vector<32x64xf32>
    %117 = tpu.matmul %115, %116, %cst_46 {dimension_numbers = #tpu.dot_dimension_numbers<[1], [0], [0], [1], [0, 0, 1, 1], [], []>} : vector<32x32xf32>, vector<32x64xf32>, vector<32x64xf32> -> vector<32x64xf32>
    %c0_47 = arith.constant 0 : index
    %c0_48 = arith.constant 0 : index
    %118 = vector.load %arg11[%c0_47, %c0_48] : memref<1x64xf32, #tpu.memory_space<vmem>>, vector<1x64xf32>
    %119 = vector.broadcast %118 : vector<1x64xf32> to vector<32x64xf32>
    %120 = arith.addf %117, %119 : vector<32x64xf32>
    %cst_49 = arith.constant 0.000000e+00 : f32
    %121 = vector.broadcast %cst_49 : f32 to vector<32x64xf32>
    %122 = arith.maximumf %120, %121 : vector<32x64xf32>
    %c0_50 = arith.constant 0 : index
    %c0_51 = arith.constant 0 : index
    %123 = vector.load %arg12[%c0_50, %c0_51] : memref<64x32xf32, #tpu.memory_space<vmem>>, vector<64x32xf32>
    %cst_52 = arith.constant dense<0.000000e+00> : vector<32x32xf32>
    %124 = tpu.matmul %122, %123, %cst_52 {dimension_numbers = #tpu.dot_dimension_numbers<[1], [0], [0], [1], [0, 0, 1, 1], [], []>} : vector<32x64xf32>, vector<64x32xf32>, vector<32x32xf32> -> vector<32x32xf32>
    %c0_53 = arith.constant 0 : index
    %c0_54 = arith.constant 0 : index
    %125 = vector.load %arg13[%c0_53, %c0_54] : memref<1x32xf32, #tpu.memory_space<vmem>>, vector<1x32xf32>
    %126 = vector.broadcast %125 : vector<1x32xf32> to vector<32x32xf32>
    %127 = arith.addf %124, %126 : vector<32x32xf32>
    %128 = arith.addf %115, %127 : vector<32x32xf32>
    %c0_55 = arith.constant 0 : index
    %c0_56 = arith.constant 0 : index
    %129 = vector.load %arg14[%c0_55, %c0_56] : memref<1x32xf32, #tpu.memory_space<vmem>>, vector<1x32xf32>
    %c0_57 = arith.constant 0 : index
    %c0_58 = arith.constant 0 : index
    %130 = vector.load %arg15[%c0_57, %c0_58] : memref<1x32xf32, #tpu.memory_space<vmem>>, vector<1x32xf32>
    %cst_59 = arith.constant dense<0.000000e+00> : vector<32xf32>
    %131 = vector.multi_reduction <add>, %128, %cst_59 [1] : vector<32x32xf32> to vector<32xf32>
    %132 = vector.shape_cast %131 : vector<32xf32> to vector<32x1xf32>
    %cst_60 = arith.constant 3.200000e+01 : f32
    %133 = vector.broadcast %cst_60 : f32 to vector<32x1xf32>
    %134 = arith.divf %132, %133 : vector<32x1xf32>
    %135 = vector.broadcast %134 : vector<32x1xf32> to vector<32x32xf32>
    %136 = arith.subf %128, %135 : vector<32x32xf32>
    %137 = arith.mulf %136, %136 : vector<32x32xf32>
    %cst_61 = arith.constant dense<0.000000e+00> : vector<32xf32>
    %138 = vector.multi_reduction <add>, %137, %cst_61 [1] : vector<32x32xf32> to vector<32xf32>
    %139 = vector.shape_cast %138 : vector<32xf32> to vector<32x1xf32>
    %cst_62 = arith.constant 3.200000e+01 : f32
    %140 = vector.broadcast %cst_62 : f32 to vector<32x1xf32>
    %141 = arith.divf %139, %140 : vector<32x1xf32>
    %142 = vector.broadcast %134 : vector<32x1xf32> to vector<32x32xf32>
    %143 = arith.subf %128, %142 : vector<32x32xf32>
    %cst_63 = arith.constant 9.99999974E-6 : f32
    %144 = vector.broadcast %cst_63 : f32 to vector<32x1xf32>
    %145 = arith.addf %141, %144 : vector<32x1xf32>
    %146 = math.rsqrt %145 : vector<32x1xf32>
    %147 = vector.broadcast %146 : vector<32x1xf32> to vector<32x32xf32>
    %148 = arith.mulf %143, %147 : vector<32x32xf32>
    %149 = vector.broadcast %129 : vector<1x32xf32> to vector<32x32xf32>
    %150 = arith.mulf %148, %149 : vector<32x32xf32>
    %151 = vector.broadcast %130 : vector<1x32xf32> to vector<32x32xf32>
    %152 = arith.addf %150, %151 : vector<32x32xf32>
    %c0_64 = arith.constant 0 : index
    %c0_65 = arith.constant 0 : index
    %153 = vector.load %arg16[%c0_64, %c0_65] : memref<32x96xf32, #tpu.memory_space<vmem>>, vector<32x96xf32>
    %cst_66 = arith.constant dense<0.000000e+00> : vector<32x96xf32>
    %154 = tpu.matmul %152, %153, %cst_66 {dimension_numbers = #tpu.dot_dimension_numbers<[1], [0], [0], [1], [0, 0, 1, 1], [], []>} : vector<32x32xf32>, vector<32x96xf32>, vector<32x96xf32> -> vector<32x96xf32>
    %c0_67 = arith.constant 0 : index
    %c0_68 = arith.constant 0 : index
    %155 = vector.load %arg17[%c0_67, %c0_68] : memref<1x96xf32, #tpu.memory_space<vmem>>, vector<1x96xf32>
    %156 = vector.broadcast %155 : vector<1x96xf32> to vector<32x96xf32>
    %157 = arith.addf %154, %156 : vector<32x96xf32>
    %158 = vector.shape_cast %157 : vector<32x96xf32> to vector<4x8x96xf32>
    %159 = vector.extract_strided_slice %158 {offsets = [0, 0, 0], sizes = [4, 8, 8], strides = [1, 1, 1]} : vector<4x8x96xf32> to vector<4x8x8xf32>
    %160 = vector.extract_strided_slice %158 {offsets = [0, 0, 32], sizes = [4, 8, 8], strides = [1, 1, 1]} : vector<4x8x96xf32> to vector<4x8x8xf32>
    %161 = vector.extract_strided_slice %158 {offsets = [0, 0, 64], sizes = [4, 8, 8], strides = [1, 1, 1]} : vector<4x8x96xf32> to vector<4x8x8xf32>
    "tpu.trace_start"() <{level = 10 : i32, message = "btd,bsd->bts"}> : () -> ()
    %cst_69 = arith.constant dense<0.000000e+00> : vector<4x8x8xf32>
    %162 = tpu.matmul %159, %160, %cst_69 {dimension_numbers = #tpu.dot_dimension_numbers<[2], [2], [1], [1], [0, 0, 0, 1, 1, 1], [0], [0]>} : vector<4x8x8xf32>, vector<4x8x8xf32>, vector<4x8x8xf32> -> vector<4x8x8xf32>
    "tpu.trace_stop"() : () -> ()
    %cst_70 = arith.constant 0.353553385 : f32
    %163 = vector.broadcast %cst_70 : f32 to vector<4x8x8xf32>
    %164 = arith.mulf %162, %163 : vector<4x8x8xf32>
    %cst_71 = arith.constant dense<0xFF800000> : vector<4x8xf32>
    %165 = vector.multi_reduction <maximumf>, %164, %cst_71 [2] : vector<4x8x8xf32> to vector<4x8xf32>
    %166 = vector.shape_cast %165 : vector<4x8xf32> to vector<4x8x1xf32>
    %167 = vector.broadcast %166 : vector<4x8x1xf32> to vector<4x8x8xf32>
    %168 = arith.subf %164, %167 : vector<4x8x8xf32>
    %169 = math.exp %168 : vector<4x8x8xf32>
    %cst_72 = arith.constant dense<0.000000e+00> : vector<4x8xf32>
    %170 = vector.multi_reduction <add>, %169, %cst_72 [2] : vector<4x8x8xf32> to vector<4x8xf32>
    %171 = vector.shape_cast %170 : vector<4x8xf32> to vector<4x8x1xf32>
    %172 = vector.broadcast %171 : vector<4x8x1xf32> to vector<4x8x8xf32>
    %173 = arith.divf %169, %172 : vector<4x8x8xf32>
    "tpu.trace_start"() <{level = 10 : i32, message = "bts,bsd->btd"}> : () -> ()
    %cst_73 = arith.constant dense<0.000000e+00> : vector<4x8x8xf32>
    %174 = tpu.matmul %173, %161, %cst_73 {dimension_numbers = #tpu.dot_dimension_numbers<[2], [1], [1], [2], [0, 0, 0, 1, 1, 2], [0], [0]>} : vector<4x8x8xf32>, vector<4x8x8xf32>, vector<4x8x8xf32> -> vector<4x8x8xf32>
    "tpu.trace_stop"() : () -> ()
    %175 = vector.extract_strided_slice %158 {offsets = [0, 0, 8], sizes = [4, 8, 8], strides = [1, 1, 1]} : vector<4x8x96xf32> to vector<4x8x8xf32>
    %176 = vector.extract_strided_slice %158 {offsets = [0, 0, 40], sizes = [4, 8, 8], strides = [1, 1, 1]} : vector<4x8x96xf32> to vector<4x8x8xf32>
    %177 = vector.extract_strided_slice %158 {offsets = [0, 0, 72], sizes = [4, 8, 8], strides = [1, 1, 1]} : vector<4x8x96xf32> to vector<4x8x8xf32>
    "tpu.trace_start"() <{level = 10 : i32, message = "btd,bsd->bts"}> : () -> ()
    %cst_74 = arith.constant dense<0.000000e+00> : vector<4x8x8xf32>
    %178 = tpu.matmul %175, %176, %cst_74 {dimension_numbers = #tpu.dot_dimension_numbers<[2], [2], [1], [1], [0, 0, 0, 1, 1, 1], [0], [0]>} : vector<4x8x8xf32>, vector<4x8x8xf32>, vector<4x8x8xf32> -> vector<4x8x8xf32>
    "tpu.trace_stop"() : () -> ()
    %cst_75 = arith.constant 0.353553385 : f32
    %179 = vector.broadcast %cst_75 : f32 to vector<4x8x8xf32>
    %180 = arith.mulf %178, %179 : vector<4x8x8xf32>
    %cst_76 = arith.constant dense<0xFF800000> : vector<4x8xf32>
    %181 = vector.multi_reduction <maximumf>, %180, %cst_76 [2] : vector<4x8x8xf32> to vector<4x8xf32>
    %182 = vector.shape_cast %181 : vector<4x8xf32> to vector<4x8x1xf32>
    %183 = vector.broadcast %182 : vector<4x8x1xf32> to vector<4x8x8xf32>
    %184 = arith.subf %180, %183 : vector<4x8x8xf32>
    %185 = math.exp %184 : vector<4x8x8xf32>
    %cst_77 = arith.constant dense<0.000000e+00> : vector<4x8xf32>
    %186 = vector.multi_reduction <add>, %185, %cst_77 [2] : vector<4x8x8xf32> to vector<4x8xf32>
    %187 = vector.shape_cast %186 : vector<4x8xf32> to vector<4x8x1xf32>
    %188 = vector.broadcast %187 : vector<4x8x1xf32> to vector<4x8x8xf32>
    %189 = arith.divf %185, %188 : vector<4x8x8xf32>
    "tpu.trace_start"() <{level = 10 : i32, message = "bts,bsd->btd"}> : () -> ()
    %cst_78 = arith.constant dense<0.000000e+00> : vector<4x8x8xf32>
    %190 = tpu.matmul %189, %177, %cst_78 {dimension_numbers = #tpu.dot_dimension_numbers<[2], [1], [1], [2], [0, 0, 0, 1, 1, 2], [0], [0]>} : vector<4x8x8xf32>, vector<4x8x8xf32>, vector<4x8x8xf32> -> vector<4x8x8xf32>
    "tpu.trace_stop"() : () -> ()
    %191 = vector.extract_strided_slice %158 {offsets = [0, 0, 16], sizes = [4, 8, 8], strides = [1, 1, 1]} : vector<4x8x96xf32> to vector<4x8x8xf32>
    %192 = vector.extract_strided_slice %158 {offsets = [0, 0, 48], sizes = [4, 8, 8], strides = [1, 1, 1]} : vector<4x8x96xf32> to vector<4x8x8xf32>
    %193 = vector.extract_strided_slice %158 {offsets = [0, 0, 80], sizes = [4, 8, 8], strides = [1, 1, 1]} : vector<4x8x96xf32> to vector<4x8x8xf32>
    "tpu.trace_start"() <{level = 10 : i32, message = "btd,bsd->bts"}> : () -> ()
    %cst_79 = arith.constant dense<0.000000e+00> : vector<4x8x8xf32>
    %194 = tpu.matmul %191, %192, %cst_79 {dimension_numbers = #tpu.dot_dimension_numbers<[2], [2], [1], [1], [0, 0, 0, 1, 1, 1], [0], [0]>} : vector<4x8x8xf32>, vector<4x8x8xf32>, vector<4x8x8xf32> -> vector<4x8x8xf32>
    "tpu.trace_stop"() : () -> ()
    %cst_80 = arith.constant 0.353553385 : f32
    %195 = vector.broadcast %cst_80 : f32 to vector<4x8x8xf32>
    %196 = arith.mulf %194, %195 : vector<4x8x8xf32>
    %cst_81 = arith.constant dense<0xFF800000> : vector<4x8xf32>
    %197 = vector.multi_reduction <maximumf>, %196, %cst_81 [2] : vector<4x8x8xf32> to vector<4x8xf32>
    %198 = vector.shape_cast %197 : vector<4x8xf32> to vector<4x8x1xf32>
    %199 = vector.broadcast %198 : vector<4x8x1xf32> to vector<4x8x8xf32>
    %200 = arith.subf %196, %199 : vector<4x8x8xf32>
    %201 = math.exp %200 : vector<4x8x8xf32>
    %cst_82 = arith.constant dense<0.000000e+00> : vector<4x8xf32>
    %202 = vector.multi_reduction <add>, %201, %cst_82 [2] : vector<4x8x8xf32> to vector<4x8xf32>
    %203 = vector.shape_cast %202 : vector<4x8xf32> to vector<4x8x1xf32>
    %204 = vector.broadcast %203 : vector<4x8x1xf32> to vector<4x8x8xf32>
    %205 = arith.divf %201, %204 : vector<4x8x8xf32>
    "tpu.trace_start"() <{level = 10 : i32, message = "bts,bsd->btd"}> : () -> ()
    %cst_83 = arith.constant dense<0.000000e+00> : vector<4x8x8xf32>
    %206 = tpu.matmul %205, %193, %cst_83 {dimension_numbers = #tpu.dot_dimension_numbers<[2], [1], [1], [2], [0, 0, 0, 1, 1, 2], [0], [0]>} : vector<4x8x8xf32>, vector<4x8x8xf32>, vector<4x8x8xf32> -> vector<4x8x8xf32>
    "tpu.trace_stop"() : () -> ()
    %207 = vector.extract_strided_slice %158 {offsets = [0, 0, 24], sizes = [4, 8, 8], strides = [1, 1, 1]} : vector<4x8x96xf32> to vector<4x8x8xf32>
    %208 = vector.extract_strided_slice %158 {offsets = [0, 0, 56], sizes = [4, 8, 8], strides = [1, 1, 1]} : vector<4x8x96xf32> to vector<4x8x8xf32>
    %209 = vector.extract_strided_slice %158 {offsets = [0, 0, 88], sizes = [4, 8, 8], strides = [1, 1, 1]} : vector<4x8x96xf32> to vector<4x8x8xf32>
    "tpu.trace_start"() <{level = 10 : i32, message = "btd,bsd->bts"}> : () -> ()
    %cst_84 = arith.constant dense<0.000000e+00> : vector<4x8x8xf32>
    %210 = tpu.matmul %207, %208, %cst_84 {dimension_numbers = #tpu.dot_dimension_numbers<[2], [2], [1], [1], [0, 0, 0, 1, 1, 1], [0], [0]>} : vector<4x8x8xf32>, vector<4x8x8xf32>, vector<4x8x8xf32> -> vector<4x8x8xf32>
    "tpu.trace_stop"() : () -> ()
    %cst_85 = arith.constant 0.353553385 : f32
    %211 = vector.broadcast %cst_85 : f32 to vector<4x8x8xf32>
    %212 = arith.mulf %210, %211 : vector<4x8x8xf32>
    %cst_86 = arith.constant dense<0xFF800000> : vector<4x8xf32>
    %213 = vector.multi_reduction <maximumf>, %212, %cst_86 [2] : vector<4x8x8xf32> to vector<4x8xf32>
    %214 = vector.shape_cast %213 : vector<4x8xf32> to vector<4x8x1xf32>
    %215 = vector.broadcast %214 : vector<4x8x1xf32> to vector<4x8x8xf32>
    %216 = arith.subf %212, %215 : vector<4x8x8xf32>
    %217 = math.exp %216 : vector<4x8x8xf32>
    %cst_87 = arith.constant dense<0.000000e+00> : vector<4x8xf32>
    %218 = vector.multi_reduction <add>, %217, %cst_87 [2] : vector<4x8x8xf32> to vector<4x8xf32>
    %219 = vector.shape_cast %218 : vector<4x8xf32> to vector<4x8x1xf32>
    %220 = vector.broadcast %219 : vector<4x8x1xf32> to vector<4x8x8xf32>
    %221 = arith.divf %217, %220 : vector<4x8x8xf32>
    "tpu.trace_start"() <{level = 10 : i32, message = "bts,bsd->btd"}> : () -> ()
    %cst_88 = arith.constant dense<0.000000e+00> : vector<4x8x8xf32>
    %222 = tpu.matmul %221, %209, %cst_88 {dimension_numbers = #tpu.dot_dimension_numbers<[2], [1], [1], [2], [0, 0, 0, 1, 1, 2], [0], [0]>} : vector<4x8x8xf32>, vector<4x8x8xf32>, vector<4x8x8xf32> -> vector<4x8x8xf32>
    "tpu.trace_stop"() : () -> ()
    %223 = tpu.concatenate %174, %190, %206, %222 in 2 : vector<4x8x8xf32>, vector<4x8x8xf32>, vector<4x8x8xf32>, vector<4x8x8xf32> -> vector<4x8x32xf32>
    %224 = vector.shape_cast %223 : vector<4x8x32xf32> to vector<32x32xf32>
    %c0_89 = arith.constant 0 : index
    %c0_90 = arith.constant 0 : index
    %225 = vector.load %arg18[%c0_89, %c0_90] : memref<32x32xf32, #tpu.memory_space<vmem>>, vector<32x32xf32>
    %cst_91 = arith.constant dense<0.000000e+00> : vector<32x32xf32>
    %226 = tpu.matmul %224, %225, %cst_91 {dimension_numbers = #tpu.dot_dimension_numbers<[1], [0], [0], [1], [0, 0, 1, 1], [], []>} : vector<32x32xf32>, vector<32x32xf32>, vector<32x32xf32> -> vector<32x32xf32>
    %c0_92 = arith.constant 0 : index
    %c0_93 = arith.constant 0 : index
    %227 = vector.load %arg19[%c0_92, %c0_93] : memref<1x32xf32, #tpu.memory_space<vmem>>, vector<1x32xf32>
    %228 = vector.broadcast %227 : vector<1x32xf32> to vector<32x32xf32>
    %229 = arith.addf %226, %228 : vector<32x32xf32>
    %230 = arith.addf %152, %229 : vector<32x32xf32>
    %c0_94 = arith.constant 0 : index
    %c0_95 = arith.constant 0 : index
    %231 = vector.load %arg20[%c0_94, %c0_95] : memref<1x32xf32, #tpu.memory_space<vmem>>, vector<1x32xf32>
    %c0_96 = arith.constant 0 : index
    %c0_97 = arith.constant 0 : index
    %232 = vector.load %arg21[%c0_96, %c0_97] : memref<1x32xf32, #tpu.memory_space<vmem>>, vector<1x32xf32>
    %cst_98 = arith.constant dense<0.000000e+00> : vector<32xf32>
    %233 = vector.multi_reduction <add>, %230, %cst_98 [1] : vector<32x32xf32> to vector<32xf32>
    %234 = vector.shape_cast %233 : vector<32xf32> to vector<32x1xf32>
    %cst_99 = arith.constant 3.200000e+01 : f32
    %235 = vector.broadcast %cst_99 : f32 to vector<32x1xf32>
    %236 = arith.divf %234, %235 : vector<32x1xf32>
    %237 = vector.broadcast %236 : vector<32x1xf32> to vector<32x32xf32>
    %238 = arith.subf %230, %237 : vector<32x32xf32>
    %239 = arith.mulf %238, %238 : vector<32x32xf32>
    %cst_100 = arith.constant dense<0.000000e+00> : vector<32xf32>
    %240 = vector.multi_reduction <add>, %239, %cst_100 [1] : vector<32x32xf32> to vector<32xf32>
    %241 = vector.shape_cast %240 : vector<32xf32> to vector<32x1xf32>
    %cst_101 = arith.constant 3.200000e+01 : f32
    %242 = vector.broadcast %cst_101 : f32 to vector<32x1xf32>
    %243 = arith.divf %241, %242 : vector<32x1xf32>
    %244 = vector.broadcast %236 : vector<32x1xf32> to vector<32x32xf32>
    %245 = arith.subf %230, %244 : vector<32x32xf32>
    %cst_102 = arith.constant 9.99999974E-6 : f32
    %246 = vector.broadcast %cst_102 : f32 to vector<32x1xf32>
    %247 = arith.addf %243, %246 : vector<32x1xf32>
    %248 = math.rsqrt %247 : vector<32x1xf32>
    %249 = vector.broadcast %248 : vector<32x1xf32> to vector<32x32xf32>
    %250 = arith.mulf %245, %249 : vector<32x32xf32>
    %251 = vector.broadcast %231 : vector<1x32xf32> to vector<32x32xf32>
    %252 = arith.mulf %250, %251 : vector<32x32xf32>
    %253 = vector.broadcast %232 : vector<1x32xf32> to vector<32x32xf32>
    %254 = arith.addf %252, %253 : vector<32x32xf32>
    %c0_103 = arith.constant 0 : index
    %c0_104 = arith.constant 0 : index
    %255 = vector.load %arg22[%c0_103, %c0_104] : memref<32x64xf32, #tpu.memory_space<vmem>>, vector<32x64xf32>
    %cst_105 = arith.constant dense<0.000000e+00> : vector<32x64xf32>
    %256 = tpu.matmul %254, %255, %cst_105 {dimension_numbers = #tpu.dot_dimension_numbers<[1], [0], [0], [1], [0, 0, 1, 1], [], []>} : vector<32x32xf32>, vector<32x64xf32>, vector<32x64xf32> -> vector<32x64xf32>
    %c0_106 = arith.constant 0 : index
    %c0_107 = arith.constant 0 : index
    %257 = vector.load %arg23[%c0_106, %c0_107] : memref<1x64xf32, #tpu.memory_space<vmem>>, vector<1x64xf32>
    %258 = vector.broadcast %257 : vector<1x64xf32> to vector<32x64xf32>
    %259 = arith.addf %256, %258 : vector<32x64xf32>
    %cst_108 = arith.constant 0.000000e+00 : f32
    %260 = vector.broadcast %cst_108 : f32 to vector<32x64xf32>
    %261 = arith.maximumf %259, %260 : vector<32x64xf32>
    %c0_109 = arith.constant 0 : index
    %c0_110 = arith.constant 0 : index
    %262 = vector.load %arg24[%c0_109, %c0_110] : memref<64x32xf32, #tpu.memory_space<vmem>>, vector<64x32xf32>
    %cst_111 = arith.constant dense<0.000000e+00> : vector<32x32xf32>
    %263 = tpu.matmul %261, %262, %cst_111 {dimension_numbers = #tpu.dot_dimension_numbers<[1], [0], [0], [1], [0, 0, 1, 1], [], []>} : vector<32x64xf32>, vector<64x32xf32>, vector<32x32xf32> -> vector<32x32xf32>
    %c0_112 = arith.constant 0 : index
    %c0_113 = arith.constant 0 : index
    %264 = vector.load %arg25[%c0_112, %c0_113] : memref<1x32xf32, #tpu.memory_space<vmem>>, vector<1x32xf32>
    %265 = vector.broadcast %264 : vector<1x32xf32> to vector<32x32xf32>
    %266 = arith.addf %263, %265 : vector<32x32xf32>
    %267 = arith.addf %254, %266 : vector<32x32xf32>
    %c0_114 = arith.constant 0 : index
    %c0_115 = arith.constant 0 : index
    %268 = vector.load %arg26[%c0_114, %c0_115] : memref<1x32xf32, #tpu.memory_space<vmem>>, vector<1x32xf32>
    %c0_116 = arith.constant 0 : index
    %c0_117 = arith.constant 0 : index
    %269 = vector.load %arg27[%c0_116, %c0_117] : memref<1x32xf32, #tpu.memory_space<vmem>>, vector<1x32xf32>
    %cst_118 = arith.constant dense<0.000000e+00> : vector<32xf32>
    %270 = vector.multi_reduction <add>, %267, %cst_118 [1] : vector<32x32xf32> to vector<32xf32>
    %271 = vector.shape_cast %270 : vector<32xf32> to vector<32x1xf32>
    %cst_119 = arith.constant 3.200000e+01 : f32
    %272 = vector.broadcast %cst_119 : f32 to vector<32x1xf32>
    %273 = arith.divf %271, %272 : vector<32x1xf32>
    %274 = vector.broadcast %273 : vector<32x1xf32> to vector<32x32xf32>
    %275 = arith.subf %267, %274 : vector<32x32xf32>
    %276 = arith.mulf %275, %275 : vector<32x32xf32>
    %cst_120 = arith.constant dense<0.000000e+00> : vector<32xf32>
    %277 = vector.multi_reduction <add>, %276, %cst_120 [1] : vector<32x32xf32> to vector<32xf32>
    %278 = vector.shape_cast %277 : vector<32xf32> to vector<32x1xf32>
    %cst_121 = arith.constant 3.200000e+01 : f32
    %279 = vector.broadcast %cst_121 : f32 to vector<32x1xf32>
    %280 = arith.divf %278, %279 : vector<32x1xf32>
    %281 = vector.broadcast %273 : vector<32x1xf32> to vector<32x32xf32>
    %282 = arith.subf %267, %281 : vector<32x32xf32>
    %cst_122 = arith.constant 9.99999974E-6 : f32
    %283 = vector.broadcast %cst_122 : f32 to vector<32x1xf32>
    %284 = arith.addf %280, %283 : vector<32x1xf32>
    %285 = math.rsqrt %284 : vector<32x1xf32>
    %286 = vector.broadcast %285 : vector<32x1xf32> to vector<32x32xf32>
    %287 = arith.mulf %282, %286 : vector<32x32xf32>
    %288 = vector.broadcast %268 : vector<1x32xf32> to vector<32x32xf32>
    %289 = arith.mulf %287, %288 : vector<32x32xf32>
    %290 = vector.broadcast %269 : vector<1x32xf32> to vector<32x32xf32>
    %291 = arith.addf %289, %290 : vector<32x32xf32>
    %292 = vector.shape_cast %291 : vector<32x32xf32> to vector<4x8x32xf32>
    %cst_123 = arith.constant dense<0.000000e+00> : vector<4x32xf32>
    %293 = vector.multi_reduction <add>, %292, %cst_123 [1] : vector<4x8x32xf32> to vector<4x32xf32>
    %cst_124 = arith.constant 8.000000e+00 : f32
    %294 = vector.broadcast %cst_124 : f32 to vector<4x32xf32>
    %295 = arith.divf %293, %294 : vector<4x32xf32>
    %c0_125 = arith.constant 0 : index
    %c0_126 = arith.constant 0 : index
    %296 = vector.load %arg28[%c0_125, %c0_126] : memref<32x4xf32, #tpu.memory_space<vmem>>, vector<32x4xf32>
    %cst_127 = arith.constant dense<0.000000e+00> : vector<4x4xf32>
    %297 = tpu.matmul %295, %296, %cst_127 {dimension_numbers = #tpu.dot_dimension_numbers<[1], [0], [0], [1], [0, 0, 1, 1], [], []>} : vector<4x32xf32>, vector<32x4xf32>, vector<4x4xf32> -> vector<4x4xf32>
    %c0_128 = arith.constant 0 : index
    %c0_129 = arith.constant 0 : index
    %298 = vector.load %arg29[%c0_128, %c0_129] : memref<1x4xf32, #tpu.memory_space<vmem>>, vector<1x4xf32>
    %299 = vector.broadcast %298 : vector<1x4xf32> to vector<4x4xf32>
    %300 = arith.addf %297, %299 : vector<4x4xf32>
    %c0_130 = arith.constant 0 : index
    %c0_131 = arith.constant 0 : index
    %c0_132 = arith.constant 0 : index
    %301 = vector.load %arg30[%c0_130, %c0_131, %c0_132] : memref<1x4x4xf32, #tpu.memory_space<vmem>>, vector<1x4x4xf32>
    %302 = vector.shape_cast %301 : vector<1x4x4xf32> to vector<4x4xf32>
    %303 = vector.shape_cast %300 : vector<4x4xf32> to vector<1x4x4xf32>
    tpu.vector_store %arg30[%c0_130, %c0_131, %c0_132], %303 {strides = array<i32>} : memref<1x4x4xf32, #tpu.memory_space<vmem>>, vector<1x4x4xf32>,
    return
  }
  func.func @transform_0(%arg0: i32) -> (i32, i32) {
    %c0_i32 = arith.constant 0 : i32
    %c0_i32_0 = arith.constant 0 : i32
    return %arg0, %c0_i32 : i32, i32
  }
  func.func @transform_1(%arg0: i32) -> (i32, i32) {
    %c0_i32 = arith.constant 0 : i32
    %c0_i32_0 = arith.constant 0 : i32
    %c0_i32_1 = arith.constant 0 : i32
    return %c0_i32, %c0_i32_0 : i32, i32
  }
  func.func @transform_2(%arg0: i32) -> (i32, i32) {
    %c0_i32 = arith.constant 0 : i32
    %c0_i32_0 = arith.constant 0 : i32
    %c0_i32_1 = arith.constant 0 : i32
    return %c0_i32, %c0_i32_0 : i32, i32
  }
  func.func @transform_3(%arg0: i32) -> (i32, i32) {
    %c0_i32 = arith.constant 0 : i32
    %c0_i32_0 = arith.constant 0 : i32
    %c0_i32_1 = arith.constant 0 : i32
    return %c0_i32, %c0_i32_0 : i32, i32
  }
  func.func @transform_4(%arg0: i32) -> (i32, i32) {
    %c0_i32 = arith.constant 0 : i32
    %c0_i32_0 = arith.constant 0 : i32
    %c0_i32_1 = arith.constant 0 : i32
    return %c0_i32, %c0_i32_0 : i32, i32
  }
  func.func @transform_5(%arg0: i32) -> (i32, i32) {
    %c0_i32 = arith.constant 0 : i32
    %c0_i32_0 = arith.constant 0 : i32
    %c0_i32_1 = arith.constant 0 : i32
    return %c0_i32, %c0_i32_0 : i32, i32
  }
  func.func @transform_6(%arg0: i32) -> (i32, i32) {
    %c0_i32 = arith.constant 0 : i32
    %c0_i32_0 = arith.constant 0 : i32
    %c0_i32_1 = arith.constant 0 : i32
    return %c0_i32, %c0_i32_0 : i32, i32
  }
  func.func @transform_7(%arg0: i32) -> (i32, i32) {
    %c0_i32 = arith.constant 0 : i32
    %c0_i32_0 = arith.constant 0 : i32
    %c0_i32_1 = arith.constant 0 : i32
    return %c0_i32, %c0_i32_0 : i32, i32
  }
  func.func @transform_8(%arg0: i32) -> (i32, i32) {
    %c0_i32 = arith.constant 0 : i32
    %c0_i32_0 = arith.constant 0 : i32
    %c0_i32_1 = arith.constant 0 : i32
    return %c0_i32, %c0_i32_0 : i32, i32
  }
  func.func @transform_9(%arg0: i32) -> (i32, i32) {
    %c0_i32 = arith.constant 0 : i32
    %c0_i32_0 = arith.constant 0 : i32
    %c0_i32_1 = arith.constant 0 : i32
    return %c0_i32, %c0_i32_0 : i32, i32
  }
  func.func @transform_10(%arg0: i32) -> (i32, i32) {
    %c0_i32 = arith.constant 0 : i32
    %c0_i32_0 = arith.constant 0 : i32
    %c0_i32_1 = arith.constant 0 : i32
    return %c0_i32, %c0_i32_0 : i32, i32
  }
  func.func @transform_11(%arg0: i32) -> (i32, i32) {
    %c0_i32 = arith.constant 0 : i32
    %c0_i32_0 = arith.constant 0 : i32
    %c0_i32_1 = arith.constant 0 : i32
    return %c0_i32, %c0_i32_0 : i32, i32
  }
  func.func @transform_12(%arg0: i32) -> (i32, i32) {
    %c0_i32 = arith.constant 0 : i32
    %c0_i32_0 = arith.constant 0 : i32
    %c0_i32_1 = arith.constant 0 : i32
    return %c0_i32, %c0_i32_0 : i32, i32
  }
  func.func @transform_13(%arg0: i32) -> (i32, i32) {
    %c0_i32 = arith.constant 0 : i32
    %c0_i32_0 = arith.constant 0 : i32
    %c0_i32_1 = arith.constant 0 : i32
    return %c0_i32, %c0_i32_0 : i32, i32
  }
  func.func @transform_14(%arg0: i32) -> (i32, i32) {
    %c0_i32 = arith.constant 0 : i32
    %c0_i32_0 = arith.constant 0 : i32
    %c0_i32_1 = arith.constant 0 : i32
    return %c0_i32, %c0_i32_0 : i32, i32
  }
  func.func @transform_15(%arg0: i32) -> (i32, i32) {
    %c0_i32 = arith.constant 0 : i32
    %c0_i32_0 = arith.constant 0 : i32
    %c0_i32_1 = arith.constant 0 : i32
    return %c0_i32, %c0_i32_0 : i32, i32
  }
  func.func @transform_16(%arg0: i32) -> (i32, i32) {
    %c0_i32 = arith.constant 0 : i32
    %c0_i32_0 = arith.constant 0 : i32
    %c0_i32_1 = arith.constant 0 : i32
    return %c0_i32, %c0_i32_0 : i32, i32
  }
  func.func @transform_17(%arg0: i32) -> (i32, i32) {
    %c0_i32 = arith.constant 0 : i32
    %c0_i32_0 = arith.constant 0 : i32
    %c0_i32_1 = arith.constant 0 : i32
    return %c0_i32, %c0_i32_0 : i32, i32
  }
  func.func @transform_18(%arg0: i32) -> (i32, i32) {
    %c0_i32 = arith.constant 0 : i32
    %c0_i32_0 = arith.constant 0 : i32
    %c0_i32_1 = arith.constant 0 : i32
    return %c0_i32, %c0_i32_0 : i32, i32
  }
  func.func @transform_19(%arg0: i32) -> (i32, i32) {
    %c0_i32 = arith.constant 0 : i32
    %c0_i32_0 = arith.constant 0 : i32
    %c0_i32_1 = arith.constant 0 : i32
    return %c0_i32, %c0_i32_0 : i32, i32
  }
  func.func @transform_20(%arg0: i32) -> (i32, i32) {
    %c0_i32 = arith.constant 0 : i32
    %c0_i32_0 = arith.constant 0 : i32
    %c0_i32_1 = arith.constant 0 : i32
    return %c0_i32, %c0_i32_0 : i32, i32
  }
  func.func @transform_21(%arg0: i32) -> (i32, i32) {
    %c0_i32 = arith.constant 0 : i32
    %c0_i32_0 = arith.constant 0 : i32
    %c0_i32_1 = arith.constant 0 : i32
    return %c0_i32, %c0_i32_0 : i32, i32
  }
  func.func @transform_22(%arg0: i32) -> (i32, i32) {
    %c0_i32 = arith.constant 0 : i32
    %c0_i32_0 = arith.constant 0 : i32
    %c0_i32_1 = arith.constant 0 : i32
    return %c0_i32, %c0_i32_0 : i32, i32
  }
  func.func @transform_23(%arg0: i32) -> (i32, i32) {
    %c0_i32 = arith.constant 0 : i32
    %c0_i32_0 = arith.constant 0 : i32
    %c0_i32_1 = arith.constant 0 : i32
    return %c0_i32, %c0_i32_0 : i32, i32
  }
  func.func @transform_24(%arg0: i32) -> (i32, i32) {
    %c0_i32 = arith.constant 0 : i32
    %c0_i32_0 = arith.constant 0 : i32
    %c0_i32_1 = arith.constant 0 : i32
    return %c0_i32, %c0_i32_0 : i32, i32
  }
  func.func @transform_25(%arg0: i32) -> (i32, i32) {
    %c0_i32 = arith.constant 0 : i32
    %c0_i32_0 = arith.constant 0 : i32
    %c0_i32_1 = arith.constant 0 : i32
    return %c0_i32, %c0_i32_0 : i32, i32
  }
  func.func @transform_26(%arg0: i32) -> (i32, i32) {
    %c0_i32 = arith.constant 0 : i32
    %c0_i32_0 = arith.constant 0 : i32
    %c0_i32_1 = arith.constant 0 : i32
    return %c0_i32, %c0_i32_0 : i32, i32
  }
  func.func @transform_27(%arg0: i32) -> (i32, i32) {
    %c0_i32 = arith.constant 0 : i32
    %c0_i32_0 = arith.constant 0 : i32
    %c0_i32_1 = arith.constant 0 : i32
    return %c0_i32, %c0_i32_0 : i32, i32
  }
  func.func @transform_28(%arg0: i32) -> (i32, i32) {
    %c0_i32 = arith.constant 0 : i32
    %c0_i32_0 = arith.constant 0 : i32
    %c0_i32_1 = arith.constant 0 : i32
    return %c0_i32, %c0_i32_0 : i32, i32
  }
  func.func @transform_29(%arg0: i32) -> (i32, i32, i32) {
    %c0_i32 = arith.constant 0 : i32
    %c0_i32_0 = arith.constant 0 : i32
    %c0_i32_1 = arith.constant 0 : i32
    return %arg0, %c0_i32, %c0_i32_0 : i32, i32, i32
  }
}

</mosaic_0001>

<llo_original>
// kernel: tpu_custom_call.1
$region0: #{tpu_custom_call.1}
  #allocation0 [shape = 'u32[]', space=smem, size = 0x4, offset = 0x4, fixed_abs, tag = 'smem constant byte address 0x4 - core index']
  #allocation1 [shape = 'u32[144,128]{1,0:T(1,128)}', space=vmem, size = 0x12000, scoped, tag = 'internal scratch']
  %s0 = inlined_call_operand.smem [shape: u32[30], index: -1, kind: input, shape index: {}]
  %s1 = sld [smem:[%s0]]
  %s2 = scalar_lea.smem %s0, 1
  %s3 = sld [smem:[%s2]]
  %s4 = scalar_lea.smem %s0, 2
  %s5 = sld [smem:[%s4]]
  %s6 = scalar_lea.smem %s0, 3
  %s7 = sld [smem:[%s6]]
  %s8 = scalar_lea.smem %s0, 4
  %s9 = sld [smem:[%s8]]
  %s10 = scalar_lea.smem %s0, 5
  %s11 = sld [smem:[%s10]]
  %s12 = scalar_lea.smem %s0, 6
  %s13 = sld [smem:[%s12]]
  %s14 = scalar_lea.smem %s0, 7
  %s15 = sld [smem:[%s14]]
  %s16 = scalar_lea.smem %s0, 8
  %s17 = sld [smem:[%s16]]
  %s18 = scalar_lea.smem %s0, 9
  %s19 = sld [smem:[%s18]]
  %s20 = scalar_lea.smem %s0, 10
  %s21 = sld [smem:[%s20]]
  %s22 = scalar_lea.smem %s0, 11
  %s23 = sld [smem:[%s22]]
  %s24 = scalar_lea.smem %s0, 12
  %s25 = sld [smem:[%s24]]
  %s26 = scalar_lea.smem %s0, 13
  %s27 = sld [smem:[%s26]]
  %s28 = scalar_lea.smem %s0, 14
  %s29 = sld [smem:[%s28]]
  %s30 = scalar_lea.smem %s0, 15
  %s31 = sld [smem:[%s30]]
  %s32 = scalar_lea.smem %s0, 16
  %s33 = sld [smem:[%s32]]
  %s34 = scalar_lea.smem %s0, 17
  %s35 = sld [smem:[%s34]]
  %s36 = scalar_lea.smem %s0, 18
  %s37 = sld [smem:[%s36]]
  %s38 = scalar_lea.smem %s0, 19
  %s39 = sld [smem:[%s38]]
  %s40 = scalar_lea.smem %s0, 20
  %s41 = sld [smem:[%s40]]
  %s42 = scalar_lea.smem %s0, 21
  %s43 = sld [smem:[%s42]]
  %s44 = scalar_lea.smem %s0, 22
  %s45 = sld [smem:[%s44]]
  %s46 = scalar_lea.smem %s0, 23
  %s47 = sld [smem:[%s46]]
  %s48 = scalar_lea.smem %s0, 24
  %s49 = sld [smem:[%s48]]
  %s50 = scalar_lea.smem %s0, 25
  %s51 = sld [smem:[%s50]]
  %s52 = scalar_lea.smem %s0, 26
  %s53 = sld [smem:[%s52]]
  %s54 = scalar_lea.smem %s0, 27
  %s55 = sld [smem:[%s54]]
  %s56 = scalar_lea.smem %s0, 28
  %s57 = sld [smem:[%s56]]
  %s58 = scalar_lea.smem %s0, 29
  %s59 = sld [smem:[%s58]]
  %s60 = sld [smem:[#allocation0]]
  $region149: #{tpu_custom_call.1} parent=0
    _
  %s62 = ssub.s32 1, %s60
  %s63 = scalar_select 0, %s62, %s60
  $region1: #{tpu_custom_call.1} parent=0
    #allocation2 [shape = 'u8[4096]{0}', space=vmem, size = 0x1000, scoped, tag = 'output window, operand 0']
    #allocation3 [shape = 's32[2]{0}', space=sflag, size = 0x8, scoped, tag = 'scoped memory for tpu_custom_call.1']
    %64 = vsyncpa [#allocation3], 0
    %s65 = scalar_lea.sflag [#allocation3], 1
    %66 = vsyncpa %s65, 0
    loop: start=0, step=1, limit=4
    $region2: #{tpu_custom_call.1} parent=1 // loop_pre_header
      _
    $region3: #{tpu_custom_call.1} parent=1 // loop_header
      %s68 = sphi 0, %s72
      %p69 = scmp.ge.s32.totalorder %s68, 4
      %s78 = sphi 0, %s80
      %s81 = sphi 0, %s78
      %s82 = sphi 0, %s81
      %s98 = sphi 0, %s82
      %s102 = sphi 0, %s102
      %s104 = sphi 0, %s102
      %s105 = sphi 0, %s104
      %s119 = sphi 0, %s105
      %s123 = sphi 0, %s123
      %s125 = sphi 0, %s123
      %s126 = sphi 0, %s125
      %s140 = sphi 0, %s126
      %s144 = sphi 0, %s144
      %s146 = sphi 0, %s144
      %s147 = sphi 0, %s146
      %s161 = sphi 0, %s147
      %s165 = sphi 0, %s165
      %s167 = sphi 0, %s165
      %s168 = sphi 0, %s167
      %s182 = sphi 0, %s168
      %s186 = sphi 0, %s186
      %s188 = sphi 0, %s186
      %s189 = sphi 0, %s188
      %s203 = sphi 0, %s189
      %s207 = sphi 0, %s207
      %s209 = sphi 0, %s207
      %s210 = sphi 0, %s209
      %s224 = sphi 0, %s210
      %s228 = sphi 0, %s228
      %s230 = sphi 0, %s228
      %s231 = sphi 0, %s230
      %s245 = sphi 0, %s231
      %s249 = sphi 0, %s249
      %s251 = sphi 0, %s249
      %s252 = sphi 0, %s251
      %s266 = sphi 0, %s252
      %s270 = sphi 0, %s270
      %s272 = sphi 0, %s270
      %s273 = sphi 0, %s272
      %s287 = sphi 0, %s273
      %s291 = sphi 0, %s291
      %s293 = sphi 0, %s291
      %s294 = sphi 0, %s293
      %s308 = sphi 0, %s294
      %s312 = sphi 0, %s312
      %s314 = sphi 0, %s312
      %s315 = sphi 0, %s314
      %s329 = sphi 0, %s315
      %s333 = sphi 0, %s333
      %s335 = sphi 0, %s333
      %s336 = sphi 0, %s335
      %s350 = sphi 0, %s336
      %s354 = sphi 0, %s354
      %s356 = sphi 0, %s354
      %s357 = sphi 0, %s356
      %s371 = sphi 0, %s357
      %s375 = sphi 0, %s375
      %s377 = sphi 0, %s375
      %s378 = sphi 0, %s377
      %s392 = sphi 0, %s378
      %s396 = sphi 0, %s396
      %s398 = sphi 0, %s396
      %s399 = sphi 0, %s398
      %s413 = sphi 0, %s399
      %s417 = sphi 0, %s417
      %s419 = sphi 0, %s417
      %s420 = sphi 0, %s419
      %s434 = sphi 0, %s420
      %s438 = sphi 0, %s438
      %s440 = sphi 0, %s438
      %s441 = sphi 0, %s440
      %s455 = sphi 0, %s441
      %s459 = sphi 0, %s459
      %s461 = sphi 0, %s459
      %s462 = sphi 0, %s461
      %s476 = sphi 0, %s462
      %s480 = sphi 0, %s480
      %s482 = sphi 0, %s480
      %s483 = sphi 0, %s482
      %s497 = sphi 0, %s483
      %s501 = sphi 0, %s501
      %s503 = sphi 0, %s501
      %s504 = sphi 0, %s503
      %s518 = sphi 0, %s504
      %s522 = sphi 0, %s522
      %s524 = sphi 0, %s522
      %s525 = sphi 0, %s524
      %s539 = sphi 0, %s525
      %s543 = sphi 0, %s543
      %s545 = sphi 0, %s543
      %s546 = sphi 0, %s545
      %s560 = sphi 0, %s546
      %s564 = sphi 0, %s564
      %s566 = sphi 0, %s564
      %s567 = sphi 0, %s566
      %s581 = sphi 0, %s567
      %s585 = sphi 0, %s585
      %s587 = sphi 0, %s585
      %s588 = sphi 0, %s587
      %s602 = sphi 0, %s588
      %s606 = sphi 0, %s606
      %s608 = sphi 0, %s606
      %s609 = sphi 0, %s608
      %s623 = sphi 0, %s609
      %s627 = sphi 0, %s627
      %s629 = sphi 0, %s627
      %s630 = sphi 0, %s629
      %s644 = sphi 0, %s630
      %s648 = sphi 0, %s648
      %s650 = sphi 0, %s648
      %s651 = sphi 0, %s650
      %s665 = sphi 0, %s651
      %s669 = sphi 0, %s669
      %s671 = sphi 0, %s669
      %s672 = sphi 0, %s671
      %s686 = sphi 0, %s672
      %s692 = sphi 0, %s694
      %s695 = sphi 0, %s692
      %s696 = sphi 0, %s695
      %s712 = sphi 0, %s696
    $region4: #{tpu_custom_call.1} parent=1 // loop_header_branch
      %71 = sbr.rel (%p69) target = $region8
    $region5: #{tpu_custom_call.1} parent=1 // loop_body
      %s73 = ssub.s32 %s68, 1
      %s74 = ssub.s32 %s68, 2
      %s75 = sadd.s32 %s68, 1
      %s76 = ssub.s32 %s68, %s75
      %p77 = scmp.eq.s32.totalorder %s76, 0
      %s79 = sadd.s32 %s78, 1
      %s80 = scalar_select %p77, %s78, %s79
      %p83 = pneg %p77
      %p84 = scmp.eq.s32.totalorder %s68, 1
      %p85 = por %p83, %p84
      %p86 = scmp.ne.s32.totalorder %s78, %s81
      %p87 = scmp.eq.s32.totalorder %s68, 0
      %p88 = por %p86, %p87
      %p89 = scmp.ne.s32.totalorder %s78, %s81
      %p90 = scmp.eq.s32.totalorder %s73, 1
      %p91 = por %p89, %p90
      %p92 = scmp.ne.s32.totalorder %s81, %s82
      %p93 = scmp.eq.s32.totalorder %s73, 0
      %p94 = por %p92, %p93
      %p95 = scmp.ne.s32.totalorder %s81, %s82
      %p96 = scmp.eq.s32.totalorder %s74, 1
      %p97 = por %p95, %p96
      %p99 = scmp.ne.s32.totalorder %s82, %s98
      %p100 = scmp.eq.s32.totalorder %s74, 0
      %p101 = por %p99, %p100
      %s103 = sadd.s32 %s102, 1
      %p106 = scmp.eq.s32.totalorder %s68, 1
      %p107 = scmp.ne.s32.totalorder %s102, %s104
      %p108 = scmp.eq.s32.totalorder %s68, 0
      %p109 = por %p107, %p108
      %p110 = scmp.ne.s32.totalorder %s102, %s104
      %p111 = scmp.eq.s32.totalorder %s73, 1
      %p112 = por %p110, %p111
      %p113 = scmp.ne.s32.totalorder %s104, %s105
      %p114 = scmp.eq.s32.totalorder %s73, 0
      %p115 = por %p113, %p114
      %p116 = scmp.ne.s32.totalorder %s104, %s105
      %p117 = scmp.eq.s32.totalorder %s74, 1
      %p118 = por %p116, %p117
      %p120 = scmp.ne.s32.totalorder %s105, %s119
      %p121 = scmp.eq.s32.totalorder %s74, 0
      %p122 = por %p120, %p121
      %s124 = sadd.s32 %s123, 1
      %p127 = scmp.eq.s32.totalorder %s68, 1
      %p128 = scmp.ne.s32.totalorder %s123, %s125
      %p129 = scmp.eq.s32.totalorder %s68, 0
      %p130 = por %p128, %p129
      %p131 = scmp.ne.s32.totalorder %s123, %s125
      %p132 = scmp.eq.s32.totalorder %s73, 1
      %p133 = por %p131, %p132
      %p134 = scmp.ne.s32.totalorder %s125, %s126
      %p135 = scmp.eq.s32.totalorder %s73, 0
      %p136 = por %p134, %p135
      %p137 = scmp.ne.s32.totalorder %s125, %s126
      %p138 = scmp.eq.s32.totalorder %s74, 1
      %p139 = por %p137, %p138
      %p141 = scmp.ne.s32.totalorder %s126, %s140
      %p142 = scmp.eq.s32.totalorder %s74, 0
      %p143 = por %p141, %p142
      %s145 = sadd.s32 %s144, 1
      %p148 = scmp.eq.s32.totalorder %s68, 1
      %p149 = scmp.ne.s32.totalorder %s144, %s146
      %p150 = scmp.eq.s32.totalorder %s68, 0
      %p151 = por %p149, %p150
      %p152 = scmp.ne.s32.totalorder %s144, %s146
      %p153 = scmp.eq.s32.totalorder %s73, 1
      %p154 = por %p152, %p153
      %p155 = scmp.ne.s32.totalorder %s146, %s147
      %p156 = scmp.eq.s32.totalorder %s73, 0
      %p157 = por %p155, %p156
      %p158 = scmp.ne.s32.totalorder %s146, %s147
      %p159 = scmp.eq.s32.totalorder %s74, 1
      %p160 = por %p158, %p159
      %p162 = scmp.ne.s32.totalorder %s147, %s161
      %p163 = scmp.eq.s32.totalorder %s74, 0
      %p164 = por %p162, %p163
      %s166 = sadd.s32 %s165, 1
      %p169 = scmp.eq.s32.totalorder %s68, 1
      %p170 = scmp.ne.s32.totalorder %s165, %s167
      %p171 = scmp.eq.s32.totalorder %s68, 0
      %p172 = por %p170, %p171
      %p173 = scmp.ne.s32.totalorder %s165, %s167
      %p174 = scmp.eq.s32.totalorder %s73, 1
      %p175 = por %p173, %p174
      %p176 = scmp.ne.s32.totalorder %s167, %s168
      %p177 = scmp.eq.s32.totalorder %s73, 0
      %p178 = por %p176, %p177
      %p179 = scmp.ne.s32.totalorder %s167, %s168
      %p180 = scmp.eq.s32.totalorder %s74, 1
      %p181 = por %p179, %p180
      %p183 = scmp.ne.s32.totalorder %s168, %s182
      %p184 = scmp.eq.s32.totalorder %s74, 0
      %p185 = por %p183, %p184
      %s187 = sadd.s32 %s186, 1
      %p190 = scmp.eq.s32.totalorder %s68, 1
      %p191 = scmp.ne.s32.totalorder %s186, %s188
      %p192 = scmp.eq.s32.totalorder %s68, 0
      %p193 = por %p191, %p192
      %p194 = scmp.ne.s32.totalorder %s186, %s188
      %p195 = scmp.eq.s32.totalorder %s73, 1
      %p196 = por %p194, %p195
      %p197 = scmp.ne.s32.totalorder %s188, %s189
      %p198 = scmp.eq.s32.totalorder %s73, 0
      %p199 = por %p197, %p198
      %p200 = scmp.ne.s32.totalorder %s188, %s189
      %p201 = scmp.eq.s32.totalorder %s74, 1
      %p202 = por %p200, %p201
      %p204 = scmp.ne.s32.totalorder %s189, %s203
      %p205 = scmp.eq.s32.totalorder %s74, 0
      %p206 = por %p204, %p205
      %s208 = sadd.s32 %s207, 1
      %p211 = scmp.eq.s32.totalorder %s68, 1
      %p212 = scmp.ne.s32.totalorder %s207, %s209
      %p213 = scmp.eq.s32.totalorder %s68, 0
      %p214 = por %p212, %p213
      %p215 = scmp.ne.s32.totalorder %s207, %s209
      %p216 = scmp.eq.s32.totalorder %s73, 1
      %p217 = por %p215, %p216
      %p218 = scmp.ne.s32.totalorder %s209, %s210
      %p219 = scmp.eq.s32.totalorder %s73, 0
      %p220 = por %p218, %p219
      %p221 = scmp.ne.s32.totalorder %s209, %s210
      %p222 = scmp.eq.s32.totalorder %s74, 1
      %p223 = por %p221, %p222
      %p225 = scmp.ne.s32.totalorder %s210, %s224
      %p226 = scmp.eq.s32.totalorder %s74, 0
      %p227 = por %p225, %p226
      %s229 = sadd.s32 %s228, 1
      %p232 = scmp.eq.s32.totalorder %s68, 1
      %p233 = scmp.ne.s32.totalorder %s228, %s230
      %p234 = scmp.eq.s32.totalorder %s68, 0
      %p235 = por %p233, %p234
      %p236 = scmp.ne.s32.totalorder %s228, %s230
      %p237 = scmp.eq.s32.totalorder %s73, 1
      %p238 = por %p236, %p237
      %p239 = scmp.ne.s32.totalorder %s230, %s231
      %p240 = scmp.eq.s32.totalorder %s73, 0
      %p241 = por %p239, %p240
      %p242 = scmp.ne.s32.totalorder %s230, %s231
      %p243 = scmp.eq.s32.totalorder %s74, 1
      %p244 = por %p242, %p243
      %p246 = scmp.ne.s32.totalorder %s231, %s245
      %p247 = scmp.eq.s32.totalorder %s74, 0
      %p248 = por %p246, %p247
      %s250 = sadd.s32 %s249, 1
      %p253 = scmp.eq.s32.totalorder %s68, 1
      %p254 = scmp.ne.s32.totalorder %s249, %s251
      %p255 = scmp.eq.s32.totalorder %s68, 0
      %p256 = por %p254, %p255
      %p257 = scmp.ne.s32.totalorder %s249, %s251
      %p258 = scmp.eq.s32.totalorder %s73, 1
      %p259 = por %p257, %p258
      %p260 = scmp.ne.s32.totalorder %s251, %s252
      %p261 = scmp.eq.s32.totalorder %s73, 0
      %p262 = por %p260, %p261
      %p263 = scmp.ne.s32.totalorder %s251, %s252
      %p264 = scmp.eq.s32.totalorder %s74, 1
      %p265 = por %p263, %p264
      %p267 = scmp.ne.s32.totalorder %s252, %s266
      %p268 = scmp.eq.s32.totalorder %s74, 0
      %p269 = por %p267, %p268
      %s271 = sadd.s32 %s270, 1
      %p274 = scmp.eq.s32.totalorder %s68, 1
      %p275 = scmp.ne.s32.totalorder %s270, %s272
      %p276 = scmp.eq.s32.totalorder %s68, 0
      %p277 = por %p275, %p276
      %p278 = scmp.ne.s32.totalorder %s270, %s272
      %p279 = scmp.eq.s32.totalorder %s73, 1
      %p280 = por %p278, %p279
      %p281 = scmp.ne.s32.totalorder %s272, %s273
      %p282 = scmp.eq.s32.totalorder %s73, 0
      %p283 = por %p281, %p282
      %p284 = scmp.ne.s32.totalorder %s272, %s273
      %p285 = scmp.eq.s32.totalorder %s74, 1
      %p286 = por %p284, %p285
      %p288 = scmp.ne.s32.totalorder %s273, %s287
      %p289 = scmp.eq.s32.totalorder %s74, 0
      %p290 = por %p288, %p289
      %s292 = sadd.s32 %s291, 1
      %p295 = scmp.eq.s32.totalorder %s68, 1
      %p296 = scmp.ne.s32.totalorder %s291, %s293
      %p297 = scmp.eq.s32.totalorder %s68, 0
      %p298 = por %p296, %p297
      %p299 = scmp.ne.s32.totalorder %s291, %s293
      %p300 = scmp.eq.s32.totalorder %s73, 1
      %p301 = por %p299, %p300
      %p302 = scmp.ne.s32.totalorder %s293, %s294
      %p303 = scmp.eq.s32.totalorder %s73, 0
      %p304 = por %p302, %p303
      %p305 = scmp.ne.s32.totalorder %s293, %s294
      %p306 = scmp.eq.s32.totalorder %s74, 1
      %p307 = por %p305, %p306
      %p309 = scmp.ne.s32.totalorder %s294, %s308
      %p310 = scmp.eq.s32.totalorder %s74, 0
      %p311 = por %p309, %p310
      %s313 = sadd.s32 %s312, 1
      %p316 = scmp.eq.s32.totalorder %s68, 1
      %p317 = scmp.ne.s32.totalorder %s312, %s314
      %p318 = scmp.eq.s32.totalorder %s68, 0
      %p319 = por %p317, %p318
      %p320 = scmp.ne.s32.totalorder %s312, %s314
      %p321 = scmp.eq.s32.totalorder %s73, 1
      %p322 = por %p320, %p321
      %p323 = scmp.ne.s32.totalorder %s314, %s315
      %p324 = scmp.eq.s32.totalorder %s73, 0
      %p325 = por %p323, %p324
      %p326 = scmp.ne.s32.totalorder %s314, %s315
      %p327 = scmp.eq.s32.totalorder %s74, 1
      %p328 = por %p326, %p327
      %p330 = scmp.ne.s32.totalorder %s315, %s329
      %p331 = scmp.eq.s32.totalorder %s74, 0
      %p332 = por %p330, %p331
      %s334 = sadd.s32 %s333, 1
      %p337 = scmp.eq.s32.totalorder %s68, 1
      %p338 = scmp.ne.s32.totalorder %s333, %s335
      %p339 = scmp.eq.s32.totalorder %s68, 0
      %p340 = por %p338, %p339
      %p341 = scmp.ne.s32.totalorder %s333, %s335
      %p342 = scmp.eq.s32.totalorder %s73, 1
      %p343 = por %p341, %p342
      %p344 = scmp.ne.s32.totalorder %s335, %s336
      %p345 = scmp.eq.s32.totalorder %s73, 0
      %p346 = por %p344, %p345
      %p347 = scmp.ne.s32.totalorder %s335, %s336
      %p348 = scmp.eq.s32.totalorder %s74, 1
      %p349 = por %p347, %p348
      %p351 = scmp.ne.s32.totalorder %s336, %s350
      %p352 = scmp.eq.s32.totalorder %s74, 0
      %p353 = por %p351, %p352
      %s355 = sadd.s32 %s354, 1
      %p358 = scmp.eq.s32.totalorder %s68, 1
      %p359 = scmp.ne.s32.totalorder %s354, %s356
      %p360 = scmp.eq.s32.totalorder %s68, 0
      %p361 = por %p359, %p360
      %p362 = scmp.ne.s32.totalorder %s354, %s356
      %p363 = scmp.eq.s32.totalorder %s73, 1
      %p364 = por %p362, %p363
      %p365 = scmp.ne.s32.totalorder %s356, %s357
      %p366 = scmp.eq.s32.totalorder %s73, 0
      %p367 = por %p365, %p366
      %p368 = scmp.ne.s32.totalorder %s356, %s357
      %p369 = scmp.eq.s32.totalorder %s74, 1
      %p370 = por %p368, %p369
      %p372 = scmp.ne.s32.totalorder %s357, %s371
      %p373 = scmp.eq.s32.totalorder %s74, 0
      %p374 = por %p372, %p373
      %s376 = sadd.s32 %s375, 1
      %p379 = scmp.eq.s32.totalorder %s68, 1
      %p380 = scmp.ne.s32.totalorder %s375, %s377
      %p381 = scmp.eq.s32.totalorder %s68, 0
      %p382 = por %p380, %p381
      %p383 = scmp.ne.s32.totalorder %s375, %s377
      %p384 = scmp.eq.s32.totalorder %s73, 1
      %p385 = por %p383, %p384
      %p386 = scmp.ne.s32.totalorder %s377, %s378
      %p387 = scmp.eq.s32.totalorder %s73, 0
      %p388 = por %p386, %p387
      %p389 = scmp.ne.s32.totalorder %s377, %s378
      %p390 = scmp.eq.s32.totalorder %s74, 1
      %p391 = por %p389, %p390
      %p393 = scmp.ne.s32.totalorder %s378, %s392
      %p394 = scmp.eq.s32.totalorder %s74, 0
      %p395 = por %p393, %p394
      %s397 = sadd.s32 %s396, 1
      %p400 = scmp.eq.s32.totalorder %s68, 1
      %p401 = scmp.ne.s32.totalorder %s396, %s398
      %p402 = scmp.eq.s32.totalorder %s68, 0
      %p403 = por %p401, %p402
      %p404 = scmp.ne.s32.totalorder %s396, %s398
      %p405 = scmp.eq.s32.totalorder %s73, 1
      %p406 = por %p404, %p405
      %p407 = scmp.ne.s32.totalorder %s398, %s399
      %p408 = scmp.eq.s32.totalorder %s73, 0
      %p409 = por %p407, %p408
      %p410 = scmp.ne.s32.totalorder %s398, %s399
      %p411 = scmp.eq.s32.totalorder %s74, 1
      %p412 = por %p410, %p411
      %p414 = scmp.ne.s32.totalorder %s399, %s413
      %p415 = scmp.eq.s32.totalorder %s74, 0
      %p416 = por %p414, %p415
      %s418 = sadd.s32 %s417, 1
      %p421 = scmp.eq.s32.totalorder %s68, 1
      %p422 = scmp.ne.s32.totalorder %s417, %s419
      %p423 = scmp.eq.s32.totalorder %s68, 0
      %p424 = por %p422, %p423
      %p425 = scmp.ne.s32.totalorder %s417, %s419
      %p426 = scmp.eq.s32.totalorder %s73, 1
      %p427 = por %p425, %p426
      %p428 = scmp.ne.s32.totalorder %s419, %s420
      %p429 = scmp.eq.s32.totalorder %s73, 0
      %p430 = por %p428, %p429
      %p431 = scmp.ne.s32.totalorder %s419, %s420
      %p432 = scmp.eq.s32.totalorder %s74, 1
      %p433 = por %p431, %p432
      %p435 = scmp.ne.s32.totalorder %s420, %s434
      %p436 = scmp.eq.s32.totalorder %s74, 0
      %p437 = por %p435, %p436
      %s439 = sadd.s32 %s438, 1
      %p442 = scmp.eq.s32.totalorder %s68, 1
      %p443 = scmp.ne.s32.totalorder %s438, %s440
      %p444 = scmp.eq.s32.totalorder %s68, 0
      %p445 = por %p443, %p444
      %p446 = scmp.ne.s32.totalorder %s438, %s440
      %p447 = scmp.eq.s32.totalorder %s73, 1
      %p448 = por %p446, %p447
      %p449 = scmp.ne.s32.totalorder %s440, %s441
      %p450 = scmp.eq.s32.totalorder %s73, 0
      %p451 = por %p449, %p450
      %p452 = scmp.ne.s32.totalorder %s440, %s441
      %p453 = scmp.eq.s32.totalorder %s74, 1
      %p454 = por %p452, %p453
      %p456 = scmp.ne.s32.totalorder %s441, %s455
      %p457 = scmp.eq.s32.totalorder %s74, 0
      %p458 = por %p456, %p457
      %s460 = sadd.s32 %s459, 1
      %p463 = scmp.eq.s32.totalorder %s68, 1
      %p464 = scmp.ne.s32.totalorder %s459, %s461
      %p465 = scmp.eq.s32.totalorder %s68, 0
      %p466 = por %p464, %p465
      %p467 = scmp.ne.s32.totalorder %s459, %s461
      %p468 = scmp.eq.s32.totalorder %s73, 1
      %p469 = por %p467, %p468
      %p470 = scmp.ne.s32.totalorder %s461, %s462
      %p471 = scmp.eq.s32.totalorder %s73, 0
      %p472 = por %p470, %p471
      %p473 = scmp.ne.s32.totalorder %s461, %s462
      %p474 = scmp.eq.s32.totalorder %s74, 1
      %p475 = por %p473, %p474
      %p477 = scmp.ne.s32.totalorder %s462, %s476
      %p478 = scmp.eq.s32.totalorder %s74, 0
      %p479 = por %p477, %p478
      %s481 = sadd.s32 %s480, 1
      %p484 = scmp.eq.s32.totalorder %s68, 1
      %p485 = scmp.ne.s32.totalorder %s480, %s482
      %p486 = scmp.eq.s32.totalorder %s68, 0
      %p487 = por %p485, %p486
      %p488 = scmp.ne.s32.totalorder %s480, %s482
      %p489 = scmp.eq.s32.totalorder %s73, 1
      %p490 = por %p488, %p489
      %p491 = scmp.ne.s32.totalorder %s482, %s483
      %p492 = scmp.eq.s32.totalorder %s73, 0
      %p493 = por %p491, %p492
      %p494 = scmp.ne.s32.totalorder %s482, %s483
      %p495 = scmp.eq.s32.totalorder %s74, 1
      %p496 = por %p494, %p495
      %p498 = scmp.ne.s32.totalorder %s483, %s497
      %p499 = scmp.eq.s32.totalorder %s74, 0
      %p500 = por %p498, %p499
      %s502 = sadd.s32 %s501, 1
      %p505 = scmp.eq.s32.totalorder %s68, 1
      %p506 = scmp.ne.s32.totalorder %s501, %s503
      %p507 = scmp.eq.s32.totalorder %s68, 0
      %p508 = por %p506, %p507
      %p509 = scmp.ne.s32.totalorder %s501, %s503
      %p510 = scmp.eq.s32.totalorder %s73, 1
      %p511 = por %p509, %p510
      %p512 = scmp.ne.s32.totalorder %s503, %s504
      %p513 = scmp.eq.s32.totalorder %s73, 0
      %p514 = por %p512, %p513
      %p515 = scmp.ne.s32.totalorder %s503, %s504
      %p516 = scmp.eq.s32.totalorder %s74, 1
      %p517 = por %p515, %p516
      %p519 = scmp.ne.s32.totalorder %s504, %s518
      %p520 = scmp.eq.s32.totalorder %s74, 0
      %p521 = por %p519, %p520
      %s523 = sadd.s32 %s522, 1
      %p526 = scmp.eq.s32.totalorder %s68, 1
      %p527 = scmp.ne.s32.totalorder %s522, %s524
      %p528 = scmp.eq.s32.totalorder %s68, 0
      %p529 = por %p527, %p528
      %p530 = scmp.ne.s32.totalorder %s522, %s524
      %p531 = scmp.eq.s32.totalorder %s73, 1
      %p532 = por %p530, %p531
      %p533 = scmp.ne.s32.totalorder %s524, %s525
      %p534 = scmp.eq.s32.totalorder %s73, 0
      %p535 = por %p533, %p534
      %p536 = scmp.ne.s32.totalorder %s524, %s525
      %p537 = scmp.eq.s32.totalorder %s74, 1
      %p538 = por %p536, %p537
      %p540 = scmp.ne.s32.totalorder %s525, %s539
      %p541 = scmp.eq.s32.totalorder %s74, 0
      %p542 = por %p540, %p541
      %s544 = sadd.s32 %s543, 1
      %p547 = scmp.eq.s32.totalorder %s68, 1
      %p548 = scmp.ne.s32.totalorder %s543, %s545
      %p549 = scmp.eq.s32.totalorder %s68, 0
      %p550 = por %p548, %p549
      %p551 = scmp.ne.s32.totalorder %s543, %s545
      %p552 = scmp.eq.s32.totalorder %s73, 1
      %p553 = por %p551, %p552
      %p554 = scmp.ne.s32.totalorder %s545, %s546
      %p555 = scmp.eq.s32.totalorder %s73, 0
      %p556 = por %p554, %p555
      %p557 = scmp.ne.s32.totalorder %s545, %s546
      %p558 = scmp.eq.s32.totalorder %s74, 1
      %p559 = por %p557, %p558
      %p561 = scmp.ne.s32.totalorder %s546, %s560
      %p562 = scmp.eq.s32.totalorder %s74, 0
      %p563 = por %p561, %p562
      %s565 = sadd.s32 %s564, 1
      %p568 = scmp.eq.s32.totalorder %s68, 1
      %p569 = scmp.ne.s32.totalorder %s564, %s566
      %p570 = scmp.eq.s32.totalorder %s68, 0
      %p571 = por %p569, %p570
      %p572 = scmp.ne.s32.totalorder %s564, %s566
      %p573 = scmp.eq.s32.totalorder %s73, 1
      %p574 = por %p572, %p573
      %p575 = scmp.ne.s32.totalorder %s566, %s567
      %p576 = scmp.eq.s32.totalorder %s73, 0
      %p577 = por %p575, %p576
      %p578 = scmp.ne.s32.totalorder %s566, %s567
      %p579 = scmp.eq.s32.totalorder %s74, 1
      %p580 = por %p578, %p579
      %p582 = scmp.ne.s32.totalorder %s567, %s581
      %p583 = scmp.eq.s32.totalorder %s74, 0
      %p584 = por %p582, %p583
      %s586 = sadd.s32 %s585, 1
      %p589 = scmp.eq.s32.totalorder %s68, 1
      %p590 = scmp.ne.s32.totalorder %s585, %s587
      %p591 = scmp.eq.s32.totalorder %s68, 0
      %p592 = por %p590, %p591
      %p593 = scmp.ne.s32.totalorder %s585, %s587
      %p594 = scmp.eq.s32.totalorder %s73, 1
      %p595 = por %p593, %p594
      %p596 = scmp.ne.s32.totalorder %s587, %s588
      %p597 = scmp.eq.s32.totalorder %s73, 0
      %p598 = por %p596, %p597
      %p599 = scmp.ne.s32.totalorder %s587, %s588
      %p600 = scmp.eq.s32.totalorder %s74, 1
      %p601 = por %p599, %p600
      %p603 = scmp.ne.s32.totalorder %s588, %s602
      %p604 = scmp.eq.s32.totalorder %s74, 0
      %p605 = por %p603, %p604
      %s607 = sadd.s32 %s606, 1
      %p610 = scmp.eq.s32.totalorder %s68, 1
      %p611 = scmp.ne.s32.totalorder %s606, %s608
      %p612 = scmp.eq.s32.totalorder %s68, 0
      %p613 = por %p611, %p612
      %p614 = scmp.ne.s32.totalorder %s606, %s608
      %p615 = scmp.eq.s32.totalorder %s73, 1
      %p616 = por %p614, %p615
      %p617 = scmp.ne.s32.totalorder %s608, %s609
      %p618 = scmp.eq.s32.totalorder %s73, 0
      %p619 = por %p617, %p618
      %p620 = scmp.ne.s32.totalorder %s608, %s609
      %p621 = scmp.eq.s32.totalorder %s74, 1
      %p622 = por %p620, %p621
      %p624 = scmp.ne.s32.totalorder %s609, %s623
      %p625 = scmp.eq.s32.totalorder %s74, 0
      %p626 = por %p624, %p625
      %s628 = sadd.s32 %s627, 1
      %p631 = scmp.eq.s32.totalorder %s68, 1
      %p632 = scmp.ne.s32.totalorder %s627, %s629
      %p633 = scmp.eq.s32.totalorder %s68, 0
      %p634 = por %p632, %p633
      %p635 = scmp.ne.s32.totalorder %s627, %s629
      %p636 = scmp.eq.s32.totalorder %s73, 1
      %p637 = por %p635, %p636
      %p638 = scmp.ne.s32.totalorder %s629, %s630
      %p639 = scmp.eq.s32.totalorder %s73, 0
      %p640 = por %p638, %p639
      %p641 = scmp.ne.s32.totalorder %s629, %s630
      %p642 = scmp.eq.s32.totalorder %s74, 1
      %p643 = por %p641, %p642
      %p645 = scmp.ne.s32.totalorder %s630, %s644
      %p646 = scmp.eq.s32.totalorder %s74, 0
      %p647 = por %p645, %p646
      %s649 = sadd.s32 %s648, 1
      %p652 = scmp.eq.s32.totalorder %s68, 1
      %p653 = scmp.ne.s32.totalorder %s648, %s650
      %p654 = scmp.eq.s32.totalorder %s68, 0
      %p655 = por %p653, %p654
      %p656 = scmp.ne.s32.totalorder %s648, %s650
      %p657 = scmp.eq.s32.totalorder %s73, 1
      %p658 = por %p656, %p657
      %p659 = scmp.ne.s32.totalorder %s650, %s651
      %p660 = scmp.eq.s32.totalorder %s73, 0
      %p661 = por %p659, %p660
      %p662 = scmp.ne.s32.totalorder %s650, %s651
      %p663 = scmp.eq.s32.totalorder %s74, 1
      %p664 = por %p662, %p663
      %p666 = scmp.ne.s32.totalorder %s651, %s665
      %p667 = scmp.eq.s32.totalorder %s74, 0
      %p668 = por %p666, %p667
      %s670 = sadd.s32 %s669, 1
      %p673 = scmp.eq.s32.totalorder %s68, 1
      %p674 = scmp.ne.s32.totalorder %s669, %s671
      %p675 = scmp.eq.s32.totalorder %s68, 0
      %p676 = por %p674, %p675
      %p677 = scmp.ne.s32.totalorder %s669, %s671
      %p678 = scmp.eq.s32.totalorder %s73, 1
      %p679 = por %p677, %p678
      %p680 = scmp.ne.s32.totalorder %s671, %s672
      %p681 = scmp.eq.s32.totalorder %s73, 0
      %p682 = por %p680, %p681
      %p683 = scmp.ne.s32.totalorder %s671, %s672
      %p684 = scmp.eq.s32.totalorder %s74, 1
      %p685 = por %p683, %p684
      %p687 = scmp.ne.s32.totalorder %s672, %s686
      %p688 = scmp.eq.s32.totalorder %s74, 0
      %p689 = por %p687, %p688
      %s690 = ssub.s32 %s68, %s75
      %p691 = scmp.eq.s32.totalorder %s690, 0
      %s693 = sadd.s32 %s692, 1
      %s694 = scalar_select %p691, %s692, %s693
      %p697 = pneg %p691
      %p698 = scmp.eq.s32.totalorder %s68, 1
      %p699 = por %p697, %p698
      %p700 = scmp.ne.s32.totalorder %s692, %s695
      %p701 = scmp.eq.s32.totalorder %s68, 0
      %p702 = por %p700, %p701
      %p703 = scmp.ne.s32.totalorder %s692, %s695
      %p704 = scmp.eq.s32.totalorder %s73, 1
      %p705 = por %p703, %p704
      %p706 = scmp.ne.s32.totalorder %s695, %s696
      %p707 = scmp.eq.s32.totalorder %s73, 0
      %p708 = por %p706, %p707
      %p709 = scmp.ne.s32.totalorder %s695, %s696
      %p710 = scmp.eq.s32.totalorder %s74, 1
      %p711 = por %p709, %p710
      %p713 = scmp.ne.s32.totalorder %s696, %s712
      %p714 = scmp.eq.s32.totalorder %s74, 0
      %p715 = por %p713, %p714
      %p716 = scmp.le.s32.totalorder 1, %s68
      %p717 = scmp.lt.s32.totalorder %s68, 3
      %p718 = pnand %p716, %p717
      %p719 = pneg %p718
      // Predicated region
      $region9: #{tpu_custom_call.1} parent=5 // pred_check
        _
      $region10: #{tpu_custom_call.1} parent=5 // pred_check_branch
        %721 = sbr.rel (%p718) target = $region12
      $region11: #{tpu_custom_call.1} parent=5 // pred_region
        %s722 = ssub.s32 %s68, 1
        // Predicated region
        $region13: #{tpu_custom_call.1} parent=11 // pred_check
          %p723 = pneg %p115
        $region14: #{tpu_custom_call.1} parent=11 // pred_check_branch
          %725 = sbr.rel (%p723) target = $region16
        $region15: #{tpu_custom_call.1} parent=11 // pred_region
          _
        $region16: #{tpu_custom_call.1} parent=11 // pred_fallthru
          _
        // Predicated region
        $region17: #{tpu_custom_call.1} parent=11 // pred_check
          %p726 = pneg %p136
        $region18: #{tpu_custom_call.1} parent=11 // pred_check_branch
          %728 = sbr.rel (%p726) target = $region20
        $region19: #{tpu_custom_call.1} parent=11 // pred_region
          _
        $region20: #{tpu_custom_call.1} parent=11 // pred_fallthru
          _
        // Predicated region
        $region21: #{tpu_custom_call.1} parent=11 // pred_check
          %p729 = pneg %p157
        $region22: #{tpu_custom_call.1} parent=11 // pred_check_branch
          %731 = sbr.rel (%p729) target = $region24
        $region23: #{tpu_custom_call.1} parent=11 // pred_region
          _
        $region24: #{tpu_custom_call.1} parent=11 // pred_fallthru
          _
        // Predicated region
        $region25: #{tpu_custom_call.1} parent=11 // pred_check
          %p732 = pneg %p178
        $region26: #{tpu_custom_call.1} parent=11 // pred_check_branch
          %734 = sbr.rel (%p732) target = $region28
        $region27: #{tpu_custom_call.1} parent=11 // pred_region
          _
        $region28: #{tpu_custom_call.1} parent=11 // pred_fallthru
          _
        // Predicated region
        $region29: #{tpu_custom_call.1} parent=11 // pred_check
          %p735 = pneg %p199
        $region30: #{tpu_custom_call.1} parent=11 // pred_check_branch
          %737 = sbr.rel (%p735) target = $region32
        $region31: #{tpu_custom_call.1} parent=11 // pred_region
          _
        $region32: #{tpu_custom_call.1} parent=11 // pred_fallthru
          _
        // Predicated region
        $region33: #{tpu_custom_call.1} parent=11 // pred_check
          %p738 = pneg %p220
        $region34: #{tpu_custom_call.1} parent=11 // pred_check_branch
          %740 = sbr.rel (%p738) target = $region36
        $region35: #{tpu_custom_call.1} parent=11 // pred_region
          _
        $region36: #{tpu_custom_call.1} parent=11 // pred_fallthru
          _
        // Predicated region
        $region37: #{tpu_custom_call.1} parent=11 // pred_check
          %p741 = pneg %p241
        $region38: #{tpu_custom_call.1} parent=11 // pred_check_branch
          %743 = sbr.rel (%p741) target = $region40
        $region39: #{tpu_custom_call.1} parent=11 // pred_region
          _
        $region40: #{tpu_custom_call.1} parent=11 // pred_fallthru
          _
        // Predicated region
        $region41: #{tpu_custom_call.1} parent=11 // pred_check
          %p744 = pneg %p262
        $region42: #{tpu_custom_call.1} parent=11 // pred_check_branch
          %746 = sbr.rel (%p744) target = $region44
        $region43: #{tpu_custom_call.1} parent=11 // pred_region
          _
        $region44: #{tpu_custom_call.1} parent=11 // pred_fallthru
          _
        // Predicated region
        $region45: #{tpu_custom_call.1} parent=11 // pred_check
          %p747 = pneg %p283
        $region46: #{tpu_custom_call.1} parent=11 // pred_check_branch
          %749 = sbr.rel (%p747) target = $region48
        $region47: #{tpu_custom_call.1} parent=11 // pred_region
          _
        $region48: #{tpu_custom_call.1} parent=11 // pred_fallthru
          _
        // Predicated region
        $region49: #{tpu_custom_call.1} parent=11 // pred_check
          %p750 = pneg %p304
        $region50: #{tpu_custom_call.1} parent=11 // pred_check_branch
          %752 = sbr.rel (%p750) target = $region52
        $region51: #{tpu_custom_call.1} parent=11 // pred_region
          _
        $region52: #{tpu_custom_call.1} parent=11 // pred_fallthru
          _
        // Predicated region
        $region53: #{tpu_custom_call.1} parent=11 // pred_check
          %p753 = pneg %p325
        $region54: #{tpu_custom_call.1} parent=11 // pred_check_branch
          %755 = sbr.rel (%p753) target = $region56
        $region55: #{tpu_custom_call.1} parent=11 // pred_region
          _
        $region56: #{tpu_custom_call.1} parent=11 // pred_fallthru
          _
        // Predicated region
        $region57: #{tpu_custom_call.1} parent=11 // pred_check
          %p756 = pneg %p346
        $region58: #{tpu_custom_call.1} parent=11 // pred_check_branch
          %758 = sbr.rel (%p756) target = $region60
        $region59: #{tpu_custom_call.1} parent=11 // pred_region
          _
        $region60: #{tpu_custom_call.1} parent=11 // pred_fallthru
          _
        // Predicated region
        $region61: #{tpu_custom_call.1} parent=11 // pred_check
          %p759 = pneg %p367
        $region62: #{tpu_custom_call.1} parent=11 // pred_check_branch
          %761 = sbr.rel (%p759) target = $region64
        $region63: #{tpu_custom_call.1} parent=11 // pred_region
          _
        $region64: #{tpu_custom_call.1} parent=11 // pred_fallthru
          _
        // Predicated region
        $region65: #{tpu_custom_call.1} parent=11 // pred_check
          %p762 = pneg %p388
        $region66: #{tpu_custom_call.1} parent=11 // pred_check_branch
          %764 = sbr.rel (%p762) target = $region68
        $region67: #{tpu_custom_call.1} parent=11 // pred_region
          _
        $region68: #{tpu_custom_call.1} parent=11 // pred_fallthru
          _
        // Predicated region
        $region69: #{tpu_custom_call.1} parent=11 // pred_check
          %p765 = pneg %p409
        $region70: #{tpu_custom_call.1} parent=11 // pred_check_branch
          %767 = sbr.rel (%p765) target = $region72
        $region71: #{tpu_custom_call.1} parent=11 // pred_region
          _
        $region72: #{tpu_custom_call.1} parent=11 // pred_fallthru
          _
        // Predicated region
        $region73: #{tpu_custom_call.1} parent=11 // pred_check
          %p768 = pneg %p430
        $region74: #{tpu_custom_call.1} parent=11 // pred_check_branch
          %770 = sbr.rel (%p768) target = $region76
        $region75: #{tpu_custom_call.1} parent=11 // pred_region
          _
        $region76: #{tpu_custom_call.1} parent=11 // pred_fallthru
          _
        // Predicated region
        $region77: #{tpu_custom_call.1} parent=11 // pred_check
          %p771 = pneg %p451
        $region78: #{tpu_custom_call.1} parent=11 // pred_check_branch
          %773 = sbr.rel (%p771) target = $region80
        $region79: #{tpu_custom_call.1} parent=11 // pred_region
          _
        $region80: #{tpu_custom_call.1} parent=11 // pred_fallthru
          _
        // Predicated region
        $region81: #{tpu_custom_call.1} parent=11 // pred_check
          %p774 = pneg %p472
        $region82: #{tpu_custom_call.1} parent=11 // pred_check_branch
          %776 = sbr.rel (%p774) target = $region84
        $region83: #{tpu_custom_call.1} parent=11 // pred_region
          _
        $region84: #{tpu_custom_call.1} parent=11 // pred_fallthru
          _
        // Predicated region
        $region85: #{tpu_custom_call.1} parent=11 // pred_check
          %p777 = pneg %p493
        $region86: #{tpu_custom_call.1} parent=11 // pred_check_branch
          %779 = sbr.rel (%p777) target = $region88
        $region87: #{tpu_custom_call.1} parent=11 // pred_region
          _
        $region88: #{tpu_custom_call.1} parent=11 // pred_fallthru
          _
        // Predicated region
        $region89: #{tpu_custom_call.1} parent=11 // pred_check
          %p780 = pneg %p514
        $region90: #{tpu_custom_call.1} parent=11 // pred_check_branch
          %782 = sbr.rel (%p780) target = $region92
        $region91: #{tpu_custom_call.1} parent=11 // pred_region
          _
        $region92: #{tpu_custom_call.1} parent=11 // pred_fallthru
          _
        // Predicated region
        $region93: #{tpu_custom_call.1} parent=11 // pred_check
          %p783 = pneg %p535
        $region94: #{tpu_custom_call.1} parent=11 // pred_check_branch
          %785 = sbr.rel (%p783) target = $region96
        $region95: #{tpu_custom_call.1} parent=11 // pred_region
          _
        $region96: #{tpu_custom_call.1} parent=11 // pred_fallthru
          _
        // Predicated region
        $region97: #{tpu_custom_call.1} parent=11 // pred_check
          %p786 = pneg %p556
        $region98: #{tpu_custom_call.1} parent=11 // pred_check_branch
          %788 = sbr.rel (%p786) target = $region100
        $region99: #{tpu_custom_call.1} parent=11 // pred_region
          _
        $region100: #{tpu_custom_call.1} parent=11 // pred_fallthru
          _
        // Predicated region
        $region101: #{tpu_custom_call.1} parent=11 // pred_check
          %p789 = pneg %p577
        $region102: #{tpu_custom_call.1} parent=11 // pred_check_branch
          %791 = sbr.rel (%p789) target = $region104
        $region103: #{tpu_custom_call.1} parent=11 // pred_region
          _
        $region104: #{tpu_custom_call.1} parent=11 // pred_fallthru
          _
        // Predicated region
        $region105: #{tpu_custom_call.1} parent=11 // pred_check
          %p792 = pneg %p598
        $region106: #{tpu_custom_call.1} parent=11 // pred_check_branch
          %794 = sbr.rel (%p792) target = $region108
        $region107: #{tpu_custom_call.1} parent=11 // pred_region
          _
        $region108: #{tpu_custom_call.1} parent=11 // pred_fallthru
          _
        // Predicated region
        $region109: #{tpu_custom_call.1} parent=11 // pred_check
          %p795 = pneg %p619
        $region110: #{tpu_custom_call.1} parent=11 // pred_check_branch
          %797 = sbr.rel (%p795) target = $region112
        $region111: #{tpu_custom_call.1} parent=11 // pred_region
          _
        $region112: #{tpu_custom_call.1} parent=11 // pred_fallthru
          _
        // Predicated region
        $region113: #{tpu_custom_call.1} parent=11 // pred_check
          %p798 = pneg %p640
        $region114: #{tpu_custom_call.1} parent=11 // pred_check_branch
          %800 = sbr.rel (%p798) target = $region116
        $region115: #{tpu_custom_call.1} parent=11 // pred_region
          _
        $region116: #{tpu_custom_call.1} parent=11 // pred_fallthru
          _
        // Predicated region
        $region117: #{tpu_custom_call.1} parent=11 // pred_check
          %p801 = pneg %p661
        $region118: #{tpu_custom_call.1} parent=11 // pred_check_branch
          %803 = sbr.rel (%p801) target = $region120
        $region119: #{tpu_custom_call.1} parent=11 // pred_region
          _
        $region120: #{tpu_custom_call.1} parent=11 // pred_fallthru
          _
        // Predicated region
        $region121: #{tpu_custom_call.1} parent=11 // pred_check
          %p804 = pneg %p682
        $region122: #{tpu_custom_call.1} parent=11 // pred_check_branch
          %806 = sbr.rel (%p804) target = $region124
        $region123: #{tpu_custom_call.1} parent=11 // pred_region
          _
        $region124: #{tpu_custom_call.1} parent=11 // pred_fallthru
          _
      $region12: #{tpu_custom_call.1} parent=5 // pred_fallthru
        _
      %p807 = scmp.lt.s32.totalorder %s68, 2
      // Predicated region
      $region125: #{tpu_custom_call.1} parent=5 // pred_check
        %p808 = pneg %p807
      $region126: #{tpu_custom_call.1} parent=5 // pred_check_branch
        %810 = sbr.rel (%p808) target = $region128
      $region127: #{tpu_custom_call.1} parent=5 // pred_region
        // Predicated region
        $region129: #{tpu_custom_call.1} parent=127 // pred_check
          %p811 = pneg %p88
        $region130: #{tpu_custom_call.1} parent=127 // pred_check_branch
          %813 = sbr.rel (%p811) target = $region132
        $region131: #{tpu_custom_call.1} parent=127 // pred_region
          %s814 = smul.u32 4, %s68
          %p815 = scmp.lt.s32.totalorder %s814, 7
          %s816 = scalar_select %p815, %s814, 7
          %s817 = smul.addr %s816, 8
          %s818 = scalar_lea.vmem %s1, %s817
          %s819 = smul.u32 4, %s68
        $region132: #{tpu_custom_call.1} parent=127 // pred_fallthru
          _
      $region128: #{tpu_custom_call.1} parent=5 // pred_fallthru
        _
      %p820 = scmp.le.s32.totalorder 1, %s68
      %p821 = scmp.lt.s32.totalorder %s68, 3
      %p822 = pnand %p820, %p821
      %p823 = pneg %p822
      // Predicated region
      $region133: #{tpu_custom_call.1} parent=5 // pred_check
        _
      $region134: #{tpu_custom_call.1} parent=5 // pred_check_branch
        %825 = sbr.rel (%p822) target = $region136
      $region135: #{tpu_custom_call.1} parent=5 // pred_region
        %s826 = ssub.s32 %s68, 1
        %s827 = smul.u32 4, %s73
        %p828 = scmp.lt.s32.totalorder %s827, 7
        %s829 = scalar_select %p828, %s827, 7
        %s830 = smul.addr %s829, 8
        %s831 = scalar_lea.vmem %s1, %s830
        %p832 = pneg %p94
        %p833 = pneg %p91
        %p834 = pneg %p115
        %p835 = pneg %p112
        %p836 = pneg %p136
        %p837 = pneg %p133
        %p838 = pneg %p157
        %p839 = pneg %p154
        %p840 = pneg %p178
        %p841 = pneg %p175
        %p842 = pneg %p199
        %p843 = pneg %p196
        %p844 = pneg %p220
        %p845 = pneg %p217
        %p846 = pneg %p241
        %p847 = pneg %p238
        %p848 = pneg %p262
        %p849 = pneg %p259
        %p850 = pneg %p283
        %p851 = pneg %p280
        %p852 = pneg %p304
        %p853 = pneg %p301
        %p854 = pneg %p325
        %p855 = pneg %p322
        %p856 = pneg %p346
        %p857 = pneg %p343
        %p858 = pneg %p367
        %p859 = pneg %p364
        %p860 = pneg %p388
        %p861 = pneg %p385
        %p862 = pneg %p409
        %p863 = pneg %p406
        %p864 = pneg %p430
        %p865 = pneg %p427
        %p866 = pneg %p451
        %p867 = pneg %p448
        %p868 = pneg %p472
        %p869 = pneg %p469
        %p870 = pneg %p493
        %p871 = pneg %p490
        %p872 = pneg %p514
        %p873 = pneg %p511
        %p874 = pneg %p535
        %p875 = pneg %p532
        %p876 = pneg %p556
        %p877 = pneg %p553
        %p878 = pneg %p577
        %p879 = pneg %p574
        %p880 = pneg %p598
        %p881 = pneg %p595
        %p882 = pneg %p619
        %p883 = pneg %p616
        %p884 = pneg %p640
        %p885 = pneg %p637
        %p886 = pneg %p661
        %p887 = pneg %p658
        %p888 = pneg %p682
        %p889 = pneg %p679
        %p890 = pneg %p708
        %p891 = pneg %p705
        %s892 = sand.u32 %s695, 1
        %s893 = scalar_lea.sflag [#allocation3], %s892
        %s894 = sand.u32 %s695, 1
        %s895 = smul.addr %s894, 4
        %s896 = scalar_lea.vmem [#allocation2], %s895
        %s897 = smul.u32 4, %s73
        %p898 = scmp.lt.s32.totalorder %s897, 7
        %s899 = scalar_select %p898, %s897, 7
        %s900 = smul.addr %s899, 8
        %s901 = scalar_lea.vmem %s1, %s900
        %s902 = smul.u32 4, %s73
        %v903 = vld [vmem:[%s901] sm:$0xff]
        %v904 = vld [vmem:[%s901 + $0x8] sm:$0xff]
        %v905 = vld [vmem:[%s901 + $0x10] sm:$0xff]
        %v906 = vld [vmem:[%s901 + $0x18] sm:$0xff]
        %v907 = vlaneseq
        %v908 = vand.u32 %v907, 127
        %909 = vset.pattern.permute.xlu0 0
        %910 = vperm.xlu0 %909, %v903
        %v911 = vpop.permute.xlu0 %910
        %912 = vset.pattern.permute.xlu0 0
        %913 = vperm.xlu0 %912, %v904
        %v914 = vpop.permute.xlu0 %913
        %915 = vset.pattern.permute.xlu0 0
        %916 = vperm.xlu0 %915, %v905
        %v917 = vpop.permute.xlu0 %916
        %918 = vset.pattern.permute.xlu0 0
        %919 = vperm.xlu0 %918, %v906
        %v920 = vpop.permute.xlu0 %919
        %vm921 = vcmp.eq.s32.totalorder %v908, %v911
        %vm922 = vcmp.eq.s32.totalorder %v908, %v914
        %vm923 = vcmp.eq.s32.totalorder %v908, %v917
        %vm924 = vcmp.eq.s32.totalorder %v908, %v920
        %v925 = vsel %vm921, 1, 0
        %v926 = vsel %vm922, 1, 0
        %v927 = vsel %vm923, 1, 0
        %v928 = vsel %vm924, 1, 0
        %v929 = vcvt.s32.f32 %v925
        %v930 = vcvt.s32.f32 %v926
        %v931 = vcvt.s32.f32 %v927
        %v932 = vcvt.s32.f32 %v928
        %v933 = vld [vmem:[%s3] sm:$0xff]
        %v934 = vld [vmem:[%s3 + $0x8] sm:$0xff]
        %v935 = vld [vmem:[%s3 + $0x10] sm:$0xff]
        %v936 = vld [vmem:[%s3 + $0x18] sm:$0xff]
        %v937 = vld [vmem:[%s3 + $0x20] sm:$0xff]
        %v938 = vld [vmem:[%s3 + $0x28] sm:$0xff]
        %v939 = vld [vmem:[%s3 + $0x30] sm:$0xff]
        %v940 = vld [vmem:[%s3 + $0x38] sm:$0xff]
        %v941 = vld [vmem:[%s3 + $0x40] sm:$0xff]
        %v942 = vld [vmem:[%s3 + $0x48] sm:$0xff]
        %v943 = vld [vmem:[%s3 + $0x50] sm:$0xff]
        %v944 = vld [vmem:[%s3 + $0x58] sm:$0xff]
        %v945 = vld [vmem:[%s3 + $0x60] sm:$0xff]
        %v946 = vld [vmem:[%s3 + $0x68] sm:$0xff]
        %v947 = vld [vmem:[%s3 + $0x70] sm:$0xff]
        %v948 = vld [vmem:[%s3 + $0x78] sm:$0xff]
        %949 = vmatprep.subr.mxu0 0.0
        %950 = vmatpush1.msra.mxu0 %v948
        %951 = vmatprep.subr.mxu0 0.0
        %952 = vmatpush1.msra.mxu0 %v947
        %953 = vmatprep.subr.mxu0 0.0
        %954 = vmatpush1.msra.mxu0 %v946
        %955 = vmatprep.subr.mxu0 0.0
        %956 = vmatpush1.msra.mxu0 %v945
        %957 = vmatprep.subr.mxu0 0.0
        %958 = vmatpush1.msra.mxu0 %v944
        %959 = vmatprep.subr.mxu0 0.0
        %960 = vmatpush1.msra.mxu0 %v943
        %961 = vmatprep.subr.mxu0 0.0
        %962 = vmatpush1.msra.mxu0 %v942
        %963 = vmatprep.subr.mxu0 0.0
        %964 = vmatpush1.msra.mxu0 %v941
        %965 = vmatprep.subr.mxu0 0.0
        %966 = vmatpush1.msra.mxu0 %v940
        %967 = vmatprep.subr.mxu0 0.0
        %968 = vmatpush1.msra.mxu0 %v939
        %969 = vmatprep.subr.mxu0 0.0
        %970 = vmatpush1.msra.mxu0 %v938
        %971 = vmatprep.subr.mxu0 0.0
        %972 = vmatpush1.msra.mxu0 %v937
        %973 = vmatprep.subr.mxu0 0.0
        %974 = vmatpush1.msra.mxu0 %v936
        %975 = vmatprep.subr.mxu0 0.0
        %976 = vmatpush1.msra.mxu0 %v935
        %977 = vmatprep.subr.mxu0 0.0
        %978 = vmatpush1.msra.mxu0 %v934
        %979 = vmatprep.subr.mxu0 0.0
        %980 = vmatpush1.msra.mxu0 %v933
        %981 = vmatprep.subr.mxu0 0.0
        %982 = vmatpush2.msra.mxu0 0.0
        %983 = vmatprep.subr.mxu0 0.0
        %984 = vmatpush2.msra.mxu0 0.0
        %985 = vmatprep.subr.mxu0 0.0
        %986 = vmatpush2.msra.mxu0 0.0
        %987 = vmatprep.subr.mxu0 0.0
        %988 = vmatpush2.msra.mxu0 0.0
        %989 = vmatprep.subr.mxu0 0.0
        %990 = vmatpush2.msra.mxu0 0.0
        %991 = vmatprep.subr.mxu0 0.0
        %992 = vmatpush2.msra.mxu0 0.0
        %993 = vmatprep.subr.mxu0 0.0
        %994 = vmatpush2.msra.mxu0 0.0
        %995 = vmatprep.subr.mxu0 0.0
        %996 = vmatpush2.msra.mxu0 0.0
        %997 = vmatprep.subr.mxu0 0.0
        %998 = vmatpush2.msra.mxu0 0.0
        %999 = vmatprep.subr.mxu0 0.0
        %1000 = vmatpush2.msra.mxu0 0.0
        %1001 = vmatprep.subr.mxu0 0.0
        %1002 = vmatpush2.msra.mxu0 0.0
        %1003 = vmatprep.subr.mxu0 0.0
        %1004 = vmatpush2.msra.mxu0 0.0
        %1005 = vmatprep.subr.mxu0 0.0
        %1006 = vmatpush2.msra.mxu0 0.0
        %1007 = vmatprep.subr.mxu0 0.0
        %1008 = vmatpush2.msra.mxu0 0.0
        %1009 = vmatprep.subr.mxu0 0.0
        %1010 = vmatpush2.msra.mxu0 0.0
        %1011 = vmatprep.subr.mxu0 0.0
        %1012 = vmatpush2.msra.mxu0 0.0
        %1013 = vmatprep.mubr.f32.mxu0 0.0
        %1014 = vmatmul.mubr.f32.gmra.mxu0 %v929
        %v1015 = vpop.f32.mrf.mxu0
        %v1016 = vadd.f32 0.0, %v1015
        %v1017 = vpop.f32.mrf.mxu0
        %1018 = vmatprep.mubr.f32.mxu0 0.0
        %1019 = vmatmul.mubr.f32.gmra.mxu0 %v930
        %v1020 = vpop.f32.mrf.mxu0
        %v1021 = vadd.f32 0.0, %v1020
        %v1022 = vpop.f32.mrf.mxu0
        %1023 = vmatprep.mubr.f32.mxu0 0.0
        %1024 = vmatmul.mubr.f32.gmra.mxu0 %v931
        %v1025 = vpop.f32.mrf.mxu0
        %v1026 = vadd.f32 0.0, %v1025
        %v1027 = vpop.f32.mrf.mxu0
        %1028 = vmatprep.mubr.f32.mxu0 0.0
        %1029 = vmatmul.mubr.f32.gmra.mxu0 %v932
        %v1030 = vpop.f32.mrf.mxu0
        %v1031 = vadd.f32 0.0, %v1030
        %v1032 = vpop.f32.mrf.mxu0
        %1033 = vdwg.mxu0
        %v1034 = vld [vmem:[%s5] sm:$0xff]
        %v1035 = vadd.f32 %v1016, %v1034
        %v1036 = vadd.f32 %v1021, %v1034
        %v1037 = vadd.f32 %v1026, %v1034
        %v1038 = vadd.f32 %v1031, %v1034
        %v1039 = vld [vmem:[%s7] sm:$0xff]
        %v1040 = vld [vmem:[%s7 + $0x8] sm:$0xff]
        %v1041 = vld [vmem:[%s7 + $0x10] sm:$0xff]
        %v1042 = vld [vmem:[%s7 + $0x18] sm:$0xff]
        %v1043 = vld [vmem:[%s9] sm:$0x1]
        %v1045 = vlaneseq
        %v1046 = vshrl.u32 %v1045, 7
        %v1047 = vsub.s32 0, %v1046
        %v1048 = vrot.slane %v1043, %v1047
        %vm1050 = vcmask 261120
        %v1052 = vsel %vm1050, %v1035, 0
        %v1055 = vsel %vm1050, %v1036, 0
        %v1058 = vsel %vm1050, %v1037, 0
        %v1061 = vsel %vm1050, %v1038, 0
        %1063 = vmatprep.subr.mxu0 0.0
        %1064 = vmatpush1.msra.mxu0 0.0
        %1065 = vmatprep.subr.mxu0 0.0
        %1066 = vmatpush1.msra.mxu0 0.0
        %1067 = vmatprep.subr.mxu0 0.0
        %1068 = vmatpush1.msra.mxu0 0.0
        %1069 = vmatprep.subr.mxu0 0.0
        %1070 = vmatpush1.msra.mxu0 0.0
        %1071 = vmatprep.subr.mxu0 0.0
        %1072 = vmatpush1.msra.mxu0 0.0
        %1073 = vmatprep.subr.mxu0 0.0
        %1074 = vmatpush1.msra.mxu0 0.0
        %1075 = vmatprep.subr.mxu0 0.0
        %1076 = vmatpush1.msra.mxu0 0.0
        %1077 = vmatprep.subr.mxu0 0.0
        %1078 = vmatpush1.msra.mxu0 0.0
        %1079 = vmatprep.subr.mxu0 0.0
        %1080 = vmatpush1.msra.mxu0 0.0
        %1081 = vmatprep.subr.mxu0 0.0
        %1082 = vmatpush1.msra.mxu0 0.0
        %1083 = vmatprep.subr.mxu0 0.0
        %1084 = vmatpush1.msra.mxu0 0.0
        %1085 = vmatprep.subr.mxu0 0.0
        %1086 = vmatpush1.msra.mxu0 0.0
        %1087 = vmatprep.subr.mxu0 0.0
        %1088 = vmatpush1.msra.mxu0 %v1042
        %1089 = vmatprep.subr.mxu0 0.0
        %1090 = vmatpush1.msra.mxu0 %v1041
        %1091 = vmatprep.subr.mxu0 0.0
        %1092 = vmatpush1.msra.mxu0 %v1040
        %1093 = vmatprep.subr.mxu0 0.0
        %1094 = vmatpush1.msra.mxu0 %v1039
        %1095 = vmatprep.subr.mxu0 0.0
        %1096 = vmatpush2.msra.mxu0 0.0
        %1097 = vmatprep.subr.mxu0 0.0
        %1098 = vmatpush2.msra.mxu0 0.0
        %1099 = vmatprep.subr.mxu0 0.0
        %1100 = vmatpush2.msra.mxu0 0.0
        %1101 = vmatprep.subr.mxu0 0.0
        %1102 = vmatpush2.msra.mxu0 0.0
        %1103 = vmatprep.subr.mxu0 0.0
        %1104 = vmatpush2.msra.mxu0 0.0
        %1105 = vmatprep.subr.mxu0 0.0
        %1106 = vmatpush2.msra.mxu0 0.0
        %1107 = vmatprep.subr.mxu0 0.0
        %1108 = vmatpush2.msra.mxu0 0.0
        %1109 = vmatprep.subr.mxu0 0.0
        %1110 = vmatpush2.msra.mxu0 0.0
        %1111 = vmatprep.subr.mxu0 0.0
        %1112 = vmatpush2.msra.mxu0 0.0
        %1113 = vmatprep.subr.mxu0 0.0
        %1114 = vmatpush2.msra.mxu0 0.0
        %1115 = vmatprep.subr.mxu0 0.0
        %1116 = vmatpush2.msra.mxu0 0.0
        %1117 = vmatprep.subr.mxu0 0.0
        %1118 = vmatpush2.msra.mxu0 0.0
        %1119 = vmatprep.subr.mxu0 0.0
        %1120 = vmatpush2.msra.mxu0 0.0
        %1121 = vmatprep.subr.mxu0 0.0
        %1122 = vmatpush2.msra.mxu0 0.0
        %1123 = vmatprep.subr.mxu0 0.0
        %1124 = vmatpush2.msra.mxu0 0.0
        %1125 = vmatprep.subr.mxu0 0.0
        %1126 = vmatpush2.msra.mxu0 0.0
        %1127 = vmatprep.mubr.f32.mxu0 0.0
        %1128 = vmatmul.mubr.f32.gmra.mxu0 %v1052
        %v1129 = vpop.f32.mrf.mxu0
        %v1130 = vadd.f32 %v1048, %v1129
        %v1131 = vpop.f32.mrf.mxu0
        %1132 = vmatprep.mubr.f32.mxu0 0.0
        %1133 = vmatmul.mubr.f32.gmra.mxu0 %v1055
        %v1134 = vpop.f32.mrf.mxu0
        %v1135 = vadd.f32 %v1048, %v1134
        %v1136 = vpop.f32.mrf.mxu0
        %1137 = vmatprep.mubr.f32.mxu0 0.0
        %1138 = vmatmul.mubr.f32.gmra.mxu0 %v1058
        %v1139 = vpop.f32.mrf.mxu0
        %v1140 = vadd.f32 %v1048, %v1139
        %v1141 = vpop.f32.mrf.mxu0
        %1142 = vmatprep.mubr.f32.mxu0 0.0
        %1143 = vmatmul.mubr.f32.gmra.mxu0 %v1061
        %v1144 = vpop.f32.mrf.mxu0
        %v1145 = vadd.f32 %v1048, %v1144
        %v1146 = vpop.f32.mrf.mxu0
        %1147 = vdwg.mxu0
        %1149 = vrot.lane.b32.xlu0 %v1130, 96
        %v1150 = vpop.permute.xlu0 %1149
        %vm1151 = vcmask 64512
        %v1152 = vsel %vm1151, %v1130, 0
        %v1154 = vsel %vm1151, %v1150, 0
        %1156 = vmatprep.subr.mxu0 0.0
        %1157 = vmatpush1.xpose.msra.mxu0 0.0
        %1158 = vmatprep.subr.mxu0 0.0
        %1159 = vmatpush1.xpose.msra.mxu0 0.0
        %1160 = vmatprep.subr.mxu0 0.0
        %1161 = vmatpush1.xpose.msra.mxu0 0.0
        %1162 = vmatprep.subr.mxu0 0.0
        %1163 = vmatpush1.xpose.msra.mxu0 0.0
        %1164 = vmatprep.subr.mxu0 0.0
        %1165 = vmatpush1.xpose.msra.mxu0 0.0
        %1166 = vmatprep.subr.mxu0 0.0
        %1167 = vmatpush1.xpose.msra.mxu0 0.0
        %1168 = vmatprep.subr.mxu0 0.0
        %1169 = vmatpush1.xpose.msra.mxu0 0.0
        %1170 = vmatprep.subr.mxu0 0.0
        %1171 = vmatpush1.xpose.msra.mxu0 0.0
        %1172 = vmatprep.subr.mxu0 0.0
        %1173 = vmatpush1.xpose.msra.mxu0 0.0
        %1174 = vmatprep.subr.mxu0 0.0
        %1175 = vmatpush1.xpose.msra.mxu0 0.0
        %1176 = vmatprep.subr.mxu0 0.0
        %1177 = vmatpush1.xpose.msra.mxu0 0.0
        %1178 = vmatprep.subr.mxu0 0.0
        %1179 = vmatpush1.xpose.msra.mxu0 0.0
        %1180 = vmatprep.subr.mxu0 0.0
        %1181 = vmatpush1.xpose.msra.mxu0 0.0
        %1182 = vmatprep.subr.mxu0 0.0
        %1183 = vmatpush1.xpose.msra.mxu0 0.0
        %1184 = vmatprep.subr.mxu0 0.0
        %1185 = vmatpush1.xpose.msra.mxu0 0.0
        %1186 = vmatprep.subr.mxu0 0.0
        %1187 = vmatpush1.xpose.msra.mxu0 %v1154
        %1188 = vmatprep.subr.mxu0 0.0
        %1189 = vmatpush2.xpose.msra.mxu0 0.0
        %1190 = vmatprep.subr.mxu0 0.0
        %1191 = vmatpush2.xpose.msra.mxu0 0.0
        %1192 = vmatprep.subr.mxu0 0.0
        %1193 = vmatpush2.xpose.msra.mxu0 0.0
        %1194 = vmatprep.subr.mxu0 0.0
        %1195 = vmatpush2.xpose.msra.mxu0 0.0
        %1196 = vmatprep.subr.mxu0 0.0
        %1197 = vmatpush2.xpose.msra.mxu0 0.0
        %1198 = vmatprep.subr.mxu0 0.0
        %1199 = vmatpush2.xpose.msra.mxu0 0.0
        %1200 = vmatprep.subr.mxu0 0.0
        %1201 = vmatpush2.xpose.msra.mxu0 0.0
        %1202 = vmatprep.subr.mxu0 0.0
        %1203 = vmatpush2.xpose.msra.mxu0 0.0
        %1204 = vmatprep.subr.mxu0 0.0
        %1205 = vmatpush2.xpose.msra.mxu0 0.0
        %1206 = vmatprep.subr.mxu0 0.0
        %1207 = vmatpush2.xpose.msra.mxu0 0.0
        %1208 = vmatprep.subr.mxu0 0.0
        %1209 = vmatpush2.xpose.msra.mxu0 0.0
        %1210 = vmatprep.subr.mxu0 0.0
        %1211 = vmatpush2.xpose.msra.mxu0 0.0
        %1212 = vmatprep.subr.mxu0 0.0
        %1213 = vmatpush2.xpose.msra.mxu0 0.0
        %1214 = vmatprep.subr.mxu0 0.0
        %1215 = vmatpush2.xpose.msra.mxu0 0.0
        %1216 = vmatprep.subr.mxu0 0.0
        %1217 = vmatpush2.xpose.msra.mxu0 0.0
        %1218 = vmatprep.subr.mxu0 0.0
        %1219 = vmatpush2.xpose.msra.mxu0 0.0
        %1220 = vmatprep.mubr.f32.mxu0 0.0
        %1221 = vmatmul.mubr.f32.gmra.mxu0 %v1152
        %v1222 = vpop.f32.mrf.mxu0
        %v1223 = vadd.f32 0.0, %v1222
        %v1224 = vpop.f32.mrf.mxu0
        %1225 = vdwg.mxu0
        %1227 = vrot.lane.b32.xlu0 %v1135, 96
        %v1228 = vpop.permute.xlu0 %1227
        %v1229 = vsel %vm1151, %v1135, 0
        %v1231 = vsel %vm1151, %v1228, 0
        %1233 = vmatprep.subr.mxu0 0.0
        %1234 = vmatpush1.xpose.msra.mxu0 0.0
        %1235 = vmatprep.subr.mxu0 0.0
        %1236 = vmatpush1.xpose.msra.mxu0 0.0
        %1237 = vmatprep.subr.mxu0 0.0
        %1238 = vmatpush1.xpose.msra.mxu0 0.0
        %1239 = vmatprep.subr.mxu0 0.0
        %1240 = vmatpush1.xpose.msra.mxu0 0.0
        %1241 = vmatprep.subr.mxu0 0.0
        %1242 = vmatpush1.xpose.msra.mxu0 0.0
        %1243 = vmatprep.subr.mxu0 0.0
        %1244 = vmatpush1.xpose.msra.mxu0 0.0
        %1245 = vmatprep.subr.mxu0 0.0
        %1246 = vmatpush1.xpose.msra.mxu0 0.0
        %1247 = vmatprep.subr.mxu0 0.0
        %1248 = vmatpush1.xpose.msra.mxu0 0.0
        %1249 = vmatprep.subr.mxu0 0.0
        %1250 = vmatpush1.xpose.msra.mxu0 0.0
        %1251 = vmatprep.subr.mxu0 0.0
        %1252 = vmatpush1.xpose.msra.mxu0 0.0
        %1253 = vmatprep.subr.mxu0 0.0
        %1254 = vmatpush1.xpose.msra.mxu0 0.0
        %1255 = vmatprep.subr.mxu0 0.0
        %1256 = vmatpush1.xpose.msra.mxu0 0.0
        %1257 = vmatprep.subr.mxu0 0.0
        %1258 = vmatpush1.xpose.msra.mxu0 0.0
        %1259 = vmatprep.subr.mxu0 0.0
        %1260 = vmatpush1.xpose.msra.mxu0 0.0
        %1261 = vmatprep.subr.mxu0 0.0
        %1262 = vmatpush1.xpose.msra.mxu0 0.0
        %1263 = vmatprep.subr.mxu0 0.0
        %1264 = vmatpush1.xpose.msra.mxu0 %v1231
        %1265 = vmatprep.subr.mxu0 0.0
        %1266 = vmatpush2.xpose.msra.mxu0 0.0
        %1267 = vmatprep.subr.mxu0 0.0
        %1268 = vmatpush2.xpose.msra.mxu0 0.0
        %1269 = vmatprep.subr.mxu0 0.0
        %1270 = vmatpush2.xpose.msra.mxu0 0.0
        %1271 = vmatprep.subr.mxu0 0.0
        %1272 = vmatpush2.xpose.msra.mxu0 0.0
        %1273 = vmatprep.subr.mxu0 0.0
        %1274 = vmatpush2.xpose.msra.mxu0 0.0
        %1275 = vmatprep.subr.mxu0 0.0
        %1276 = vmatpush2.xpose.msra.mxu0 0.0
        %1277 = vmatprep.subr.mxu0 0.0
        %1278 = vmatpush2.xpose.msra.mxu0 0.0
        %1279 = vmatprep.subr.mxu0 0.0
        %1280 = vmatpush2.xpose.msra.mxu0 0.0
        %1281 = vmatprep.subr.mxu0 0.0
        %1282 = vmatpush2.xpose.msra.mxu0 0.0
        %1283 = vmatprep.subr.mxu0 0.0
        %1284 = vmatpush2.xpose.msra.mxu0 0.0
        %1285 = vmatprep.subr.mxu0 0.0
        %1286 = vmatpush2.xpose.msra.mxu0 0.0
        %1287 = vmatprep.subr.mxu0 0.0
        %1288 = vmatpush2.xpose.msra.mxu0 0.0
        %1289 = vmatprep.subr.mxu0 0.0
        %1290 = vmatpush2.xpose.msra.mxu0 0.0
        %1291 = vmatprep.subr.mxu0 0.0
        %1292 = vmatpush2.xpose.msra.mxu0 0.0
        %1293 = vmatprep.subr.mxu0 0.0
        %1294 = vmatpush2.xpose.msra.mxu0 0.0
        %1295 = vmatprep.subr.mxu0 0.0
        %1296 = vmatpush2.xpose.msra.mxu0 0.0
        %1297 = vmatprep.mubr.f32.mxu0 0.0
        %1298 = vmatmul.mubr.f32.gmra.mxu0 %v1229
        %v1299 = vpop.f32.mrf.mxu0
        %v1300 = vadd.f32 0.0, %v1299
        %v1301 = vpop.f32.mrf.mxu0
        %1302 = vdwg.mxu0
        %1304 = vrot.lane.b32.xlu0 %v1140, 96
        %v1305 = vpop.permute.xlu0 %1304
        %v1306 = vsel %vm1151, %v1140, 0
        %v1308 = vsel %vm1151, %v1305, 0
        %1310 = vmatprep.subr.mxu0 0.0
        %1311 = vmatpush1.xpose.msra.mxu0 0.0
        %1312 = vmatprep.subr.mxu0 0.0
        %1313 = vmatpush1.xpose.msra.mxu0 0.0
        %1314 = vmatprep.subr.mxu0 0.0
        %1315 = vmatpush1.xpose.msra.mxu0 0.0
        %1316 = vmatprep.subr.mxu0 0.0
        %1317 = vmatpush1.xpose.msra.mxu0 0.0
        %1318 = vmatprep.subr.mxu0 0.0
        %1319 = vmatpush1.xpose.msra.mxu0 0.0
        %1320 = vmatprep.subr.mxu0 0.0
        %1321 = vmatpush1.xpose.msra.mxu0 0.0
        %1322 = vmatprep.subr.mxu0 0.0
        %1323 = vmatpush1.xpose.msra.mxu0 0.0
        %1324 = vmatprep.subr.mxu0 0.0
        %1325 = vmatpush1.xpose.msra.mxu0 0.0
        %1326 = vmatprep.subr.mxu0 0.0
        %1327 = vmatpush1.xpose.msra.mxu0 0.0
        %1328 = vmatprep.subr.mxu0 0.0
        %1329 = vmatpush1.xpose.msra.mxu0 0.0
        %1330 = vmatprep.subr.mxu0 0.0
        %1331 = vmatpush1.xpose.msra.mxu0 0.0
        %1332 = vmatprep.subr.mxu0 0.0
        %1333 = vmatpush1.xpose.msra.mxu0 0.0
        %1334 = vmatprep.subr.mxu0 0.0
        %1335 = vmatpush1.xpose.msra.mxu0 0.0
        %1336 = vmatprep.subr.mxu0 0.0
        %1337 = vmatpush1.xpose.msra.mxu0 0.0
        %1338 = vmatprep.subr.mxu0 0.0
        %1339 = vmatpush1.xpose.msra.mxu0 0.0
        %1340 = vmatprep.subr.mxu0 0.0
        %1341 = vmatpush1.xpose.msra.mxu0 %v1308
        %1342 = vmatprep.subr.mxu0 0.0
        %1343 = vmatpush2.xpose.msra.mxu0 0.0
        %1344 = vmatprep.subr.mxu0 0.0
        %1345 = vmatpush2.xpose.msra.mxu0 0.0
        %1346 = vmatprep.subr.mxu0 0.0
        %1347 = vmatpush2.xpose.msra.mxu0 0.0
        %1348 = vmatprep.subr.mxu0 0.0
        %1349 = vmatpush2.xpose.msra.mxu0 0.0
        %1350 = vmatprep.subr.mxu0 0.0
        %1351 = vmatpush2.xpose.msra.mxu0 0.0
        %1352 = vmatprep.subr.mxu0 0.0
        %1353 = vmatpush2.xpose.msra.mxu0 0.0
        %1354 = vmatprep.subr.mxu0 0.0
        %1355 = vmatpush2.xpose.msra.mxu0 0.0
        %1356 = vmatprep.subr.mxu0 0.0
        %1357 = vmatpush2.xpose.msra.mxu0 0.0
        %1358 = vmatprep.subr.mxu0 0.0
        %1359 = vmatpush2.xpose.msra.mxu0 0.0
        %1360 = vmatprep.subr.mxu0 0.0
        %1361 = vmatpush2.xpose.msra.mxu0 0.0
        %1362 = vmatprep.subr.mxu0 0.0
        %1363 = vmatpush2.xpose.msra.mxu0 0.0
        %1364 = vmatprep.subr.mxu0 0.0
        %1365 = vmatpush2.xpose.msra.mxu0 0.0
        %1366 = vmatprep.subr.mxu0 0.0
        %1367 = vmatpush2.xpose.msra.mxu0 0.0
        %1368 = vmatprep.subr.mxu0 0.0
        %1369 = vmatpush2.xpose.msra.mxu0 0.0
        %1370 = vmatprep.subr.mxu0 0.0
        %1371 = vmatpush2.xpose.msra.mxu0 0.0
        %1372 = vmatprep.subr.mxu0 0.0
        %1373 = vmatpush2.xpose.msra.mxu0 0.0
        %1374 = vmatprep.mubr.f32.mxu0 0.0
        %1375 = vmatmul.mubr.f32.gmra.mxu0 %v1306
        %v1376 = vpop.f32.mrf.mxu0
        %v1377 = vadd.f32 0.0, %v1376
        %v1378 = vpop.f32.mrf.mxu0
        %1379 = vdwg.mxu0
        %1381 = vrot.lane.b32.xlu0 %v1145, 96
        %v1382 = vpop.permute.xlu0 %1381
        %v1383 = vsel %vm1151, %v1145, 0
        %v1385 = vsel %vm1151, %v1382, 0
        %1387 = vmatprep.subr.mxu0 0.0
        %1388 = vmatpush1.xpose.msra.mxu0 0.0
        %1389 = vmatprep.subr.mxu0 0.0
        %1390 = vmatpush1.xpose.msra.mxu0 0.0
        %1391 = vmatprep.subr.mxu0 0.0
        %1392 = vmatpush1.xpose.msra.mxu0 0.0
        %1393 = vmatprep.subr.mxu0 0.0
        %1394 = vmatpush1.xpose.msra.mxu0 0.0
        %1395 = vmatprep.subr.mxu0 0.0
        %1396 = vmatpush1.xpose.msra.mxu0 0.0
        %1397 = vmatprep.subr.mxu0 0.0
        %1398 = vmatpush1.xpose.msra.mxu0 0.0
        %1399 = vmatprep.subr.mxu0 0.0
        %1400 = vmatpush1.xpose.msra.mxu0 0.0
        %1401 = vmatprep.subr.mxu0 0.0
        %1402 = vmatpush1.xpose.msra.mxu0 0.0
        %1403 = vmatprep.subr.mxu0 0.0
        %1404 = vmatpush1.xpose.msra.mxu0 0.0
        %1405 = vmatprep.subr.mxu0 0.0
        %1406 = vmatpush1.xpose.msra.mxu0 0.0
        %1407 = vmatprep.subr.mxu0 0.0
        %1408 = vmatpush1.xpose.msra.mxu0 0.0
        %1409 = vmatprep.subr.mxu0 0.0
        %1410 = vmatpush1.xpose.msra.mxu0 0.0
        %1411 = vmatprep.subr.mxu0 0.0
        %1412 = vmatpush1.xpose.msra.mxu0 0.0
        %1413 = vmatprep.subr.mxu0 0.0
        %1414 = vmatpush1.xpose.msra.mxu0 0.0
        %1415 = vmatprep.subr.mxu0 0.0
        %1416 = vmatpush1.xpose.msra.mxu0 0.0
        %1417 = vmatprep.subr.mxu0 0.0
        %1418 = vmatpush1.xpose.msra.mxu0 %v1385
        %1419 = vmatprep.subr.mxu0 0.0
        %1420 = vmatpush2.xpose.msra.mxu0 0.0
        %1421 = vmatprep.subr.mxu0 0.0
        %1422 = vmatpush2.xpose.msra.mxu0 0.0
        %1423 = vmatprep.subr.mxu0 0.0
        %1424 = vmatpush2.xpose.msra.mxu0 0.0
        %1425 = vmatprep.subr.mxu0 0.0
        %1426 = vmatpush2.xpose.msra.mxu0 0.0
        %1427 = vmatprep.subr.mxu0 0.0
        %1428 = vmatpush2.xpose.msra.mxu0 0.0
        %1429 = vmatprep.subr.mxu0 0.0
        %1430 = vmatpush2.xpose.msra.mxu0 0.0
        %1431 = vmatprep.subr.mxu0 0.0
        %1432 = vmatpush2.xpose.msra.mxu0 0.0
        %1433 = vmatprep.subr.mxu0 0.0
        %1434 = vmatpush2.xpose.msra.mxu0 0.0
        %1435 = vmatprep.subr.mxu0 0.0
        %1436 = vmatpush2.xpose.msra.mxu0 0.0
        %1437 = vmatprep.subr.mxu0 0.0
        %1438 = vmatpush2.xpose.msra.mxu0 0.0
        %1439 = vmatprep.subr.mxu0 0.0
        %1440 = vmatpush2.xpose.msra.mxu0 0.0
        %1441 = vmatprep.subr.mxu0 0.0
        %1442 = vmatpush2.xpose.msra.mxu0 0.0
        %1443 = vmatprep.subr.mxu0 0.0
        %1444 = vmatpush2.xpose.msra.mxu0 0.0
        %1445 = vmatprep.subr.mxu0 0.0
        %1446 = vmatpush2.xpose.msra.mxu0 0.0
        %1447 = vmatprep.subr.mxu0 0.0
        %1448 = vmatpush2.xpose.msra.mxu0 0.0
        %1449 = vmatprep.subr.mxu0 0.0
        %1450 = vmatpush2.xpose.msra.mxu0 0.0
        %1451 = vmatprep.mubr.f32.mxu0 0.0
        %1452 = vmatmul.mubr.f32.gmra.mxu0 %v1383
        %v1453 = vpop.f32.mrf.mxu0
        %v1454 = vadd.f32 0.0, %v1453
        %v1455 = vpop.f32.mrf.mxu0
        %1456 = vdwg.mxu0
        %v1457 = vmul.f32 %v1223, 0.35355338
        %v1458 = vmul.f32 %v1300, 0.35355338
        %v1459 = vmul.f32 %v1377, 0.35355338
        %v1460 = vmul.f32 %v1454, 0.35355338
        %v1461 = vsel %vm1151, %v1457, -inf
        %1462 = vmax.xlane.f32.xlu0 %v1461
        %v1463 = vpop.xlane.xlu0 %1462
        %v1464 = vsel %vm1151, %v1458, -inf
        %1465 = vmax.xlane.f32.xlu0 %v1464
        %v1466 = vpop.xlane.xlu0 %1465
        %v1467 = vsel %vm1151, %v1459, -inf
        %1468 = vmax.xlane.f32.xlu0 %v1467
        %v1469 = vpop.xlane.xlu0 %1468
        %v1470 = vsel %vm1151, %v1460, -inf
        %1471 = vmax.xlane.f32.xlu0 %v1470
        %v1472 = vpop.xlane.xlu0 %1471
        %v1473 = vsub.f32 %v1457, %v1463
        %v1474 = vsub.f32 %v1458, %v1466
        %v1475 = vsub.f32 %v1459, %v1469
        %v1476 = vsub.f32 %v1460, %v1472
        %v1477 = vmul.f32 %v1473, 1.442695
        %v1478 = vpow.pop %v1477
        %v1479 = vmul.f32 %v1474, 1.442695
        %v1480 = vpow.pop %v1479
        %v1481 = vmul.f32 %v1475, 1.442695
        %v1482 = vpow.pop %v1481
        %v1483 = vmul.f32 %v1476, 1.442695
        %v1484 = vpow.pop %v1483
        %v1485 = vsel %vm1151, %v1478, 0.0
        %1486 = vadd.xlane.f32.xlu0 %v1485
        %v1487 = vpop.xlane.xlu0 %1486
        %v1488 = vsel %vm1151, %v1480, 0.0
        %1489 = vadd.xlane.f32.xlu0 %v1488
        %v1490 = vpop.xlane.xlu0 %1489
        %v1491 = vsel %vm1151, %v1482, 0.0
        %1492 = vadd.xlane.f32.xlu0 %v1491
        %v1493 = vpop.xlane.xlu0 %1492
        %v1494 = vsel %vm1151, %v1484, 0.0
        %1495 = vadd.xlane.f32.xlu0 %v1494
        %v1496 = vpop.xlane.xlu0 %1495
        %v1497 = vrcp.pop %v1487
        %v1498 = vmul.f32 %v1478, %v1497
        %v1499 = vrcp.pop %v1490
        %v1500 = vmul.f32 %v1480, %v1499
        %v1501 = vrcp.pop %v1493
        %v1502 = vmul.f32 %v1482, %v1501
        %v1503 = vrcp.pop %v1496
        %v1504 = vmul.f32 %v1484, %v1503
        %1505 = vrot.lane.b32.xlu0 %v1130, 64
        %v1506 = vpop.permute.xlu0 %1505
        %v1509 = vsel %vm1151, %v1498, 0
        %1511 = vmatprep.subr.mxu0 0.0
        %1512 = vmatpush1.msra.mxu0 0.0
        %1513 = vmatprep.subr.mxu0 0.0
        %1514 = vmatpush1.msra.mxu0 0.0
        %1515 = vmatprep.subr.mxu0 0.0
        %1516 = vmatpush1.msra.mxu0 0.0
        %1517 = vmatprep.subr.mxu0 0.0
        %1518 = vmatpush1.msra.mxu0 0.0
        %1519 = vmatprep.subr.mxu0 0.0
        %1520 = vmatpush1.msra.mxu0 0.0
        %1521 = vmatprep.subr.mxu0 0.0
        %1522 = vmatpush1.msra.mxu0 0.0
        %1523 = vmatprep.subr.mxu0 0.0
        %1524 = vmatpush1.msra.mxu0 0.0
        %1525 = vmatprep.subr.mxu0 0.0
        %1526 = vmatpush1.msra.mxu0 0.0
        %1527 = vmatprep.subr.mxu0 0.0
        %1528 = vmatpush1.msra.mxu0 0.0
        %1529 = vmatprep.subr.mxu0 0.0
        %1530 = vmatpush1.msra.mxu0 0.0
        %1531 = vmatprep.subr.mxu0 0.0
        %1532 = vmatpush1.msra.mxu0 0.0
        %1533 = vmatprep.subr.mxu0 0.0
        %1534 = vmatpush1.msra.mxu0 0.0
        %1535 = vmatprep.subr.mxu0 0.0
        %1536 = vmatpush1.msra.mxu0 0.0
        %1537 = vmatprep.subr.mxu0 0.0
        %1538 = vmatpush1.msra.mxu0 0.0
        %1539 = vmatprep.subr.mxu0 0.0
        %1540 = vmatpush1.msra.mxu0 0.0
        %1541 = vmatprep.subr.mxu0 0.0
        %1542 = vmatpush1.msra.mxu0 %v1506
        %1543 = vmatprep.subr.mxu0 0.0
        %1544 = vmatpush2.msra.mxu0 0.0
        %1545 = vmatprep.subr.mxu0 0.0
        %1546 = vmatpush2.msra.mxu0 0.0
        %1547 = vmatprep.subr.mxu0 0.0
        %1548 = vmatpush2.msra.mxu0 0.0
        %1549 = vmatprep.subr.mxu0 0.0
        %1550 = vmatpush2.msra.mxu0 0.0
        %1551 = vmatprep.subr.mxu0 0.0
        %1552 = vmatpush2.msra.mxu0 0.0
        %1553 = vmatprep.subr.mxu0 0.0
        %1554 = vmatpush2.msra.mxu0 0.0
        %1555 = vmatprep.subr.mxu0 0.0
        %1556 = vmatpush2.msra.mxu0 0.0
        %1557 = vmatprep.subr.mxu0 0.0
        %1558 = vmatpush2.msra.mxu0 0.0
        %1559 = vmatprep.subr.mxu0 0.0
        %1560 = vmatpush2.msra.mxu0 0.0
        %1561 = vmatprep.subr.mxu0 0.0
        %1562 = vmatpush2.msra.mxu0 0.0
        %1563 = vmatprep.subr.mxu0 0.0
        %1564 = vmatpush2.msra.mxu0 0.0
        %1565 = vmatprep.subr.mxu0 0.0
        %1566 = vmatpush2.msra.mxu0 0.0
        %1567 = vmatprep.subr.mxu0 0.0
        %1568 = vmatpush2.msra.mxu0 0.0
        %1569 = vmatprep.subr.mxu0 0.0
        %1570 = vmatpush2.msra.mxu0 0.0
        %1571 = vmatprep.subr.mxu0 0.0
        %1572 = vmatpush2.msra.mxu0 0.0
        %1573 = vmatprep.subr.mxu0 0.0
        %1574 = vmatpush2.msra.mxu0 0.0
        %1575 = vmatprep.mubr.f32.mxu0 0.0
        %1576 = vmatmul.mubr.f32.gmra.mxu0 %v1509
        %v1577 = vpop.f32.mrf.mxu0
        %v1578 = vadd.f32 0.0, %v1577
        %v1579 = vpop.f32.mrf.mxu0
        %1580 = vdwg.mxu0
        %1581 = vrot.lane.b32.xlu0 %v1135, 64
        %v1582 = vpop.permute.xlu0 %1581
        %v1585 = vsel %vm1151, %v1500, 0
        %1587 = vmatprep.subr.mxu0 0.0
        %1588 = vmatpush1.msra.mxu0 0.0
        %1589 = vmatprep.subr.mxu0 0.0
        %1590 = vmatpush1.msra.mxu0 0.0
        %1591 = vmatprep.subr.mxu0 0.0
        %1592 = vmatpush1.msra.mxu0 0.0
        %1593 = vmatprep.subr.mxu0 0.0
        %1594 = vmatpush1.msra.mxu0 0.0
        %1595 = vmatprep.subr.mxu0 0.0
        %1596 = vmatpush1.msra.mxu0 0.0
        %1597 = vmatprep.subr.mxu0 0.0
        %1598 = vmatpush1.msra.mxu0 0.0
        %1599 = vmatprep.subr.mxu0 0.0
        %1600 = vmatpush1.msra.mxu0 0.0
        %1601 = vmatprep.subr.mxu0 0.0
        %1602 = vmatpush1.msra.mxu0 0.0
        %1603 = vmatprep.subr.mxu0 0.0
        %1604 = vmatpush1.msra.mxu0 0.0
        %1605 = vmatprep.subr.mxu0 0.0
        %1606 = vmatpush1.msra.mxu0 0.0
        %1607 = vmatprep.subr.mxu0 0.0
        %1608 = vmatpush1.msra.mxu0 0.0
        %1609 = vmatprep.subr.mxu0 0.0
        %1610 = vmatpush1.msra.mxu0 0.0
        %1611 = vmatprep.subr.mxu0 0.0
        %1612 = vmatpush1.msra.mxu0 0.0
        %1613 = vmatprep.subr.mxu0 0.0
        %1614 = vmatpush1.msra.mxu0 0.0
        %1615 = vmatprep.subr.mxu0 0.0
        %1616 = vmatpush1.msra.mxu0 0.0
        %1617 = vmatprep.subr.mxu0 0.0
        %1618 = vmatpush1.msra.mxu0 %v1582
        %1619 = vmatprep.subr.mxu0 0.0
        %1620 = vmatpush2.msra.mxu0 0.0
        %1621 = vmatprep.subr.mxu0 0.0
        %1622 = vmatpush2.msra.mxu0 0.0
        %1623 = vmatprep.subr.mxu0 0.0
        %1624 = vmatpush2.msra.mxu0 0.0
        %1625 = vmatprep.subr.mxu0 0.0
        %1626 = vmatpush2.msra.mxu0 0.0
        %1627 = vmatprep.subr.mxu0 0.0
        %1628 = vmatpush2.msra.mxu0 0.0
        %1629 = vmatprep.subr.mxu0 0.0
        %1630 = vmatpush2.msra.mxu0 0.0
        %1631 = vmatprep.subr.mxu0 0.0
        %1632 = vmatpush2.msra.mxu0 0.0
        %1633 = vmatprep.subr.mxu0 0.0
        %1634 = vmatpush2.msra.mxu0 0.0
        %1635 = vmatprep.subr.mxu0 0.0
        %1636 = vmatpush2.msra.mxu0 0.0
        %1637 = vmatprep.subr.mxu0 0.0
        %1638 = vmatpush2.msra.mxu0 0.0
        %1639 = vmatprep.subr.mxu0 0.0
        %1640 = vmatpush2.msra.mxu0 0.0
        %1641 = vmatprep.subr.mxu0 0.0
        %1642 = vmatpush2.msra.mxu0 0.0
        %1643 = vmatprep.subr.mxu0 0.0
        %1644 = vmatpush2.msra.mxu0 0.0
        %1645 = vmatprep.subr.mxu0 0.0
        %1646 = vmatpush2.msra.mxu0 0.0
        %1647 = vmatprep.subr.mxu0 0.0
        %1648 = vmatpush2.msra.mxu0 0.0
        %1649 = vmatprep.subr.mxu0 0.0
        %1650 = vmatpush2.msra.mxu0 0.0
        %1651 = vmatprep.mubr.f32.mxu0 0.0
        %1652 = vmatmul.mubr.f32.gmra.mxu0 %v1585
        %v1653 = vpop.f32.mrf.mxu0
        %v1654 = vadd.f32 0.0, %v1653
        %v1655 = vpop.f32.mrf.mxu0
        %1656 = vdwg.mxu0
        %1657 = vrot.lane.b32.xlu0 %v1140, 64
        %v1658 = vpop.permute.xlu0 %1657
        %v1661 = vsel %vm1151, %v1502, 0
        %1663 = vmatprep.subr.mxu0 0.0
        %1664 = vmatpush1.msra.mxu0 0.0
        %1665 = vmatprep.subr.mxu0 0.0
        %1666 = vmatpush1.msra.mxu0 0.0
        %1667 = vmatprep.subr.mxu0 0.0
        %1668 = vmatpush1.msra.mxu0 0.0
        %1669 = vmatprep.subr.mxu0 0.0
        %1670 = vmatpush1.msra.mxu0 0.0
        %1671 = vmatprep.subr.mxu0 0.0
        %1672 = vmatpush1.msra.mxu0 0.0
        %1673 = vmatprep.subr.mxu0 0.0
        %1674 = vmatpush1.msra.mxu0 0.0
        %1675 = vmatprep.subr.mxu0 0.0
        %1676 = vmatpush1.msra.mxu0 0.0
        %1677 = vmatprep.subr.mxu0 0.0
        %1678 = vmatpush1.msra.mxu0 0.0
        %1679 = vmatprep.subr.mxu0 0.0
        %1680 = vmatpush1.msra.mxu0 0.0
        %1681 = vmatprep.subr.mxu0 0.0
        %1682 = vmatpush1.msra.mxu0 0.0
        %1683 = vmatprep.subr.mxu0 0.0
        %1684 = vmatpush1.msra.mxu0 0.0
        %1685 = vmatprep.subr.mxu0 0.0
        %1686 = vmatpush1.msra.mxu0 0.0
        %1687 = vmatprep.subr.mxu0 0.0
        %1688 = vmatpush1.msra.mxu0 0.0
        %1689 = vmatprep.subr.mxu0 0.0
        %1690 = vmatpush1.msra.mxu0 0.0
        %1691 = vmatprep.subr.mxu0 0.0
        %1692 = vmatpush1.msra.mxu0 0.0
        %1693 = vmatprep.subr.mxu0 0.0
        %1694 = vmatpush1.msra.mxu0 %v1658
        %1695 = vmatprep.subr.mxu0 0.0
        %1696 = vmatpush2.msra.mxu0 0.0
        %1697 = vmatprep.subr.mxu0 0.0
        %1698 = vmatpush2.msra.mxu0 0.0
        %1699 = vmatprep.subr.mxu0 0.0
        %1700 = vmatpush2.msra.mxu0 0.0
        %1701 = vmatprep.subr.mxu0 0.0
        %1702 = vmatpush2.msra.mxu0 0.0
        %1703 = vmatprep.subr.mxu0 0.0
        %1704 = vmatpush2.msra.mxu0 0.0
        %1705 = vmatprep.subr.mxu0 0.0
        %1706 = vmatpush2.msra.mxu0 0.0
        %1707 = vmatprep.subr.mxu0 0.0
        %1708 = vmatpush2.msra.mxu0 0.0
        %1709 = vmatprep.subr.mxu0 0.0
        %1710 = vmatpush2.msra.mxu0 0.0
        %1711 = vmatprep.subr.mxu0 0.0
        %1712 = vmatpush2.msra.mxu0 0.0
        %1713 = vmatprep.subr.mxu0 0.0
        %1714 = vmatpush2.msra.mxu0 0.0
        %1715 = vmatprep.subr.mxu0 0.0
        %1716 = vmatpush2.msra.mxu0 0.0
        %1717 = vmatprep.subr.mxu0 0.0
        %1718 = vmatpush2.msra.mxu0 0.0
        %1719 = vmatprep.subr.mxu0 0.0
        %1720 = vmatpush2.msra.mxu0 0.0
        %1721 = vmatprep.subr.mxu0 0.0
        %1722 = vmatpush2.msra.mxu0 0.0
        %1723 = vmatprep.subr.mxu0 0.0
        %1724 = vmatpush2.msra.mxu0 0.0
        %1725 = vmatprep.subr.mxu0 0.0
        %1726 = vmatpush2.msra.mxu0 0.0
        %1727 = vmatprep.mubr.f32.mxu0 0.0
        %1728 = vmatmul.mubr.f32.gmra.mxu0 %v1661
        %v1729 = vpop.f32.mrf.mxu0
        %v1730 = vadd.f32 0.0, %v1729
        %v1731 = vpop.f32.mrf.mxu0
        %1732 = vdwg.mxu0
        %1733 = vrot.lane.b32.xlu0 %v1145, 64
        %v1734 = vpop.permute.xlu0 %1733
        %v1737 = vsel %vm1151, %v1504, 0
        %1739 = vmatprep.subr.mxu0 0.0
        %1740 = vmatpush1.msra.mxu0 0.0
        %1741 = vmatprep.subr.mxu0 0.0
        %1742 = vmatpush1.msra.mxu0 0.0
        %1743 = vmatprep.subr.mxu0 0.0
        %1744 = vmatpush1.msra.mxu0 0.0
        %1745 = vmatprep.subr.mxu0 0.0
        %1746 = vmatpush1.msra.mxu0 0.0
        %1747 = vmatprep.subr.mxu0 0.0
        %1748 = vmatpush1.msra.mxu0 0.0
        %1749 = vmatprep.subr.mxu0 0.0
        %1750 = vmatpush1.msra.mxu0 0.0
        %1751 = vmatprep.subr.mxu0 0.0
        %1752 = vmatpush1.msra.mxu0 0.0
        %1753 = vmatprep.subr.mxu0 0.0
        %1754 = vmatpush1.msra.mxu0 0.0
        %1755 = vmatprep.subr.mxu0 0.0
        %1756 = vmatpush1.msra.mxu0 0.0
        %1757 = vmatprep.subr.mxu0 0.0
        %1758 = vmatpush1.msra.mxu0 0.0
        %1759 = vmatprep.subr.mxu0 0.0
        %1760 = vmatpush1.msra.mxu0 0.0
        %1761 = vmatprep.subr.mxu0 0.0
        %1762 = vmatpush1.msra.mxu0 0.0
        %1763 = vmatprep.subr.mxu0 0.0
        %1764 = vmatpush1.msra.mxu0 0.0
        %1765 = vmatprep.subr.mxu0 0.0
        %1766 = vmatpush1.msra.mxu0 0.0
        %1767 = vmatprep.subr.mxu0 0.0
        %1768 = vmatpush1.msra.mxu0 0.0
        %1769 = vmatprep.subr.mxu0 0.0
        %1770 = vmatpush1.msra.mxu0 %v1734
        %1771 = vmatprep.subr.mxu0 0.0
        %1772 = vmatpush2.msra.mxu0 0.0
        %1773 = vmatprep.subr.mxu0 0.0
        %1774 = vmatpush2.msra.mxu0 0.0
        %1775 = vmatprep.subr.mxu0 0.0
        %1776 = vmatpush2.msra.mxu0 0.0
        %1777 = vmatprep.subr.mxu0 0.0
        %1778 = vmatpush2.msra.mxu0 0.0
        %1779 = vmatprep.subr.mxu0 0.0
        %1780 = vmatpush2.msra.mxu0 0.0
        %1781 = vmatprep.subr.mxu0 0.0
        %1782 = vmatpush2.msra.mxu0 0.0
        %1783 = vmatprep.subr.mxu0 0.0
        %1784 = vmatpush2.msra.mxu0 0.0
        %1785 = vmatprep.subr.mxu0 0.0
        %1786 = vmatpush2.msra.mxu0 0.0
        %1787 = vmatprep.subr.mxu0 0.0
        %1788 = vmatpush2.msra.mxu0 0.0
        %1789 = vmatprep.subr.mxu0 0.0
        %1790 = vmatpush2.msra.mxu0 0.0
        %1791 = vmatprep.subr.mxu0 0.0
        %1792 = vmatpush2.msra.mxu0 0.0
        %1793 = vmatprep.subr.mxu0 0.0
        %1794 = vmatpush2.msra.mxu0 0.0
        %1795 = vmatprep.subr.mxu0 0.0
        %1796 = vmatpush2.msra.mxu0 0.0
        %1797 = vmatprep.subr.mxu0 0.0
        %1798 = vmatpush2.msra.mxu0 0.0
        %1799 = vmatprep.subr.mxu0 0.0
        %1800 = vmatpush2.msra.mxu0 0.0
        %1801 = vmatprep.subr.mxu0 0.0
        %1802 = vmatpush2.msra.mxu0 0.0
        %1803 = vmatprep.mubr.f32.mxu0 0.0
        %1804 = vmatmul.mubr.f32.gmra.mxu0 %v1737
        %v1805 = vpop.f32.mrf.mxu0
        %v1806 = vadd.f32 0.0, %v1805
        %v1807 = vpop.f32.mrf.mxu0
        %1808 = vdwg.mxu0
        %1809 = vrot.lane.b32.xlu0 %v1130, 120
        %v1810 = vpop.permute.xlu0 %1809
        %1811 = vrot.lane.b32.xlu0 %v1130, 88
        %v1812 = vpop.permute.xlu0 %1811
        %v1813 = vsel %vm1151, %v1810, 0
        %v1815 = vsel %vm1151, %v1812, 0
        %1817 = vmatprep.subr.mxu0 0.0
        %1818 = vmatpush1.xpose.msra.mxu0 0.0
        %1819 = vmatprep.subr.mxu0 0.0
        %1820 = vmatpush1.xpose.msra.mxu0 0.0
        %1821 = vmatprep.subr.mxu0 0.0
        %1822 = vmatpush1.xpose.msra.mxu0 0.0
        %1823 = vmatprep.subr.mxu0 0.0
        %1824 = vmatpush1.xpose.msra.mxu0 0.0
        %1825 = vmatprep.subr.mxu0 0.0
        %1826 = vmatpush1.xpose.msra.mxu0 0.0
        %1827 = vmatprep.subr.mxu0 0.0
        %1828 = vmatpush1.xpose.msra.mxu0 0.0
        %1829 = vmatprep.subr.mxu0 0.0
        %1830 = vmatpush1.xpose.msra.mxu0 0.0
        %1831 = vmatprep.subr.mxu0 0.0
        %1832 = vmatpush1.xpose.msra.mxu0 0.0
        %1833 = vmatprep.subr.mxu0 0.0
        %1834 = vmatpush1.xpose.msra.mxu0 0.0
        %1835 = vmatprep.subr.mxu0 0.0
        %1836 = vmatpush1.xpose.msra.mxu0 0.0
        %1837 = vmatprep.subr.mxu0 0.0
        %1838 = vmatpush1.xpose.msra.mxu0 0.0
        %1839 = vmatprep.subr.mxu0 0.0
        %1840 = vmatpush1.xpose.msra.mxu0 0.0
        %1841 = vmatprep.subr.mxu0 0.0
        %1842 = vmatpush1.xpose.msra.mxu0 0.0
        %1843 = vmatprep.subr.mxu0 0.0
        %1844 = vmatpush1.xpose.msra.mxu0 0.0
        %1845 = vmatprep.subr.mxu0 0.0
        %1846 = vmatpush1.xpose.msra.mxu0 0.0
        %1847 = vmatprep.subr.mxu0 0.0
        %1848 = vmatpush1.xpose.msra.mxu0 %v1815
        %1849 = vmatprep.subr.mxu0 0.0
        %1850 = vmatpush2.xpose.msra.mxu0 0.0
        %1851 = vmatprep.subr.mxu0 0.0
        %1852 = vmatpush2.xpose.msra.mxu0 0.0
        %1853 = vmatprep.subr.mxu0 0.0
        %1854 = vmatpush2.xpose.msra.mxu0 0.0
        %1855 = vmatprep.subr.mxu0 0.0
        %1856 = vmatpush2.xpose.msra.mxu0 0.0
        %1857 = vmatprep.subr.mxu0 0.0
        %1858 = vmatpush2.xpose.msra.mxu0 0.0
        %1859 = vmatprep.subr.mxu0 0.0
        %1860 = vmatpush2.xpose.msra.mxu0 0.0
        %1861 = vmatprep.subr.mxu0 0.0
        %1862 = vmatpush2.xpose.msra.mxu0 0.0
        %1863 = vmatprep.subr.mxu0 0.0
        %1864 = vmatpush2.xpose.msra.mxu0 0.0
        %1865 = vmatprep.subr.mxu0 0.0
        %1866 = vmatpush2.xpose.msra.mxu0 0.0
        %1867 = vmatprep.subr.mxu0 0.0
        %1868 = vmatpush2.xpose.msra.mxu0 0.0
        %1869 = vmatprep.subr.mxu0 0.0
        %1870 = vmatpush2.xpose.msra.mxu0 0.0
        %1871 = vmatprep.subr.mxu0 0.0
        %1872 = vmatpush2.xpose.msra.mxu0 0.0
        %1873 = vmatprep.subr.mxu0 0.0
        %1874 = vmatpush2.xpose.msra.mxu0 0.0
        %1875 = vmatprep.subr.mxu0 0.0
        %1876 = vmatpush2.xpose.msra.mxu0 0.0
        %1877 = vmatprep.subr.mxu0 0.0
        %1878 = vmatpush2.xpose.msra.mxu0 0.0
        %1879 = vmatprep.subr.mxu0 0.0
        %1880 = vmatpush2.xpose.msra.mxu0 0.0
        %1881 = vmatprep.mubr.f32.mxu0 0.0
        %1882 = vmatmul.mubr.f32.gmra.mxu0 %v1813
        %v1883 = vpop.f32.mrf.mxu0
        %v1884 = vadd.f32 0.0, %v1883
        %v1885 = vpop.f32.mrf.mxu0
        %1886 = vdwg.mxu0
        %1887 = vrot.lane.b32.xlu0 %v1135, 120
        %v1888 = vpop.permute.xlu0 %1887
        %1889 = vrot.lane.b32.xlu0 %v1135, 88
        %v1890 = vpop.permute.xlu0 %1889
        %v1891 = vsel %vm1151, %v1888, 0
        %v1893 = vsel %vm1151, %v1890, 0
        %1895 = vmatprep.subr.mxu0 0.0
        %1896 = vmatpush1.xpose.msra.mxu0 0.0
        %1897 = vmatprep.subr.mxu0 0.0
        %1898 = vmatpush1.xpose.msra.mxu0 0.0
        %1899 = vmatprep.subr.mxu0 0.0
        %1900 = vmatpush1.xpose.msra.mxu0 0.0
        %1901 = vmatprep.subr.mxu0 0.0
        %1902 = vmatpush1.xpose.msra.mxu0 0.0
        %1903 = vmatprep.subr.mxu0 0.0
        %1904 = vmatpush1.xpose.msra.mxu0 0.0
        %1905 = vmatprep.subr.mxu0 0.0
        %1906 = vmatpush1.xpose.msra.mxu0 0.0
        %1907 = vmatprep.subr.mxu0 0.0
        %1908 = vmatpush1.xpose.msra.mxu0 0.0
        %1909 = vmatprep.subr.mxu0 0.0
        %1910 = vmatpush1.xpose.msra.mxu0 0.0
        %1911 = vmatprep.subr.mxu0 0.0
        %1912 = vmatpush1.xpose.msra.mxu0 0.0
        %1913 = vmatprep.subr.mxu0 0.0
        %1914 = vmatpush1.xpose.msra.mxu0 0.0
        %1915 = vmatprep.subr.mxu0 0.0
        %1916 = vmatpush1.xpose.msra.mxu0 0.0
        %1917 = vmatprep.subr.mxu0 0.0
        %1918 = vmatpush1.xpose.msra.mxu0 0.0
        %1919 = vmatprep.subr.mxu0 0.0
        %1920 = vmatpush1.xpose.msra.mxu0 0.0
        %1921 = vmatprep.subr.mxu0 0.0
        %1922 = vmatpush1.xpose.msra.mxu0 0.0
        %1923 = vmatprep.subr.mxu0 0.0
        %1924 = vmatpush1.xpose.msra.mxu0 0.0
        %1925 = vmatprep.subr.mxu0 0.0
        %1926 = vmatpush1.xpose.msra.mxu0 %v1893
        %1927 = vmatprep.subr.mxu0 0.0
        %1928 = vmatpush2.xpose.msra.mxu0 0.0
        %1929 = vmatprep.subr.mxu0 0.0
        %1930 = vmatpush2.xpose.msra.mxu0 0.0
        %1931 = vmatprep.subr.mxu0 0.0
        %1932 = vmatpush2.xpose.msra.mxu0 0.0
        %1933 = vmatprep.subr.mxu0 0.0
        %1934 = vmatpush2.xpose.msra.mxu0 0.0
        %1935 = vmatprep.subr.mxu0 0.0
        %1936 = vmatpush2.xpose.msra.mxu0 0.0
        %1937 = vmatprep.subr.mxu0 0.0
        %1938 = vmatpush2.xpose.msra.mxu0 0.0
        %1939 = vmatprep.subr.mxu0 0.0
        %1940 = vmatpush2.xpose.msra.mxu0 0.0
        %1941 = vmatprep.subr.mxu0 0.0
        %1942 = vmatpush2.xpose.msra.mxu0 0.0
        %1943 = vmatprep.subr.mxu0 0.0
        %1944 = vmatpush2.xpose.msra.mxu0 0.0
        %1945 = vmatprep.subr.mxu0 0.0
        %1946 = vmatpush2.xpose.msra.mxu0 0.0
        %1947 = vmatprep.subr.mxu0 0.0
        %1948 = vmatpush2.xpose.msra.mxu0 0.0
        %1949 = vmatprep.subr.mxu0 0.0
        %1950 = vmatpush2.xpose.msra.mxu0 0.0
        %1951 = vmatprep.subr.mxu0 0.0
        %1952 = vmatpush2.xpose.msra.mxu0 0.0
        %1953 = vmatprep.subr.mxu0 0.0
        %1954 = vmatpush2.xpose.msra.mxu0 0.0
        %1955 = vmatprep.subr.mxu0 0.0
        %1956 = vmatpush2.xpose.msra.mxu0 0.0
        %1957 = vmatprep.subr.mxu0 0.0
        %1958 = vmatpush2.xpose.msra.mxu0 0.0
        %1959 = vmatprep.mubr.f32.mxu0 0.0
        %1960 = vmatmul.mubr.f32.gmra.mxu0 %v1891
        %v1961 = vpop.f32.mrf.mxu0
        %v1962 = vadd.f32 0.0, %v1961
        %v1963 = vpop.f32.mrf.mxu0
        %1964 = vdwg.mxu0
        %1965 = vrot.lane.b32.xlu0 %v1140, 120
        %v1966 = vpop.permute.xlu0 %1965
        %1967 = vrot.lane.b32.xlu0 %v1140, 88
        %v1968 = vpop.permute.xlu0 %1967
        %v1969 = vsel %vm1151, %v1966, 0
        %v1971 = vsel %vm1151, %v1968, 0
        %1973 = vmatprep.subr.mxu0 0.0
        %1974 = vmatpush1.xpose.msra.mxu0 0.0
        %1975 = vmatprep.subr.mxu0 0.0
        %1976 = vmatpush1.xpose.msra.mxu0 0.0
        %1977 = vmatprep.subr.mxu0 0.0
        %1978 = vmatpush1.xpose.msra.mxu0 0.0
        %1979 = vmatprep.subr.mxu0 0.0
        %1980 = vmatpush1.xpose.msra.mxu0 0.0
        %1981 = vmatprep.subr.mxu0 0.0
        %1982 = vmatpush1.xpose.msra.mxu0 0.0
        %1983 = vmatprep.subr.mxu0 0.0
        %1984 = vmatpush1.xpose.msra.mxu0 0.0
        %1985 = vmatprep.subr.mxu0 0.0
        %1986 = vmatpush1.xpose.msra.mxu0 0.0
        %1987 = vmatprep.subr.mxu0 0.0
        %1988 = vmatpush1.xpose.msra.mxu0 0.0
        %1989 = vmatprep.subr.mxu0 0.0
        %1990 = vmatpush1.xpose.msra.mxu0 0.0
        %1991 = vmatprep.subr.mxu0 0.0
        %1992 = vmatpush1.xpose.msra.mxu0 0.0
        %1993 = vmatprep.subr.mxu0 0.0
        %1994 = vmatpush1.xpose.msra.mxu0 0.0
        %1995 = vmatprep.subr.mxu0 0.0
        %1996 = vmatpush1.xpose.msra.mxu0 0.0
        %1997 = vmatprep.subr.mxu0 0.0
        %1998 = vmatpush1.xpose.msra.mxu0 0.0
        %1999 = vmatprep.subr.mxu0 0.0
        %2000 = vmatpush1.xpose.msra.mxu0 0.0
        %2001 = vmatprep.subr.mxu0 0.0
        %2002 = vmatpush1.xpose.msra.mxu0 0.0
        %2003 = vmatprep.subr.mxu0 0.0
        %2004 = vmatpush1.xpose.msra.mxu0 %v1971
        %2005 = vmatprep.subr.mxu0 0.0
        %2006 = vmatpush2.xpose.msra.mxu0 0.0
        %2007 = vmatprep.subr.mxu0 0.0
        %2008 = vmatpush2.xpose.msra.mxu0 0.0
        %2009 = vmatprep.subr.mxu0 0.0
        %2010 = vmatpush2.xpose.msra.mxu0 0.0
        %2011 = vmatprep.subr.mxu0 0.0
        %2012 = vmatpush2.xpose.msra.mxu0 0.0
        %2013 = vmatprep.subr.mxu0 0.0
        %2014 = vmatpush2.xpose.msra.mxu0 0.0
        %2015 = vmatprep.subr.mxu0 0.0
        %2016 = vmatpush2.xpose.msra.mxu0 0.0
        %2017 = vmatprep.subr.mxu0 0.0
        %2018 = vmatpush2.xpose.msra.mxu0 0.0
        %2019 = vmatprep.subr.mxu0 0.0
        %2020 = vmatpush2.xpose.msra.mxu0 0.0
        %2021 = vmatprep.subr.mxu0 0.0
        %2022 = vmatpush2.xpose.msra.mxu0 0.0
        %2023 = vmatprep.subr.mxu0 0.0
        %2024 = vmatpush2.xpose.msra.mxu0 0.0
        %2025 = vmatprep.subr.mxu0 0.0
        %2026 = vmatpush2.xpose.msra.mxu0 0.0
        %2027 = vmatprep.subr.mxu0 0.0
        %2028 = vmatpush2.xpose.msra.mxu0 0.0
        %2029 = vmatprep.subr.mxu0 0.0
        %2030 = vmatpush2.xpose.msra.mxu0 0.0
        %2031 = vmatprep.subr.mxu0 0.0
        %2032 = vmatpush2.xpose.msra.mxu0 0.0
        %2033 = vmatprep.subr.mxu0 0.0
        %2034 = vmatpush2.xpose.msra.mxu0 0.0
        %2035 = vmatprep.subr.mxu0 0.0
        %2036 = vmatpush2.xpose.msra.mxu0 0.0
        %2037 = vmatprep.mubr.f32.mxu0 0.0
        %2038 = vmatmul.mubr.f32.gmra.mxu0 %v1969
        %v2039 = vpop.f32.mrf.mxu0
        %v2040 = vadd.f32 0.0, %v2039
        %v2041 = vpop.f32.mrf.mxu0
        %2042 = vdwg.mxu0
        %2043 = vrot.lane.b32.xlu0 %v1145, 120
        %v2044 = vpop.permute.xlu0 %2043
        %2045 = vrot.lane.b32.xlu0 %v1145, 88
        %v2046 = vpop.permute.xlu0 %2045
        %v2047 = vsel %vm1151, %v2044, 0
        %v2049 = vsel %vm1151, %v2046, 0
        %2051 = vmatprep.subr.mxu0 0.0
        %2052 = vmatpush1.xpose.msra.mxu0 0.0
        %2053 = vmatprep.subr.mxu0 0.0
        %2054 = vmatpush1.xpose.msra.mxu0 0.0
        %2055 = vmatprep.subr.mxu0 0.0
        %2056 = vmatpush1.xpose.msra.mxu0 0.0
        %2057 = vmatprep.subr.mxu0 0.0
        %2058 = vmatpush1.xpose.msra.mxu0 0.0
        %2059 = vmatprep.subr.mxu0 0.0
        %2060 = vmatpush1.xpose.msra.mxu0 0.0
        %2061 = vmatprep.subr.mxu0 0.0
        %2062 = vmatpush1.xpose.msra.mxu0 0.0
        %2063 = vmatprep.subr.mxu0 0.0
        %2064 = vmatpush1.xpose.msra.mxu0 0.0
        %2065 = vmatprep.subr.mxu0 0.0
        %2066 = vmatpush1.xpose.msra.mxu0 0.0
        %2067 = vmatprep.subr.mxu0 0.0
        %2068 = vmatpush1.xpose.msra.mxu0 0.0
        %2069 = vmatprep.subr.mxu0 0.0
        %2070 = vmatpush1.xpose.msra.mxu0 0.0
        %2071 = vmatprep.subr.mxu0 0.0
        %2072 = vmatpush1.xpose.msra.mxu0 0.0
        %2073 = vmatprep.subr.mxu0 0.0
        %2074 = vmatpush1.xpose.msra.mxu0 0.0
        %2075 = vmatprep.subr.mxu0 0.0
        %2076 = vmatpush1.xpose.msra.mxu0 0.0
        %2077 = vmatprep.subr.mxu0 0.0
        %2078 = vmatpush1.xpose.msra.mxu0 0.0
        %2079 = vmatprep.subr.mxu0 0.0
        %2080 = vmatpush1.xpose.msra.mxu0 0.0
        %2081 = vmatprep.subr.mxu0 0.0
        %2082 = vmatpush1.xpose.msra.mxu0 %v2049
        %2083 = vmatprep.subr.mxu0 0.0
        %2084 = vmatpush2.xpose.msra.mxu0 0.0
        %2085 = vmatprep.subr.mxu0 0.0
        %2086 = vmatpush2.xpose.msra.mxu0 0.0
        %2087 = vmatprep.subr.mxu0 0.0
        %2088 = vmatpush2.xpose.msra.mxu0 0.0
        %2089 = vmatprep.subr.mxu0 0.0
        %2090 = vmatpush2.xpose.msra.mxu0 0.0
        %2091 = vmatprep.subr.mxu0 0.0
        %2092 = vmatpush2.xpose.msra.mxu0 0.0
        %2093 = vmatprep.subr.mxu0 0.0
        %2094 = vmatpush2.xpose.msra.mxu0 0.0
        %2095 = vmatprep.subr.mxu0 0.0
        %2096 = vmatpush2.xpose.msra.mxu0 0.0
        %2097 = vmatprep.subr.mxu0 0.0
        %2098 = vmatpush2.xpose.msra.mxu0 0.0
        %2099 = vmatprep.subr.mxu0 0.0
        %2100 = vmatpush2.xpose.msra.mxu0 0.0
        %2101 = vmatprep.subr.mxu0 0.0
        %2102 = vmatpush2.xpose.msra.mxu0 0.0
        %2103 = vmatprep.subr.mxu0 0.0
        %2104 = vmatpush2.xpose.msra.mxu0 0.0
        %2105 = vmatprep.subr.mxu0 0.0
        %2106 = vmatpush2.xpose.msra.mxu0 0.0
        %2107 = vmatprep.subr.mxu0 0.0
        %2108 = vmatpush2.xpose.msra.mxu0 0.0
        %2109 = vmatprep.subr.mxu0 0.0
        %2110 = vmatpush2.xpose.msra.mxu0 0.0
        %2111 = vmatprep.subr.mxu0 0.0
        %2112 = vmatpush2.xpose.msra.mxu0 0.0
        %2113 = vmatprep.subr.mxu0 0.0
        %2114 = vmatpush2.xpose.msra.mxu0 0.0
        %2115 = vmatprep.mubr.f32.mxu0 0.0
        %2116 = vmatmul.mubr.f32.gmra.mxu0 %v2047
        %v2117 = vpop.f32.mrf.mxu0
        %v2118 = vadd.f32 0.0, %v2117
        %v2119 = vpop.f32.mrf.mxu0
        %2120 = vdwg.mxu0
        %v2121 = vmul.f32 %v1884, 0.35355338
        %v2122 = vmul.f32 %v1962, 0.35355338
        %v2123 = vmul.f32 %v2040, 0.35355338
        %v2124 = vmul.f32 %v2118, 0.35355338
        %v2125 = vsel %vm1151, %v2121, -inf
        %2126 = vmax.xlane.f32.xlu0 %v2125
        %v2127 = vpop.xlane.xlu0 %2126
        %v2128 = vsel %vm1151, %v2122, -inf
        %2129 = vmax.xlane.f32.xlu0 %v2128
        %v2130 = vpop.xlane.xlu0 %2129
        %v2131 = vsel %vm1151, %v2123, -inf
        %2132 = vmax.xlane.f32.xlu0 %v2131
        %v2133 = vpop.xlane.xlu0 %2132
        %v2134 = vsel %vm1151, %v2124, -inf
        %2135 = vmax.xlane.f32.xlu0 %v2134
        %v2136 = vpop.xlane.xlu0 %2135
        %v2137 = vsub.f32 %v2121, %v2127
        %v2138 = vsub.f32 %v2122, %v2130
        %v2139 = vsub.f32 %v2123, %v2133
        %v2140 = vsub.f32 %v2124, %v2136
        %v2141 = vmul.f32 %v2137, 1.442695
        %v2142 = vpow.pop %v2141
        %v2143 = vmul.f32 %v2138, 1.442695
        %v2144 = vpow.pop %v2143
        %v2145 = vmul.f32 %v2139, 1.442695
        %v2146 = vpow.pop %v2145
        %v2147 = vmul.f32 %v2140, 1.442695
        %v2148 = vpow.pop %v2147
        %v2149 = vsel %vm1151, %v2142, 0.0
        %2150 = vadd.xlane.f32.xlu0 %v2149
        %v2151 = vpop.xlane.xlu0 %2150
        %v2152 = vsel %vm1151, %v2144, 0.0
        %2153 = vadd.xlane.f32.xlu0 %v2152
        %v2154 = vpop.xlane.xlu0 %2153
        %v2155 = vsel %vm1151, %v2146, 0.0
        %2156 = vadd.xlane.f32.xlu0 %v2155
        %v2157 = vpop.xlane.xlu0 %2156
        %v2158 = vsel %vm1151, %v2148, 0.0
        %2159 = vadd.xlane.f32.xlu0 %v2158
        %v2160 = vpop.xlane.xlu0 %2159
        %v2161 = vrcp.pop %v2151
        %v2162 = vmul.f32 %v2142, %v2161
        %v2163 = vrcp.pop %v2154
        %v2164 = vmul.f32 %v2144, %v2163
        %v2165 = vrcp.pop %v2157
        %v2166 = vmul.f32 %v2146, %v2165
        %v2167 = vrcp.pop %v2160
        %v2168 = vmul.f32 %v2148, %v2167
        %2169 = vrot.lane.b32.xlu0 %v1130, 56
        %v2170 = vpop.permute.xlu0 %2169
        %v2173 = vsel %vm1151, %v2162, 0
        %2175 = vmatprep.subr.mxu0 0.0
        %2176 = vmatpush1.msra.mxu0 0.0
        %2177 = vmatprep.subr.mxu0 0.0
        %2178 = vmatpush1.msra.mxu0 0.0
        %2179 = vmatprep.subr.mxu0 0.0
        %2180 = vmatpush1.msra.mxu0 0.0
        %2181 = vmatprep.subr.mxu0 0.0
        %2182 = vmatpush1.msra.mxu0 0.0
        %2183 = vmatprep.subr.mxu0 0.0
        %2184 = vmatpush1.msra.mxu0 0.0
        %2185 = vmatprep.subr.mxu0 0.0
        %2186 = vmatpush1.msra.mxu0 0.0
        %2187 = vmatprep.subr.mxu0 0.0
        %2188 = vmatpush1.msra.mxu0 0.0
        %2189 = vmatprep.subr.mxu0 0.0
        %2190 = vmatpush1.msra.mxu0 0.0
        %2191 = vmatprep.subr.mxu0 0.0
        %2192 = vmatpush1.msra.mxu0 0.0
        %2193 = vmatprep.subr.mxu0 0.0
        %2194 = vmatpush1.msra.mxu0 0.0
        %2195 = vmatprep.subr.mxu0 0.0
        %2196 = vmatpush1.msra.mxu0 0.0
        %2197 = vmatprep.subr.mxu0 0.0
        %2198 = vmatpush1.msra.mxu0 0.0
        %2199 = vmatprep.subr.mxu0 0.0
        %2200 = vmatpush1.msra.mxu0 0.0
        %2201 = vmatprep.subr.mxu0 0.0
        %2202 = vmatpush1.msra.mxu0 0.0
        %2203 = vmatprep.subr.mxu0 0.0
        %2204 = vmatpush1.msra.mxu0 0.0
        %2205 = vmatprep.subr.mxu0 0.0
        %2206 = vmatpush1.msra.mxu0 %v2170
        %2207 = vmatprep.subr.mxu0 0.0
        %2208 = vmatpush2.msra.mxu0 0.0
        %2209 = vmatprep.subr.mxu0 0.0
        %2210 = vmatpush2.msra.mxu0 0.0
        %2211 = vmatprep.subr.mxu0 0.0
        %2212 = vmatpush2.msra.mxu0 0.0
        %2213 = vmatprep.subr.mxu0 0.0
        %2214 = vmatpush2.msra.mxu0 0.0
        %2215 = vmatprep.subr.mxu0 0.0
        %2216 = vmatpush2.msra.mxu0 0.0
        %2217 = vmatprep.subr.mxu0 0.0
        %2218 = vmatpush2.msra.mxu0 0.0
        %2219 = vmatprep.subr.mxu0 0.0
        %2220 = vmatpush2.msra.mxu0 0.0
        %2221 = vmatprep.subr.mxu0 0.0
        %2222 = vmatpush2.msra.mxu0 0.0
        %2223 = vmatprep.subr.mxu0 0.0
        %2224 = vmatpush2.msra.mxu0 0.0
        %2225 = vmatprep.subr.mxu0 0.0
        %2226 = vmatpush2.msra.mxu0 0.0
        %2227 = vmatprep.subr.mxu0 0.0
        %2228 = vmatpush2.msra.mxu0 0.0
        %2229 = vmatprep.subr.mxu0 0.0
        %2230 = vmatpush2.msra.mxu0 0.0
        %2231 = vmatprep.subr.mxu0 0.0
        %2232 = vmatpush2.msra.mxu0 0.0
        %2233 = vmatprep.subr.mxu0 0.0
        %2234 = vmatpush2.msra.mxu0 0.0
        %2235 = vmatprep.subr.mxu0 0.0
        %2236 = vmatpush2.msra.mxu0 0.0
        %2237 = vmatprep.subr.mxu0 0.0
        %2238 = vmatpush2.msra.mxu0 0.0
        %2239 = vmatprep.mubr.f32.mxu0 0.0
        %2240 = vmatmul.mubr.f32.gmra.mxu0 %v2173
        %v2241 = vpop.f32.mrf.mxu0
        %v2242 = vadd.f32 0.0, %v2241
        %v2243 = vpop.f32.mrf.mxu0
        %2244 = vdwg.mxu0
        %2245 = vrot.lane.b32.xlu0 %v1135, 56
        %v2246 = vpop.permute.xlu0 %2245
        %v2249 = vsel %vm1151, %v2164, 0
        %2251 = vmatprep.subr.mxu0 0.0
        %2252 = vmatpush1.msra.mxu0 0.0
        %2253 = vmatprep.subr.mxu0 0.0
        %2254 = vmatpush1.msra.mxu0 0.0
        %2255 = vmatprep.subr.mxu0 0.0
        %2256 = vmatpush1.msra.mxu0 0.0
        %2257 = vmatprep.subr.mxu0 0.0
        %2258 = vmatpush1.msra.mxu0 0.0
        %2259 = vmatprep.subr.mxu0 0.0
        %2260 = vmatpush1.msra.mxu0 0.0
        %2261 = vmatprep.subr.mxu0 0.0
        %2262 = vmatpush1.msra.mxu0 0.0
        %2263 = vmatprep.subr.mxu0 0.0
        %2264 = vmatpush1.msra.mxu0 0.0
        %2265 = vmatprep.subr.mxu0 0.0
        %2266 = vmatpush1.msra.mxu0 0.0
        %2267 = vmatprep.subr.mxu0 0.0
        %2268 = vmatpush1.msra.mxu0 0.0
        %2269 = vmatprep.subr.mxu0 0.0
        %2270 = vmatpush1.msra.mxu0 0.0
        %2271 = vmatprep.subr.mxu0 0.0
        %2272 = vmatpush1.msra.mxu0 0.0
        %2273 = vmatprep.subr.mxu0 0.0
        %2274 = vmatpush1.msra.mxu0 0.0
        %2275 = vmatprep.subr.mxu0 0.0
        %2276 = vmatpush1.msra.mxu0 0.0
        %2277 = vmatprep.subr.mxu0 0.0
        %2278 = vmatpush1.msra.mxu0 0.0
        %2279 = vmatprep.subr.mxu0 0.0
        %2280 = vmatpush1.msra.mxu0 0.0
        %2281 = vmatprep.subr.mxu0 0.0
        %2282 = vmatpush1.msra.mxu0 %v2246
        %2283 = vmatprep.subr.mxu0 0.0
        %2284 = vmatpush2.msra.mxu0 0.0
        %2285 = vmatprep.subr.mxu0 0.0
        %2286 = vmatpush2.msra.mxu0 0.0
        %2287 = vmatprep.subr.mxu0 0.0
        %2288 = vmatpush2.msra.mxu0 0.0
        %2289 = vmatprep.subr.mxu0 0.0
        %2290 = vmatpush2.msra.mxu0 0.0
        %2291 = vmatprep.subr.mxu0 0.0
        %2292 = vmatpush2.msra.mxu0 0.0
        %2293 = vmatprep.subr.mxu0 0.0
        %2294 = vmatpush2.msra.mxu0 0.0
        %2295 = vmatprep.subr.mxu0 0.0
        %2296 = vmatpush2.msra.mxu0 0.0
        %2297 = vmatprep.subr.mxu0 0.0
        %2298 = vmatpush2.msra.mxu0 0.0
        %2299 = vmatprep.subr.mxu0 0.0
        %2300 = vmatpush2.msra.mxu0 0.0
        %2301 = vmatprep.subr.mxu0 0.0
        %2302 = vmatpush2.msra.mxu0 0.0
        %2303 = vmatprep.subr.mxu0 0.0
        %2304 = vmatpush2.msra.mxu0 0.0
        %2305 = vmatprep.subr.mxu0 0.0
        %2306 = vmatpush2.msra.mxu0 0.0
        %2307 = vmatprep.subr.mxu0 0.0
        %2308 = vmatpush2.msra.mxu0 0.0
        %2309 = vmatprep.subr.mxu0 0.0
        %2310 = vmatpush2.msra.mxu0 0.0
        %2311 = vmatprep.subr.mxu0 0.0
        %2312 = vmatpush2.msra.mxu0 0.0
        %2313 = vmatprep.subr.mxu0 0.0
        %2314 = vmatpush2.msra.mxu0 0.0
        %2315 = vmatprep.mubr.f32.mxu0 0.0
        %2316 = vmatmul.mubr.f32.gmra.mxu0 %v2249
        %v2317 = vpop.f32.mrf.mxu0
        %v2318 = vadd.f32 0.0, %v2317
        %v2319 = vpop.f32.mrf.mxu0
        %2320 = vdwg.mxu0
        %2321 = vrot.lane.b32.xlu0 %v1140, 56
        %v2322 = vpop.permute.xlu0 %2321
        %v2325 = vsel %vm1151, %v2166, 0
        %2327 = vmatprep.subr.mxu0 0.0
        %2328 = vmatpush1.msra.mxu0 0.0
        %2329 = vmatprep.subr.mxu0 0.0
        %2330 = vmatpush1.msra.mxu0 0.0
        %2331 = vmatprep.subr.mxu0 0.0
        %2332 = vmatpush1.msra.mxu0 0.0
        %2333 = vmatprep.subr.mxu0 0.0
        %2334 = vmatpush1.msra.mxu0 0.0
        %2335 = vmatprep.subr.mxu0 0.0
        %2336 = vmatpush1.msra.mxu0 0.0
        %2337 = vmatprep.subr.mxu0 0.0
        %2338 = vmatpush1.msra.mxu0 0.0
        %2339 = vmatprep.subr.mxu0 0.0
        %2340 = vmatpush1.msra.mxu0 0.0
        %2341 = vmatprep.subr.mxu0 0.0
        %2342 = vmatpush1.msra.mxu0 0.0
        %2343 = vmatprep.subr.mxu0 0.0
        %2344 = vmatpush1.msra.mxu0 0.0
        %2345 = vmatprep.subr.mxu0 0.0
        %2346 = vmatpush1.msra.mxu0 0.0
        %2347 = vmatprep.subr.mxu0 0.0
        %2348 = vmatpush1.msra.mxu0 0.0
        %2349 = vmatprep.subr.mxu0 0.0
        %2350 = vmatpush1.msra.mxu0 0.0
        %2351 = vmatprep.subr.mxu0 0.0
        %2352 = vmatpush1.msra.mxu0 0.0
        %2353 = vmatprep.subr.mxu0 0.0
        %2354 = vmatpush1.msra.mxu0 0.0
        %2355 = vmatprep.subr.mxu0 0.0
        %2356 = vmatpush1.msra.mxu0 0.0
        %2357 = vmatprep.subr.mxu0 0.0
        %2358 = vmatpush1.msra.mxu0 %v2322
        %2359 = vmatprep.subr.mxu0 0.0
        %2360 = vmatpush2.msra.mxu0 0.0
        %2361 = vmatprep.subr.mxu0 0.0
        %2362 = vmatpush2.msra.mxu0 0.0
        %2363 = vmatprep.subr.mxu0 0.0
        %2364 = vmatpush2.msra.mxu0 0.0
        %2365 = vmatprep.subr.mxu0 0.0
        %2366 = vmatpush2.msra.mxu0 0.0
        %2367 = vmatprep.subr.mxu0 0.0
        %2368 = vmatpush2.msra.mxu0 0.0
        %2369 = vmatprep.subr.mxu0 0.0
        %2370 = vmatpush2.msra.mxu0 0.0
        %2371 = vmatprep.subr.mxu0 0.0
        %2372 = vmatpush2.msra.mxu0 0.0
        %2373 = vmatprep.subr.mxu0 0.0
        %2374 = vmatpush2.msra.mxu0 0.0
        %2375 = vmatprep.subr.mxu0 0.0
        %2376 = vmatpush2.msra.mxu0 0.0
        %2377 = vmatprep.subr.mxu0 0.0
        %2378 = vmatpush2.msra.mxu0 0.0
        %2379 = vmatprep.subr.mxu0 0.0
        %2380 = vmatpush2.msra.mxu0 0.0
        %2381 = vmatprep.subr.mxu0 0.0
        %2382 = vmatpush2.msra.mxu0 0.0
        %2383 = vmatprep.subr.mxu0 0.0
        %2384 = vmatpush2.msra.mxu0 0.0
        %2385 = vmatprep.subr.mxu0 0.0
        %2386 = vmatpush2.msra.mxu0 0.0
        %2387 = vmatprep.subr.mxu0 0.0
        %2388 = vmatpush2.msra.mxu0 0.0
        %2389 = vmatprep.subr.mxu0 0.0
        %2390 = vmatpush2.msra.mxu0 0.0
        %2391 = vmatprep.mubr.f32.mxu0 0.0
        %2392 = vmatmul.mubr.f32.gmra.mxu0 %v2325
        %v2393 = vpop.f32.mrf.mxu0
        %v2394 = vadd.f32 0.0, %v2393
        %v2395 = vpop.f32.mrf.mxu0
        %2396 = vdwg.mxu0
        %2397 = vrot.lane.b32.xlu0 %v1145, 56
        %v2398 = vpop.permute.xlu0 %2397
        %v2401 = vsel %vm1151, %v2168, 0
        %2403 = vmatprep.subr.mxu0 0.0
        %2404 = vmatpush1.msra.mxu0 0.0
        %2405 = vmatprep.subr.mxu0 0.0
        %2406 = vmatpush1.msra.mxu0 0.0
        %2407 = vmatprep.subr.mxu0 0.0
        %2408 = vmatpush1.msra.mxu0 0.0
        %2409 = vmatprep.subr.mxu0 0.0
        %2410 = vmatpush1.msra.mxu0 0.0
        %2411 = vmatprep.subr.mxu0 0.0
        %2412 = vmatpush1.msra.mxu0 0.0
        %2413 = vmatprep.subr.mxu0 0.0
        %2414 = vmatpush1.msra.mxu0 0.0
        %2415 = vmatprep.subr.mxu0 0.0
        %2416 = vmatpush1.msra.mxu0 0.0
        %2417 = vmatprep.subr.mxu0 0.0
        %2418 = vmatpush1.msra.mxu0 0.0
        %2419 = vmatprep.subr.mxu0 0.0
        %2420 = vmatpush1.msra.mxu0 0.0
        %2421 = vmatprep.subr.mxu0 0.0
        %2422 = vmatpush1.msra.mxu0 0.0
        %2423 = vmatprep.subr.mxu0 0.0
        %2424 = vmatpush1.msra.mxu0 0.0
        %2425 = vmatprep.subr.mxu0 0.0
        %2426 = vmatpush1.msra.mxu0 0.0
        %2427 = vmatprep.subr.mxu0 0.0
        %2428 = vmatpush1.msra.mxu0 0.0
        %2429 = vmatprep.subr.mxu0 0.0
        %2430 = vmatpush1.msra.mxu0 0.0
        %2431 = vmatprep.subr.mxu0 0.0
        %2432 = vmatpush1.msra.mxu0 0.0
        %2433 = vmatprep.subr.mxu0 0.0
        %2434 = vmatpush1.msra.mxu0 %v2398
        %2435 = vmatprep.subr.mxu0 0.0
        %2436 = vmatpush2.msra.mxu0 0.0
        %2437 = vmatprep.subr.mxu0 0.0
        %2438 = vmatpush2.msra.mxu0 0.0
        %2439 = vmatprep.subr.mxu0 0.0
        %2440 = vmatpush2.msra.mxu0 0.0
        %2441 = vmatprep.subr.mxu0 0.0
        %2442 = vmatpush2.msra.mxu0 0.0
        %2443 = vmatprep.subr.mxu0 0.0
        %2444 = vmatpush2.msra.mxu0 0.0
        %2445 = vmatprep.subr.mxu0 0.0
        %2446 = vmatpush2.msra.mxu0 0.0
        %2447 = vmatprep.subr.mxu0 0.0
        %2448 = vmatpush2.msra.mxu0 0.0
        %2449 = vmatprep.subr.mxu0 0.0
        %2450 = vmatpush2.msra.mxu0 0.0
        %2451 = vmatprep.subr.mxu0 0.0
        %2452 = vmatpush2.msra.mxu0 0.0
        %2453 = vmatprep.subr.mxu0 0.0
        %2454 = vmatpush2.msra.mxu0 0.0
        %2455 = vmatprep.subr.mxu0 0.0
        %2456 = vmatpush2.msra.mxu0 0.0
        %2457 = vmatprep.subr.mxu0 0.0
        %2458 = vmatpush2.msra.mxu0 0.0
        %2459 = vmatprep.subr.mxu0 0.0
        %2460 = vmatpush2.msra.mxu0 0.0
        %2461 = vmatprep.subr.mxu0 0.0
        %2462 = vmatpush2.msra.mxu0 0.0
        %2463 = vmatprep.subr.mxu0 0.0
        %2464 = vmatpush2.msra.mxu0 0.0
        %2465 = vmatprep.subr.mxu0 0.0
        %2466 = vmatpush2.msra.mxu0 0.0
        %2467 = vmatprep.mubr.f32.mxu0 0.0
        %2468 = vmatmul.mubr.f32.gmra.mxu0 %v2401
        %v2469 = vpop.f32.mrf.mxu0
        %v2470 = vadd.f32 0.0, %v2469
        %v2471 = vpop.f32.mrf.mxu0
        %2472 = vdwg.mxu0
        %2473 = vrot.lane.b32.xlu0 %v1130, 112
        %v2474 = vpop.permute.xlu0 %2473
        %2475 = vrot.lane.b32.xlu0 %v1130, 80
        %v2476 = vpop.permute.xlu0 %2475
        %v2477 = vsel %vm1151, %v2474, 0
        %v2479 = vsel %vm1151, %v2476, 0
        %2481 = vmatprep.subr.mxu0 0.0
        %2482 = vmatpush1.xpose.msra.mxu0 0.0
        %2483 = vmatprep.subr.mxu0 0.0
        %2484 = vmatpush1.xpose.msra.mxu0 0.0
        %2485 = vmatprep.subr.mxu0 0.0
        %2486 = vmatpush1.xpose.msra.mxu0 0.0
        %2487 = vmatprep.subr.mxu0 0.0
        %2488 = vmatpush1.xpose.msra.mxu0 0.0
        %2489 = vmatprep.subr.mxu0 0.0
        %2490 = vmatpush1.xpose.msra.mxu0 0.0
        %2491 = vmatprep.subr.mxu0 0.0
        %2492 = vmatpush1.xpose.msra.mxu0 0.0
        %2493 = vmatprep.subr.mxu0 0.0
        %2494 = vmatpush1.xpose.msra.mxu0 0.0
        %2495 = vmatprep.subr.mxu0 0.0
        %2496 = vmatpush1.xpose.msra.mxu0 0.0
        %2497 = vmatprep.subr.mxu0 0.0
        %2498 = vmatpush1.xpose.msra.mxu0 0.0
        %2499 = vmatprep.subr.mxu0 0.0
        %2500 = vmatpush1.xpose.msra.mxu0 0.0
        %2501 = vmatprep.subr.mxu0 0.0
        %2502 = vmatpush1.xpose.msra.mxu0 0.0
        %2503 = vmatprep.subr.mxu0 0.0
        %2504 = vmatpush1.xpose.msra.mxu0 0.0
        %2505 = vmatprep.subr.mxu0 0.0
        %2506 = vmatpush1.xpose.msra.mxu0 0.0
        %2507 = vmatprep.subr.mxu0 0.0
        %2508 = vmatpush1.xpose.msra.mxu0 0.0
        %2509 = vmatprep.subr.mxu0 0.0
        %2510 = vmatpush1.xpose.msra.mxu0 0.0
        %2511 = vmatprep.subr.mxu0 0.0
        %2512 = vmatpush1.xpose.msra.mxu0 %v2479
        %2513 = vmatprep.subr.mxu0 0.0
        %2514 = vmatpush2.xpose.msra.mxu0 0.0
        %2515 = vmatprep.subr.mxu0 0.0
        %2516 = vmatpush2.xpose.msra.mxu0 0.0
        %2517 = vmatprep.subr.mxu0 0.0
        %2518 = vmatpush2.xpose.msra.mxu0 0.0
        %2519 = vmatprep.subr.mxu0 0.0
        %2520 = vmatpush2.xpose.msra.mxu0 0.0
        %2521 = vmatprep.subr.mxu0 0.0
        %2522 = vmatpush2.xpose.msra.mxu0 0.0
        %2523 = vmatprep.subr.mxu0 0.0
        %2524 = vmatpush2.xpose.msra.mxu0 0.0
        %2525 = vmatprep.subr.mxu0 0.0
        %2526 = vmatpush2.xpose.msra.mxu0 0.0
        %2527 = vmatprep.subr.mxu0 0.0
        %2528 = vmatpush2.xpose.msra.mxu0 0.0
        %2529 = vmatprep.subr.mxu0 0.0
        %2530 = vmatpush2.xpose.msra.mxu0 0.0
        %2531 = vmatprep.subr.mxu0 0.0
        %2532 = vmatpush2.xpose.msra.mxu0 0.0
        %2533 = vmatprep.subr.mxu0 0.0
        %2534 = vmatpush2.xpose.msra.mxu0 0.0
        %2535 = vmatprep.subr.mxu0 0.0
        %2536 = vmatpush2.xpose.msra.mxu0 0.0
        %2537 = vmatprep.subr.mxu0 0.0
        %2538 = vmatpush2.xpose.msra.mxu0 0.0
        %2539 = vmatprep.subr.mxu0 0.0
        %2540 = vmatpush2.xpose.msra.mxu0 0.0
        %2541 = vmatprep.subr.mxu0 0.0
        %2542 = vmatpush2.xpose.msra.mxu0 0.0
        %2543 = vmatprep.subr.mxu0 0.0
        %2544 = vmatpush2.xpose.msra.mxu0 0.0
        %2545 = vmatprep.mubr.f32.mxu0 0.0
        %2546 = vmatmul.mubr.f32.gmra.mxu0 %v2477
        %v2547 = vpop.f32.mrf.mxu0
        %v2548 = vadd.f32 0.0, %v2547
        %v2549 = vpop.f32.mrf.mxu0
        %2550 = vdwg.mxu0
        %2551 = vrot.lane.b32.xlu0 %v1135, 112
        %v2552 = vpop.permute.xlu0 %2551
        %2553 = vrot.lane.b32.xlu0 %v1135, 80
        %v2554 = vpop.permute.xlu0 %2553
        %v2555 = vsel %vm1151, %v2552, 0
        %v2557 = vsel %vm1151, %v2554, 0
        %2559 = vmatprep.subr.mxu0 0.0
        %2560 = vmatpush1.xpose.msra.mxu0 0.0
        %2561 = vmatprep.subr.mxu0 0.0
        %2562 = vmatpush1.xpose.msra.mxu0 0.0
        %2563 = vmatprep.subr.mxu0 0.0
        %2564 = vmatpush1.xpose.msra.mxu0 0.0
        %2565 = vmatprep.subr.mxu0 0.0
        %2566 = vmatpush1.xpose.msra.mxu0 0.0
        %2567 = vmatprep.subr.mxu0 0.0
        %2568 = vmatpush1.xpose.msra.mxu0 0.0
        %2569 = vmatprep.subr.mxu0 0.0
        %2570 = vmatpush1.xpose.msra.mxu0 0.0
        %2571 = vmatprep.subr.mxu0 0.0
        %2572 = vmatpush1.xpose.msra.mxu0 0.0
        %2573 = vmatprep.subr.mxu0 0.0
        %2574 = vmatpush1.xpose.msra.mxu0 0.0
        %2575 = vmatprep.subr.mxu0 0.0
        %2576 = vmatpush1.xpose.msra.mxu0 0.0
        %2577 = vmatprep.subr.mxu0 0.0
        %2578 = vmatpush1.xpose.msra.mxu0 0.0
        %2579 = vmatprep.subr.mxu0 0.0
        %2580 = vmatpush1.xpose.msra.mxu0 0.0
        %2581 = vmatprep.subr.mxu0 0.0
        %2582 = vmatpush1.xpose.msra.mxu0 0.0
        %2583 = vmatprep.subr.mxu0 0.0
        %2584 = vmatpush1.xpose.msra.mxu0 0.0
        %2585 = vmatprep.subr.mxu0 0.0
        %2586 = vmatpush1.xpose.msra.mxu0 0.0
        %2587 = vmatprep.subr.mxu0 0.0
        %2588 = vmatpush1.xpose.msra.mxu0 0.0
        %2589 = vmatprep.subr.mxu0 0.0
        %2590 = vmatpush1.xpose.msra.mxu0 %v2557
        %2591 = vmatprep.subr.mxu0 0.0
        %2592 = vmatpush2.xpose.msra.mxu0 0.0
        %2593 = vmatprep.subr.mxu0 0.0
        %2594 = vmatpush2.xpose.msra.mxu0 0.0
        %2595 = vmatprep.subr.mxu0 0.0
        %2596 = vmatpush2.xpose.msra.mxu0 0.0
        %2597 = vmatprep.subr.mxu0 0.0
        %2598 = vmatpush2.xpose.msra.mxu0 0.0
        %2599 = vmatprep.subr.mxu0 0.0
        %2600 = vmatpush2.xpose.msra.mxu0 0.0
        %2601 = vmatprep.subr.mxu0 0.0
        %2602 = vmatpush2.xpose.msra.mxu0 0.0
        %2603 = vmatprep.subr.mxu0 0.0
        %2604 = vmatpush2.xpose.msra.mxu0 0.0
        %2605 = vmatprep.subr.mxu0 0.0
        %2606 = vmatpush2.xpose.msra.mxu0 0.0
        %2607 = vmatprep.subr.mxu0 0.0
        %2608 = vmatpush2.xpose.msra.mxu0 0.0
        %2609 = vmatprep.subr.mxu0 0.0
        %2610 = vmatpush2.xpose.msra.mxu0 0.0
        %2611 = vmatprep.subr.mxu0 0.0
        %2612 = vmatpush2.xpose.msra.mxu0 0.0
        %2613 = vmatprep.subr.mxu0 0.0
        %2614 = vmatpush2.xpose.msra.mxu0 0.0
        %2615 = vmatprep.subr.mxu0 0.0
        %2616 = vmatpush2.xpose.msra.mxu0 0.0
        %2617 = vmatprep.subr.mxu0 0.0
        %2618 = vmatpush2.xpose.msra.mxu0 0.0
        %2619 = vmatprep.subr.mxu0 0.0
        %2620 = vmatpush2.xpose.msra.mxu0 0.0
        %2621 = vmatprep.subr.mxu0 0.0
        %2622 = vmatpush2.xpose.msra.mxu0 0.0
        %2623 = vmatprep.mubr.f32.mxu0 0.0
        %2624 = vmatmul.mubr.f32.gmra.mxu0 %v2555
        %v2625 = vpop.f32.mrf.mxu0
        %v2626 = vadd.f32 0.0, %v2625
        %v2627 = vpop.f32.mrf.mxu0
        %2628 = vdwg.mxu0
        %2629 = vrot.lane.b32.xlu0 %v1140, 112
        %v2630 = vpop.permute.xlu0 %2629
        %2631 = vrot.lane.b32.xlu0 %v1140, 80
        %v2632 = vpop.permute.xlu0 %2631
        %v2633 = vsel %vm1151, %v2630, 0
        %v2635 = vsel %vm1151, %v2632, 0
        %2637 = vmatprep.subr.mxu0 0.0
        %2638 = vmatpush1.xpose.msra.mxu0 0.0
        %2639 = vmatprep.subr.mxu0 0.0
        %2640 = vmatpush1.xpose.msra.mxu0 0.0
        %2641 = vmatprep.subr.mxu0 0.0
        %2642 = vmatpush1.xpose.msra.mxu0 0.0
        %2643 = vmatprep.subr.mxu0 0.0
        %2644 = vmatpush1.xpose.msra.mxu0 0.0
        %2645 = vmatprep.subr.mxu0 0.0
        %2646 = vmatpush1.xpose.msra.mxu0 0.0
        %2647 = vmatprep.subr.mxu0 0.0
        %2648 = vmatpush1.xpose.msra.mxu0 0.0
        %2649 = vmatprep.subr.mxu0 0.0
        %2650 = vmatpush1.xpose.msra.mxu0 0.0
        %2651 = vmatprep.subr.mxu0 0.0
        %2652 = vmatpush1.xpose.msra.mxu0 0.0
        %2653 = vmatprep.subr.mxu0 0.0
        %2654 = vmatpush1.xpose.msra.mxu0 0.0
        %2655 = vmatprep.subr.mxu0 0.0
        %2656 = vmatpush1.xpose.msra.mxu0 0.0
        %2657 = vmatprep.subr.mxu0 0.0
        %2658 = vmatpush1.xpose.msra.mxu0 0.0
        %2659 = vmatprep.subr.mxu0 0.0
        %2660 = vmatpush1.xpose.msra.mxu0 0.0
        %2661 = vmatprep.subr.mxu0 0.0
        %2662 = vmatpush1.xpose.msra.mxu0 0.0
        %2663 = vmatprep.subr.mxu0 0.0
        %2664 = vmatpush1.xpose.msra.mxu0 0.0
        %2665 = vmatprep.subr.mxu0 0.0
        %2666 = vmatpush1.xpose.msra.mxu0 0.0
        %2667 = vmatprep.subr.mxu0 0.0
        %2668 = vmatpush1.xpose.msra.mxu0 %v2635
        %2669 = vmatprep.subr.mxu0 0.0
        %2670 = vmatpush2.xpose.msra.mxu0 0.0
        %2671 = vmatprep.subr.mxu0 0.0
        %2672 = vmatpush2.xpose.msra.mxu0 0.0
        %2673 = vmatprep.subr.mxu0 0.0
        %2674 = vmatpush2.xpose.msra.mxu0 0.0
        %2675 = vmatprep.subr.mxu0 0.0
        %2676 = vmatpush2.xpose.msra.mxu0 0.0
        %2677 = vmatprep.subr.mxu0 0.0
        %2678 = vmatpush2.xpose.msra.mxu0 0.0
        %2679 = vmatprep.subr.mxu0 0.0
        %2680 = vmatpush2.xpose.msra.mxu0 0.0
        %2681 = vmatprep.subr.mxu0 0.0
        %2682 = vmatpush2.xpose.msra.mxu0 0.0
        %2683 = vmatprep.subr.mxu0 0.0
        %2684 = vmatpush2.xpose.msra.mxu0 0.0
        %2685 = vmatprep.subr.mxu0 0.0
        %2686 = vmatpush2.xpose.msra.mxu0 0.0
        %2687 = vmatprep.subr.mxu0 0.0
        %2688 = vmatpush2.xpose.msra.mxu0 0.0
        %2689 = vmatprep.subr.mxu0 0.0
        %2690 = vmatpush2.xpose.msra.mxu0 0.0
        %2691 = vmatprep.subr.mxu0 0.0
        %2692 = vmatpush2.xpose.msra.mxu0 0.0
        %2693 = vmatprep.subr.mxu0 0.0
        %2694 = vmatpush2.xpose.msra.mxu0 0.0
        %2695 = vmatprep.subr.mxu0 0.0
        %2696 = vmatpush2.xpose.msra.mxu0 0.0
        %2697 = vmatprep.subr.mxu0 0.0
        %2698 = vmatpush2.xpose.msra.mxu0 0.0
        %2699 = vmatprep.subr.mxu0 0.0
        %2700 = vmatpush2.xpose.msra.mxu0 0.0
        %2701 = vmatprep.mubr.f32.mxu0 0.0
        %2702 = vmatmul.mubr.f32.gmra.mxu0 %v2633
        %v2703 = vpop.f32.mrf.mxu0
        %v2704 = vadd.f32 0.0, %v2703
        %v2705 = vpop.f32.mrf.mxu0
        %2706 = vdwg.mxu0
        %2707 = vrot.lane.b32.xlu0 %v1145, 112
        %v2708 = vpop.permute.xlu0 %2707
        %2709 = vrot.lane.b32.xlu0 %v1145, 80
        %v2710 = vpop.permute.xlu0 %2709
        %v2711 = vsel %vm1151, %v2708, 0
        %v2713 = vsel %vm1151, %v2710, 0
        %2715 = vmatprep.subr.mxu0 0.0
        %2716 = vmatpush1.xpose.msra.mxu0 0.0
        %2717 = vmatprep.subr.mxu0 0.0
        %2718 = vmatpush1.xpose.msra.mxu0 0.0
        %2719 = vmatprep.subr.mxu0 0.0
        %2720 = vmatpush1.xpose.msra.mxu0 0.0
        %2721 = vmatprep.subr.mxu0 0.0
        %2722 = vmatpush1.xpose.msra.mxu0 0.0
        %2723 = vmatprep.subr.mxu0 0.0
        %2724 = vmatpush1.xpose.msra.mxu0 0.0
        %2725 = vmatprep.subr.mxu0 0.0
        %2726 = vmatpush1.xpose.msra.mxu0 0.0
        %2727 = vmatprep.subr.mxu0 0.0
        %2728 = vmatpush1.xpose.msra.mxu0 0.0
        %2729 = vmatprep.subr.mxu0 0.0
        %2730 = vmatpush1.xpose.msra.mxu0 0.0
        %2731 = vmatprep.subr.mxu0 0.0
        %2732 = vmatpush1.xpose.msra.mxu0 0.0
        %2733 = vmatprep.subr.mxu0 0.0
        %2734 = vmatpush1.xpose.msra.mxu0 0.0
        %2735 = vmatprep.subr.mxu0 0.0
        %2736 = vmatpush1.xpose.msra.mxu0 0.0
        %2737 = vmatprep.subr.mxu0 0.0
        %2738 = vmatpush1.xpose.msra.mxu0 0.0
        %2739 = vmatprep.subr.mxu0 0.0
        %2740 = vmatpush1.xpose.msra.mxu0 0.0
        %2741 = vmatprep.subr.mxu0 0.0
        %2742 = vmatpush1.xpose.msra.mxu0 0.0
        %2743 = vmatprep.subr.mxu0 0.0
        %2744 = vmatpush1.xpose.msra.mxu0 0.0
        %2745 = vmatprep.subr.mxu0 0.0
        %2746 = vmatpush1.xpose.msra.mxu0 %v2713
        %2747 = vmatprep.subr.mxu0 0.0
        %2748 = vmatpush2.xpose.msra.mxu0 0.0
        %2749 = vmatprep.subr.mxu0 0.0
        %2750 = vmatpush2.xpose.msra.mxu0 0.0
        %2751 = vmatprep.subr.mxu0 0.0
        %2752 = vmatpush2.xpose.msra.mxu0 0.0
        %2753 = vmatprep.subr.mxu0 0.0
        %2754 = vmatpush2.xpose.msra.mxu0 0.0
        %2755 = vmatprep.subr.mxu0 0.0
        %2756 = vmatpush2.xpose.msra.mxu0 0.0
        %2757 = vmatprep.subr.mxu0 0.0
        %2758 = vmatpush2.xpose.msra.mxu0 0.0
        %2759 = vmatprep.subr.mxu0 0.0
        %2760 = vmatpush2.xpose.msra.mxu0 0.0
        %2761 = vmatprep.subr.mxu0 0.0
        %2762 = vmatpush2.xpose.msra.mxu0 0.0
        %2763 = vmatprep.subr.mxu0 0.0
        %2764 = vmatpush2.xpose.msra.mxu0 0.0
        %2765 = vmatprep.subr.mxu0 0.0
        %2766 = vmatpush2.xpose.msra.mxu0 0.0
        %2767 = vmatprep.subr.mxu0 0.0
        %2768 = vmatpush2.xpose.msra.mxu0 0.0
        %2769 = vmatprep.subr.mxu0 0.0
        %2770 = vmatpush2.xpose.msra.mxu0 0.0
        %2771 = vmatprep.subr.mxu0 0.0
        %2772 = vmatpush2.xpose.msra.mxu0 0.0
        %2773 = vmatprep.subr.mxu0 0.0
        %2774 = vmatpush2.xpose.msra.mxu0 0.0
        %2775 = vmatprep.subr.mxu0 0.0
        %2776 = vmatpush2.xpose.msra.mxu0 0.0
        %2777 = vmatprep.subr.mxu0 0.0
        %2778 = vmatpush2.xpose.msra.mxu0 0.0
        %2779 = vmatprep.mubr.f32.mxu0 0.0
        %2780 = vmatmul.mubr.f32.gmra.mxu0 %v2711
        %v2781 = vpop.f32.mrf.mxu0
        %v2782 = vadd.f32 0.0, %v2781
        %v2783 = vpop.f32.mrf.mxu0
        %2784 = vdwg.mxu0
        %v2785 = vmul.f32 %v2548, 0.35355338
        %v2786 = vmul.f32 %v2626, 0.35355338
        %v2787 = vmul.f32 %v2704, 0.35355338
        %v2788 = vmul.f32 %v2782, 0.35355338
        %v2789 = vsel %vm1151, %v2785, -inf
        %2790 = vmax.xlane.f32.xlu0 %v2789
        %v2791 = vpop.xlane.xlu0 %2790
        %v2792 = vsel %vm1151, %v2786, -inf
        %2793 = vmax.xlane.f32.xlu0 %v2792
        %v2794 = vpop.xlane.xlu0 %2793
        %v2795 = vsel %vm1151, %v2787, -inf
        %2796 = vmax.xlane.f32.xlu0 %v2795
        %v2797 = vpop.xlane.xlu0 %2796
        %v2798 = vsel %vm1151, %v2788, -inf
        %2799 = vmax.xlane.f32.xlu0 %v2798
        %v2800 = vpop.xlane.xlu0 %2799
        %v2801 = vsub.f32 %v2785, %v2791
        %v2802 = vsub.f32 %v2786, %v2794
        %v2803 = vsub.f32 %v2787, %v2797
        %v2804 = vsub.f32 %v2788, %v2800
        %v2805 = vmul.f32 %v2801, 1.442695
        %v2806 = vpow.pop %v2805
        %v2807 = vmul.f32 %v2802, 1.442695
        %v2808 = vpow.pop %v2807
        %v2809 = vmul.f32 %v2803, 1.442695
        %v2810 = vpow.pop %v2809
        %v2811 = vmul.f32 %v2804, 1.442695
        %v2812 = vpow.pop %v2811
        %v2813 = vsel %vm1151, %v2806, 0.0
        %2814 = vadd.xlane.f32.xlu0 %v2813
        %v2815 = vpop.xlane.xlu0 %2814
        %v2816 = vsel %vm1151, %v2808, 0.0
        %2817 = vadd.xlane.f32.xlu0 %v2816
        %v2818 = vpop.xlane.xlu0 %2817
        %v2819 = vsel %vm1151, %v2810, 0.0
        %2820 = vadd.xlane.f32.xlu0 %v2819
        %v2821 = vpop.xlane.xlu0 %2820
        %v2822 = vsel %vm1151, %v2812, 0.0
        %2823 = vadd.xlane.f32.xlu0 %v2822
        %v2824 = vpop.xlane.xlu0 %2823
        %v2825 = vrcp.pop %v2815
        %v2826 = vmul.f32 %v2806, %v2825
        %v2827 = vrcp.pop %v2818
        %v2828 = vmul.f32 %v2808, %v2827
        %v2829 = vrcp.pop %v2821
        %v2830 = vmul.f32 %v2810, %v2829
        %v2831 = vrcp.pop %v2824
        %v2832 = vmul.f32 %v2812, %v2831
        %2833 = vrot.lane.b32.xlu0 %v1130, 48
        %v2834 = vpop.permute.xlu0 %2833
        %v2837 = vsel %vm1151, %v2826, 0
        %2839 = vmatprep.subr.mxu0 0.0
        %2840 = vmatpush1.msra.mxu0 0.0
        %2841 = vmatprep.subr.mxu0 0.0
        %2842 = vmatpush1.msra.mxu0 0.0
        %2843 = vmatprep.subr.mxu0 0.0
        %2844 = vmatpush1.msra.mxu0 0.0
        %2845 = vmatprep.subr.mxu0 0.0
        %2846 = vmatpush1.msra.mxu0 0.0
        %2847 = vmatprep.subr.mxu0 0.0
        %2848 = vmatpush1.msra.mxu0 0.0
        %2849 = vmatprep.subr.mxu0 0.0
        %2850 = vmatpush1.msra.mxu0 0.0
        %2851 = vmatprep.subr.mxu0 0.0
        %2852 = vmatpush1.msra.mxu0 0.0
        %2853 = vmatprep.subr.mxu0 0.0
        %2854 = vmatpush1.msra.mxu0 0.0
        %2855 = vmatprep.subr.mxu0 0.0
        %2856 = vmatpush1.msra.mxu0 0.0
        %2857 = vmatprep.subr.mxu0 0.0
        %2858 = vmatpush1.msra.mxu0 0.0
        %2859 = vmatprep.subr.mxu0 0.0
        %2860 = vmatpush1.msra.mxu0 0.0
        %2861 = vmatprep.subr.mxu0 0.0
        %2862 = vmatpush1.msra.mxu0 0.0
        %2863 = vmatprep.subr.mxu0 0.0
        %2864 = vmatpush1.msra.mxu0 0.0
        %2865 = vmatprep.subr.mxu0 0.0
        %2866 = vmatpush1.msra.mxu0 0.0
        %2867 = vmatprep.subr.mxu0 0.0
        %2868 = vmatpush1.msra.mxu0 0.0
        %2869 = vmatprep.subr.mxu0 0.0
        %2870 = vmatpush1.msra.mxu0 %v2834
        %2871 = vmatprep.subr.mxu0 0.0
        %2872 = vmatpush2.msra.mxu0 0.0
        %2873 = vmatprep.subr.mxu0 0.0
        %2874 = vmatpush2.msra.mxu0 0.0
        %2875 = vmatprep.subr.mxu0 0.0
        %2876 = vmatpush2.msra.mxu0 0.0
        %2877 = vmatprep.subr.mxu0 0.0
        %2878 = vmatpush2.msra.mxu0 0.0
        %2879 = vmatprep.subr.mxu0 0.0
        %2880 = vmatpush2.msra.mxu0 0.0
        %2881 = vmatprep.subr.mxu0 0.0
        %2882 = vmatpush2.msra.mxu0 0.0
        %2883 = vmatprep.subr.mxu0 0.0
        %2884 = vmatpush2.msra.mxu0 0.0
        %2885 = vmatprep.subr.mxu0 0.0
        %2886 = vmatpush2.msra.mxu0 0.0
        %2887 = vmatprep.subr.mxu0 0.0
        %2888 = vmatpush2.msra.mxu0 0.0
        %2889 = vmatprep.subr.mxu0 0.0
        %2890 = vmatpush2.msra.mxu0 0.0
        %2891 = vmatprep.subr.mxu0 0.0
        %2892 = vmatpush2.msra.mxu0 0.0
        %2893 = vmatprep.subr.mxu0 0.0
        %2894 = vmatpush2.msra.mxu0 0.0
        %2895 = vmatprep.subr.mxu0 0.0
        %2896 = vmatpush2.msra.mxu0 0.0
        %2897 = vmatprep.subr.mxu0 0.0
        %2898 = vmatpush2.msra.mxu0 0.0
        %2899 = vmatprep.subr.mxu0 0.0
        %2900 = vmatpush2.msra.mxu0 0.0
        %2901 = vmatprep.subr.mxu0 0.0
        %2902 = vmatpush2.msra.mxu0 0.0
        %2903 = vmatprep.mubr.f32.mxu0 0.0
        %2904 = vmatmul.mubr.f32.gmra.mxu0 %v2837
        %v2905 = vpop.f32.mrf.mxu0
        %v2906 = vadd.f32 0.0, %v2905
        %v2907 = vpop.f32.mrf.mxu0
        %2908 = vdwg.mxu0
        %2909 = vrot.lane.b32.xlu0 %v1135, 48
        %v2910 = vpop.permute.xlu0 %2909
        %v2913 = vsel %vm1151, %v2828, 0
        %2915 = vmatprep.subr.mxu0 0.0
        %2916 = vmatpush1.msra.mxu0 0.0
        %2917 = vmatprep.subr.mxu0 0.0
        %2918 = vmatpush1.msra.mxu0 0.0
        %2919 = vmatprep.subr.mxu0 0.0
        %2920 = vmatpush1.msra.mxu0 0.0
        %2921 = vmatprep.subr.mxu0 0.0
        %2922 = vmatpush1.msra.mxu0 0.0
        %2923 = vmatprep.subr.mxu0 0.0
        %2924 = vmatpush1.msra.mxu0 0.0
        %2925 = vmatprep.subr.mxu0 0.0
        %2926 = vmatpush1.msra.mxu0 0.0
        %2927 = vmatprep.subr.mxu0 0.0
        %2928 = vmatpush1.msra.mxu0 0.0
        %2929 = vmatprep.subr.mxu0 0.0
        %2930 = vmatpush1.msra.mxu0 0.0
        %2931 = vmatprep.subr.mxu0 0.0
        %2932 = vmatpush1.msra.mxu0 0.0
        %2933 = vmatprep.subr.mxu0 0.0
        %2934 = vmatpush1.msra.mxu0 0.0
        %2935 = vmatprep.subr.mxu0 0.0
        %2936 = vmatpush1.msra.mxu0 0.0
        %2937 = vmatprep.subr.mxu0 0.0
        %2938 = vmatpush1.msra.mxu0 0.0
        %2939 = vmatprep.subr.mxu0 0.0
        %2940 = vmatpush1.msra.mxu0 0.0
        %2941 = vmatprep.subr.mxu0 0.0
        %2942 = vmatpush1.msra.mxu0 0.0
        %2943 = vmatprep.subr.mxu0 0.0
        %2944 = vmatpush1.msra.mxu0 0.0
        %2945 = vmatprep.subr.mxu0 0.0
        %2946 = vmatpush1.msra.mxu0 %v2910
        %2947 = vmatprep.subr.mxu0 0.0
        %2948 = vmatpush2.msra.mxu0 0.0
        %2949 = vmatprep.subr.mxu0 0.0
        %2950 = vmatpush2.msra.mxu0 0.0
        %2951 = vmatprep.subr.mxu0 0.0
        %2952 = vmatpush2.msra.mxu0 0.0
        %2953 = vmatprep.subr.mxu0 0.0
        %2954 = vmatpush2.msra.mxu0 0.0
        %2955 = vmatprep.subr.mxu0 0.0
        %2956 = vmatpush2.msra.mxu0 0.0
        %2957 = vmatprep.subr.mxu0 0.0
        %2958 = vmatpush2.msra.mxu0 0.0
        %2959 = vmatprep.subr.mxu0 0.0
        %2960 = vmatpush2.msra.mxu0 0.0
        %2961 = vmatprep.subr.mxu0 0.0
        %2962 = vmatpush2.msra.mxu0 0.0
        %2963 = vmatprep.subr.mxu0 0.0
        %2964 = vmatpush2.msra.mxu0 0.0
        %2965 = vmatprep.subr.mxu0 0.0
        %2966 = vmatpush2.msra.mxu0 0.0
        %2967 = vmatprep.subr.mxu0 0.0
        %2968 = vmatpush2.msra.mxu0 0.0
        %2969 = vmatprep.subr.mxu0 0.0
        %2970 = vmatpush2.msra.mxu0 0.0
        %2971 = vmatprep.subr.mxu0 0.0
        %2972 = vmatpush2.msra.mxu0 0.0
        %2973 = vmatprep.subr.mxu0 0.0
        %2974 = vmatpush2.msra.mxu0 0.0
        %2975 = vmatprep.subr.mxu0 0.0
        %2976 = vmatpush2.msra.mxu0 0.0
        %2977 = vmatprep.subr.mxu0 0.0
        %2978 = vmatpush2.msra.mxu0 0.0
        %2979 = vmatprep.mubr.f32.mxu0 0.0
        %2980 = vmatmul.mubr.f32.gmra.mxu0 %v2913
        %v2981 = vpop.f32.mrf.mxu0
        %v2982 = vadd.f32 0.0, %v2981
        %v2983 = vpop.f32.mrf.mxu0
        %2984 = vdwg.mxu0
        %2985 = vrot.lane.b32.xlu0 %v1140, 48
        %v2986 = vpop.permute.xlu0 %2985
        %v2989 = vsel %vm1151, %v2830, 0
        %2991 = vmatprep.subr.mxu0 0.0
        %2992 = vmatpush1.msra.mxu0 0.0
        %2993 = vmatprep.subr.mxu0 0.0
        %2994 = vmatpush1.msra.mxu0 0.0
        %2995 = vmatprep.subr.mxu0 0.0
        %2996 = vmatpush1.msra.mxu0 0.0
        %2997 = vmatprep.subr.mxu0 0.0
        %2998 = vmatpush1.msra.mxu0 0.0
        %2999 = vmatprep.subr.mxu0 0.0
        %3000 = vmatpush1.msra.mxu0 0.0
        %3001 = vmatprep.subr.mxu0 0.0
        %3002 = vmatpush1.msra.mxu0 0.0
        %3003 = vmatprep.subr.mxu0 0.0
        %3004 = vmatpush1.msra.mxu0 0.0
        %3005 = vmatprep.subr.mxu0 0.0
        %3006 = vmatpush1.msra.mxu0 0.0
        %3007 = vmatprep.subr.mxu0 0.0
        %3008 = vmatpush1.msra.mxu0 0.0
        %3009 = vmatprep.subr.mxu0 0.0
        %3010 = vmatpush1.msra.mxu0 0.0
        %3011 = vmatprep.subr.mxu0 0.0
        %3012 = vmatpush1.msra.mxu0 0.0
        %3013 = vmatprep.subr.mxu0 0.0
        %3014 = vmatpush1.msra.mxu0 0.0
        %3015 = vmatprep.subr.mxu0 0.0
        %3016 = vmatpush1.msra.mxu0 0.0
        %3017 = vmatprep.subr.mxu0 0.0
        %3018 = vmatpush1.msra.mxu0 0.0
        %3019 = vmatprep.subr.mxu0 0.0
        %3020 = vmatpush1.msra.mxu0 0.0
        %3021 = vmatprep.subr.mxu0 0.0
        %3022 = vmatpush1.msra.mxu0 %v2986
        %3023 = vmatprep.subr.mxu0 0.0
        %3024 = vmatpush2.msra.mxu0 0.0
        %3025 = vmatprep.subr.mxu0 0.0
        %3026 = vmatpush2.msra.mxu0 0.0
        %3027 = vmatprep.subr.mxu0 0.0
        %3028 = vmatpush2.msra.mxu0 0.0
        %3029 = vmatprep.subr.mxu0 0.0
        %3030 = vmatpush2.msra.mxu0 0.0
        %3031 = vmatprep.subr.mxu0 0.0
        %3032 = vmatpush2.msra.mxu0 0.0
        %3033 = vmatprep.subr.mxu0 0.0
        %3034 = vmatpush2.msra.mxu0 0.0
        %3035 = vmatprep.subr.mxu0 0.0
        %3036 = vmatpush2.msra.mxu0 0.0
        %3037 = vmatprep.subr.mxu0 0.0
        %3038 = vmatpush2.msra.mxu0 0.0
        %3039 = vmatprep.subr.mxu0 0.0
        %3040 = vmatpush2.msra.mxu0 0.0
        %3041 = vmatprep.subr.mxu0 0.0
        %3042 = vmatpush2.msra.mxu0 0.0
        %3043 = vmatprep.subr.mxu0 0.0
        %3044 = vmatpush2.msra.mxu0 0.0
        %3045 = vmatprep.subr.mxu0 0.0
        %3046 = vmatpush2.msra.mxu0 0.0
        %3047 = vmatprep.subr.mxu0 0.0
        %3048 = vmatpush2.msra.mxu0 0.0
        %3049 = vmatprep.subr.mxu0 0.0
        %3050 = vmatpush2.msra.mxu0 0.0
        %3051 = vmatprep.subr.mxu0 0.0
        %3052 = vmatpush2.msra.mxu0 0.0
        %3053 = vmatprep.subr.mxu0 0.0
        %3054 = vmatpush2.msra.mxu0 0.0
        %3055 = vmatprep.mubr.f32.mxu0 0.0
        %3056 = vmatmul.mubr.f32.gmra.mxu0 %v2989
        %v3057 = vpop.f32.mrf.mxu0
        %v3058 = vadd.f32 0.0, %v3057
        %v3059 = vpop.f32.mrf.mxu0
        %3060 = vdwg.mxu0
        %3061 = vrot.lane.b32.xlu0 %v1145, 48
        %v3062 = vpop.permute.xlu0 %3061
        %v3065 = vsel %vm1151, %v2832, 0
        %3067 = vmatprep.subr.mxu0 0.0
        %3068 = vmatpush1.msra.mxu0 0.0
        %3069 = vmatprep.subr.mxu0 0.0
        %3070 = vmatpush1.msra.mxu0 0.0
        %3071 = vmatprep.subr.mxu0 0.0
        %3072 = vmatpush1.msra.mxu0 0.0
        %3073 = vmatprep.subr.mxu0 0.0
        %3074 = vmatpush1.msra.mxu0 0.0
        %3075 = vmatprep.subr.mxu0 0.0
        %3076 = vmatpush1.msra.mxu0 0.0
        %3077 = vmatprep.subr.mxu0 0.0
        %3078 = vmatpush1.msra.mxu0 0.0
        %3079 = vmatprep.subr.mxu0 0.0
        %3080 = vmatpush1.msra.mxu0 0.0
        %3081 = vmatprep.subr.mxu0 0.0
        %3082 = vmatpush1.msra.mxu0 0.0
        %3083 = vmatprep.subr.mxu0 0.0
        %3084 = vmatpush1.msra.mxu0 0.0
        %3085 = vmatprep.subr.mxu0 0.0
        %3086 = vmatpush1.msra.mxu0 0.0
        %3087 = vmatprep.subr.mxu0 0.0
        %3088 = vmatpush1.msra.mxu0 0.0
        %3089 = vmatprep.subr.mxu0 0.0
        %3090 = vmatpush1.msra.mxu0 0.0
        %3091 = vmatprep.subr.mxu0 0.0
        %3092 = vmatpush1.msra.mxu0 0.0
        %3093 = vmatprep.subr.mxu0 0.0
        %3094 = vmatpush1.msra.mxu0 0.0
        %3095 = vmatprep.subr.mxu0 0.0
        %3096 = vmatpush1.msra.mxu0 0.0
        %3097 = vmatprep.subr.mxu0 0.0
        %3098 = vmatpush1.msra.mxu0 %v3062
        %3099 = vmatprep.subr.mxu0 0.0
        %3100 = vmatpush2.msra.mxu0 0.0
        %3101 = vmatprep.subr.mxu0 0.0
        %3102 = vmatpush2.msra.mxu0 0.0
        %3103 = vmatprep.subr.mxu0 0.0
        %3104 = vmatpush2.msra.mxu0 0.0
        %3105 = vmatprep.subr.mxu0 0.0
        %3106 = vmatpush2.msra.mxu0 0.0
        %3107 = vmatprep.subr.mxu0 0.0
        %3108 = vmatpush2.msra.mxu0 0.0
        %3109 = vmatprep.subr.mxu0 0.0
        %3110 = vmatpush2.msra.mxu0 0.0
        %3111 = vmatprep.subr.mxu0 0.0
        %3112 = vmatpush2.msra.mxu0 0.0
        %3113 = vmatprep.subr.mxu0 0.0
        %3114 = vmatpush2.msra.mxu0 0.0
        %3115 = vmatprep.subr.mxu0 0.0
        %3116 = vmatpush2.msra.mxu0 0.0
        %3117 = vmatprep.subr.mxu0 0.0
        %3118 = vmatpush2.msra.mxu0 0.0
        %3119 = vmatprep.subr.mxu0 0.0
        %3120 = vmatpush2.msra.mxu0 0.0
        %3121 = vmatprep.subr.mxu0 0.0
        %3122 = vmatpush2.msra.mxu0 0.0
        %3123 = vmatprep.subr.mxu0 0.0
        %3124 = vmatpush2.msra.mxu0 0.0
        %3125 = vmatprep.subr.mxu0 0.0
        %3126 = vmatpush2.msra.mxu0 0.0
        %3127 = vmatprep.subr.mxu0 0.0
        %3128 = vmatpush2.msra.mxu0 0.0
        %3129 = vmatprep.subr.mxu0 0.0
        %3130 = vmatpush2.msra.mxu0 0.0
        %3131 = vmatprep.mubr.f32.mxu0 0.0
        %3132 = vmatmul.mubr.f32.gmra.mxu0 %v3065
        %v3133 = vpop.f32.mrf.mxu0
        %v3134 = vadd.f32 0.0, %v3133
        %v3135 = vpop.f32.mrf.mxu0
        %3136 = vdwg.mxu0
        %3137 = vrot.lane.b32.xlu0 %v1130, 104
        %v3138 = vpop.permute.xlu0 %3137
        %3139 = vrot.lane.b32.xlu0 %v1130, 72
        %v3140 = vpop.permute.xlu0 %3139
        %v3141 = vsel %vm1151, %v3138, 0
        %v3143 = vsel %vm1151, %v3140, 0
        %3145 = vmatprep.subr.mxu0 0.0
        %3146 = vmatpush1.xpose.msra.mxu0 0.0
        %3147 = vmatprep.subr.mxu0 0.0
        %3148 = vmatpush1.xpose.msra.mxu0 0.0
        %3149 = vmatprep.subr.mxu0 0.0
        %3150 = vmatpush1.xpose.msra.mxu0 0.0
        %3151 = vmatprep.subr.mxu0 0.0
        %3152 = vmatpush1.xpose.msra.mxu0 0.0
        %3153 = vmatprep.subr.mxu0 0.0
        %3154 = vmatpush1.xpose.msra.mxu0 0.0
        %3155 = vmatprep.subr.mxu0 0.0
        %3156 = vmatpush1.xpose.msra.mxu0 0.0
        %3157 = vmatprep.subr.mxu0 0.0
        %3158 = vmatpush1.xpose.msra.mxu0 0.0
        %3159 = vmatprep.subr.mxu0 0.0
        %3160 = vmatpush1.xpose.msra.mxu0 0.0
        %3161 = vmatprep.subr.mxu0 0.0
        %3162 = vmatpush1.xpose.msra.mxu0 0.0
        %3163 = vmatprep.subr.mxu0 0.0
        %3164 = vmatpush1.xpose.msra.mxu0 0.0
        %3165 = vmatprep.subr.mxu0 0.0
        %3166 = vmatpush1.xpose.msra.mxu0 0.0
        %3167 = vmatprep.subr.mxu0 0.0
        %3168 = vmatpush1.xpose.msra.mxu0 0.0
        %3169 = vmatprep.subr.mxu0 0.0
        %3170 = vmatpush1.xpose.msra.mxu0 0.0
        %3171 = vmatprep.subr.mxu0 0.0
        %3172 = vmatpush1.xpose.msra.mxu0 0.0
        %3173 = vmatprep.subr.mxu0 0.0
        %3174 = vmatpush1.xpose.msra.mxu0 0.0
        %3175 = vmatprep.subr.mxu0 0.0
        %3176 = vmatpush1.xpose.msra.mxu0 %v3143
        %3177 = vmatprep.subr.mxu0 0.0
        %3178 = vmatpush2.xpose.msra.mxu0 0.0
        %3179 = vmatprep.subr.mxu0 0.0
        %3180 = vmatpush2.xpose.msra.mxu0 0.0
        %3181 = vmatprep.subr.mxu0 0.0
        %3182 = vmatpush2.xpose.msra.mxu0 0.0
        %3183 = vmatprep.subr.mxu0 0.0
        %3184 = vmatpush2.xpose.msra.mxu0 0.0
        %3185 = vmatprep.subr.mxu0 0.0
        %3186 = vmatpush2.xpose.msra.mxu0 0.0
        %3187 = vmatprep.subr.mxu0 0.0
        %3188 = vmatpush2.xpose.msra.mxu0 0.0
        %3189 = vmatprep.subr.mxu0 0.0
        %3190 = vmatpush2.xpose.msra.mxu0 0.0
        %3191 = vmatprep.subr.mxu0 0.0
        %3192 = vmatpush2.xpose.msra.mxu0 0.0
        %3193 = vmatprep.subr.mxu0 0.0
        %3194 = vmatpush2.xpose.msra.mxu0 0.0
        %3195 = vmatprep.subr.mxu0 0.0
        %3196 = vmatpush2.xpose.msra.mxu0 0.0
        %3197 = vmatprep.subr.mxu0 0.0
        %3198 = vmatpush2.xpose.msra.mxu0 0.0
        %3199 = vmatprep.subr.mxu0 0.0
        %3200 = vmatpush2.xpose.msra.mxu0 0.0
        %3201 = vmatprep.subr.mxu0 0.0
        %3202 = vmatpush2.xpose.msra.mxu0 0.0
        %3203 = vmatprep.subr.mxu0 0.0
        %3204 = vmatpush2.xpose.msra.mxu0 0.0
        %3205 = vmatprep.subr.mxu0 0.0
        %3206 = vmatpush2.xpose.msra.mxu0 0.0
        %3207 = vmatprep.subr.mxu0 0.0
        %3208 = vmatpush2.xpose.msra.mxu0 0.0
        %3209 = vmatprep.mubr.f32.mxu0 0.0
        %3210 = vmatmul.mubr.f32.gmra.mxu0 %v3141
        %v3211 = vpop.f32.mrf.mxu0
        %v3212 = vadd.f32 0.0, %v3211
        %v3213 = vpop.f32.mrf.mxu0
        %3214 = vdwg.mxu0
        %3215 = vrot.lane.b32.xlu0 %v1135, 104
        %v3216 = vpop.permute.xlu0 %3215
        %3217 = vrot.lane.b32.xlu0 %v1135, 72
        %v3218 = vpop.permute.xlu0 %3217
        %v3219 = vsel %vm1151, %v3216, 0
        %v3221 = vsel %vm1151, %v3218, 0
        %3223 = vmatprep.subr.mxu0 0.0
        %3224 = vmatpush1.xpose.msra.mxu0 0.0
        %3225 = vmatprep.subr.mxu0 0.0
        %3226 = vmatpush1.xpose.msra.mxu0 0.0
        %3227 = vmatprep.subr.mxu0 0.0
        %3228 = vmatpush1.xpose.msra.mxu0 0.0
        %3229 = vmatprep.subr.mxu0 0.0
        %3230 = vmatpush1.xpose.msra.mxu0 0.0
        %3231 = vmatprep.subr.mxu0 0.0
        %3232 = vmatpush1.xpose.msra.mxu0 0.0
        %3233 = vmatprep.subr.mxu0 0.0
        %3234 = vmatpush1.xpose.msra.mxu0 0.0
        %3235 = vmatprep.subr.mxu0 0.0
        %3236 = vmatpush1.xpose.msra.mxu0 0.0
        %3237 = vmatprep.subr.mxu0 0.0
        %3238 = vmatpush1.xpose.msra.mxu0 0.0
        %3239 = vmatprep.subr.mxu0 0.0
        %3240 = vmatpush1.xpose.msra.mxu0 0.0
        %3241 = vmatprep.subr.mxu0 0.0
        %3242 = vmatpush1.xpose.msra.mxu0 0.0
        %3243 = vmatprep.subr.mxu0 0.0
        %3244 = vmatpush1.xpose.msra.mxu0 0.0
        %3245 = vmatprep.subr.mxu0 0.0
        %3246 = vmatpush1.xpose.msra.mxu0 0.0
        %3247 = vmatprep.subr.mxu0 0.0
        %3248 = vmatpush1.xpose.msra.mxu0 0.0
        %3249 = vmatprep.subr.mxu0 0.0
        %3250 = vmatpush1.xpose.msra.mxu0 0.0
        %3251 = vmatprep.subr.mxu0 0.0
        %3252 = vmatpush1.xpose.msra.mxu0 0.0
        %3253 = vmatprep.subr.mxu0 0.0
        %3254 = vmatpush1.xpose.msra.mxu0 %v3221
        %3255 = vmatprep.subr.mxu0 0.0
        %3256 = vmatpush2.xpose.msra.mxu0 0.0
        %3257 = vmatprep.subr.mxu0 0.0
        %3258 = vmatpush2.xpose.msra.mxu0 0.0
        %3259 = vmatprep.subr.mxu0 0.0
        %3260 = vmatpush2.xpose.msra.mxu0 0.0
        %3261 = vmatprep.subr.mxu0 0.0
        %3262 = vmatpush2.xpose.msra.mxu0 0.0
        %3263 = vmatprep.subr.mxu0 0.0
        %3264 = vmatpush2.xpose.msra.mxu0 0.0
        %3265 = vmatprep.subr.mxu0 0.0
        %3266 = vmatpush2.xpose.msra.mxu0 0.0
        %3267 = vmatprep.subr.mxu0 0.0
        %3268 = vmatpush2.xpose.msra.mxu0 0.0
        %3269 = vmatprep.subr.mxu0 0.0
        %3270 = vmatpush2.xpose.msra.mxu0 0.0
        %3271 = vmatprep.subr.mxu0 0.0
        %3272 = vmatpush2.xpose.msra.mxu0 0.0
        %3273 = vmatprep.subr.mxu0 0.0
        %3274 = vmatpush2.xpose.msra.mxu0 0.0
        %3275 = vmatprep.subr.mxu0 0.0
        %3276 = vmatpush2.xpose.msra.mxu0 0.0
        %3277 = vmatprep.subr.mxu0 0.0
        %3278 = vmatpush2.xpose.msra.mxu0 0.0
        %3279 = vmatprep.subr.mxu0 0.0
        %3280 = vmatpush2.xpose.msra.mxu0 0.0
        %3281 = vmatprep.subr.mxu0 0.0
        %3282 = vmatpush2.xpose.msra.mxu0 0.0
        %3283 = vmatprep.subr.mxu0 0.0
        %3284 = vmatpush2.xpose.msra.mxu0 0.0
        %3285 = vmatprep.subr.mxu0 0.0
        %3286 = vmatpush2.xpose.msra.mxu0 0.0
        %3287 = vmatprep.mubr.f32.mxu0 0.0
        %3288 = vmatmul.mubr.f32.gmra.mxu0 %v3219
        %v3289 = vpop.f32.mrf.mxu0
        %v3290 = vadd.f32 0.0, %v3289
        %v3291 = vpop.f32.mrf.mxu0
        %3292 = vdwg.mxu0
        %3293 = vrot.lane.b32.xlu0 %v1140, 104
        %v3294 = vpop.permute.xlu0 %3293
        %3295 = vrot.lane.b32.xlu0 %v1140, 72
        %v3296 = vpop.permute.xlu0 %3295
        %v3297 = vsel %vm1151, %v3294, 0
        %v3299 = vsel %vm1151, %v3296, 0
        %3301 = vmatprep.subr.mxu0 0.0
        %3302 = vmatpush1.xpose.msra.mxu0 0.0
        %3303 = vmatprep.subr.mxu0 0.0
        %3304 = vmatpush1.xpose.msra.mxu0 0.0
        %3305 = vmatprep.subr.mxu0 0.0
        %3306 = vmatpush1.xpose.msra.mxu0 0.0
        %3307 = vmatprep.subr.mxu0 0.0
        %3308 = vmatpush1.xpose.msra.mxu0 0.0
        %3309 = vmatprep.subr.mxu0 0.0
        %3310 = vmatpush1.xpose.msra.mxu0 0.0
        %3311 = vmatprep.subr.mxu0 0.0
        %3312 = vmatpush1.xpose.msra.mxu0 0.0
        %3313 = vmatprep.subr.mxu0 0.0
        %3314 = vmatpush1.xpose.msra.mxu0 0.0
        %3315 = vmatprep.subr.mxu0 0.0
        %3316 = vmatpush1.xpose.msra.mxu0 0.0
        %3317 = vmatprep.subr.mxu0 0.0
        %3318 = vmatpush1.xpose.msra.mxu0 0.0
        %3319 = vmatprep.subr.mxu0 0.0
        %3320 = vmatpush1.xpose.msra.mxu0 0.0
        %3321 = vmatprep.subr.mxu0 0.0
        %3322 = vmatpush1.xpose.msra.mxu0 0.0
        %3323 = vmatprep.subr.mxu0 0.0
        %3324 = vmatpush1.xpose.msra.mxu0 0.0
        %3325 = vmatprep.subr.mxu0 0.0
        %3326 = vmatpush1.xpose.msra.mxu0 0.0
        %3327 = vmatprep.subr.mxu0 0.0
        %3328 = vmatpush1.xpose.msra.mxu0 0.0
        %3329 = vmatprep.subr.mxu0 0.0
        %3330 = vmatpush1.xpose.msra.mxu0 0.0
        %3331 = vmatprep.subr.mxu0 0.0
        %3332 = vmatpush1.xpose.msra.mxu0 %v3299
        %3333 = vmatprep.subr.mxu0 0.0
        %3334 = vmatpush2.xpose.msra.mxu0 0.0
        %3335 = vmatprep.subr.mxu0 0.0
        %3336 = vmatpush2.xpose.msra.mxu0 0.0
        %3337 = vmatprep.subr.mxu0 0.0
        %3338 = vmatpush2.xpose.msra.mxu0 0.0
        %3339 = vmatprep.subr.mxu0 0.0
        %3340 = vmatpush2.xpose.msra.mxu0 0.0
        %3341 = vmatprep.subr.mxu0 0.0
        %3342 = vmatpush2.xpose.msra.mxu0 0.0
        %3343 = vmatprep.subr.mxu0 0.0
        %3344 = vmatpush2.xpose.msra.mxu0 0.0
        %3345 = vmatprep.subr.mxu0 0.0
        %3346 = vmatpush2.xpose.msra.mxu0 0.0
        %3347 = vmatprep.subr.mxu0 0.0
        %3348 = vmatpush2.xpose.msra.mxu0 0.0
        %3349 = vmatprep.subr.mxu0 0.0
        %3350 = vmatpush2.xpose.msra.mxu0 0.0
        %3351 = vmatprep.subr.mxu0 0.0
        %3352 = vmatpush2.xpose.msra.mxu0 0.0
        %3353 = vmatprep.subr.mxu0 0.0
        %3354 = vmatpush2.xpose.msra.mxu0 0.0
        %3355 = vmatprep.subr.mxu0 0.0
        %3356 = vmatpush2.xpose.msra.mxu0 0.0
        %3357 = vmatprep.subr.mxu0 0.0
        %3358 = vmatpush2.xpose.msra.mxu0 0.0
        %3359 = vmatprep.subr.mxu0 0.0
        %3360 = vmatpush2.xpose.msra.mxu0 0.0
        %3361 = vmatprep.subr.mxu0 0.0
        %3362 = vmatpush2.xpose.msra.mxu0 0.0
        %3363 = vmatprep.subr.mxu0 0.0
        %3364 = vmatpush2.xpose.msra.mxu0 0.0
        %3365 = vmatprep.mubr.f32.mxu0 0.0
        %3366 = vmatmul.mubr.f32.gmra.mxu0 %v3297
        %v3367 = vpop.f32.mrf.mxu0
        %v3368 = vadd.f32 0.0, %v3367
        %v3369 = vpop.f32.mrf.mxu0
        %3370 = vdwg.mxu0
        %3371 = vrot.lane.b32.xlu0 %v1145, 104
        %v3372 = vpop.permute.xlu0 %3371
        %3373 = vrot.lane.b32.xlu0 %v1145, 72
        %v3374 = vpop.permute.xlu0 %3373
        %v3375 = vsel %vm1151, %v3372, 0
        %v3377 = vsel %vm1151, %v3374, 0
        %3379 = vmatprep.subr.mxu0 0.0
        %3380 = vmatpush1.xpose.msra.mxu0 0.0
        %3381 = vmatprep.subr.mxu0 0.0
        %3382 = vmatpush1.xpose.msra.mxu0 0.0
        %3383 = vmatprep.subr.mxu0 0.0
        %3384 = vmatpush1.xpose.msra.mxu0 0.0
        %3385 = vmatprep.subr.mxu0 0.0
        %3386 = vmatpush1.xpose.msra.mxu0 0.0
        %3387 = vmatprep.subr.mxu0 0.0
        %3388 = vmatpush1.xpose.msra.mxu0 0.0
        %3389 = vmatprep.subr.mxu0 0.0
        %3390 = vmatpush1.xpose.msra.mxu0 0.0
        %3391 = vmatprep.subr.mxu0 0.0
        %3392 = vmatpush1.xpose.msra.mxu0 0.0
        %3393 = vmatprep.subr.mxu0 0.0
        %3394 = vmatpush1.xpose.msra.mxu0 0.0
        %3395 = vmatprep.subr.mxu0 0.0
        %3396 = vmatpush1.xpose.msra.mxu0 0.0
        %3397 = vmatprep.subr.mxu0 0.0
        %3398 = vmatpush1.xpose.msra.mxu0 0.0
        %3399 = vmatprep.subr.mxu0 0.0
        %3400 = vmatpush1.xpose.msra.mxu0 0.0
        %3401 = vmatprep.subr.mxu0 0.0
        %3402 = vmatpush1.xpose.msra.mxu0 0.0
        %3403 = vmatprep.subr.mxu0 0.0
        %3404 = vmatpush1.xpose.msra.mxu0 0.0
        %3405 = vmatprep.subr.mxu0 0.0
        %3406 = vmatpush1.xpose.msra.mxu0 0.0
        %3407 = vmatprep.subr.mxu0 0.0
        %3408 = vmatpush1.xpose.msra.mxu0 0.0
        %3409 = vmatprep.subr.mxu0 0.0
        %3410 = vmatpush1.xpose.msra.mxu0 %v3377
        %3411 = vmatprep.subr.mxu0 0.0
        %3412 = vmatpush2.xpose.msra.mxu0 0.0
        %3413 = vmatprep.subr.mxu0 0.0
        %3414 = vmatpush2.xpose.msra.mxu0 0.0
        %3415 = vmatprep.subr.mxu0 0.0
        %3416 = vmatpush2.xpose.msra.mxu0 0.0
        %3417 = vmatprep.subr.mxu0 0.0
        %3418 = vmatpush2.xpose.msra.mxu0 0.0
        %3419 = vmatprep.subr.mxu0 0.0
        %3420 = vmatpush2.xpose.msra.mxu0 0.0
        %3421 = vmatprep.subr.mxu0 0.0
        %3422 = vmatpush2.xpose.msra.mxu0 0.0
        %3423 = vmatprep.subr.mxu0 0.0
        %3424 = vmatpush2.xpose.msra.mxu0 0.0
        %3425 = vmatprep.subr.mxu0 0.0
        %3426 = vmatpush2.xpose.msra.mxu0 0.0
        %3427 = vmatprep.subr.mxu0 0.0
        %3428 = vmatpush2.xpose.msra.mxu0 0.0
        %3429 = vmatprep.subr.mxu0 0.0
        %3430 = vmatpush2.xpose.msra.mxu0 0.0
        %3431 = vmatprep.subr.mxu0 0.0
        %3432 = vmatpush2.xpose.msra.mxu0 0.0
        %3433 = vmatprep.subr.mxu0 0.0
        %3434 = vmatpush2.xpose.msra.mxu0 0.0
        %3435 = vmatprep.subr.mxu0 0.0
        %3436 = vmatpush2.xpose.msra.mxu0 0.0
        %3437 = vmatprep.subr.mxu0 0.0
        %3438 = vmatpush2.xpose.msra.mxu0 0.0
        %3439 = vmatprep.subr.mxu0 0.0
        %3440 = vmatpush2.xpose.msra.mxu0 0.0
        %3441 = vmatprep.subr.mxu0 0.0
        %3442 = vmatpush2.xpose.msra.mxu0 0.0
        %3443 = vmatprep.mubr.f32.mxu0 0.0
        %3444 = vmatmul.mubr.f32.gmra.mxu0 %v3375
        %v3445 = vpop.f32.mrf.mxu0
        %v3446 = vadd.f32 0.0, %v3445
        %v3447 = vpop.f32.mrf.mxu0
        %3448 = vdwg.mxu0
        %v3449 = vmul.f32 %v3212, 0.35355338
        %v3450 = vmul.f32 %v3290, 0.35355338
        %v3451 = vmul.f32 %v3368, 0.35355338
        %v3452 = vmul.f32 %v3446, 0.35355338
        %v3453 = vsel %vm1151, %v3449, -inf
        %3454 = vmax.xlane.f32.xlu0 %v3453
        %v3455 = vpop.xlane.xlu0 %3454
        %v3456 = vsel %vm1151, %v3450, -inf
        %3457 = vmax.xlane.f32.xlu0 %v3456
        %v3458 = vpop.xlane.xlu0 %3457
        %v3459 = vsel %vm1151, %v3451, -inf
        %3460 = vmax.xlane.f32.xlu0 %v3459
        %v3461 = vpop.xlane.xlu0 %3460
        %v3462 = vsel %vm1151, %v3452, -inf
        %3463 = vmax.xlane.f32.xlu0 %v3462
        %v3464 = vpop.xlane.xlu0 %3463
        %v3465 = vsub.f32 %v3449, %v3455
        %v3466 = vsub.f32 %v3450, %v3458
        %v3467 = vsub.f32 %v3451, %v3461
        %v3468 = vsub.f32 %v3452, %v3464
        %v3469 = vmul.f32 %v3465, 1.442695
        %v3470 = vpow.pop %v3469
        %v3471 = vmul.f32 %v3466, 1.442695
        %v3472 = vpow.pop %v3471
        %v3473 = vmul.f32 %v3467, 1.442695
        %v3474 = vpow.pop %v3473
        %v3475 = vmul.f32 %v3468, 1.442695
        %v3476 = vpow.pop %v3475
        %v3477 = vsel %vm1151, %v3470, 0.0
        %3478 = vadd.xlane.f32.xlu0 %v3477
        %v3479 = vpop.xlane.xlu0 %3478
        %v3480 = vsel %vm1151, %v3472, 0.0
        %3481 = vadd.xlane.f32.xlu0 %v3480
        %v3482 = vpop.xlane.xlu0 %3481
        %v3483 = vsel %vm1151, %v3474, 0.0
        %3484 = vadd.xlane.f32.xlu0 %v3483
        %v3485 = vpop.xlane.xlu0 %3484
        %v3486 = vsel %vm1151, %v3476, 0.0
        %3487 = vadd.xlane.f32.xlu0 %v3486
        %v3488 = vpop.xlane.xlu0 %3487
        %v3489 = vrcp.pop %v3479
        %v3490 = vmul.f32 %v3470, %v3489
        %v3491 = vrcp.pop %v3482
        %v3492 = vmul.f32 %v3472, %v3491
        %v3493 = vrcp.pop %v3485
        %v3494 = vmul.f32 %v3474, %v3493
        %v3495 = vrcp.pop %v3488
        %v3496 = vmul.f32 %v3476, %v3495
        %3497 = vrot.lane.b32.xlu0 %v1130, 40
        %v3498 = vpop.permute.xlu0 %3497
        %v3501 = vsel %vm1151, %v3490, 0
        %3503 = vmatprep.subr.mxu0 0.0
        %3504 = vmatpush1.msra.mxu0 0.0
        %3505 = vmatprep.subr.mxu0 0.0
        %3506 = vmatpush1.msra.mxu0 0.0
        %3507 = vmatprep.subr.mxu0 0.0
        %3508 = vmatpush1.msra.mxu0 0.0
        %3509 = vmatprep.subr.mxu0 0.0
        %3510 = vmatpush1.msra.mxu0 0.0
        %3511 = vmatprep.subr.mxu0 0.0
        %3512 = vmatpush1.msra.mxu0 0.0
        %3513 = vmatprep.subr.mxu0 0.0
        %3514 = vmatpush1.msra.mxu0 0.0
        %3515 = vmatprep.subr.mxu0 0.0
        %3516 = vmatpush1.msra.mxu0 0.0
        %3517 = vmatprep.subr.mxu0 0.0
        %3518 = vmatpush1.msra.mxu0 0.0
        %3519 = vmatprep.subr.mxu0 0.0
        %3520 = vmatpush1.msra.mxu0 0.0
        %3521 = vmatprep.subr.mxu0 0.0
        %3522 = vmatpush1.msra.mxu0 0.0
        %3523 = vmatprep.subr.mxu0 0.0
        %3524 = vmatpush1.msra.mxu0 0.0
        %3525 = vmatprep.subr.mxu0 0.0
        %3526 = vmatpush1.msra.mxu0 0.0
        %3527 = vmatprep.subr.mxu0 0.0
        %3528 = vmatpush1.msra.mxu0 0.0
        %3529 = vmatprep.subr.mxu0 0.0
        %3530 = vmatpush1.msra.mxu0 0.0
        %3531 = vmatprep.subr.mxu0 0.0
        %3532 = vmatpush1.msra.mxu0 0.0
        %3533 = vmatprep.subr.mxu0 0.0
        %3534 = vmatpush1.msra.mxu0 %v3498
        %3535 = vmatprep.subr.mxu0 0.0
        %3536 = vmatpush2.msra.mxu0 0.0
        %3537 = vmatprep.subr.mxu0 0.0
        %3538 = vmatpush2.msra.mxu0 0.0
        %3539 = vmatprep.subr.mxu0 0.0
        %3540 = vmatpush2.msra.mxu0 0.0
        %3541 = vmatprep.subr.mxu0 0.0
        %3542 = vmatpush2.msra.mxu0 0.0
        %3543 = vmatprep.subr.mxu0 0.0
        %3544 = vmatpush2.msra.mxu0 0.0
        %3545 = vmatprep.subr.mxu0 0.0
        %3546 = vmatpush2.msra.mxu0 0.0
        %3547 = vmatprep.subr.mxu0 0.0
        %3548 = vmatpush2.msra.mxu0 0.0
        %3549 = vmatprep.subr.mxu0 0.0
        %3550 = vmatpush2.msra.mxu0 0.0
        %3551 = vmatprep.subr.mxu0 0.0
        %3552 = vmatpush2.msra.mxu0 0.0
        %3553 = vmatprep.subr.mxu0 0.0
        %3554 = vmatpush2.msra.mxu0 0.0
        %3555 = vmatprep.subr.mxu0 0.0
        %3556 = vmatpush2.msra.mxu0 0.0
        %3557 = vmatprep.subr.mxu0 0.0
        %3558 = vmatpush2.msra.mxu0 0.0
        %3559 = vmatprep.subr.mxu0 0.0
        %3560 = vmatpush2.msra.mxu0 0.0
        %3561 = vmatprep.subr.mxu0 0.0
        %3562 = vmatpush2.msra.mxu0 0.0
        %3563 = vmatprep.subr.mxu0 0.0
        %3564 = vmatpush2.msra.mxu0 0.0
        %3565 = vmatprep.subr.mxu0 0.0
        %3566 = vmatpush2.msra.mxu0 0.0
        %3567 = vmatprep.mubr.f32.mxu0 0.0
        %3568 = vmatmul.mubr.f32.gmra.mxu0 %v3501
        %v3569 = vpop.f32.mrf.mxu0
        %v3570 = vadd.f32 0.0, %v3569
        %v3571 = vpop.f32.mrf.mxu0
        %3572 = vdwg.mxu0
        %3573 = vrot.lane.b32.xlu0 %v1135, 40
        %v3574 = vpop.permute.xlu0 %3573
        %v3577 = vsel %vm1151, %v3492, 0
        %3579 = vmatprep.subr.mxu0 0.0
        %3580 = vmatpush1.msra.mxu0 0.0
        %3581 = vmatprep.subr.mxu0 0.0
        %3582 = vmatpush1.msra.mxu0 0.0
        %3583 = vmatprep.subr.mxu0 0.0
        %3584 = vmatpush1.msra.mxu0 0.0
        %3585 = vmatprep.subr.mxu0 0.0
        %3586 = vmatpush1.msra.mxu0 0.0
        %3587 = vmatprep.subr.mxu0 0.0
        %3588 = vmatpush1.msra.mxu0 0.0
        %3589 = vmatprep.subr.mxu0 0.0
        %3590 = vmatpush1.msra.mxu0 0.0
        %3591 = vmatprep.subr.mxu0 0.0
        %3592 = vmatpush1.msra.mxu0 0.0
        %3593 = vmatprep.subr.mxu0 0.0
        %3594 = vmatpush1.msra.mxu0 0.0
        %3595 = vmatprep.subr.mxu0 0.0
        %3596 = vmatpush1.msra.mxu0 0.0
        %3597 = vmatprep.subr.mxu0 0.0
        %3598 = vmatpush1.msra.mxu0 0.0
        %3599 = vmatprep.subr.mxu0 0.0
        %3600 = vmatpush1.msra.mxu0 0.0
        %3601 = vmatprep.subr.mxu0 0.0
        %3602 = vmatpush1.msra.mxu0 0.0
        %3603 = vmatprep.subr.mxu0 0.0
        %3604 = vmatpush1.msra.mxu0 0.0
        %3605 = vmatprep.subr.mxu0 0.0
        %3606 = vmatpush1.msra.mxu0 0.0
        %3607 = vmatprep.subr.mxu0 0.0
        %3608 = vmatpush1.msra.mxu0 0.0
        %3609 = vmatprep.subr.mxu0 0.0
        %3610 = vmatpush1.msra.mxu0 %v3574
        %3611 = vmatprep.subr.mxu0 0.0
        %3612 = vmatpush2.msra.mxu0 0.0
        %3613 = vmatprep.subr.mxu0 0.0
        %3614 = vmatpush2.msra.mxu0 0.0
        %3615 = vmatprep.subr.mxu0 0.0
        %3616 = vmatpush2.msra.mxu0 0.0
        %3617 = vmatprep.subr.mxu0 0.0
        %3618 = vmatpush2.msra.mxu0 0.0
        %3619 = vmatprep.subr.mxu0 0.0
        %3620 = vmatpush2.msra.mxu0 0.0
        %3621 = vmatprep.subr.mxu0 0.0
        %3622 = vmatpush2.msra.mxu0 0.0
        %3623 = vmatprep.subr.mxu0 0.0
        %3624 = vmatpush2.msra.mxu0 0.0
        %3625 = vmatprep.subr.mxu0 0.0
        %3626 = vmatpush2.msra.mxu0 0.0
        %3627 = vmatprep.subr.mxu0 0.0
        %3628 = vmatpush2.msra.mxu0 0.0
        %3629 = vmatprep.subr.mxu0 0.0
        %3630 = vmatpush2.msra.mxu0 0.0
        %3631 = vmatprep.subr.mxu0 0.0
        %3632 = vmatpush2.msra.mxu0 0.0
        %3633 = vmatprep.subr.mxu0 0.0
        %3634 = vmatpush2.msra.mxu0 0.0
        %3635 = vmatprep.subr.mxu0 0.0
        %3636 = vmatpush2.msra.mxu0 0.0
        %3637 = vmatprep.subr.mxu0 0.0
        %3638 = vmatpush2.msra.mxu0 0.0
        %3639 = vmatprep.subr.mxu0 0.0
        %3640 = vmatpush2.msra.mxu0 0.0
        %3641 = vmatprep.subr.mxu0 0.0
        %3642 = vmatpush2.msra.mxu0 0.0
        %3643 = vmatprep.mubr.f32.mxu0 0.0
        %3644 = vmatmul.mubr.f32.gmra.mxu0 %v3577
        %v3645 = vpop.f32.mrf.mxu0
        %v3646 = vadd.f32 0.0, %v3645
        %v3647 = vpop.f32.mrf.mxu0
        %3648 = vdwg.mxu0
        %3649 = vrot.lane.b32.xlu0 %v1140, 40
        %v3650 = vpop.permute.xlu0 %3649
        %v3653 = vsel %vm1151, %v3494, 0
        %3655 = vmatprep.subr.mxu0 0.0
        %3656 = vmatpush1.msra.mxu0 0.0
        %3657 = vmatprep.subr.mxu0 0.0
        %3658 = vmatpush1.msra.mxu0 0.0
        %3659 = vmatprep.subr.mxu0 0.0
        %3660 = vmatpush1.msra.mxu0 0.0
        %3661 = vmatprep.subr.mxu0 0.0
        %3662 = vmatpush1.msra.mxu0 0.0
        %3663 = vmatprep.subr.mxu0 0.0
        %3664 = vmatpush1.msra.mxu0 0.0
        %3665 = vmatprep.subr.mxu0 0.0
        %3666 = vmatpush1.msra.mxu0 0.0
        %3667 = vmatprep.subr.mxu0 0.0
        %3668 = vmatpush1.msra.mxu0 0.0
        %3669 = vmatprep.subr.mxu0 0.0
        %3670 = vmatpush1.msra.mxu0 0.0
        %3671 = vmatprep.subr.mxu0 0.0
        %3672 = vmatpush1.msra.mxu0 0.0
        %3673 = vmatprep.subr.mxu0 0.0
        %3674 = vmatpush1.msra.mxu0 0.0
        %3675 = vmatprep.subr.mxu0 0.0
        %3676 = vmatpush1.msra.mxu0 0.0
        %3677 = vmatprep.subr.mxu0 0.0
        %3678 = vmatpush1.msra.mxu0 0.0
        %3679 = vmatprep.subr.mxu0 0.0
        %3680 = vmatpush1.msra.mxu0 0.0
        %3681 = vmatprep.subr.mxu0 0.0
        %3682 = vmatpush1.msra.mxu0 0.0
        %3683 = vmatprep.subr.mxu0 0.0
        %3684 = vmatpush1.msra.mxu0 0.0
        %3685 = vmatprep.subr.mxu0 0.0
        %3686 = vmatpush1.msra.mxu0 %v3650
        %3687 = vmatprep.subr.mxu0 0.0
        %3688 = vmatpush2.msra.mxu0 0.0
        %3689 = vmatprep.subr.mxu0 0.0
        %3690 = vmatpush2.msra.mxu0 0.0
        %3691 = vmatprep.subr.mxu0 0.0
        %3692 = vmatpush2.msra.mxu0 0.0
        %3693 = vmatprep.subr.mxu0 0.0
        %3694 = vmatpush2.msra.mxu0 0.0
        %3695 = vmatprep.subr.mxu0 0.0
        %3696 = vmatpush2.msra.mxu0 0.0
        %3697 = vmatprep.subr.mxu0 0.0
        %3698 = vmatpush2.msra.mxu0 0.0
        %3699 = vmatprep.subr.mxu0 0.0
        %3700 = vmatpush2.msra.mxu0 0.0
        %3701 = vmatprep.subr.mxu0 0.0
        %3702 = vmatpush2.msra.mxu0 0.0
        %3703 = vmatprep.subr.mxu0 0.0
        %3704 = vmatpush2.msra.mxu0 0.0
        %3705 = vmatprep.subr.mxu0 0.0
        %3706 = vmatpush2.msra.mxu0 0.0
        %3707 = vmatprep.subr.mxu0 0.0
        %3708 = vmatpush2.msra.mxu0 0.0
        %3709 = vmatprep.subr.mxu0 0.0
        %3710 = vmatpush2.msra.mxu0 0.0
        %3711 = vmatprep.subr.mxu0 0.0
        %3712 = vmatpush2.msra.mxu0 0.0
        %3713 = vmatprep.subr.mxu0 0.0
        %3714 = vmatpush2.msra.mxu0 0.0
        %3715 = vmatprep.subr.mxu0 0.0
        %3716 = vmatpush2.msra.mxu0 0.0
        %3717 = vmatprep.subr.mxu0 0.0
        %3718 = vmatpush2.msra.mxu0 0.0
        %3719 = vmatprep.mubr.f32.mxu0 0.0
        %3720 = vmatmul.mubr.f32.gmra.mxu0 %v3653
        %v3721 = vpop.f32.mrf.mxu0
        %v3722 = vadd.f32 0.0, %v3721
        %v3723 = vpop.f32.mrf.mxu0
        %3724 = vdwg.mxu0
        %3725 = vrot.lane.b32.xlu0 %v1145, 40
        %v3726 = vpop.permute.xlu0 %3725
        %v3729 = vsel %vm1151, %v3496, 0
        %3731 = vmatprep.subr.mxu0 0.0
        %3732 = vmatpush1.msra.mxu0 0.0
        %3733 = vmatprep.subr.mxu0 0.0
        %3734 = vmatpush1.msra.mxu0 0.0
        %3735 = vmatprep.subr.mxu0 0.0
        %3736 = vmatpush1.msra.mxu0 0.0
        %3737 = vmatprep.subr.mxu0 0.0
        %3738 = vmatpush1.msra.mxu0 0.0
        %3739 = vmatprep.subr.mxu0 0.0
        %3740 = vmatpush1.msra.mxu0 0.0
        %3741 = vmatprep.subr.mxu0 0.0
        %3742 = vmatpush1.msra.mxu0 0.0
        %3743 = vmatprep.subr.mxu0 0.0
        %3744 = vmatpush1.msra.mxu0 0.0
        %3745 = vmatprep.subr.mxu0 0.0
        %3746 = vmatpush1.msra.mxu0 0.0
        %3747 = vmatprep.subr.mxu0 0.0
        %3748 = vmatpush1.msra.mxu0 0.0
        %3749 = vmatprep.subr.mxu0 0.0
        %3750 = vmatpush1.msra.mxu0 0.0
        %3751 = vmatprep.subr.mxu0 0.0
        %3752 = vmatpush1.msra.mxu0 0.0
        %3753 = vmatprep.subr.mxu0 0.0
        %3754 = vmatpush1.msra.mxu0 0.0
        %3755 = vmatprep.subr.mxu0 0.0
        %3756 = vmatpush1.msra.mxu0 0.0
        %3757 = vmatprep.subr.mxu0 0.0
        %3758 = vmatpush1.msra.mxu0 0.0
        %3759 = vmatprep.subr.mxu0 0.0
        %3760 = vmatpush1.msra.mxu0 0.0
        %3761 = vmatprep.subr.mxu0 0.0
        %3762 = vmatpush1.msra.mxu0 %v3726
        %3763 = vmatprep.subr.mxu0 0.0
        %3764 = vmatpush2.msra.mxu0 0.0
        %3765 = vmatprep.subr.mxu0 0.0
        %3766 = vmatpush2.msra.mxu0 0.0
        %3767 = vmatprep.subr.mxu0 0.0
        %3768 = vmatpush2.msra.mxu0 0.0
        %3769 = vmatprep.subr.mxu0 0.0
        %3770 = vmatpush2.msra.mxu0 0.0
        %3771 = vmatprep.subr.mxu0 0.0
        %3772 = vmatpush2.msra.mxu0 0.0
        %3773 = vmatprep.subr.mxu0 0.0
        %3774 = vmatpush2.msra.mxu0 0.0
        %3775 = vmatprep.subr.mxu0 0.0
        %3776 = vmatpush2.msra.mxu0 0.0
        %3777 = vmatprep.subr.mxu0 0.0
        %3778 = vmatpush2.msra.mxu0 0.0
        %3779 = vmatprep.subr.mxu0 0.0
        %3780 = vmatpush2.msra.mxu0 0.0
        %3781 = vmatprep.subr.mxu0 0.0
        %3782 = vmatpush2.msra.mxu0 0.0
        %3783 = vmatprep.subr.mxu0 0.0
        %3784 = vmatpush2.msra.mxu0 0.0
        %3785 = vmatprep.subr.mxu0 0.0
        %3786 = vmatpush2.msra.mxu0 0.0
        %3787 = vmatprep.subr.mxu0 0.0
        %3788 = vmatpush2.msra.mxu0 0.0
        %3789 = vmatprep.subr.mxu0 0.0
        %3790 = vmatpush2.msra.mxu0 0.0
        %3791 = vmatprep.subr.mxu0 0.0
        %3792 = vmatpush2.msra.mxu0 0.0
        %3793 = vmatprep.subr.mxu0 0.0
        %3794 = vmatpush2.msra.mxu0 0.0
        %3795 = vmatprep.mubr.f32.mxu0 0.0
        %3796 = vmatmul.mubr.f32.gmra.mxu0 %v3729
        %v3797 = vpop.f32.mrf.mxu0
        %v3798 = vadd.f32 0.0, %v3797
        %v3799 = vpop.f32.mrf.mxu0
        %3800 = vdwg.mxu0
        %3805 = vrot.lane.b32.xlu0 %v2242, 8
        %v3806 = vpop.permute.xlu0 %3805
        %3807 = vrot.lane.b32.xlu0 %v2318, 8
        %v3808 = vpop.permute.xlu0 %3807
        %3809 = vrot.lane.b32.xlu0 %v2394, 8
        %v3810 = vpop.permute.xlu0 %3809
        %3811 = vrot.lane.b32.xlu0 %v2470, 8
        %v3812 = vpop.permute.xlu0 %3811
        %3821 = vrot.lane.b32.xlu0 %v2906, 16
        %v3822 = vpop.permute.xlu0 %3821
        %3823 = vrot.lane.b32.xlu0 %v2982, 16
        %v3824 = vpop.permute.xlu0 %3823
        %3825 = vrot.lane.b32.xlu0 %v3058, 16
        %v3826 = vpop.permute.xlu0 %3825
        %3827 = vrot.lane.b32.xlu0 %v3134, 16
        %v3828 = vpop.permute.xlu0 %3827
        %3837 = vrot.lane.b32.xlu0 %v3570, 24
        %v3838 = vpop.permute.xlu0 %3837
        %3839 = vrot.lane.b32.xlu0 %v3646, 24
        %v3840 = vpop.permute.xlu0 %3839
        %3841 = vrot.lane.b32.xlu0 %v3722, 24
        %v3842 = vpop.permute.xlu0 %3841
        %3843 = vrot.lane.b32.xlu0 %v3798, 24
        %v3844 = vpop.permute.xlu0 %3843
        %v3849 = vsel %vm1151, %v1578, %v3806
        %v3850 = vsel %vm1151, %v1654, %v3808
        %v3851 = vsel %vm1151, %v1730, %v3810
        %v3852 = vsel %vm1151, %v1806, %v3812
        %vm3853 = vcmask 130048
        %v3854 = vsel %vm3853, %v3849, %v3822
        %v3855 = vsel %vm3853, %v3850, %v3824
        %v3856 = vsel %vm3853, %v3851, %v3826
        %v3857 = vsel %vm3853, %v3852, %v3828
        %vm3858 = vcmask 195584
        %v3859 = vsel %vm3858, %v3854, %v3838
        %v3860 = vsel %vm3858, %v3855, %v3840
        %v3861 = vsel %vm3858, %v3856, %v3842
        %v3862 = vsel %vm3858, %v3857, %v3844
        %v3863 = vld [vmem:[%s11] sm:$0xff]
        %v3864 = vld [vmem:[%s11 + $0x8] sm:$0xff]
        %v3865 = vld [vmem:[%s11 + $0x10] sm:$0xff]
        %v3866 = vld [vmem:[%s11 + $0x18] sm:$0xff]
        %v3867 = vld [vmem:[%s13] sm:$0x1]
        %v3869 = vlaneseq
        %v3870 = vshrl.u32 %v3869, 7
        %v3871 = vsub.s32 0, %v3870
        %v3872 = vrot.slane %v3867, %v3871
        %v3875 = vsel %vm1050, %v3859, 0
        %v3878 = vsel %vm1050, %v3860, 0
        %v3881 = vsel %vm1050, %v3861, 0
        %v3884 = vsel %vm1050, %v3862, 0
        %3886 = vmatprep.subr.mxu0 0.0
        %3887 = vmatpush1.msra.mxu0 0.0
        %3888 = vmatprep.subr.mxu0 0.0
        %3889 = vmatpush1.msra.mxu0 0.0
        %3890 = vmatprep.subr.mxu0 0.0
        %3891 = vmatpush1.msra.mxu0 0.0
        %3892 = vmatprep.subr.mxu0 0.0
        %3893 = vmatpush1.msra.mxu0 0.0
        %3894 = vmatprep.subr.mxu0 0.0
        %3895 = vmatpush1.msra.mxu0 0.0
        %3896 = vmatprep.subr.mxu0 0.0
        %3897 = vmatpush1.msra.mxu0 0.0
        %3898 = vmatprep.subr.mxu0 0.0
        %3899 = vmatpush1.msra.mxu0 0.0
        %3900 = vmatprep.subr.mxu0 0.0
        %3901 = vmatpush1.msra.mxu0 0.0
        %3902 = vmatprep.subr.mxu0 0.0
        %3903 = vmatpush1.msra.mxu0 0.0
        %3904 = vmatprep.subr.mxu0 0.0
        %3905 = vmatpush1.msra.mxu0 0.0
        %3906 = vmatprep.subr.mxu0 0.0
        %3907 = vmatpush1.msra.mxu0 0.0
        %3908 = vmatprep.subr.mxu0 0.0
        %3909 = vmatpush1.msra.mxu0 0.0
        %3910 = vmatprep.subr.mxu0 0.0
        %3911 = vmatpush1.msra.mxu0 %v3866
        %3912 = vmatprep.subr.mxu0 0.0
        %3913 = vmatpush1.msra.mxu0 %v3865
        %3914 = vmatprep.subr.mxu0 0.0
        %3915 = vmatpush1.msra.mxu0 %v3864
        %3916 = vmatprep.subr.mxu0 0.0
        %3917 = vmatpush1.msra.mxu0 %v3863
        %3918 = vmatprep.subr.mxu0 0.0
        %3919 = vmatpush2.msra.mxu0 0.0
        %3920 = vmatprep.subr.mxu0 0.0
        %3921 = vmatpush2.msra.mxu0 0.0
        %3922 = vmatprep.subr.mxu0 0.0
        %3923 = vmatpush2.msra.mxu0 0.0
        %3924 = vmatprep.subr.mxu0 0.0
        %3925 = vmatpush2.msra.mxu0 0.0
        %3926 = vmatprep.subr.mxu0 0.0
        %3927 = vmatpush2.msra.mxu0 0.0
        %3928 = vmatprep.subr.mxu0 0.0
        %3929 = vmatpush2.msra.mxu0 0.0
        %3930 = vmatprep.subr.mxu0 0.0
        %3931 = vmatpush2.msra.mxu0 0.0
        %3932 = vmatprep.subr.mxu0 0.0
        %3933 = vmatpush2.msra.mxu0 0.0
        %3934 = vmatprep.subr.mxu0 0.0
        %3935 = vmatpush2.msra.mxu0 0.0
        %3936 = vmatprep.subr.mxu0 0.0
        %3937 = vmatpush2.msra.mxu0 0.0
        %3938 = vmatprep.subr.mxu0 0.0
        %3939 = vmatpush2.msra.mxu0 0.0
        %3940 = vmatprep.subr.mxu0 0.0
        %3941 = vmatpush2.msra.mxu0 0.0
        %3942 = vmatprep.subr.mxu0 0.0
        %3943 = vmatpush2.msra.mxu0 0.0
        %3944 = vmatprep.subr.mxu0 0.0
        %3945 = vmatpush2.msra.mxu0 0.0
        %3946 = vmatprep.subr.mxu0 0.0
        %3947 = vmatpush2.msra.mxu0 0.0
        %3948 = vmatprep.subr.mxu0 0.0
        %3949 = vmatpush2.msra.mxu0 0.0
        %3950 = vmatprep.mubr.f32.mxu0 0.0
        %3951 = vmatmul.mubr.f32.gmra.mxu0 %v3875
        %v3952 = vpop.f32.mrf.mxu0
        %v3953 = vadd.f32 %v3872, %v3952
        %v3954 = vpop.f32.mrf.mxu0
        %3955 = vmatprep.mubr.f32.mxu0 0.0
        %3956 = vmatmul.mubr.f32.gmra.mxu0 %v3878
        %v3957 = vpop.f32.mrf.mxu0
        %v3958 = vadd.f32 %v3872, %v3957
        %v3959 = vpop.f32.mrf.mxu0
        %3960 = vmatprep.mubr.f32.mxu0 0.0
        %3961 = vmatmul.mubr.f32.gmra.mxu0 %v3881
        %v3962 = vpop.f32.mrf.mxu0
        %v3963 = vadd.f32 %v3872, %v3962
        %v3964 = vpop.f32.mrf.mxu0
        %3965 = vmatprep.mubr.f32.mxu0 0.0
        %3966 = vmatmul.mubr.f32.gmra.mxu0 %v3884
        %v3967 = vpop.f32.mrf.mxu0
        %v3968 = vadd.f32 %v3872, %v3967
        %v3969 = vpop.f32.mrf.mxu0
        %3970 = vdwg.mxu0
        %v3971 = vadd.f32 %v1035, %v3953
        %v3972 = vadd.f32 %v1036, %v3958
        %v3973 = vadd.f32 %v1037, %v3963
        %v3974 = vadd.f32 %v1038, %v3968
        %v3975 = vld [vmem:[%s15] sm:$0x1]
        %v3976 = vld [vmem:[%s17] sm:$0x1]
        %v3977 = vsel %vm1050, %v3971, 0.0
        %3978 = vadd.xlane.f32.xlu0 %v3977
        %v3979 = vpop.xlane.xlu0 %3978
        %v3980 = vsel %vm1050, %v3972, 0.0
        %3981 = vadd.xlane.f32.xlu0 %v3980
        %v3982 = vpop.xlane.xlu0 %3981
        %v3983 = vsel %vm1050, %v3973, 0.0
        %3984 = vadd.xlane.f32.xlu0 %v3983
        %v3985 = vpop.xlane.xlu0 %3984
        %v3986 = vsel %vm1050, %v3974, 0.0
        %3987 = vadd.xlane.f32.xlu0 %v3986
        %v3988 = vpop.xlane.xlu0 %3987
        %v3989 = vrcp.pop 32.0
        %v3990 = vmul.f32 %v3979, %v3989
        %v3991 = vmul.f32 %v3982, %v3989
        %v3992 = vmul.f32 %v3985, %v3989
        %v3993 = vmul.f32 %v3988, %v3989
        %v3994 = vsub.f32 %v3971, %v3990
        %v3995 = vsub.f32 %v3972, %v3991
        %v3996 = vsub.f32 %v3973, %v3992
        %v3997 = vsub.f32 %v3974, %v3993
        %v3998 = vmul.f32 %v3994, %v3994
        %v3999 = vmul.f32 %v3995, %v3995
        %v4000 = vmul.f32 %v3996, %v3996
        %v4001 = vmul.f32 %v3997, %v3997
        %v4002 = vsel %vm1050, %v3998, 0.0
        %4003 = vadd.xlane.f32.xlu0 %v4002
        %v4004 = vpop.xlane.xlu0 %4003
        %v4005 = vsel %vm1050, %v3999, 0.0
        %4006 = vadd.xlane.f32.xlu0 %v4005
        %v4007 = vpop.xlane.xlu0 %4006
        %v4008 = vsel %vm1050, %v4000, 0.0
        %4009 = vadd.xlane.f32.xlu0 %v4008
        %v4010 = vpop.xlane.xlu0 %4009
        %v4011 = vsel %vm1050, %v4001, 0.0
        %4012 = vadd.xlane.f32.xlu0 %v4011
        %v4013 = vpop.xlane.xlu0 %4012
        %v4014 = vmul.f32 %v4004, %v3989
        %v4015 = vmul.f32 %v4007, %v3989
        %v4016 = vmul.f32 %v4010, %v3989
        %v4017 = vmul.f32 %v4013, %v3989
        %v4018 = vadd.f32 %v4014, 1e-05
        %v4019 = vadd.f32 %v4015, 1e-05
        %v4020 = vadd.f32 %v4016, 1e-05
        %v4021 = vadd.f32 %v4017, 1e-05
        %v4022 = vrsqrt.pop %v4018
        %v4023 = vrsqrt.pop %v4019
        %v4024 = vrsqrt.pop %v4020
        %v4025 = vrsqrt.pop %v4021
        %v4026 = vmul.f32 %v3994, %v4022
        %v4027 = vmul.f32 %v3995, %v4023
        %v4028 = vmul.f32 %v3996, %v4024
        %v4029 = vmul.f32 %v3997, %v4025
        %v4031 = vlaneseq
        %v4032 = vshrl.u32 %v4031, 7
        %v4033 = vsub.s32 0, %v4032
        %v4034 = vrot.slane %v3975, %v4033
        %v4036 = vmul.f32 %v4026, %v4034
        %v4037 = vmul.f32 %v4027, %v4034
        %v4038 = vmul.f32 %v4028, %v4034
        %v4039 = vmul.f32 %v4029, %v4034
        %v4041 = vlaneseq
        %v4042 = vshrl.u32 %v4041, 7
        %v4043 = vsub.s32 0, %v4042
        %v4044 = vrot.slane %v3976, %v4043
        %v4046 = vadd.f32 %v4036, %v4044
        %v4047 = vadd.f32 %v4037, %v4044
        %v4048 = vadd.f32 %v4038, %v4044
        %v4049 = vadd.f32 %v4039, %v4044
        %v4050 = vld [vmem:[%s19] sm:$0xff]
        %v4051 = vld [vmem:[%s19 + $0x8] sm:$0xff]
        %v4052 = vld [vmem:[%s19 + $0x10] sm:$0xff]
        %v4053 = vld [vmem:[%s19 + $0x18] sm:$0xff]
        %v4054 = vld [vmem:[%s21] sm:$0x1]
        %v4056 = vlaneseq
        %v4057 = vshrl.u32 %v4056, 7
        %v4058 = vsub.s32 0, %v4057
        %v4059 = vrot.slane %v4054, %v4058
        %v4062 = vsel %vm1050, %v4046, 0
        %v4065 = vsel %vm1050, %v4047, 0
        %v4068 = vsel %vm1050, %v4048, 0
        %v4071 = vsel %vm1050, %v4049, 0
        %4073 = vmatprep.subr.mxu0 0.0
        %4074 = vmatpush1.msra.mxu0 0.0
        %4075 = vmatprep.subr.mxu0 0.0
        %4076 = vmatpush1.msra.mxu0 0.0
        %4077 = vmatprep.subr.mxu0 0.0
        %4078 = vmatpush1.msra.mxu0 0.0
        %4079 = vmatprep.subr.mxu0 0.0
        %4080 = vmatpush1.msra.mxu0 0.0
        %4081 = vmatprep.subr.mxu0 0.0
        %4082 = vmatpush1.msra.mxu0 0.0
        %4083 = vmatprep.subr.mxu0 0.0
        %4084 = vmatpush1.msra.mxu0 0.0
        %4085 = vmatprep.subr.mxu0 0.0
        %4086 = vmatpush1.msra.mxu0 0.0
        %4087 = vmatprep.subr.mxu0 0.0
        %4088 = vmatpush1.msra.mxu0 0.0
        %4089 = vmatprep.subr.mxu0 0.0
        %4090 = vmatpush1.msra.mxu0 0.0
        %4091 = vmatprep.subr.mxu0 0.0
        %4092 = vmatpush1.msra.mxu0 0.0
        %4093 = vmatprep.subr.mxu0 0.0
        %4094 = vmatpush1.msra.mxu0 0.0
        %4095 = vmatprep.subr.mxu0 0.0
        %4096 = vmatpush1.msra.mxu0 0.0
        %4097 = vmatprep.subr.mxu0 0.0
        %4098 = vmatpush1.msra.mxu0 %v4053
        %4099 = vmatprep.subr.mxu0 0.0
        %4100 = vmatpush1.msra.mxu0 %v4052
        %4101 = vmatprep.subr.mxu0 0.0
        %4102 = vmatpush1.msra.mxu0 %v4051
        %4103 = vmatprep.subr.mxu0 0.0
        %4104 = vmatpush1.msra.mxu0 %v4050
        %4105 = vmatprep.subr.mxu0 0.0
        %4106 = vmatpush2.msra.mxu0 0.0
        %4107 = vmatprep.subr.mxu0 0.0
        %4108 = vmatpush2.msra.mxu0 0.0
        %4109 = vmatprep.subr.mxu0 0.0
        %4110 = vmatpush2.msra.mxu0 0.0
        %4111 = vmatprep.subr.mxu0 0.0
        %4112 = vmatpush2.msra.mxu0 0.0
        %4113 = vmatprep.subr.mxu0 0.0
        %4114 = vmatpush2.msra.mxu0 0.0
        %4115 = vmatprep.subr.mxu0 0.0
        %4116 = vmatpush2.msra.mxu0 0.0
        %4117 = vmatprep.subr.mxu0 0.0
        %4118 = vmatpush2.msra.mxu0 0.0
        %4119 = vmatprep.subr.mxu0 0.0
        %4120 = vmatpush2.msra.mxu0 0.0
        %4121 = vmatprep.subr.mxu0 0.0
        %4122 = vmatpush2.msra.mxu0 0.0
        %4123 = vmatprep.subr.mxu0 0.0
        %4124 = vmatpush2.msra.mxu0 0.0
        %4125 = vmatprep.subr.mxu0 0.0
        %4126 = vmatpush2.msra.mxu0 0.0
        %4127 = vmatprep.subr.mxu0 0.0
        %4128 = vmatpush2.msra.mxu0 0.0
        %4129 = vmatprep.subr.mxu0 0.0
        %4130 = vmatpush2.msra.mxu0 0.0
        %4131 = vmatprep.subr.mxu0 0.0
        %4132 = vmatpush2.msra.mxu0 0.0
        %4133 = vmatprep.subr.mxu0 0.0
        %4134 = vmatpush2.msra.mxu0 0.0
        %4135 = vmatprep.subr.mxu0 0.0
        %4136 = vmatpush2.msra.mxu0 0.0
        %4137 = vmatprep.mubr.f32.mxu0 0.0
        %4138 = vmatmul.mubr.f32.gmra.mxu0 %v4062
        %v4139 = vpop.f32.mrf.mxu0
        %v4140 = vadd.f32 %v4059, %v4139
        %v4141 = vpop.f32.mrf.mxu0
        %4142 = vmatprep.mubr.f32.mxu0 0.0
        %4143 = vmatmul.mubr.f32.gmra.mxu0 %v4065
        %v4144 = vpop.f32.mrf.mxu0
        %v4145 = vadd.f32 %v4059, %v4144
        %v4146 = vpop.f32.mrf.mxu0
        %4147 = vmatprep.mubr.f32.mxu0 0.0
        %4148 = vmatmul.mubr.f32.gmra.mxu0 %v4068
        %v4149 = vpop.f32.mrf.mxu0
        %v4150 = vadd.f32 %v4059, %v4149
        %v4151 = vpop.f32.mrf.mxu0
        %4152 = vmatprep.mubr.f32.mxu0 0.0
        %4153 = vmatmul.mubr.f32.gmra.mxu0 %v4071
        %v4154 = vpop.f32.mrf.mxu0
        %v4155 = vadd.f32 %v4059, %v4154
        %v4156 = vpop.f32.mrf.mxu0
        %4157 = vdwg.mxu0
        %v4158 = vmax.f32 %v4140, 0.0
        %v4159 = vmax.f32 %v4145, 0.0
        %v4160 = vmax.f32 %v4150, 0.0
        %v4161 = vmax.f32 %v4155, 0.0
        %v4162 = vld [vmem:[%s23] sm:$0xff]
        %v4163 = vld [vmem:[%s23 + $0x8] sm:$0xff]
        %v4164 = vld [vmem:[%s23 + $0x10] sm:$0xff]
        %v4165 = vld [vmem:[%s23 + $0x18] sm:$0xff]
        %v4166 = vld [vmem:[%s23 + $0x20] sm:$0xff]
        %v4167 = vld [vmem:[%s23 + $0x28] sm:$0xff]
        %v4168 = vld [vmem:[%s23 + $0x30] sm:$0xff]
        %v4169 = vld [vmem:[%s23 + $0x38] sm:$0xff]
        %v4170 = vld [vmem:[%s25] sm:$0x1]
        %v4172 = vlaneseq
        %v4173 = vshrl.u32 %v4172, 7
        %v4174 = vsub.s32 0, %v4173
        %v4175 = vrot.slane %v4170, %v4174
        %vm4177 = vcmask 523264
        %v4179 = vsel %vm4177, %v4158, 0
        %v4182 = vsel %vm4177, %v4159, 0
        %v4185 = vsel %vm4177, %v4160, 0
        %v4188 = vsel %vm4177, %v4161, 0
        %4190 = vmatprep.subr.mxu0 0.0
        %4191 = vmatpush1.msra.mxu0 0.0
        %4192 = vmatprep.subr.mxu0 0.0
        %4193 = vmatpush1.msra.mxu0 0.0
        %4194 = vmatprep.subr.mxu0 0.0
        %4195 = vmatpush1.msra.mxu0 0.0
        %4196 = vmatprep.subr.mxu0 0.0
        %4197 = vmatpush1.msra.mxu0 0.0
        %4198 = vmatprep.subr.mxu0 0.0
        %4199 = vmatpush1.msra.mxu0 0.0
        %4200 = vmatprep.subr.mxu0 0.0
        %4201 = vmatpush1.msra.mxu0 0.0
        %4202 = vmatprep.subr.mxu0 0.0
        %4203 = vmatpush1.msra.mxu0 0.0
        %4204 = vmatprep.subr.mxu0 0.0
        %4205 = vmatpush1.msra.mxu0 0.0
        %4206 = vmatprep.subr.mxu0 0.0
        %4207 = vmatpush1.msra.mxu0 %v4169
        %4208 = vmatprep.subr.mxu0 0.0
        %4209 = vmatpush1.msra.mxu0 %v4168
        %4210 = vmatprep.subr.mxu0 0.0
        %4211 = vmatpush1.msra.mxu0 %v4167
        %4212 = vmatprep.subr.mxu0 0.0
        %4213 = vmatpush1.msra.mxu0 %v4166
        %4214 = vmatprep.subr.mxu0 0.0
        %4215 = vmatpush1.msra.mxu0 %v4165
        %4216 = vmatprep.subr.mxu0 0.0
        %4217 = vmatpush1.msra.mxu0 %v4164
        %4218 = vmatprep.subr.mxu0 0.0
        %4219 = vmatpush1.msra.mxu0 %v4163
        %4220 = vmatprep.subr.mxu0 0.0
        %4221 = vmatpush1.msra.mxu0 %v4162
        %4222 = vmatprep.subr.mxu0 0.0
        %4223 = vmatpush2.msra.mxu0 0.0
        %4224 = vmatprep.subr.mxu0 0.0
        %4225 = vmatpush2.msra.mxu0 0.0
        %4226 = vmatprep.subr.mxu0 0.0
        %4227 = vmatpush2.msra.mxu0 0.0
        %4228 = vmatprep.subr.mxu0 0.0
        %4229 = vmatpush2.msra.mxu0 0.0
        %4230 = vmatprep.subr.mxu0 0.0
        %4231 = vmatpush2.msra.mxu0 0.0
        %4232 = vmatprep.subr.mxu0 0.0
        %4233 = vmatpush2.msra.mxu0 0.0
        %4234 = vmatprep.subr.mxu0 0.0
        %4235 = vmatpush2.msra.mxu0 0.0
        %4236 = vmatprep.subr.mxu0 0.0
        %4237 = vmatpush2.msra.mxu0 0.0
        %4238 = vmatprep.subr.mxu0 0.0
        %4239 = vmatpush2.msra.mxu0 0.0
        %4240 = vmatprep.subr.mxu0 0.0
        %4241 = vmatpush2.msra.mxu0 0.0
        %4242 = vmatprep.subr.mxu0 0.0
        %4243 = vmatpush2.msra.mxu0 0.0
        %4244 = vmatprep.subr.mxu0 0.0
        %4245 = vmatpush2.msra.mxu0 0.0
        %4246 = vmatprep.subr.mxu0 0.0
        %4247 = vmatpush2.msra.mxu0 0.0
        %4248 = vmatprep.subr.mxu0 0.0
        %4249 = vmatpush2.msra.mxu0 0.0
        %4250 = vmatprep.subr.mxu0 0.0
        %4251 = vmatpush2.msra.mxu0 0.0
        %4252 = vmatprep.subr.mxu0 0.0
        %4253 = vmatpush2.msra.mxu0 0.0
        %4254 = vmatprep.mubr.f32.mxu0 0.0
        %4255 = vmatmul.mubr.f32.gmra.mxu0 %v4179
        %v4256 = vpop.f32.mrf.mxu0
        %v4257 = vadd.f32 %v4175, %v4256
        %v4258 = vpop.f32.mrf.mxu0
        %4259 = vmatprep.mubr.f32.mxu0 0.0
        %4260 = vmatmul.mubr.f32.gmra.mxu0 %v4182
        %v4261 = vpop.f32.mrf.mxu0
        %v4262 = vadd.f32 %v4175, %v4261
        %v4263 = vpop.f32.mrf.mxu0
        %4264 = vmatprep.mubr.f32.mxu0 0.0
        %4265 = vmatmul.mubr.f32.gmra.mxu0 %v4185
        %v4266 = vpop.f32.mrf.mxu0
        %v4267 = vadd.f32 %v4175, %v4266
        %v4268 = vpop.f32.mrf.mxu0
        %4269 = vmatprep.mubr.f32.mxu0 0.0
        %4270 = vmatmul.mubr.f32.gmra.mxu0 %v4188
        %v4271 = vpop.f32.mrf.mxu0
        %v4272 = vadd.f32 %v4175, %v4271
        %v4273 = vpop.f32.mrf.mxu0
        %4274 = vdwg.mxu0
        %v4275 = vadd.f32 %v4046, %v4257
        %v4276 = vadd.f32 %v4047, %v4262
        %v4277 = vadd.f32 %v4048, %v4267
        %v4278 = vadd.f32 %v4049, %v4272
        %v4279 = vld [vmem:[%s27] sm:$0x1]
        %v4280 = vld [vmem:[%s29] sm:$0x1]
        %v4281 = vsel %vm1050, %v4275, 0.0
        %4282 = vadd.xlane.f32.xlu0 %v4281
        %v4283 = vpop.xlane.xlu0 %4282
        %v4284 = vsel %vm1050, %v4276, 0.0
        %4285 = vadd.xlane.f32.xlu0 %v4284
        %v4286 = vpop.xlane.xlu0 %4285
        %v4287 = vsel %vm1050, %v4277, 0.0
        %4288 = vadd.xlane.f32.xlu0 %v4287
        %v4289 = vpop.xlane.xlu0 %4288
        %v4290 = vsel %vm1050, %v4278, 0.0
        %4291 = vadd.xlane.f32.xlu0 %v4290
        %v4292 = vpop.xlane.xlu0 %4291
        %v4293 = vmul.f32 %v4283, %v3989
        %v4294 = vmul.f32 %v4286, %v3989
        %v4295 = vmul.f32 %v4289, %v3989
        %v4296 = vmul.f32 %v4292, %v3989
        %v4297 = vsub.f32 %v4275, %v4293
        %v4298 = vsub.f32 %v4276, %v4294
        %v4299 = vsub.f32 %v4277, %v4295
        %v4300 = vsub.f32 %v4278, %v4296
        %v4301 = vmul.f32 %v4297, %v4297
        %v4302 = vmul.f32 %v4298, %v4298
        %v4303 = vmul.f32 %v4299, %v4299
        %v4304 = vmul.f32 %v4300, %v4300
        %v4305 = vsel %vm1050, %v4301, 0.0
        %4306 = vadd.xlane.f32.xlu0 %v4305
        %v4307 = vpop.xlane.xlu0 %4306
        %v4308 = vsel %vm1050, %v4302, 0.0
        %4309 = vadd.xlane.f32.xlu0 %v4308
        %v4310 = vpop.xlane.xlu0 %4309
        %v4311 = vsel %vm1050, %v4303, 0.0
        %4312 = vadd.xlane.f32.xlu0 %v4311
        %v4313 = vpop.xlane.xlu0 %4312
        %v4314 = vsel %vm1050, %v4304, 0.0
        %4315 = vadd.xlane.f32.xlu0 %v4314
        %v4316 = vpop.xlane.xlu0 %4315
        %v4317 = vmul.f32 %v4307, %v3989
        %v4318 = vmul.f32 %v4310, %v3989
        %v4319 = vmul.f32 %v4313, %v3989
        %v4320 = vmul.f32 %v4316, %v3989
        %v4321 = vadd.f32 %v4317, 1e-05
        %v4322 = vadd.f32 %v4318, 1e-05
        %v4323 = vadd.f32 %v4319, 1e-05
        %v4324 = vadd.f32 %v4320, 1e-05
        %v4325 = vrsqrt.pop %v4321
        %v4326 = vrsqrt.pop %v4322
        %v4327 = vrsqrt.pop %v4323
        %v4328 = vrsqrt.pop %v4324
        %v4329 = vmul.f32 %v4297, %v4325
        %v4330 = vmul.f32 %v4298, %v4326
        %v4331 = vmul.f32 %v4299, %v4327
        %v4332 = vmul.f32 %v4300, %v4328
        %v4334 = vlaneseq
        %v4335 = vshrl.u32 %v4334, 7
        %v4336 = vsub.s32 0, %v4335
        %v4337 = vrot.slane %v4279, %v4336
        %v4339 = vmul.f32 %v4329, %v4337
        %v4340 = vmul.f32 %v4330, %v4337
        %v4341 = vmul.f32 %v4331, %v4337
        %v4342 = vmul.f32 %v4332, %v4337
        %v4344 = vlaneseq
        %v4345 = vshrl.u32 %v4344, 7
        %v4346 = vsub.s32 0, %v4345
        %v4347 = vrot.slane %v4280, %v4346
        %v4349 = vadd.f32 %v4339, %v4347
        %v4350 = vadd.f32 %v4340, %v4347
        %v4351 = vadd.f32 %v4341, %v4347
        %v4352 = vadd.f32 %v4342, %v4347
        %v4353 = vld [vmem:[%s31] sm:$0xff]
        %v4354 = vld [vmem:[%s31 + $0x8] sm:$0xff]
        %v4355 = vld [vmem:[%s31 + $0x10] sm:$0xff]
        %v4356 = vld [vmem:[%s31 + $0x18] sm:$0xff]
        %v4357 = vld [vmem:[%s33] sm:$0x1]
        %v4359 = vlaneseq
        %v4360 = vshrl.u32 %v4359, 7
        %v4361 = vsub.s32 0, %v4360
        %v4362 = vrot.slane %v4357, %v4361
        %v4365 = vsel %vm1050, %v4349, 0
        %v4368 = vsel %vm1050, %v4350, 0
        %v4371 = vsel %vm1050, %v4351, 0
        %v4374 = vsel %vm1050, %v4352, 0
        %4376 = vmatprep.subr.mxu0 0.0
        %4377 = vmatpush1.msra.mxu0 0.0
        %4378 = vmatprep.subr.mxu0 0.0
        %4379 = vmatpush1.msra.mxu0 0.0
        %4380 = vmatprep.subr.mxu0 0.0
        %4381 = vmatpush1.msra.mxu0 0.0
        %4382 = vmatprep.subr.mxu0 0.0
        %4383 = vmatpush1.msra.mxu0 0.0
        %4384 = vmatprep.subr.mxu0 0.0
        %4385 = vmatpush1.msra.mxu0 0.0
        %4386 = vmatprep.subr.mxu0 0.0
        %4387 = vmatpush1.msra.mxu0 0.0
        %4388 = vmatprep.subr.mxu0 0.0
        %4389 = vmatpush1.msra.mxu0 0.0
        %4390 = vmatprep.subr.mxu0 0.0
        %4391 = vmatpush1.msra.mxu0 0.0
        %4392 = vmatprep.subr.mxu0 0.0
        %4393 = vmatpush1.msra.mxu0 0.0
        %4394 = vmatprep.subr.mxu0 0.0
        %4395 = vmatpush1.msra.mxu0 0.0
        %4396 = vmatprep.subr.mxu0 0.0
        %4397 = vmatpush1.msra.mxu0 0.0
        %4398 = vmatprep.subr.mxu0 0.0
        %4399 = vmatpush1.msra.mxu0 0.0
        %4400 = vmatprep.subr.mxu0 0.0
        %4401 = vmatpush1.msra.mxu0 %v4356
        %4402 = vmatprep.subr.mxu0 0.0
        %4403 = vmatpush1.msra.mxu0 %v4355
        %4404 = vmatprep.subr.mxu0 0.0
        %4405 = vmatpush1.msra.mxu0 %v4354
        %4406 = vmatprep.subr.mxu0 0.0
        %4407 = vmatpush1.msra.mxu0 %v4353
        %4408 = vmatprep.subr.mxu0 0.0
        %4409 = vmatpush2.msra.mxu0 0.0
        %4410 = vmatprep.subr.mxu0 0.0
        %4411 = vmatpush2.msra.mxu0 0.0
        %4412 = vmatprep.subr.mxu0 0.0
        %4413 = vmatpush2.msra.mxu0 0.0
        %4414 = vmatprep.subr.mxu0 0.0
        %4415 = vmatpush2.msra.mxu0 0.0
        %4416 = vmatprep.subr.mxu0 0.0
        %4417 = vmatpush2.msra.mxu0 0.0
        %4418 = vmatprep.subr.mxu0 0.0
        %4419 = vmatpush2.msra.mxu0 0.0
        %4420 = vmatprep.subr.mxu0 0.0
        %4421 = vmatpush2.msra.mxu0 0.0
        %4422 = vmatprep.subr.mxu0 0.0
        %4423 = vmatpush2.msra.mxu0 0.0
        %4424 = vmatprep.subr.mxu0 0.0
        %4425 = vmatpush2.msra.mxu0 0.0
        %4426 = vmatprep.subr.mxu0 0.0
        %4427 = vmatpush2.msra.mxu0 0.0
        %4428 = vmatprep.subr.mxu0 0.0
        %4429 = vmatpush2.msra.mxu0 0.0
        %4430 = vmatprep.subr.mxu0 0.0
        %4431 = vmatpush2.msra.mxu0 0.0
        %4432 = vmatprep.subr.mxu0 0.0
        %4433 = vmatpush2.msra.mxu0 0.0
        %4434 = vmatprep.subr.mxu0 0.0
        %4435 = vmatpush2.msra.mxu0 0.0
        %4436 = vmatprep.subr.mxu0 0.0
        %4437 = vmatpush2.msra.mxu0 0.0
        %4438 = vmatprep.subr.mxu0 0.0
        %4439 = vmatpush2.msra.mxu0 0.0
        %4440 = vmatprep.mubr.f32.mxu0 0.0
        %4441 = vmatmul.mubr.f32.gmra.mxu0 %v4365
        %v4442 = vpop.f32.mrf.mxu0
        %v4443 = vadd.f32 %v4362, %v4442
        %v4444 = vpop.f32.mrf.mxu0
        %4445 = vmatprep.mubr.f32.mxu0 0.0
        %4446 = vmatmul.mubr.f32.gmra.mxu0 %v4368
        %v4447 = vpop.f32.mrf.mxu0
        %v4448 = vadd.f32 %v4362, %v4447
        %v4449 = vpop.f32.mrf.mxu0
        %4450 = vmatprep.mubr.f32.mxu0 0.0
        %4451 = vmatmul.mubr.f32.gmra.mxu0 %v4371
        %v4452 = vpop.f32.mrf.mxu0
        %v4453 = vadd.f32 %v4362, %v4452
        %v4454 = vpop.f32.mrf.mxu0
        %4455 = vmatprep.mubr.f32.mxu0 0.0
        %4456 = vmatmul.mubr.f32.gmra.mxu0 %v4374
        %v4457 = vpop.f32.mrf.mxu0
        %v4458 = vadd.f32 %v4362, %v4457
        %v4459 = vpop.f32.mrf.mxu0
        %4460 = vdwg.mxu0
        %4462 = vrot.lane.b32.xlu0 %v4443, 96
        %v4463 = vpop.permute.xlu0 %4462
        %v4464 = vsel %vm1151, %v4443, 0
        %v4466 = vsel %vm1151, %v4463, 0
        %4468 = vmatprep.subr.mxu0 0.0
        %4469 = vmatpush1.xpose.msra.mxu0 0.0
        %4470 = vmatprep.subr.mxu0 0.0
        %4471 = vmatpush1.xpose.msra.mxu0 0.0
        %4472 = vmatprep.subr.mxu0 0.0
        %4473 = vmatpush1.xpose.msra.mxu0 0.0
        %4474 = vmatprep.subr.mxu0 0.0
        %4475 = vmatpush1.xpose.msra.mxu0 0.0
        %4476 = vmatprep.subr.mxu0 0.0
        %4477 = vmatpush1.xpose.msra.mxu0 0.0
        %4478 = vmatprep.subr.mxu0 0.0
        %4479 = vmatpush1.xpose.msra.mxu0 0.0
        %4480 = vmatprep.subr.mxu0 0.0
        %4481 = vmatpush1.xpose.msra.mxu0 0.0
        %4482 = vmatprep.subr.mxu0 0.0
        %4483 = vmatpush1.xpose.msra.mxu0 0.0
        %4484 = vmatprep.subr.mxu0 0.0
        %4485 = vmatpush1.xpose.msra.mxu0 0.0
        %4486 = vmatprep.subr.mxu0 0.0
        %4487 = vmatpush1.xpose.msra.mxu0 0.0
        %4488 = vmatprep.subr.mxu0 0.0
        %4489 = vmatpush1.xpose.msra.mxu0 0.0
        %4490 = vmatprep.subr.mxu0 0.0
        %4491 = vmatpush1.xpose.msra.mxu0 0.0
        %4492 = vmatprep.subr.mxu0 0.0
        %4493 = vmatpush1.xpose.msra.mxu0 0.0
        %4494 = vmatprep.subr.mxu0 0.0
        %4495 = vmatpush1.xpose.msra.mxu0 0.0
        %4496 = vmatprep.subr.mxu0 0.0
        %4497 = vmatpush1.xpose.msra.mxu0 0.0
        %4498 = vmatprep.subr.mxu0 0.0
        %4499 = vmatpush1.xpose.msra.mxu0 %v4466
        %4500 = vmatprep.subr.mxu0 0.0
        %4501 = vmatpush2.xpose.msra.mxu0 0.0
        %4502 = vmatprep.subr.mxu0 0.0
        %4503 = vmatpush2.xpose.msra.mxu0 0.0
        %4504 = vmatprep.subr.mxu0 0.0
        %4505 = vmatpush2.xpose.msra.mxu0 0.0
        %4506 = vmatprep.subr.mxu0 0.0
        %4507 = vmatpush2.xpose.msra.mxu0 0.0
        %4508 = vmatprep.subr.mxu0 0.0
        %4509 = vmatpush2.xpose.msra.mxu0 0.0
        %4510 = vmatprep.subr.mxu0 0.0
        %4511 = vmatpush2.xpose.msra.mxu0 0.0
        %4512 = vmatprep.subr.mxu0 0.0
        %4513 = vmatpush2.xpose.msra.mxu0 0.0
        %4514 = vmatprep.subr.mxu0 0.0
        %4515 = vmatpush2.xpose.msra.mxu0 0.0
        %4516 = vmatprep.subr.mxu0 0.0
        %4517 = vmatpush2.xpose.msra.mxu0 0.0
        %4518 = vmatprep.subr.mxu0 0.0
        %4519 = vmatpush2.xpose.msra.mxu0 0.0
        %4520 = vmatprep.subr.mxu0 0.0
        %4521 = vmatpush2.xpose.msra.mxu0 0.0
        %4522 = vmatprep.subr.mxu0 0.0
        %4523 = vmatpush2.xpose.msra.mxu0 0.0
        %4524 = vmatprep.subr.mxu0 0.0
        %4525 = vmatpush2.xpose.msra.mxu0 0.0
        %4526 = vmatprep.subr.mxu0 0.0
        %4527 = vmatpush2.xpose.msra.mxu0 0.0
        %4528 = vmatprep.subr.mxu0 0.0
        %4529 = vmatpush2.xpose.msra.mxu0 0.0
        %4530 = vmatprep.subr.mxu0 0.0
        %4531 = vmatpush2.xpose.msra.mxu0 0.0
        %4532 = vmatprep.mubr.f32.mxu0 0.0
        %4533 = vmatmul.mubr.f32.gmra.mxu0 %v4464
        %v4534 = vpop.f32.mrf.mxu0
        %v4535 = vadd.f32 0.0, %v4534
        %v4536 = vpop.f32.mrf.mxu0
        %4537 = vdwg.mxu0
        %4539 = vrot.lane.b32.xlu0 %v4448, 96
        %v4540 = vpop.permute.xlu0 %4539
        %v4541 = vsel %vm1151, %v4448, 0
        %v4543 = vsel %vm1151, %v4540, 0
        %4545 = vmatprep.subr.mxu0 0.0
        %4546 = vmatpush1.xpose.msra.mxu0 0.0
        %4547 = vmatprep.subr.mxu0 0.0
        %4548 = vmatpush1.xpose.msra.mxu0 0.0
        %4549 = vmatprep.subr.mxu0 0.0
        %4550 = vmatpush1.xpose.msra.mxu0 0.0
        %4551 = vmatprep.subr.mxu0 0.0
        %4552 = vmatpush1.xpose.msra.mxu0 0.0
        %4553 = vmatprep.subr.mxu0 0.0
        %4554 = vmatpush1.xpose.msra.mxu0 0.0
        %4555 = vmatprep.subr.mxu0 0.0
        %4556 = vmatpush1.xpose.msra.mxu0 0.0
        %4557 = vmatprep.subr.mxu0 0.0
        %4558 = vmatpush1.xpose.msra.mxu0 0.0
        %4559 = vmatprep.subr.mxu0 0.0
        %4560 = vmatpush1.xpose.msra.mxu0 0.0
        %4561 = vmatprep.subr.mxu0 0.0
        %4562 = vmatpush1.xpose.msra.mxu0 0.0
        %4563 = vmatprep.subr.mxu0 0.0
        %4564 = vmatpush1.xpose.msra.mxu0 0.0
        %4565 = vmatprep.subr.mxu0 0.0
        %4566 = vmatpush1.xpose.msra.mxu0 0.0
        %4567 = vmatprep.subr.mxu0 0.0
        %4568 = vmatpush1.xpose.msra.mxu0 0.0
        %4569 = vmatprep.subr.mxu0 0.0
        %4570 = vmatpush1.xpose.msra.mxu0 0.0
        %4571 = vmatprep.subr.mxu0 0.0
        %4572 = vmatpush1.xpose.msra.mxu0 0.0
        %4573 = vmatprep.subr.mxu0 0.0
        %4574 = vmatpush1.xpose.msra.mxu0 0.0
        %4575 = vmatprep.subr.mxu0 0.0
        %4576 = vmatpush1.xpose.msra.mxu0 %v4543
        %4577 = vmatprep.subr.mxu0 0.0
        %4578 = vmatpush2.xpose.msra.mxu0 0.0
        %4579 = vmatprep.subr.mxu0 0.0
        %4580 = vmatpush2.xpose.msra.mxu0 0.0
        %4581 = vmatprep.subr.mxu0 0.0
        %4582 = vmatpush2.xpose.msra.mxu0 0.0
        %4583 = vmatprep.subr.mxu0 0.0
        %4584 = vmatpush2.xpose.msra.mxu0 0.0
        %4585 = vmatprep.subr.mxu0 0.0
        %4586 = vmatpush2.xpose.msra.mxu0 0.0
        %4587 = vmatprep.subr.mxu0 0.0
        %4588 = vmatpush2.xpose.msra.mxu0 0.0
        %4589 = vmatprep.subr.mxu0 0.0
        %4590 = vmatpush2.xpose.msra.mxu0 0.0
        %4591 = vmatprep.subr.mxu0 0.0
        %4592 = vmatpush2.xpose.msra.mxu0 0.0
        %4593 = vmatprep.subr.mxu0 0.0
        %4594 = vmatpush2.xpose.msra.mxu0 0.0
        %4595 = vmatprep.subr.mxu0 0.0
        %4596 = vmatpush2.xpose.msra.mxu0 0.0
        %4597 = vmatprep.subr.mxu0 0.0
        %4598 = vmatpush2.xpose.msra.mxu0 0.0
        %4599 = vmatprep.subr.mxu0 0.0
        %4600 = vmatpush2.xpose.msra.mxu0 0.0
        %4601 = vmatprep.subr.mxu0 0.0
        %4602 = vmatpush2.xpose.msra.mxu0 0.0
        %4603 = vmatprep.subr.mxu0 0.0
        %4604 = vmatpush2.xpose.msra.mxu0 0.0
        %4605 = vmatprep.subr.mxu0 0.0
        %4606 = vmatpush2.xpose.msra.mxu0 0.0
        %4607 = vmatprep.subr.mxu0 0.0
        %4608 = vmatpush2.xpose.msra.mxu0 0.0
        %4609 = vmatprep.mubr.f32.mxu0 0.0
        %4610 = vmatmul.mubr.f32.gmra.mxu0 %v4541
        %v4611 = vpop.f32.mrf.mxu0
        %v4612 = vadd.f32 0.0, %v4611
        %v4613 = vpop.f32.mrf.mxu0
        %4614 = vdwg.mxu0
        %4616 = vrot.lane.b32.xlu0 %v4453, 96
        %v4617 = vpop.permute.xlu0 %4616
        %v4618 = vsel %vm1151, %v4453, 0
        %v4620 = vsel %vm1151, %v4617, 0
        %4622 = vmatprep.subr.mxu0 0.0
        %4623 = vmatpush1.xpose.msra.mxu0 0.0
        %4624 = vmatprep.subr.mxu0 0.0
        %4625 = vmatpush1.xpose.msra.mxu0 0.0
        %4626 = vmatprep.subr.mxu0 0.0
        %4627 = vmatpush1.xpose.msra.mxu0 0.0
        %4628 = vmatprep.subr.mxu0 0.0
        %4629 = vmatpush1.xpose.msra.mxu0 0.0
        %4630 = vmatprep.subr.mxu0 0.0
        %4631 = vmatpush1.xpose.msra.mxu0 0.0
        %4632 = vmatprep.subr.mxu0 0.0
        %4633 = vmatpush1.xpose.msra.mxu0 0.0
        %4634 = vmatprep.subr.mxu0 0.0
        %4635 = vmatpush1.xpose.msra.mxu0 0.0
        %4636 = vmatprep.subr.mxu0 0.0
        %4637 = vmatpush1.xpose.msra.mxu0 0.0
        %4638 = vmatprep.subr.mxu0 0.0
        %4639 = vmatpush1.xpose.msra.mxu0 0.0
        %4640 = vmatprep.subr.mxu0 0.0
        %4641 = vmatpush1.xpose.msra.mxu0 0.0
        %4642 = vmatprep.subr.mxu0 0.0
        %4643 = vmatpush1.xpose.msra.mxu0 0.0
        %4644 = vmatprep.subr.mxu0 0.0
        %4645 = vmatpush1.xpose.msra.mxu0 0.0
        %4646 = vmatprep.subr.mxu0 0.0
        %4647 = vmatpush1.xpose.msra.mxu0 0.0
        %4648 = vmatprep.subr.mxu0 0.0
        %4649 = vmatpush1.xpose.msra.mxu0 0.0
        %4650 = vmatprep.subr.mxu0 0.0
        %4651 = vmatpush1.xpose.msra.mxu0 0.0
        %4652 = vmatprep.subr.mxu0 0.0
        %4653 = vmatpush1.xpose.msra.mxu0 %v4620
        %4654 = vmatprep.subr.mxu0 0.0
        %4655 = vmatpush2.xpose.msra.mxu0 0.0
        %4656 = vmatprep.subr.mxu0 0.0
        %4657 = vmatpush2.xpose.msra.mxu0 0.0
        %4658 = vmatprep.subr.mxu0 0.0
        %4659 = vmatpush2.xpose.msra.mxu0 0.0
        %4660 = vmatprep.subr.mxu0 0.0
        %4661 = vmatpush2.xpose.msra.mxu0 0.0
        %4662 = vmatprep.subr.mxu0 0.0
        %4663 = vmatpush2.xpose.msra.mxu0 0.0
        %4664 = vmatprep.subr.mxu0 0.0
        %4665 = vmatpush2.xpose.msra.mxu0 0.0
        %4666 = vmatprep.subr.mxu0 0.0
        %4667 = vmatpush2.xpose.msra.mxu0 0.0
        %4668 = vmatprep.subr.mxu0 0.0
        %4669 = vmatpush2.xpose.msra.mxu0 0.0
        %4670 = vmatprep.subr.mxu0 0.0
        %4671 = vmatpush2.xpose.msra.mxu0 0.0
        %4672 = vmatprep.subr.mxu0 0.0
        %4673 = vmatpush2.xpose.msra.mxu0 0.0
        %4674 = vmatprep.subr.mxu0 0.0
        %4675 = vmatpush2.xpose.msra.mxu0 0.0
        %4676 = vmatprep.subr.mxu0 0.0
        %4677 = vmatpush2.xpose.msra.mxu0 0.0
        %4678 = vmatprep.subr.mxu0 0.0
        %4679 = vmatpush2.xpose.msra.mxu0 0.0
        %4680 = vmatprep.subr.mxu0 0.0
        %4681 = vmatpush2.xpose.msra.mxu0 0.0
        %4682 = vmatprep.subr.mxu0 0.0
        %4683 = vmatpush2.xpose.msra.mxu0 0.0
        %4684 = vmatprep.subr.mxu0 0.0
        %4685 = vmatpush2.xpose.msra.mxu0 0.0
        %4686 = vmatprep.mubr.f32.mxu0 0.0
        %4687 = vmatmul.mubr.f32.gmra.mxu0 %v4618
        %v4688 = vpop.f32.mrf.mxu0
        %v4689 = vadd.f32 0.0, %v4688
        %v4690 = vpop.f32.mrf.mxu0
        %4691 = vdwg.mxu0
        %4693 = vrot.lane.b32.xlu0 %v4458, 96
        %v4694 = vpop.permute.xlu0 %4693
        %v4695 = vsel %vm1151, %v4458, 0
        %v4697 = vsel %vm1151, %v4694, 0
        %4699 = vmatprep.subr.mxu0 0.0
        %4700 = vmatpush1.xpose.msra.mxu0 0.0
        %4701 = vmatprep.subr.mxu0 0.0
        %4702 = vmatpush1.xpose.msra.mxu0 0.0
        %4703 = vmatprep.subr.mxu0 0.0
        %4704 = vmatpush1.xpose.msra.mxu0 0.0
        %4705 = vmatprep.subr.mxu0 0.0
        %4706 = vmatpush1.xpose.msra.mxu0 0.0
        %4707 = vmatprep.subr.mxu0 0.0
        %4708 = vmatpush1.xpose.msra.mxu0 0.0
        %4709 = vmatprep.subr.mxu0 0.0
        %4710 = vmatpush1.xpose.msra.mxu0 0.0
        %4711 = vmatprep.subr.mxu0 0.0
        %4712 = vmatpush1.xpose.msra.mxu0 0.0
        %4713 = vmatprep.subr.mxu0 0.0
        %4714 = vmatpush1.xpose.msra.mxu0 0.0
        %4715 = vmatprep.subr.mxu0 0.0
        %4716 = vmatpush1.xpose.msra.mxu0 0.0
        %4717 = vmatprep.subr.mxu0 0.0
        %4718 = vmatpush1.xpose.msra.mxu0 0.0
        %4719 = vmatprep.subr.mxu0 0.0
        %4720 = vmatpush1.xpose.msra.mxu0 0.0
        %4721 = vmatprep.subr.mxu0 0.0
        %4722 = vmatpush1.xpose.msra.mxu0 0.0
        %4723 = vmatprep.subr.mxu0 0.0
        %4724 = vmatpush1.xpose.msra.mxu0 0.0
        %4725 = vmatprep.subr.mxu0 0.0
        %4726 = vmatpush1.xpose.msra.mxu0 0.0
        %4727 = vmatprep.subr.mxu0 0.0
        %4728 = vmatpush1.xpose.msra.mxu0 0.0
        %4729 = vmatprep.subr.mxu0 0.0
        %4730 = vmatpush1.xpose.msra.mxu0 %v4697
        %4731 = vmatprep.subr.mxu0 0.0
        %4732 = vmatpush2.xpose.msra.mxu0 0.0
        %4733 = vmatprep.subr.mxu0 0.0
        %4734 = vmatpush2.xpose.msra.mxu0 0.0
        %4735 = vmatprep.subr.mxu0 0.0
        %4736 = vmatpush2.xpose.msra.mxu0 0.0
        %4737 = vmatprep.subr.mxu0 0.0
        %4738 = vmatpush2.xpose.msra.mxu0 0.0
        %4739 = vmatprep.subr.mxu0 0.0
        %4740 = vmatpush2.xpose.msra.mxu0 0.0
        %4741 = vmatprep.subr.mxu0 0.0
        %4742 = vmatpush2.xpose.msra.mxu0 0.0
        %4743 = vmatprep.subr.mxu0 0.0
        %4744 = vmatpush2.xpose.msra.mxu0 0.0
        %4745 = vmatprep.subr.mxu0 0.0
        %4746 = vmatpush2.xpose.msra.mxu0 0.0
        %4747 = vmatprep.subr.mxu0 0.0
        %4748 = vmatpush2.xpose.msra.mxu0 0.0
        %4749 = vmatprep.subr.mxu0 0.0
        %4750 = vmatpush2.xpose.msra.mxu0 0.0
        %4751 = vmatprep.subr.mxu0 0.0
        %4752 = vmatpush2.xpose.msra.mxu0 0.0
        %4753 = vmatprep.subr.mxu0 0.0
        %4754 = vmatpush2.xpose.msra.mxu0 0.0
        %4755 = vmatprep.subr.mxu0 0.0
        %4756 = vmatpush2.xpose.msra.mxu0 0.0
        %4757 = vmatprep.subr.mxu0 0.0
        %4758 = vmatpush2.xpose.msra.mxu0 0.0
        %4759 = vmatprep.subr.mxu0 0.0
        %4760 = vmatpush2.xpose.msra.mxu0 0.0
        %4761 = vmatprep.subr.mxu0 0.0
        %4762 = vmatpush2.xpose.msra.mxu0 0.0
        %4763 = vmatprep.mubr.f32.mxu0 0.0
        %4764 = vmatmul.mubr.f32.gmra.mxu0 %v4695
        %v4765 = vpop.f32.mrf.mxu0
        %v4766 = vadd.f32 0.0, %v4765
        %v4767 = vpop.f32.mrf.mxu0
        %4768 = vdwg.mxu0
        %v4769 = vmul.f32 %v4535, 0.35355338
        %v4770 = vmul.f32 %v4612, 0.35355338
        %v4771 = vmul.f32 %v4689, 0.35355338
        %v4772 = vmul.f32 %v4766, 0.35355338
        %v4773 = vsel %vm1151, %v4769, -inf
        %4774 = vmax.xlane.f32.xlu0 %v4773
        %v4775 = vpop.xlane.xlu0 %4774
        %v4776 = vsel %vm1151, %v4770, -inf
        %4777 = vmax.xlane.f32.xlu0 %v4776
        %v4778 = vpop.xlane.xlu0 %4777
        %v4779 = vsel %vm1151, %v4771, -inf
        %4780 = vmax.xlane.f32.xlu0 %v4779
        %v4781 = vpop.xlane.xlu0 %4780
        %v4782 = vsel %vm1151, %v4772, -inf
        %4783 = vmax.xlane.f32.xlu0 %v4782
        %v4784 = vpop.xlane.xlu0 %4783
        %v4785 = vsub.f32 %v4769, %v4775
        %v4786 = vsub.f32 %v4770, %v4778
        %v4787 = vsub.f32 %v4771, %v4781
        %v4788 = vsub.f32 %v4772, %v4784
        %v4789 = vmul.f32 %v4785, 1.442695
        %v4790 = vpow.pop %v4789
        %v4791 = vmul.f32 %v4786, 1.442695
        %v4792 = vpow.pop %v4791
        %v4793 = vmul.f32 %v4787, 1.442695
        %v4794 = vpow.pop %v4793
        %v4795 = vmul.f32 %v4788, 1.442695
        %v4796 = vpow.pop %v4795
        %v4797 = vsel %vm1151, %v4790, 0.0
        %4798 = vadd.xlane.f32.xlu0 %v4797
        %v4799 = vpop.xlane.xlu0 %4798
        %v4800 = vsel %vm1151, %v4792, 0.0
        %4801 = vadd.xlane.f32.xlu0 %v4800
        %v4802 = vpop.xlane.xlu0 %4801
        %v4803 = vsel %vm1151, %v4794, 0.0
        %4804 = vadd.xlane.f32.xlu0 %v4803
        %v4805 = vpop.xlane.xlu0 %4804
        %v4806 = vsel %vm1151, %v4796, 0.0
        %4807 = vadd.xlane.f32.xlu0 %v4806
        %v4808 = vpop.xlane.xlu0 %4807
        %v4809 = vrcp.pop %v4799
        %v4810 = vmul.f32 %v4790, %v4809
        %v4811 = vrcp.pop %v4802
        %v4812 = vmul.f32 %v4792, %v4811
        %v4813 = vrcp.pop %v4805
        %v4814 = vmul.f32 %v4794, %v4813
        %v4815 = vrcp.pop %v4808
        %v4816 = vmul.f32 %v4796, %v4815
        %4817 = vrot.lane.b32.xlu0 %v4443, 64
        %v4818 = vpop.permute.xlu0 %4817
        %v4821 = vsel %vm1151, %v4810, 0
        %4823 = vmatprep.subr.mxu0 0.0
        %4824 = vmatpush1.msra.mxu0 0.0
        %4825 = vmatprep.subr.mxu0 0.0
        %4826 = vmatpush1.msra.mxu0 0.0
        %4827 = vmatprep.subr.mxu0 0.0
        %4828 = vmatpush1.msra.mxu0 0.0
        %4829 = vmatprep.subr.mxu0 0.0
        %4830 = vmatpush1.msra.mxu0 0.0
        %4831 = vmatprep.subr.mxu0 0.0
        %4832 = vmatpush1.msra.mxu0 0.0
        %4833 = vmatprep.subr.mxu0 0.0
        %4834 = vmatpush1.msra.mxu0 0.0
        %4835 = vmatprep.subr.mxu0 0.0
        %4836 = vmatpush1.msra.mxu0 0.0
        %4837 = vmatprep.subr.mxu0 0.0
        %4838 = vmatpush1.msra.mxu0 0.0
        %4839 = vmatprep.subr.mxu0 0.0
        %4840 = vmatpush1.msra.mxu0 0.0
        %4841 = vmatprep.subr.mxu0 0.0
        %4842 = vmatpush1.msra.mxu0 0.0
        %4843 = vmatprep.subr.mxu0 0.0
        %4844 = vmatpush1.msra.mxu0 0.0
        %4845 = vmatprep.subr.mxu0 0.0
        %4846 = vmatpush1.msra.mxu0 0.0
        %4847 = vmatprep.subr.mxu0 0.0
        %4848 = vmatpush1.msra.mxu0 0.0
        %4849 = vmatprep.subr.mxu0 0.0
        %4850 = vmatpush1.msra.mxu0 0.0
        %4851 = vmatprep.subr.mxu0 0.0
        %4852 = vmatpush1.msra.mxu0 0.0
        %4853 = vmatprep.subr.mxu0 0.0
        %4854 = vmatpush1.msra.mxu0 %v4818
        %4855 = vmatprep.subr.mxu0 0.0
        %4856 = vmatpush2.msra.mxu0 0.0
        %4857 = vmatprep.subr.mxu0 0.0
        %4858 = vmatpush2.msra.mxu0 0.0
        %4859 = vmatprep.subr.mxu0 0.0
        %4860 = vmatpush2.msra.mxu0 0.0
        %4861 = vmatprep.subr.mxu0 0.0
        %4862 = vmatpush2.msra.mxu0 0.0
        %4863 = vmatprep.subr.mxu0 0.0
        %4864 = vmatpush2.msra.mxu0 0.0
        %4865 = vmatprep.subr.mxu0 0.0
        %4866 = vmatpush2.msra.mxu0 0.0
        %4867 = vmatprep.subr.mxu0 0.0
        %4868 = vmatpush2.msra.mxu0 0.0
        %4869 = vmatprep.subr.mxu0 0.0
        %4870 = vmatpush2.msra.mxu0 0.0
        %4871 = vmatprep.subr.mxu0 0.0
        %4872 = vmatpush2.msra.mxu0 0.0
        %4873 = vmatprep.subr.mxu0 0.0
        %4874 = vmatpush2.msra.mxu0 0.0
        %4875 = vmatprep.subr.mxu0 0.0
        %4876 = vmatpush2.msra.mxu0 0.0
        %4877 = vmatprep.subr.mxu0 0.0
        %4878 = vmatpush2.msra.mxu0 0.0
        %4879 = vmatprep.subr.mxu0 0.0
        %4880 = vmatpush2.msra.mxu0 0.0
        %4881 = vmatprep.subr.mxu0 0.0
        %4882 = vmatpush2.msra.mxu0 0.0
        %4883 = vmatprep.subr.mxu0 0.0
        %4884 = vmatpush2.msra.mxu0 0.0
        %4885 = vmatprep.subr.mxu0 0.0
        %4886 = vmatpush2.msra.mxu0 0.0
        %4887 = vmatprep.mubr.f32.mxu0 0.0
        %4888 = vmatmul.mubr.f32.gmra.mxu0 %v4821
        %v4889 = vpop.f32.mrf.mxu0
        %v4890 = vadd.f32 0.0, %v4889
        %v4891 = vpop.f32.mrf.mxu0
        %4892 = vdwg.mxu0
        %4893 = vrot.lane.b32.xlu0 %v4448, 64
        %v4894 = vpop.permute.xlu0 %4893
        %v4897 = vsel %vm1151, %v4812, 0
        %4899 = vmatprep.subr.mxu0 0.0
        %4900 = vmatpush1.msra.mxu0 0.0
        %4901 = vmatprep.subr.mxu0 0.0
        %4902 = vmatpush1.msra.mxu0 0.0
        %4903 = vmatprep.subr.mxu0 0.0
        %4904 = vmatpush1.msra.mxu0 0.0
        %4905 = vmatprep.subr.mxu0 0.0
        %4906 = vmatpush1.msra.mxu0 0.0
        %4907 = vmatprep.subr.mxu0 0.0
        %4908 = vmatpush1.msra.mxu0 0.0
        %4909 = vmatprep.subr.mxu0 0.0
        %4910 = vmatpush1.msra.mxu0 0.0
        %4911 = vmatprep.subr.mxu0 0.0
        %4912 = vmatpush1.msra.mxu0 0.0
        %4913 = vmatprep.subr.mxu0 0.0
        %4914 = vmatpush1.msra.mxu0 0.0
        %4915 = vmatprep.subr.mxu0 0.0
        %4916 = vmatpush1.msra.mxu0 0.0
        %4917 = vmatprep.subr.mxu0 0.0
        %4918 = vmatpush1.msra.mxu0 0.0
        %4919 = vmatprep.subr.mxu0 0.0
        %4920 = vmatpush1.msra.mxu0 0.0
        %4921 = vmatprep.subr.mxu0 0.0
        %4922 = vmatpush1.msra.mxu0 0.0
        %4923 = vmatprep.subr.mxu0 0.0
        %4924 = vmatpush1.msra.mxu0 0.0
        %4925 = vmatprep.subr.mxu0 0.0
        %4926 = vmatpush1.msra.mxu0 0.0
        %4927 = vmatprep.subr.mxu0 0.0
        %4928 = vmatpush1.msra.mxu0 0.0
        %4929 = vmatprep.subr.mxu0 0.0
        %4930 = vmatpush1.msra.mxu0 %v4894
        %4931 = vmatprep.subr.mxu0 0.0
        %4932 = vmatpush2.msra.mxu0 0.0
        %4933 = vmatprep.subr.mxu0 0.0
        %4934 = vmatpush2.msra.mxu0 0.0
        %4935 = vmatprep.subr.mxu0 0.0
        %4936 = vmatpush2.msra.mxu0 0.0
        %4937 = vmatprep.subr.mxu0 0.0
        %4938 = vmatpush2.msra.mxu0 0.0
        %4939 = vmatprep.subr.mxu0 0.0
        %4940 = vmatpush2.msra.mxu0 0.0
        %4941 = vmatprep.subr.mxu0 0.0
        %4942 = vmatpush2.msra.mxu0 0.0
        %4943 = vmatprep.subr.mxu0 0.0
        %4944 = vmatpush2.msra.mxu0 0.0
        %4945 = vmatprep.subr.mxu0 0.0
        %4946 = vmatpush2.msra.mxu0 0.0
        %4947 = vmatprep.subr.mxu0 0.0
        %4948 = vmatpush2.msra.mxu0 0.0
        %4949 = vmatprep.subr.mxu0 0.0
        %4950 = vmatpush2.msra.mxu0 0.0
        %4951 = vmatprep.subr.mxu0 0.0
        %4952 = vmatpush2.msra.mxu0 0.0
        %4953 = vmatprep.subr.mxu0 0.0
        %4954 = vmatpush2.msra.mxu0 0.0
        %4955 = vmatprep.subr.mxu0 0.0
        %4956 = vmatpush2.msra.mxu0 0.0
        %4957 = vmatprep.subr.mxu0 0.0
        %4958 = vmatpush2.msra.mxu0 0.0
        %4959 = vmatprep.subr.mxu0 0.0
        %4960 = vmatpush2.msra.mxu0 0.0
        %4961 = vmatprep.subr.mxu0 0.0
        %4962 = vmatpush2.msra.mxu0 0.0
        %4963 = vmatprep.mubr.f32.mxu0 0.0
        %4964 = vmatmul.mubr.f32.gmra.mxu0 %v4897
        %v4965 = vpop.f32.mrf.mxu0
        %v4966 = vadd.f32 0.0, %v4965
        %v4967 = vpop.f32.mrf.mxu0
        %4968 = vdwg.mxu0
        %4969 = vrot.lane.b32.xlu0 %v4453, 64
        %v4970 = vpop.permute.xlu0 %4969
        %v4973 = vsel %vm1151, %v4814, 0
        %4975 = vmatprep.subr.mxu0 0.0
        %4976 = vmatpush1.msra.mxu0 0.0
        %4977 = vmatprep.subr.mxu0 0.0
        %4978 = vmatpush1.msra.mxu0 0.0
        %4979 = vmatprep.subr.mxu0 0.0
        %4980 = vmatpush1.msra.mxu0 0.0
        %4981 = vmatprep.subr.mxu0 0.0
        %4982 = vmatpush1.msra.mxu0 0.0
        %4983 = vmatprep.subr.mxu0 0.0
        %4984 = vmatpush1.msra.mxu0 0.0
        %4985 = vmatprep.subr.mxu0 0.0
        %4986 = vmatpush1.msra.mxu0 0.0
        %4987 = vmatprep.subr.mxu0 0.0
        %4988 = vmatpush1.msra.mxu0 0.0
        %4989 = vmatprep.subr.mxu0 0.0
        %4990 = vmatpush1.msra.mxu0 0.0
        %4991 = vmatprep.subr.mxu0 0.0
        %4992 = vmatpush1.msra.mxu0 0.0
        %4993 = vmatprep.subr.mxu0 0.0
        %4994 = vmatpush1.msra.mxu0 0.0
        %4995 = vmatprep.subr.mxu0 0.0
        %4996 = vmatpush1.msra.mxu0 0.0
        %4997 = vmatprep.subr.mxu0 0.0
        %4998 = vmatpush1.msra.mxu0 0.0
        %4999 = vmatprep.subr.mxu0 0.0
        %5000 = vmatpush1.msra.mxu0 0.0
        %5001 = vmatprep.subr.mxu0 0.0
        %5002 = vmatpush1.msra.mxu0 0.0
        %5003 = vmatprep.subr.mxu0 0.0
        %5004 = vmatpush1.msra.mxu0 0.0
        %5005 = vmatprep.subr.mxu0 0.0
        %5006 = vmatpush1.msra.mxu0 %v4970
        %5007 = vmatprep.subr.mxu0 0.0
        %5008 = vmatpush2.msra.mxu0 0.0
        %5009 = vmatprep.subr.mxu0 0.0
        %5010 = vmatpush2.msra.mxu0 0.0
        %5011 = vmatprep.subr.mxu0 0.0
        %5012 = vmatpush2.msra.mxu0 0.0
        %5013 = vmatprep.subr.mxu0 0.0
        %5014 = vmatpush2.msra.mxu0 0.0
        %5015 = vmatprep.subr.mxu0 0.0
        %5016 = vmatpush2.msra.mxu0 0.0
        %5017 = vmatprep.subr.mxu0 0.0
        %5018 = vmatpush2.msra.mxu0 0.0
        %5019 = vmatprep.subr.mxu0 0.0
        %5020 = vmatpush2.msra.mxu0 0.0
        %5021 = vmatprep.subr.mxu0 0.0
        %5022 = vmatpush2.msra.mxu0 0.0
        %5023 = vmatprep.subr.mxu0 0.0
        %5024 = vmatpush2.msra.mxu0 0.0
        %5025 = vmatprep.subr.mxu0 0.0
        %5026 = vmatpush2.msra.mxu0 0.0
        %5027 = vmatprep.subr.mxu0 0.0
        %5028 = vmatpush2.msra.mxu0 0.0
        %5029 = vmatprep.subr.mxu0 0.0
        %5030 = vmatpush2.msra.mxu0 0.0
        %5031 = vmatprep.subr.mxu0 0.0
        %5032 = vmatpush2.msra.mxu0 0.0
        %5033 = vmatprep.subr.mxu0 0.0
        %5034 = vmatpush2.msra.mxu0 0.0
        %5035 = vmatprep.subr.mxu0 0.0
        %5036 = vmatpush2.msra.mxu0 0.0
        %5037 = vmatprep.subr.mxu0 0.0
        %5038 = vmatpush2.msra.mxu0 0.0
        %5039 = vmatprep.mubr.f32.mxu0 0.0
        %5040 = vmatmul.mubr.f32.gmra.mxu0 %v4973
        %v5041 = vpop.f32.mrf.mxu0
        %v5042 = vadd.f32 0.0, %v5041
        %v5043 = vpop.f32.mrf.mxu0
        %5044 = vdwg.mxu0
        %5045 = vrot.lane.b32.xlu0 %v4458, 64
        %v5046 = vpop.permute.xlu0 %5045
        %v5049 = vsel %vm1151, %v4816, 0
        %5051 = vmatprep.subr.mxu0 0.0
        %5052 = vmatpush1.msra.mxu0 0.0
        %5053 = vmatprep.subr.mxu0 0.0
        %5054 = vmatpush1.msra.mxu0 0.0
        %5055 = vmatprep.subr.mxu0 0.0
        %5056 = vmatpush1.msra.mxu0 0.0
        %5057 = vmatprep.subr.mxu0 0.0
        %5058 = vmatpush1.msra.mxu0 0.0
        %5059 = vmatprep.subr.mxu0 0.0
        %5060 = vmatpush1.msra.mxu0 0.0
        %5061 = vmatprep.subr.mxu0 0.0
        %5062 = vmatpush1.msra.mxu0 0.0
        %5063 = vmatprep.subr.mxu0 0.0
        %5064 = vmatpush1.msra.mxu0 0.0
        %5065 = vmatprep.subr.mxu0 0.0
        %5066 = vmatpush1.msra.mxu0 0.0
        %5067 = vmatprep.subr.mxu0 0.0
        %5068 = vmatpush1.msra.mxu0 0.0
        %5069 = vmatprep.subr.mxu0 0.0
        %5070 = vmatpush1.msra.mxu0 0.0
        %5071 = vmatprep.subr.mxu0 0.0
        %5072 = vmatpush1.msra.mxu0 0.0
        %5073 = vmatprep.subr.mxu0 0.0
        %5074 = vmatpush1.msra.mxu0 0.0
        %5075 = vmatprep.subr.mxu0 0.0
        %5076 = vmatpush1.msra.mxu0 0.0
        %5077 = vmatprep.subr.mxu0 0.0
        %5078 = vmatpush1.msra.mxu0 0.0
        %5079 = vmatprep.subr.mxu0 0.0
        %5080 = vmatpush1.msra.mxu0 0.0
        %5081 = vmatprep.subr.mxu0 0.0
        %5082 = vmatpush1.msra.mxu0 %v5046
        %5083 = vmatprep.subr.mxu0 0.0
        %5084 = vmatpush2.msra.mxu0 0.0
        %5085 = vmatprep.subr.mxu0 0.0
        %5086 = vmatpush2.msra.mxu0 0.0
        %5087 = vmatprep.subr.mxu0 0.0
        %5088 = vmatpush2.msra.mxu0 0.0
        %5089 = vmatprep.subr.mxu0 0.0
        %5090 = vmatpush2.msra.mxu0 0.0
        %5091 = vmatprep.subr.mxu0 0.0
        %5092 = vmatpush2.msra.mxu0 0.0
        %5093 = vmatprep.subr.mxu0 0.0
        %5094 = vmatpush2.msra.mxu0 0.0
        %5095 = vmatprep.subr.mxu0 0.0
        %5096 = vmatpush2.msra.mxu0 0.0
        %5097 = vmatprep.subr.mxu0 0.0
        %5098 = vmatpush2.msra.mxu0 0.0
        %5099 = vmatprep.subr.mxu0 0.0
        %5100 = vmatpush2.msra.mxu0 0.0
        %5101 = vmatprep.subr.mxu0 0.0
        %5102 = vmatpush2.msra.mxu0 0.0
        %5103 = vmatprep.subr.mxu0 0.0
        %5104 = vmatpush2.msra.mxu0 0.0
        %5105 = vmatprep.subr.mxu0 0.0
        %5106 = vmatpush2.msra.mxu0 0.0
        %5107 = vmatprep.subr.mxu0 0.0
        %5108 = vmatpush2.msra.mxu0 0.0
        %5109 = vmatprep.subr.mxu0 0.0
        %5110 = vmatpush2.msra.mxu0 0.0
        %5111 = vmatprep.subr.mxu0 0.0
        %5112 = vmatpush2.msra.mxu0 0.0
        %5113 = vmatprep.subr.mxu0 0.0
        %5114 = vmatpush2.msra.mxu0 0.0
        %5115 = vmatprep.mubr.f32.mxu0 0.0
        %5116 = vmatmul.mubr.f32.gmra.mxu0 %v5049
        %v5117 = vpop.f32.mrf.mxu0
        %v5118 = vadd.f32 0.0, %v5117
        %v5119 = vpop.f32.mrf.mxu0
        %5120 = vdwg.mxu0
        %5121 = vrot.lane.b32.xlu0 %v4443, 120
        %v5122 = vpop.permute.xlu0 %5121
        %5123 = vrot.lane.b32.xlu0 %v4443, 88
        %v5124 = vpop.permute.xlu0 %5123
        %v5125 = vsel %vm1151, %v5122, 0
        %v5127 = vsel %vm1151, %v5124, 0
        %5129 = vmatprep.subr.mxu0 0.0
        %5130 = vmatpush1.xpose.msra.mxu0 0.0
        %5131 = vmatprep.subr.mxu0 0.0
        %5132 = vmatpush1.xpose.msra.mxu0 0.0
        %5133 = vmatprep.subr.mxu0 0.0
        %5134 = vmatpush1.xpose.msra.mxu0 0.0
        %5135 = vmatprep.subr.mxu0 0.0
        %5136 = vmatpush1.xpose.msra.mxu0 0.0
        %5137 = vmatprep.subr.mxu0 0.0
        %5138 = vmatpush1.xpose.msra.mxu0 0.0
        %5139 = vmatprep.subr.mxu0 0.0
        %5140 = vmatpush1.xpose.msra.mxu0 0.0
        %5141 = vmatprep.subr.mxu0 0.0
        %5142 = vmatpush1.xpose.msra.mxu0 0.0
        %5143 = vmatprep.subr.mxu0 0.0
        %5144 = vmatpush1.xpose.msra.mxu0 0.0
        %5145 = vmatprep.subr.mxu0 0.0
        %5146 = vmatpush1.xpose.msra.mxu0 0.0
        %5147 = vmatprep.subr.mxu0 0.0
        %5148 = vmatpush1.xpose.msra.mxu0 0.0
        %5149 = vmatprep.subr.mxu0 0.0
        %5150 = vmatpush1.xpose.msra.mxu0 0.0
        %5151 = vmatprep.subr.mxu0 0.0
        %5152 = vmatpush1.xpose.msra.mxu0 0.0
        %5153 = vmatprep.subr.mxu0 0.0
        %5154 = vmatpush1.xpose.msra.mxu0 0.0
        %5155 = vmatprep.subr.mxu0 0.0
        %5156 = vmatpush1.xpose.msra.mxu0 0.0
        %5157 = vmatprep.subr.mxu0 0.0
        %5158 = vmatpush1.xpose.msra.mxu0 0.0
        %5159 = vmatprep.subr.mxu0 0.0
        %5160 = vmatpush1.xpose.msra.mxu0 %v5127
        %5161 = vmatprep.subr.mxu0 0.0
        %5162 = vmatpush2.xpose.msra.mxu0 0.0
        %5163 = vmatprep.subr.mxu0 0.0
        %5164 = vmatpush2.xpose.msra.mxu0 0.0
        %5165 = vmatprep.subr.mxu0 0.0
        %5166 = vmatpush2.xpose.msra.mxu0 0.0
        %5167 = vmatprep.subr.mxu0 0.0
        %5168 = vmatpush2.xpose.msra.mxu0 0.0
        %5169 = vmatprep.subr.mxu0 0.0
        %5170 = vmatpush2.xpose.msra.mxu0 0.0
        %5171 = vmatprep.subr.mxu0 0.0
        %5172 = vmatpush2.xpose.msra.mxu0 0.0
        %5173 = vmatprep.subr.mxu0 0.0
        %5174 = vmatpush2.xpose.msra.mxu0 0.0
        %5175 = vmatprep.subr.mxu0 0.0
        %5176 = vmatpush2.xpose.msra.mxu0 0.0
        %5177 = vmatprep.subr.mxu0 0.0
        %5178 = vmatpush2.xpose.msra.mxu0 0.0
        %5179 = vmatprep.subr.mxu0 0.0
        %5180 = vmatpush2.xpose.msra.mxu0 0.0
        %5181 = vmatprep.subr.mxu0 0.0
        %5182 = vmatpush2.xpose.msra.mxu0 0.0
        %5183 = vmatprep.subr.mxu0 0.0
        %5184 = vmatpush2.xpose.msra.mxu0 0.0
        %5185 = vmatprep.subr.mxu0 0.0
        %5186 = vmatpush2.xpose.msra.mxu0 0.0
        %5187 = vmatprep.subr.mxu0 0.0
        %5188 = vmatpush2.xpose.msra.mxu0 0.0
        %5189 = vmatprep.subr.mxu0 0.0
        %5190 = vmatpush2.xpose.msra.mxu0 0.0
        %5191 = vmatprep.subr.mxu0 0.0
        %5192 = vmatpush2.xpose.msra.mxu0 0.0
        %5193 = vmatprep.mubr.f32.mxu0 0.0
        %5194 = vmatmul.mubr.f32.gmra.mxu0 %v5125
        %v5195 = vpop.f32.mrf.mxu0
        %v5196 = vadd.f32 0.0, %v5195
        %v5197 = vpop.f32.mrf.mxu0
        %5198 = vdwg.mxu0
        %5199 = vrot.lane.b32.xlu0 %v4448, 120
        %v5200 = vpop.permute.xlu0 %5199
        %5201 = vrot.lane.b32.xlu0 %v4448, 88
        %v5202 = vpop.permute.xlu0 %5201
        %v5203 = vsel %vm1151, %v5200, 0
        %v5205 = vsel %vm1151, %v5202, 0
        %5207 = vmatprep.subr.mxu0 0.0
        %5208 = vmatpush1.xpose.msra.mxu0 0.0
        %5209 = vmatprep.subr.mxu0 0.0
        %5210 = vmatpush1.xpose.msra.mxu0 0.0
        %5211 = vmatprep.subr.mxu0 0.0
        %5212 = vmatpush1.xpose.msra.mxu0 0.0
        %5213 = vmatprep.subr.mxu0 0.0
        %5214 = vmatpush1.xpose.msra.mxu0 0.0
        %5215 = vmatprep.subr.mxu0 0.0
        %5216 = vmatpush1.xpose.msra.mxu0 0.0
        %5217 = vmatprep.subr.mxu0 0.0
        %5218 = vmatpush1.xpose.msra.mxu0 0.0
        %5219 = vmatprep.subr.mxu0 0.0
        %5220 = vmatpush1.xpose.msra.mxu0 0.0
        %5221 = vmatprep.subr.mxu0 0.0
        %5222 = vmatpush1.xpose.msra.mxu0 0.0
        %5223 = vmatprep.subr.mxu0 0.0
        %5224 = vmatpush1.xpose.msra.mxu0 0.0
        %5225 = vmatprep.subr.mxu0 0.0
        %5226 = vmatpush1.xpose.msra.mxu0 0.0
        %5227 = vmatprep.subr.mxu0 0.0
        %5228 = vmatpush1.xpose.msra.mxu0 0.0
        %5229 = vmatprep.subr.mxu0 0.0
        %5230 = vmatpush1.xpose.msra.mxu0 0.0
        %5231 = vmatprep.subr.mxu0 0.0
        %5232 = vmatpush1.xpose.msra.mxu0 0.0
        %5233 = vmatprep.subr.mxu0 0.0
        %5234 = vmatpush1.xpose.msra.mxu0 0.0
        %5235 = vmatprep.subr.mxu0 0.0
        %5236 = vmatpush1.xpose.msra.mxu0 0.0
        %5237 = vmatprep.subr.mxu0 0.0
        %5238 = vmatpush1.xpose.msra.mxu0 %v5205
        %5239 = vmatprep.subr.mxu0 0.0
        %5240 = vmatpush2.xpose.msra.mxu0 0.0
        %5241 = vmatprep.subr.mxu0 0.0
        %5242 = vmatpush2.xpose.msra.mxu0 0.0
        %5243 = vmatprep.subr.mxu0 0.0
        %5244 = vmatpush2.xpose.msra.mxu0 0.0
        %5245 = vmatprep.subr.mxu0 0.0
        %5246 = vmatpush2.xpose.msra.mxu0 0.0
        %5247 = vmatprep.subr.mxu0 0.0
        %5248 = vmatpush2.xpose.msra.mxu0 0.0
        %5249 = vmatprep.subr.mxu0 0.0
        %5250 = vmatpush2.xpose.msra.mxu0 0.0
        %5251 = vmatprep.subr.mxu0 0.0
        %5252 = vmatpush2.xpose.msra.mxu0 0.0
        %5253 = vmatprep.subr.mxu0 0.0
        %5254 = vmatpush2.xpose.msra.mxu0 0.0
        %5255 = vmatprep.subr.mxu0 0.0
        %5256 = vmatpush2.xpose.msra.mxu0 0.0
        %5257 = vmatprep.subr.mxu0 0.0
        %5258 = vmatpush2.xpose.msra.mxu0 0.0
        %5259 = vmatprep.subr.mxu0 0.0
        %5260 = vmatpush2.xpose.msra.mxu0 0.0
        %5261 = vmatprep.subr.mxu0 0.0
        %5262 = vmatpush2.xpose.msra.mxu0 0.0
        %5263 = vmatprep.subr.mxu0 0.0
        %5264 = vmatpush2.xpose.msra.mxu0 0.0
        %5265 = vmatprep.subr.mxu0 0.0
        %5266 = vmatpush2.xpose.msra.mxu0 0.0
        %5267 = vmatprep.subr.mxu0 0.0
        %5268 = vmatpush2.xpose.msra.mxu0 0.0
        %5269 = vmatprep.subr.mxu0 0.0
        %5270 = vmatpush2.xpose.msra.mxu0 0.0
        %5271 = vmatprep.mubr.f32.mxu0 0.0
        %5272 = vmatmul.mubr.f32.gmra.mxu0 %v5203
        %v5273 = vpop.f32.mrf.mxu0
        %v5274 = vadd.f32 0.0, %v5273
        %v5275 = vpop.f32.mrf.mxu0
        %5276 = vdwg.mxu0
        %5277 = vrot.lane.b32.xlu0 %v4453, 120
        %v5278 = vpop.permute.xlu0 %5277
        %5279 = vrot.lane.b32.xlu0 %v4453, 88
        %v5280 = vpop.permute.xlu0 %5279
        %v5281 = vsel %vm1151, %v5278, 0
        %v5283 = vsel %vm1151, %v5280, 0
        %5285 = vmatprep.subr.mxu0 0.0
        %5286 = vmatpush1.xpose.msra.mxu0 0.0
        %5287 = vmatprep.subr.mxu0 0.0
        %5288 = vmatpush1.xpose.msra.mxu0 0.0
        %5289 = vmatprep.subr.mxu0 0.0
        %5290 = vmatpush1.xpose.msra.mxu0 0.0
        %5291 = vmatprep.subr.mxu0 0.0
        %5292 = vmatpush1.xpose.msra.mxu0 0.0
        %5293 = vmatprep.subr.mxu0 0.0
        %5294 = vmatpush1.xpose.msra.mxu0 0.0
        %5295 = vmatprep.subr.mxu0 0.0
        %5296 = vmatpush1.xpose.msra.mxu0 0.0
        %5297 = vmatprep.subr.mxu0 0.0
        %5298 = vmatpush1.xpose.msra.mxu0 0.0
        %5299 = vmatprep.subr.mxu0 0.0
        %5300 = vmatpush1.xpose.msra.mxu0 0.0
        %5301 = vmatprep.subr.mxu0 0.0
        %5302 = vmatpush1.xpose.msra.mxu0 0.0
        %5303 = vmatprep.subr.mxu0 0.0
        %5304 = vmatpush1.xpose.msra.mxu0 0.0
        %5305 = vmatprep.subr.mxu0 0.0
        %5306 = vmatpush1.xpose.msra.mxu0 0.0
        %5307 = vmatprep.subr.mxu0 0.0
        %5308 = vmatpush1.xpose.msra.mxu0 0.0
        %5309 = vmatprep.subr.mxu0 0.0
        %5310 = vmatpush1.xpose.msra.mxu0 0.0
        %5311 = vmatprep.subr.mxu0 0.0
        %5312 = vmatpush1.xpose.msra.mxu0 0.0
        %5313 = vmatprep.subr.mxu0 0.0
        %5314 = vmatpush1.xpose.msra.mxu0 0.0
        %5315 = vmatprep.subr.mxu0 0.0
        %5316 = vmatpush1.xpose.msra.mxu0 %v5283
        %5317 = vmatprep.subr.mxu0 0.0
        %5318 = vmatpush2.xpose.msra.mxu0 0.0
        %5319 = vmatprep.subr.mxu0 0.0
        %5320 = vmatpush2.xpose.msra.mxu0 0.0
        %5321 = vmatprep.subr.mxu0 0.0
        %5322 = vmatpush2.xpose.msra.mxu0 0.0
        %5323 = vmatprep.subr.mxu0 0.0
        %5324 = vmatpush2.xpose.msra.mxu0 0.0
        %5325 = vmatprep.subr.mxu0 0.0
        %5326 = vmatpush2.xpose.msra.mxu0 0.0
        %5327 = vmatprep.subr.mxu0 0.0
        %5328 = vmatpush2.xpose.msra.mxu0 0.0
        %5329 = vmatprep.subr.mxu0 0.0
        %5330 = vmatpush2.xpose.msra.mxu0 0.0
        %5331 = vmatprep.subr.mxu0 0.0
        %5332 = vmatpush2.xpose.msra.mxu0 0.0
        %5333 = vmatprep.subr.mxu0 0.0
        %5334 = vmatpush2.xpose.msra.mxu0 0.0
        %5335 = vmatprep.subr.mxu0 0.0
        %5336 = vmatpush2.xpose.msra.mxu0 0.0
        %5337 = vmatprep.subr.mxu0 0.0
        %5338 = vmatpush2.xpose.msra.mxu0 0.0
        %5339 = vmatprep.subr.mxu0 0.0
        %5340 = vmatpush2.xpose.msra.mxu0 0.0
        %5341 = vmatprep.subr.mxu0 0.0
        %5342 = vmatpush2.xpose.msra.mxu0 0.0
        %5343 = vmatprep.subr.mxu0 0.0
        %5344 = vmatpush2.xpose.msra.mxu0 0.0
        %5345 = vmatprep.subr.mxu0 0.0
        %5346 = vmatpush2.xpose.msra.mxu0 0.0
        %5347 = vmatprep.subr.mxu0 0.0
        %5348 = vmatpush2.xpose.msra.mxu0 0.0
        %5349 = vmatprep.mubr.f32.mxu0 0.0
        %5350 = vmatmul.mubr.f32.gmra.mxu0 %v5281
        %v5351 = vpop.f32.mrf.mxu0
        %v5352 = vadd.f32 0.0, %v5351
        %v5353 = vpop.f32.mrf.mxu0
        %5354 = vdwg.mxu0
        %5355 = vrot.lane.b32.xlu0 %v4458, 120
        %v5356 = vpop.permute.xlu0 %5355
        %5357 = vrot.lane.b32.xlu0 %v4458, 88
        %v5358 = vpop.permute.xlu0 %5357
        %v5359 = vsel %vm1151, %v5356, 0
        %v5361 = vsel %vm1151, %v5358, 0
        %5363 = vmatprep.subr.mxu0 0.0
        %5364 = vmatpush1.xpose.msra.mxu0 0.0
        %5365 = vmatprep.subr.mxu0 0.0
        %5366 = vmatpush1.xpose.msra.mxu0 0.0
        %5367 = vmatprep.subr.mxu0 0.0
        %5368 = vmatpush1.xpose.msra.mxu0 0.0
        %5369 = vmatprep.subr.mxu0 0.0
        %5370 = vmatpush1.xpose.msra.mxu0 0.0
        %5371 = vmatprep.subr.mxu0 0.0
        %5372 = vmatpush1.xpose.msra.mxu0 0.0
        %5373 = vmatprep.subr.mxu0 0.0
        %5374 = vmatpush1.xpose.msra.mxu0 0.0
        %5375 = vmatprep.subr.mxu0 0.0
        %5376 = vmatpush1.xpose.msra.mxu0 0.0
        %5377 = vmatprep.subr.mxu0 0.0
        %5378 = vmatpush1.xpose.msra.mxu0 0.0
        %5379 = vmatprep.subr.mxu0 0.0
        %5380 = vmatpush1.xpose.msra.mxu0 0.0
        %5381 = vmatprep.subr.mxu0 0.0
        %5382 = vmatpush1.xpose.msra.mxu0 0.0
        %5383 = vmatprep.subr.mxu0 0.0
        %5384 = vmatpush1.xpose.msra.mxu0 0.0
        %5385 = vmatprep.subr.mxu0 0.0
        %5386 = vmatpush1.xpose.msra.mxu0 0.0
        %5387 = vmatprep.subr.mxu0 0.0
        %5388 = vmatpush1.xpose.msra.mxu0 0.0
        %5389 = vmatprep.subr.mxu0 0.0
        %5390 = vmatpush1.xpose.msra.mxu0 0.0
        %5391 = vmatprep.subr.mxu0 0.0
        %5392 = vmatpush1.xpose.msra.mxu0 0.0
        %5393 = vmatprep.subr.mxu0 0.0
        %5394 = vmatpush1.xpose.msra.mxu0 %v5361
        %5395 = vmatprep.subr.mxu0 0.0
        %5396 = vmatpush2.xpose.msra.mxu0 0.0
        %5397 = vmatprep.subr.mxu0 0.0
        %5398 = vmatpush2.xpose.msra.mxu0 0.0
        %5399 = vmatprep.subr.mxu0 0.0
        %5400 = vmatpush2.xpose.msra.mxu0 0.0
        %5401 = vmatprep.subr.mxu0 0.0
        %5402 = vmatpush2.xpose.msra.mxu0 0.0
        %5403 = vmatprep.subr.mxu0 0.0
        %5404 = vmatpush2.xpose.msra.mxu0 0.0
        %5405 = vmatprep.subr.mxu0 0.0
        %5406 = vmatpush2.xpose.msra.mxu0 0.0
        %5407 = vmatprep.subr.mxu0 0.0
        %5408 = vmatpush2.xpose.msra.mxu0 0.0
        %5409 = vmatprep.subr.mxu0 0.0
        %5410 = vmatpush2.xpose.msra.mxu0 0.0
        %5411 = vmatprep.subr.mxu0 0.0
        %5412 = vmatpush2.xpose.msra.mxu0 0.0
        %5413 = vmatprep.subr.mxu0 0.0
        %5414 = vmatpush2.xpose.msra.mxu0 0.0
        %5415 = vmatprep.subr.mxu0 0.0
        %5416 = vmatpush2.xpose.msra.mxu0 0.0
        %5417 = vmatprep.subr.mxu0 0.0
        %5418 = vmatpush2.xpose.msra.mxu0 0.0
        %5419 = vmatprep.subr.mxu0 0.0
        %5420 = vmatpush2.xpose.msra.mxu0 0.0
        %5421 = vmatprep.subr.mxu0 0.0
        %5422 = vmatpush2.xpose.msra.mxu0 0.0
        %5423 = vmatprep.subr.mxu0 0.0
        %5424 = vmatpush2.xpose.msra.mxu0 0.0
        %5425 = vmatprep.subr.mxu0 0.0
        %5426 = vmatpush2.xpose.msra.mxu0 0.0
        %5427 = vmatprep.mubr.f32.mxu0 0.0
        %5428 = vmatmul.mubr.f32.gmra.mxu0 %v5359
        %v5429 = vpop.f32.mrf.mxu0
        %v5430 = vadd.f32 0.0, %v5429
        %v5431 = vpop.f32.mrf.mxu0
        %5432 = vdwg.mxu0
        %v5433 = vmul.f32 %v5196, 0.35355338
        %v5434 = vmul.f32 %v5274, 0.35355338
        %v5435 = vmul.f32 %v5352, 0.35355338
        %v5436 = vmul.f32 %v5430, 0.35355338
        %v5437 = vsel %vm1151, %v5433, -inf
        %5438 = vmax.xlane.f32.xlu0 %v5437
        %v5439 = vpop.xlane.xlu0 %5438
        %v5440 = vsel %vm1151, %v5434, -inf
        %5441 = vmax.xlane.f32.xlu0 %v5440
        %v5442 = vpop.xlane.xlu0 %5441
        %v5443 = vsel %vm1151, %v5435, -inf
        %5444 = vmax.xlane.f32.xlu0 %v5443
        %v5445 = vpop.xlane.xlu0 %5444
        %v5446 = vsel %vm1151, %v5436, -inf
        %5447 = vmax.xlane.f32.xlu0 %v5446
        %v5448 = vpop.xlane.xlu0 %5447
        %v5449 = vsub.f32 %v5433, %v5439
        %v5450 = vsub.f32 %v5434, %v5442
        %v5451 = vsub.f32 %v5435, %v5445
        %v5452 = vsub.f32 %v5436, %v5448
        %v5453 = vmul.f32 %v5449, 1.442695
        %v5454 = vpow.pop %v5453
        %v5455 = vmul.f32 %v5450, 1.442695
        %v5456 = vpow.pop %v5455
        %v5457 = vmul.f32 %v5451, 1.442695
        %v5458 = vpow.pop %v5457
        %v5459 = vmul.f32 %v5452, 1.442695
        %v5460 = vpow.pop %v5459
        %v5461 = vsel %vm1151, %v5454, 0.0
        %5462 = vadd.xlane.f32.xlu0 %v5461
        %v5463 = vpop.xlane.xlu0 %5462
        %v5464 = vsel %vm1151, %v5456, 0.0
        %5465 = vadd.xlane.f32.xlu0 %v5464
        %v5466 = vpop.xlane.xlu0 %5465
        %v5467 = vsel %vm1151, %v5458, 0.0
        %5468 = vadd.xlane.f32.xlu0 %v5467
        %v5469 = vpop.xlane.xlu0 %5468
        %v5470 = vsel %vm1151, %v5460, 0.0
        %5471 = vadd.xlane.f32.xlu0 %v5470
        %v5472 = vpop.xlane.xlu0 %5471
        %v5473 = vrcp.pop %v5463
        %v5474 = vmul.f32 %v5454, %v5473
        %v5475 = vrcp.pop %v5466
        %v5476 = vmul.f32 %v5456, %v5475
        %v5477 = vrcp.pop %v5469
        %v5478 = vmul.f32 %v5458, %v5477
        %v5479 = vrcp.pop %v5472
        %v5480 = vmul.f32 %v5460, %v5479
        %5481 = vrot.lane.b32.xlu0 %v4443, 56
        %v5482 = vpop.permute.xlu0 %5481
        %v5485 = vsel %vm1151, %v5474, 0
        %5487 = vmatprep.subr.mxu0 0.0
        %5488 = vmatpush1.msra.mxu0 0.0
        %5489 = vmatprep.subr.mxu0 0.0
        %5490 = vmatpush1.msra.mxu0 0.0
        %5491 = vmatprep.subr.mxu0 0.0
        %5492 = vmatpush1.msra.mxu0 0.0
        %5493 = vmatprep.subr.mxu0 0.0
        %5494 = vmatpush1.msra.mxu0 0.0
        %5495 = vmatprep.subr.mxu0 0.0
        %5496 = vmatpush1.msra.mxu0 0.0
        %5497 = vmatprep.subr.mxu0 0.0
        %5498 = vmatpush1.msra.mxu0 0.0
        %5499 = vmatprep.subr.mxu0 0.0
        %5500 = vmatpush1.msra.mxu0 0.0
        %5501 = vmatprep.subr.mxu0 0.0
        %5502 = vmatpush1.msra.mxu0 0.0
        %5503 = vmatprep.subr.mxu0 0.0
        %5504 = vmatpush1.msra.mxu0 0.0
        %5505 = vmatprep.subr.mxu0 0.0
        %5506 = vmatpush1.msra.mxu0 0.0
        %5507 = vmatprep.subr.mxu0 0.0
        %5508 = vmatpush1.msra.mxu0 0.0
        %5509 = vmatprep.subr.mxu0 0.0
        %5510 = vmatpush1.msra.mxu0 0.0
        %5511 = vmatprep.subr.mxu0 0.0
        %5512 = vmatpush1.msra.mxu0 0.0
        %5513 = vmatprep.subr.mxu0 0.0
        %5514 = vmatpush1.msra.mxu0 0.0
        %5515 = vmatprep.subr.mxu0 0.0
        %5516 = vmatpush1.msra.mxu0 0.0
        %5517 = vmatprep.subr.mxu0 0.0
        %5518 = vmatpush1.msra.mxu0 %v5482
        %5519 = vmatprep.subr.mxu0 0.0
        %5520 = vmatpush2.msra.mxu0 0.0
        %5521 = vmatprep.subr.mxu0 0.0
        %5522 = vmatpush2.msra.mxu0 0.0
        %5523 = vmatprep.subr.mxu0 0.0
        %5524 = vmatpush2.msra.mxu0 0.0
        %5525 = vmatprep.subr.mxu0 0.0
        %5526 = vmatpush2.msra.mxu0 0.0
        %5527 = vmatprep.subr.mxu0 0.0
        %5528 = vmatpush2.msra.mxu0 0.0
        %5529 = vmatprep.subr.mxu0 0.0
        %5530 = vmatpush2.msra.mxu0 0.0
        %5531 = vmatprep.subr.mxu0 0.0
        %5532 = vmatpush2.msra.mxu0 0.0
        %5533 = vmatprep.subr.mxu0 0.0
        %5534 = vmatpush2.msra.mxu0 0.0
        %5535 = vmatprep.subr.mxu0 0.0
        %5536 = vmatpush2.msra.mxu0 0.0
        %5537 = vmatprep.subr.mxu0 0.0
        %5538 = vmatpush2.msra.mxu0 0.0
        %5539 = vmatprep.subr.mxu0 0.0
        %5540 = vmatpush2.msra.mxu0 0.0
        %5541 = vmatprep.subr.mxu0 0.0
        %5542 = vmatpush2.msra.mxu0 0.0
        %5543 = vmatprep.subr.mxu0 0.0
        %5544 = vmatpush2.msra.mxu0 0.0
        %5545 = vmatprep.subr.mxu0 0.0
        %5546 = vmatpush2.msra.mxu0 0.0
        %5547 = vmatprep.subr.mxu0 0.0
        %5548 = vmatpush2.msra.mxu0 0.0
        %5549 = vmatprep.subr.mxu0 0.0
        %5550 = vmatpush2.msra.mxu0 0.0
        %5551 = vmatprep.mubr.f32.mxu0 0.0
        %5552 = vmatmul.mubr.f32.gmra.mxu0 %v5485
        %v5553 = vpop.f32.mrf.mxu0
        %v5554 = vadd.f32 0.0, %v5553
        %v5555 = vpop.f32.mrf.mxu0
        %5556 = vdwg.mxu0
        %5557 = vrot.lane.b32.xlu0 %v4448, 56
        %v5558 = vpop.permute.xlu0 %5557
        %v5561 = vsel %vm1151, %v5476, 0
        %5563 = vmatprep.subr.mxu0 0.0
        %5564 = vmatpush1.msra.mxu0 0.0
        %5565 = vmatprep.subr.mxu0 0.0
        %5566 = vmatpush1.msra.mxu0 0.0
        %5567 = vmatprep.subr.mxu0 0.0
        %5568 = vmatpush1.msra.mxu0 0.0
        %5569 = vmatprep.subr.mxu0 0.0
        %5570 = vmatpush1.msra.mxu0 0.0
        %5571 = vmatprep.subr.mxu0 0.0
        %5572 = vmatpush1.msra.mxu0 0.0
        %5573 = vmatprep.subr.mxu0 0.0
        %5574 = vmatpush1.msra.mxu0 0.0
        %5575 = vmatprep.subr.mxu0 0.0
        %5576 = vmatpush1.msra.mxu0 0.0
        %5577 = vmatprep.subr.mxu0 0.0
        %5578 = vmatpush1.msra.mxu0 0.0
        %5579 = vmatprep.subr.mxu0 0.0
        %5580 = vmatpush1.msra.mxu0 0.0
        %5581 = vmatprep.subr.mxu0 0.0
        %5582 = vmatpush1.msra.mxu0 0.0
        %5583 = vmatprep.subr.mxu0 0.0
        %5584 = vmatpush1.msra.mxu0 0.0
        %5585 = vmatprep.subr.mxu0 0.0
        %5586 = vmatpush1.msra.mxu0 0.0
        %5587 = vmatprep.subr.mxu0 0.0
        %5588 = vmatpush1.msra.mxu0 0.0
        %5589 = vmatprep.subr.mxu0 0.0
        %5590 = vmatpush1.msra.mxu0 0.0
        %5591 = vmatprep.subr.mxu0 0.0
        %5592 = vmatpush1.msra.mxu0 0.0
        %5593 = vmatprep.subr.mxu0 0.0
        %5594 = vmatpush1.msra.mxu0 %v5558
        %5595 = vmatprep.subr.mxu0 0.0
        %5596 = vmatpush2.msra.mxu0 0.0
        %5597 = vmatprep.subr.mxu0 0.0
        %5598 = vmatpush2.msra.mxu0 0.0
        %5599 = vmatprep.subr.mxu0 0.0
        %5600 = vmatpush2.msra.mxu0 0.0
        %5601 = vmatprep.subr.mxu0 0.0
        %5602 = vmatpush2.msra.mxu0 0.0
        %5603 = vmatprep.subr.mxu0 0.0
        %5604 = vmatpush2.msra.mxu0 0.0
        %5605 = vmatprep.subr.mxu0 0.0
        %5606 = vmatpush2.msra.mxu0 0.0
        %5607 = vmatprep.subr.mxu0 0.0
        %5608 = vmatpush2.msra.mxu0 0.0
        %5609 = vmatprep.subr.mxu0 0.0
        %5610 = vmatpush2.msra.mxu0 0.0
        %5611 = vmatprep.subr.mxu0 0.0
        %5612 = vmatpush2.msra.mxu0 0.0
        %5613 = vmatprep.subr.mxu0 0.0
        %5614 = vmatpush2.msra.mxu0 0.0
        %5615 = vmatprep.subr.mxu0 0.0
        %5616 = vmatpush2.msra.mxu0 0.0
        %5617 = vmatprep.subr.mxu0 0.0
        %5618 = vmatpush2.msra.mxu0 0.0
        %5619 = vmatprep.subr.mxu0 0.0
        %5620 = vmatpush2.msra.mxu0 0.0
        %5621 = vmatprep.subr.mxu0 0.0
        %5622 = vmatpush2.msra.mxu0 0.0
        %5623 = vmatprep.subr.mxu0 0.0
        %5624 = vmatpush2.msra.mxu0 0.0
        %5625 = vmatprep.subr.mxu0 0.0
        %5626 = vmatpush2.msra.mxu0 0.0
        %5627 = vmatprep.mubr.f32.mxu0 0.0
        %5628 = vmatmul.mubr.f32.gmra.mxu0 %v5561
        %v5629 = vpop.f32.mrf.mxu0
        %v5630 = vadd.f32 0.0, %v5629
        %v5631 = vpop.f32.mrf.mxu0
        %5632 = vdwg.mxu0
        %5633 = vrot.lane.b32.xlu0 %v4453, 56
        %v5634 = vpop.permute.xlu0 %5633
        %v5637 = vsel %vm1151, %v5478, 0
        %5639 = vmatprep.subr.mxu0 0.0
        %5640 = vmatpush1.msra.mxu0 0.0
        %5641 = vmatprep.subr.mxu0 0.0
        %5642 = vmatpush1.msra.mxu0 0.0
        %5643 = vmatprep.subr.mxu0 0.0
        %5644 = vmatpush1.msra.mxu0 0.0
        %5645 = vmatprep.subr.mxu0 0.0
        %5646 = vmatpush1.msra.mxu0 0.0
        %5647 = vmatprep.subr.mxu0 0.0
        %5648 = vmatpush1.msra.mxu0 0.0
        %5649 = vmatprep.subr.mxu0 0.0
        %5650 = vmatpush1.msra.mxu0 0.0
        %5651 = vmatprep.subr.mxu0 0.0
        %5652 = vmatpush1.msra.mxu0 0.0
        %5653 = vmatprep.subr.mxu0 0.0
        %5654 = vmatpush1.msra.mxu0 0.0
        %5655 = vmatprep.subr.mxu0 0.0
        %5656 = vmatpush1.msra.mxu0 0.0
        %5657 = vmatprep.subr.mxu0 0.0
        %5658 = vmatpush1.msra.mxu0 0.0
        %5659 = vmatprep.subr.mxu0 0.0
        %5660 = vmatpush1.msra.mxu0 0.0
        %5661 = vmatprep.subr.mxu0 0.0
        %5662 = vmatpush1.msra.mxu0 0.0
        %5663 = vmatprep.subr.mxu0 0.0
        %5664 = vmatpush1.msra.mxu0 0.0
        %5665 = vmatprep.subr.mxu0 0.0
        %5666 = vmatpush1.msra.mxu0 0.0
        %5667 = vmatprep.subr.mxu0 0.0
        %5668 = vmatpush1.msra.mxu0 0.0
        %5669 = vmatprep.subr.mxu0 0.0
        %5670 = vmatpush1.msra.mxu0 %v5634
        %5671 = vmatprep.subr.mxu0 0.0
        %5672 = vmatpush2.msra.mxu0 0.0
        %5673 = vmatprep.subr.mxu0 0.0
        %5674 = vmatpush2.msra.mxu0 0.0
        %5675 = vmatprep.subr.mxu0 0.0
        %5676 = vmatpush2.msra.mxu0 0.0
        %5677 = vmatprep.subr.mxu0 0.0
        %5678 = vmatpush2.msra.mxu0 0.0
        %5679 = vmatprep.subr.mxu0 0.0
        %5680 = vmatpush2.msra.mxu0 0.0
        %5681 = vmatprep.subr.mxu0 0.0
        %5682 = vmatpush2.msra.mxu0 0.0
        %5683 = vmatprep.subr.mxu0 0.0
        %5684 = vmatpush2.msra.mxu0 0.0
        %5685 = vmatprep.subr.mxu0 0.0
        %5686 = vmatpush2.msra.mxu0 0.0
        %5687 = vmatprep.subr.mxu0 0.0
        %5688 = vmatpush2.msra.mxu0 0.0
        %5689 = vmatprep.subr.mxu0 0.0
        %5690 = vmatpush2.msra.mxu0 0.0
        %5691 = vmatprep.subr.mxu0 0.0
        %5692 = vmatpush2.msra.mxu0 0.0
        %5693 = vmatprep.subr.mxu0 0.0
        %5694 = vmatpush2.msra.mxu0 0.0
        %5695 = vmatprep.subr.mxu0 0.0
        %5696 = vmatpush2.msra.mxu0 0.0
        %5697 = vmatprep.subr.mxu0 0.0
        %5698 = vmatpush2.msra.mxu0 0.0
        %5699 = vmatprep.subr.mxu0 0.0
        %5700 = vmatpush2.msra.mxu0 0.0
        %5701 = vmatprep.subr.mxu0 0.0
        %5702 = vmatpush2.msra.mxu0 0.0
        %5703 = vmatprep.mubr.f32.mxu0 0.0
        %5704 = vmatmul.mubr.f32.gmra.mxu0 %v5637
        %v5705 = vpop.f32.mrf.mxu0
        %v5706 = vadd.f32 0.0, %v5705
        %v5707 = vpop.f32.mrf.mxu0
        %5708 = vdwg.mxu0
        %5709 = vrot.lane.b32.xlu0 %v4458, 56
        %v5710 = vpop.permute.xlu0 %5709
        %v5713 = vsel %vm1151, %v5480, 0
        %5715 = vmatprep.subr.mxu0 0.0
        %5716 = vmatpush1.msra.mxu0 0.0
        %5717 = vmatprep.subr.mxu0 0.0
        %5718 = vmatpush1.msra.mxu0 0.0
        %5719 = vmatprep.subr.mxu0 0.0
        %5720 = vmatpush1.msra.mxu0 0.0
        %5721 = vmatprep.subr.mxu0 0.0
        %5722 = vmatpush1.msra.mxu0 0.0
        %5723 = vmatprep.subr.mxu0 0.0
        %5724 = vmatpush1.msra.mxu0 0.0
        %5725 = vmatprep.subr.mxu0 0.0
        %5726 = vmatpush1.msra.mxu0 0.0
        %5727 = vmatprep.subr.mxu0 0.0
        %5728 = vmatpush1.msra.mxu0 0.0
        %5729 = vmatprep.subr.mxu0 0.0
        %5730 = vmatpush1.msra.mxu0 0.0
        %5731 = vmatprep.subr.mxu0 0.0
        %5732 = vmatpush1.msra.mxu0 0.0
        %5733 = vmatprep.subr.mxu0 0.0
        %5734 = vmatpush1.msra.mxu0 0.0
        %5735 = vmatprep.subr.mxu0 0.0
        %5736 = vmatpush1.msra.mxu0 0.0
        %5737 = vmatprep.subr.mxu0 0.0
        %5738 = vmatpush1.msra.mxu0 0.0
        %5739 = vmatprep.subr.mxu0 0.0
        %5740 = vmatpush1.msra.mxu0 0.0
        %5741 = vmatprep.subr.mxu0 0.0
        %5742 = vmatpush1.msra.mxu0 0.0
        %5743 = vmatprep.subr.mxu0 0.0
        %5744 = vmatpush1.msra.mxu0 0.0
        %5745 = vmatprep.subr.mxu0 0.0
        %5746 = vmatpush1.msra.mxu0 %v5710
        %5747 = vmatprep.subr.mxu0 0.0
        %5748 = vmatpush2.msra.mxu0 0.0
        %5749 = vmatprep.subr.mxu0 0.0
        %5750 = vmatpush2.msra.mxu0 0.0
        %5751 = vmatprep.subr.mxu0 0.0
        %5752 = vmatpush2.msra.mxu0 0.0
        %5753 = vmatprep.subr.mxu0 0.0
        %5754 = vmatpush2.msra.mxu0 0.0
        %5755 = vmatprep.subr.mxu0 0.0
        %5756 = vmatpush2.msra.mxu0 0.0
        %5757 = vmatprep.subr.mxu0 0.0
        %5758 = vmatpush2.msra.mxu0 0.0
        %5759 = vmatprep.subr.mxu0 0.0
        %5760 = vmatpush2.msra.mxu0 0.0
        %5761 = vmatprep.subr.mxu0 0.0
        %5762 = vmatpush2.msra.mxu0 0.0
        %5763 = vmatprep.subr.mxu0 0.0
        %5764 = vmatpush2.msra.mxu0 0.0
        %5765 = vmatprep.subr.mxu0 0.0
        %5766 = vmatpush2.msra.mxu0 0.0
        %5767 = vmatprep.subr.mxu0 0.0
        %5768 = vmatpush2.msra.mxu0 0.0
        %5769 = vmatprep.subr.mxu0 0.0
        %5770 = vmatpush2.msra.mxu0 0.0
        %5771 = vmatprep.subr.mxu0 0.0
        %5772 = vmatpush2.msra.mxu0 0.0
        %5773 = vmatprep.subr.mxu0 0.0
        %5774 = vmatpush2.msra.mxu0 0.0
        %5775 = vmatprep.subr.mxu0 0.0
        %5776 = vmatpush2.msra.mxu0 0.0
        %5777 = vmatprep.subr.mxu0 0.0
        %5778 = vmatpush2.msra.mxu0 0.0
        %5779 = vmatprep.mubr.f32.mxu0 0.0
        %5780 = vmatmul.mubr.f32.gmra.mxu0 %v5713
        %v5781 = vpop.f32.mrf.mxu0
        %v5782 = vadd.f32 0.0, %v5781
        %v5783 = vpop.f32.mrf.mxu0
        %5784 = vdwg.mxu0
        %5785 = vrot.lane.b32.xlu0 %v4443, 112
        %v5786 = vpop.permute.xlu0 %5785
        %5787 = vrot.lane.b32.xlu0 %v4443, 80
        %v5788 = vpop.permute.xlu0 %5787
        %v5789 = vsel %vm1151, %v5786, 0
        %v5791 = vsel %vm1151, %v5788, 0
        %5793 = vmatprep.subr.mxu0 0.0
        %5794 = vmatpush1.xpose.msra.mxu0 0.0
        %5795 = vmatprep.subr.mxu0 0.0
        %5796 = vmatpush1.xpose.msra.mxu0 0.0
        %5797 = vmatprep.subr.mxu0 0.0
        %5798 = vmatpush1.xpose.msra.mxu0 0.0
        %5799 = vmatprep.subr.mxu0 0.0
        %5800 = vmatpush1.xpose.msra.mxu0 0.0
        %5801 = vmatprep.subr.mxu0 0.0
        %5802 = vmatpush1.xpose.msra.mxu0 0.0
        %5803 = vmatprep.subr.mxu0 0.0
        %5804 = vmatpush1.xpose.msra.mxu0 0.0
        %5805 = vmatprep.subr.mxu0 0.0
        %5806 = vmatpush1.xpose.msra.mxu0 0.0
        %5807 = vmatprep.subr.mxu0 0.0
        %5808 = vmatpush1.xpose.msra.mxu0 0.0
        %5809 = vmatprep.subr.mxu0 0.0
        %5810 = vmatpush1.xpose.msra.mxu0 0.0
        %5811 = vmatprep.subr.mxu0 0.0
        %5812 = vmatpush1.xpose.msra.mxu0 0.0
        %5813 = vmatprep.subr.mxu0 0.0
        %5814 = vmatpush1.xpose.msra.mxu0 0.0
        %5815 = vmatprep.subr.mxu0 0.0
        %5816 = vmatpush1.xpose.msra.mxu0 0.0
        %5817 = vmatprep.subr.mxu0 0.0
        %5818 = vmatpush1.xpose.msra.mxu0 0.0
        %5819 = vmatprep.subr.mxu0 0.0
        %5820 = vmatpush1.xpose.msra.mxu0 0.0
        %5821 = vmatprep.subr.mxu0 0.0
        %5822 = vmatpush1.xpose.msra.mxu0 0.0
        %5823 = vmatprep.subr.mxu0 0.0
        %5824 = vmatpush1.xpose.msra.mxu0 %v5791
        %5825 = vmatprep.subr.mxu0 0.0
        %5826 = vmatpush2.xpose.msra.mxu0 0.0
        %5827 = vmatprep.subr.mxu0 0.0
        %5828 = vmatpush2.xpose.msra.mxu0 0.0
        %5829 = vmatprep.subr.mxu0 0.0
        %5830 = vmatpush2.xpose.msra.mxu0 0.0
        %5831 = vmatprep.subr.mxu0 0.0
        %5832 = vmatpush2.xpose.msra.mxu0 0.0
        %5833 = vmatprep.subr.mxu0 0.0
        %5834 = vmatpush2.xpose.msra.mxu0 0.0
        %5835 = vmatprep.subr.mxu0 0.0
        %5836 = vmatpush2.xpose.msra.mxu0 0.0
        %5837 = vmatprep.subr.mxu0 0.0
        %5838 = vmatpush2.xpose.msra.mxu0 0.0
        %5839 = vmatprep.subr.mxu0 0.0
        %5840 = vmatpush2.xpose.msra.mxu0 0.0
        %5841 = vmatprep.subr.mxu0 0.0
        %5842 = vmatpush2.xpose.msra.mxu0 0.0
        %5843 = vmatprep.subr.mxu0 0.0
        %5844 = vmatpush2.xpose.msra.mxu0 0.0
        %5845 = vmatprep.subr.mxu0 0.0
        %5846 = vmatpush2.xpose.msra.mxu0 0.0
        %5847 = vmatprep.subr.mxu0 0.0
        %5848 = vmatpush2.xpose.msra.mxu0 0.0
        %5849 = vmatprep.subr.mxu0 0.0
        %5850 = vmatpush2.xpose.msra.mxu0 0.0
        %5851 = vmatprep.subr.mxu0 0.0
        %5852 = vmatpush2.xpose.msra.mxu0 0.0
        %5853 = vmatprep.subr.mxu0 0.0
        %5854 = vmatpush2.xpose.msra.mxu0 0.0
        %5855 = vmatprep.subr.mxu0 0.0
        %5856 = vmatpush2.xpose.msra.mxu0 0.0
        %5857 = vmatprep.mubr.f32.mxu0 0.0
        %5858 = vmatmul.mubr.f32.gmra.mxu0 %v5789
        %v5859 = vpop.f32.mrf.mxu0
        %v5860 = vadd.f32 0.0, %v5859
        %v5861 = vpop.f32.mrf.mxu0
        %5862 = vdwg.mxu0
        %5863 = vrot.lane.b32.xlu0 %v4448, 112
        %v5864 = vpop.permute.xlu0 %5863
        %5865 = vrot.lane.b32.xlu0 %v4448, 80
        %v5866 = vpop.permute.xlu0 %5865
        %v5867 = vsel %vm1151, %v5864, 0
        %v5869 = vsel %vm1151, %v5866, 0
        %5871 = vmatprep.subr.mxu0 0.0
        %5872 = vmatpush1.xpose.msra.mxu0 0.0
        %5873 = vmatprep.subr.mxu0 0.0
        %5874 = vmatpush1.xpose.msra.mxu0 0.0
        %5875 = vmatprep.subr.mxu0 0.0
        %5876 = vmatpush1.xpose.msra.mxu0 0.0
        %5877 = vmatprep.subr.mxu0 0.0
        %5878 = vmatpush1.xpose.msra.mxu0 0.0
        %5879 = vmatprep.subr.mxu0 0.0
        %5880 = vmatpush1.xpose.msra.mxu0 0.0
        %5881 = vmatprep.subr.mxu0 0.0
        %5882 = vmatpush1.xpose.msra.mxu0 0.0
        %5883 = vmatprep.subr.mxu0 0.0
        %5884 = vmatpush1.xpose.msra.mxu0 0.0
        %5885 = vmatprep.subr.mxu0 0.0
        %5886 = vmatpush1.xpose.msra.mxu0 0.0
        %5887 = vmatprep.subr.mxu0 0.0
        %5888 = vmatpush1.xpose.msra.mxu0 0.0
        %5889 = vmatprep.subr.mxu0 0.0
        %5890 = vmatpush1.xpose.msra.mxu0 0.0
        %5891 = vmatprep.subr.mxu0 0.0
        %5892 = vmatpush1.xpose.msra.mxu0 0.0
        %5893 = vmatprep.subr.mxu0 0.0
        %5894 = vmatpush1.xpose.msra.mxu0 0.0
        %5895 = vmatprep.subr.mxu0 0.0
        %5896 = vmatpush1.xpose.msra.mxu0 0.0
        %5897 = vmatprep.subr.mxu0 0.0
        %5898 = vmatpush1.xpose.msra.mxu0 0.0
        %5899 = vmatprep.subr.mxu0 0.0
        %5900 = vmatpush1.xpose.msra.mxu0 0.0
        %5901 = vmatprep.subr.mxu0 0.0
        %5902 = vmatpush1.xpose.msra.mxu0 %v5869
        %5903 = vmatprep.subr.mxu0 0.0
        %5904 = vmatpush2.xpose.msra.mxu0 0.0
        %5905 = vmatprep.subr.mxu0 0.0
        %5906 = vmatpush2.xpose.msra.mxu0 0.0
        %5907 = vmatprep.subr.mxu0 0.0
        %5908 = vmatpush2.xpose.msra.mxu0 0.0
        %5909 = vmatprep.subr.mxu0 0.0
        %5910 = vmatpush2.xpose.msra.mxu0 0.0
        %5911 = vmatprep.subr.mxu0 0.0
        %5912 = vmatpush2.xpose.msra.mxu0 0.0
        %5913 = vmatprep.subr.mxu0 0.0
        %5914 = vmatpush2.xpose.msra.mxu0 0.0
        %5915 = vmatprep.subr.mxu0 0.0
        %5916 = vmatpush2.xpose.msra.mxu0 0.0
        %5917 = vmatprep.subr.mxu0 0.0
        %5918 = vmatpush2.xpose.msra.mxu0 0.0
        %5919 = vmatprep.subr.mxu0 0.0
        %5920 = vmatpush2.xpose.msra.mxu0 0.0
        %5921 = vmatprep.subr.mxu0 0.0
        %5922 = vmatpush2.xpose.msra.mxu0 0.0
        %5923 = vmatprep.subr.mxu0 0.0
        %5924 = vmatpush2.xpose.msra.mxu0 0.0
        %5925 = vmatprep.subr.mxu0 0.0
        %5926 = vmatpush2.xpose.msra.mxu0 0.0
        %5927 = vmatprep.subr.mxu0 0.0
        %5928 = vmatpush2.xpose.msra.mxu0 0.0
        %5929 = vmatprep.subr.mxu0 0.0
        %5930 = vmatpush2.xpose.msra.mxu0 0.0
        %5931 = vmatprep.subr.mxu0 0.0
        %5932 = vmatpush2.xpose.msra.mxu0 0.0
        %5933 = vmatprep.subr.mxu0 0.0
        %5934 = vmatpush2.xpose.msra.mxu0 0.0
        %5935 = vmatprep.mubr.f32.mxu0 0.0
        %5936 = vmatmul.mubr.f32.gmra.mxu0 %v5867
        %v5937 = vpop.f32.mrf.mxu0
        %v5938 = vadd.f32 0.0, %v5937
        %v5939 = vpop.f32.mrf.mxu0
        %5940 = vdwg.mxu0
        %5941 = vrot.lane.b32.xlu0 %v4453, 112
        %v5942 = vpop.permute.xlu0 %5941
        %5943 = vrot.lane.b32.xlu0 %v4453, 80
        %v5944 = vpop.permute.xlu0 %5943
        %v5945 = vsel %vm1151, %v5942, 0
        %v5947 = vsel %vm1151, %v5944, 0
        %5949 = vmatprep.subr.mxu0 0.0
        %5950 = vmatpush1.xpose.msra.mxu0 0.0
        %5951 = vmatprep.subr.mxu0 0.0
        %5952 = vmatpush1.xpose.msra.mxu0 0.0
        %5953 = vmatprep.subr.mxu0 0.0
        %5954 = vmatpush1.xpose.msra.mxu0 0.0
        %5955 = vmatprep.subr.mxu0 0.0
        %5956 = vmatpush1.xpose.msra.mxu0 0.0
        %5957 = vmatprep.subr.mxu0 0.0
        %5958 = vmatpush1.xpose.msra.mxu0 0.0
        %5959 = vmatprep.subr.mxu0 0.0
        %5960 = vmatpush1.xpose.msra.mxu0 0.0
        %5961 = vmatprep.subr.mxu0 0.0
        %5962 = vmatpush1.xpose.msra.mxu0 0.0
        %5963 = vmatprep.subr.mxu0 0.0
        %5964 = vmatpush1.xpose.msra.mxu0 0.0
        %5965 = vmatprep.subr.mxu0 0.0
        %5966 = vmatpush1.xpose.msra.mxu0 0.0
        %5967 = vmatprep.subr.mxu0 0.0
        %5968 = vmatpush1.xpose.msra.mxu0 0.0
        %5969 = vmatprep.subr.mxu0 0.0
        %5970 = vmatpush1.xpose.msra.mxu0 0.0
        %5971 = vmatprep.subr.mxu0 0.0
        %5972 = vmatpush1.xpose.msra.mxu0 0.0
        %5973 = vmatprep.subr.mxu0 0.0
        %5974 = vmatpush1.xpose.msra.mxu0 0.0
        %5975 = vmatprep.subr.mxu0 0.0
        %5976 = vmatpush1.xpose.msra.mxu0 0.0
        %5977 = vmatprep.subr.mxu0 0.0
        %5978 = vmatpush1.xpose.msra.mxu0 0.0
        %5979 = vmatprep.subr.mxu0 0.0
        %5980 = vmatpush1.xpose.msra.mxu0 %v5947
        %5981 = vmatprep.subr.mxu0 0.0
        %5982 = vmatpush2.xpose.msra.mxu0 0.0
        %5983 = vmatprep.subr.mxu0 0.0
        %5984 = vmatpush2.xpose.msra.mxu0 0.0
        %5985 = vmatprep.subr.mxu0 0.0
        %5986 = vmatpush2.xpose.msra.mxu0 0.0
        %5987 = vmatprep.subr.mxu0 0.0
        %5988 = vmatpush2.xpose.msra.mxu0 0.0
        %5989 = vmatprep.subr.mxu0 0.0
        %5990 = vmatpush2.xpose.msra.mxu0 0.0
        %5991 = vmatprep.subr.mxu0 0.0
        %5992 = vmatpush2.xpose.msra.mxu0 0.0
        %5993 = vmatprep.subr.mxu0 0.0
        %5994 = vmatpush2.xpose.msra.mxu0 0.0
        %5995 = vmatprep.subr.mxu0 0.0
        %5996 = vmatpush2.xpose.msra.mxu0 0.0
        %5997 = vmatprep.subr.mxu0 0.0
        %5998 = vmatpush2.xpose.msra.mxu0 0.0
        %5999 = vmatprep.subr.mxu0 0.0
        %6000 = vmatpush2.xpose.msra.mxu0 0.0
        %6001 = vmatprep.subr.mxu0 0.0
        %6002 = vmatpush2.xpose.msra.mxu0 0.0
        %6003 = vmatprep.subr.mxu0 0.0
        %6004 = vmatpush2.xpose.msra.mxu0 0.0
        %6005 = vmatprep.subr.mxu0 0.0
        %6006 = vmatpush2.xpose.msra.mxu0 0.0
        %6007 = vmatprep.subr.mxu0 0.0
        %6008 = vmatpush2.xpose.msra.mxu0 0.0
        %6009 = vmatprep.subr.mxu0 0.0
        %6010 = vmatpush2.xpose.msra.mxu0 0.0
        %6011 = vmatprep.subr.mxu0 0.0
        %6012 = vmatpush2.xpose.msra.mxu0 0.0
        %6013 = vmatprep.mubr.f32.mxu0 0.0
        %6014 = vmatmul.mubr.f32.gmra.mxu0 %v5945
        %v6015 = vpop.f32.mrf.mxu0
        %v6016 = vadd.f32 0.0, %v6015
        %v6017 = vpop.f32.mrf.mxu0
        %6018 = vdwg.mxu0
        %6019 = vrot.lane.b32.xlu0 %v4458, 112
        %v6020 = vpop.permute.xlu0 %6019
        %6021 = vrot.lane.b32.xlu0 %v4458, 80
        %v6022 = vpop.permute.xlu0 %6021
        %v6023 = vsel %vm1151, %v6020, 0
        %v6025 = vsel %vm1151, %v6022, 0
        %6027 = vmatprep.subr.mxu0 0.0
        %6028 = vmatpush1.xpose.msra.mxu0 0.0
        %6029 = vmatprep.subr.mxu0 0.0
        %6030 = vmatpush1.xpose.msra.mxu0 0.0
        %6031 = vmatprep.subr.mxu0 0.0
        %6032 = vmatpush1.xpose.msra.mxu0 0.0
        %6033 = vmatprep.subr.mxu0 0.0
        %6034 = vmatpush1.xpose.msra.mxu0 0.0
        %6035 = vmatprep.subr.mxu0 0.0
        %6036 = vmatpush1.xpose.msra.mxu0 0.0
        %6037 = vmatprep.subr.mxu0 0.0
        %6038 = vmatpush1.xpose.msra.mxu0 0.0
        %6039 = vmatprep.subr.mxu0 0.0
        %6040 = vmatpush1.xpose.msra.mxu0 0.0
        %6041 = vmatprep.subr.mxu0 0.0
        %6042 = vmatpush1.xpose.msra.mxu0 0.0
        %6043 = vmatprep.subr.mxu0 0.0
        %6044 = vmatpush1.xpose.msra.mxu0 0.0
        %6045 = vmatprep.subr.mxu0 0.0
        %6046 = vmatpush1.xpose.msra.mxu0 0.0
        %6047 = vmatprep.subr.mxu0 0.0
        %6048 = vmatpush1.xpose.msra.mxu0 0.0
        %6049 = vmatprep.subr.mxu0 0.0
        %6050 = vmatpush1.xpose.msra.mxu0 0.0
        %6051 = vmatprep.subr.mxu0 0.0
        %6052 = vmatpush1.xpose.msra.mxu0 0.0
        %6053 = vmatprep.subr.mxu0 0.0
        %6054 = vmatpush1.xpose.msra.mxu0 0.0
        %6055 = vmatprep.subr.mxu0 0.0
        %6056 = vmatpush1.xpose.msra.mxu0 0.0
        %6057 = vmatprep.subr.mxu0 0.0
        %6058 = vmatpush1.xpose.msra.mxu0 %v6025
        %6059 = vmatprep.subr.mxu0 0.0
        %6060 = vmatpush2.xpose.msra.mxu0 0.0
        %6061 = vmatprep.subr.mxu0 0.0
        %6062 = vmatpush2.xpose.msra.mxu0 0.0
        %6063 = vmatprep.subr.mxu0 0.0
        %6064 = vmatpush2.xpose.msra.mxu0 0.0
        %6065 = vmatprep.subr.mxu0 0.0
        %6066 = vmatpush2.xpose.msra.mxu0 0.0
        %6067 = vmatprep.subr.mxu0 0.0
        %6068 = vmatpush2.xpose.msra.mxu0 0.0
        %6069 = vmatprep.subr.mxu0 0.0
        %6070 = vmatpush2.xpose.msra.mxu0 0.0
        %6071 = vmatprep.subr.mxu0 0.0
        %6072 = vmatpush2.xpose.msra.mxu0 0.0
        %6073 = vmatprep.subr.mxu0 0.0
        %6074 = vmatpush2.xpose.msra.mxu0 0.0
        %6075 = vmatprep.subr.mxu0 0.0
        %6076 = vmatpush2.xpose.msra.mxu0 0.0
        %6077 = vmatprep.subr.mxu0 0.0
        %6078 = vmatpush2.xpose.msra.mxu0 0.0
        %6079 = vmatprep.subr.mxu0 0.0
        %6080 = vmatpush2.xpose.msra.mxu0 0.0
        %6081 = vmatprep.subr.mxu0 0.0
        %6082 = vmatpush2.xpose.msra.mxu0 0.0
        %6083 = vmatprep.subr.mxu0 0.0
        %6084 = vmatpush2.xpose.msra.mxu0 0.0
        %6085 = vmatprep.subr.mxu0 0.0
        %6086 = vmatpush2.xpose.msra.mxu0 0.0
        %6087 = vmatprep.subr.mxu0 0.0
        %6088 = vmatpush2.xpose.msra.mxu0 0.0
        %6089 = vmatprep.subr.mxu0 0.0
        %6090 = vmatpush2.xpose.msra.mxu0 0.0
        %6091 = vmatprep.mubr.f32.mxu0 0.0
        %6092 = vmatmul.mubr.f32.gmra.mxu0 %v6023
        %v6093 = vpop.f32.mrf.mxu0
        %v6094 = vadd.f32 0.0, %v6093
        %v6095 = vpop.f32.mrf.mxu0
        %6096 = vdwg.mxu0
        %v6097 = vmul.f32 %v5860, 0.35355338
        %v6098 = vmul.f32 %v5938, 0.35355338
        %v6099 = vmul.f32 %v6016, 0.35355338
        %v6100 = vmul.f32 %v6094, 0.35355338
        %v6101 = vsel %vm1151, %v6097, -inf
        %6102 = vmax.xlane.f32.xlu0 %v6101
        %v6103 = vpop.xlane.xlu0 %6102
        %v6104 = vsel %vm1151, %v6098, -inf
        %6105 = vmax.xlane.f32.xlu0 %v6104
        %v6106 = vpop.xlane.xlu0 %6105
        %v6107 = vsel %vm1151, %v6099, -inf
        %6108 = vmax.xlane.f32.xlu0 %v6107
        %v6109 = vpop.xlane.xlu0 %6108
        %v6110 = vsel %vm1151, %v6100, -inf
        %6111 = vmax.xlane.f32.xlu0 %v6110
        %v6112 = vpop.xlane.xlu0 %6111
        %v6113 = vsub.f32 %v6097, %v6103
        %v6114 = vsub.f32 %v6098, %v6106
        %v6115 = vsub.f32 %v6099, %v6109
        %v6116 = vsub.f32 %v6100, %v6112
        %v6117 = vmul.f32 %v6113, 1.442695
        %v6118 = vpow.pop %v6117
        %v6119 = vmul.f32 %v6114, 1.442695
        %v6120 = vpow.pop %v6119
        %v6121 = vmul.f32 %v6115, 1.442695
        %v6122 = vpow.pop %v6121
        %v6123 = vmul.f32 %v6116, 1.442695
        %v6124 = vpow.pop %v6123
        %v6125 = vsel %vm1151, %v6118, 0.0
        %6126 = vadd.xlane.f32.xlu0 %v6125
        %v6127 = vpop.xlane.xlu0 %6126
        %v6128 = vsel %vm1151, %v6120, 0.0
        %6129 = vadd.xlane.f32.xlu0 %v6128
        %v6130 = vpop.xlane.xlu0 %6129
        %v6131 = vsel %vm1151, %v6122, 0.0
        %6132 = vadd.xlane.f32.xlu0 %v6131
        %v6133 = vpop.xlane.xlu0 %6132
        %v6134 = vsel %vm1151, %v6124, 0.0
        %6135 = vadd.xlane.f32.xlu0 %v6134
        %v6136 = vpop.xlane.xlu0 %6135
        %v6137 = vrcp.pop %v6127
        %v6138 = vmul.f32 %v6118, %v6137
        %v6139 = vrcp.pop %v6130
        %v6140 = vmul.f32 %v6120, %v6139
        %v6141 = vrcp.pop %v6133
        %v6142 = vmul.f32 %v6122, %v6141
        %v6143 = vrcp.pop %v6136
        %v6144 = vmul.f32 %v6124, %v6143
        %6145 = vrot.lane.b32.xlu0 %v4443, 48
        %v6146 = vpop.permute.xlu0 %6145
        %v6149 = vsel %vm1151, %v6138, 0
        %6151 = vmatprep.subr.mxu0 0.0
        %6152 = vmatpush1.msra.mxu0 0.0
        %6153 = vmatprep.subr.mxu0 0.0
        %6154 = vmatpush1.msra.mxu0 0.0
        %6155 = vmatprep.subr.mxu0 0.0
        %6156 = vmatpush1.msra.mxu0 0.0
        %6157 = vmatprep.subr.mxu0 0.0
        %6158 = vmatpush1.msra.mxu0 0.0
        %6159 = vmatprep.subr.mxu0 0.0
        %6160 = vmatpush1.msra.mxu0 0.0
        %6161 = vmatprep.subr.mxu0 0.0
        %6162 = vmatpush1.msra.mxu0 0.0
        %6163 = vmatprep.subr.mxu0 0.0
        %6164 = vmatpush1.msra.mxu0 0.0
        %6165 = vmatprep.subr.mxu0 0.0
        %6166 = vmatpush1.msra.mxu0 0.0
        %6167 = vmatprep.subr.mxu0 0.0
        %6168 = vmatpush1.msra.mxu0 0.0
        %6169 = vmatprep.subr.mxu0 0.0
        %6170 = vmatpush1.msra.mxu0 0.0
        %6171 = vmatprep.subr.mxu0 0.0
        %6172 = vmatpush1.msra.mxu0 0.0
        %6173 = vmatprep.subr.mxu0 0.0
        %6174 = vmatpush1.msra.mxu0 0.0
        %6175 = vmatprep.subr.mxu0 0.0
        %6176 = vmatpush1.msra.mxu0 0.0
        %6177 = vmatprep.subr.mxu0 0.0
        %6178 = vmatpush1.msra.mxu0 0.0
        %6179 = vmatprep.subr.mxu0 0.0
        %6180 = vmatpush1.msra.mxu0 0.0
        %6181 = vmatprep.subr.mxu0 0.0
        %6182 = vmatpush1.msra.mxu0 %v6146
        %6183 = vmatprep.subr.mxu0 0.0
        %6184 = vmatpush2.msra.mxu0 0.0
        %6185 = vmatprep.subr.mxu0 0.0
        %6186 = vmatpush2.msra.mxu0 0.0
        %6187 = vmatprep.subr.mxu0 0.0
        %6188 = vmatpush2.msra.mxu0 0.0
        %6189 = vmatprep.subr.mxu0 0.0
        %6190 = vmatpush2.msra.mxu0 0.0
        %6191 = vmatprep.subr.mxu0 0.0
        %6192 = vmatpush2.msra.mxu0 0.0
        %6193 = vmatprep.subr.mxu0 0.0
        %6194 = vmatpush2.msra.mxu0 0.0
        %6195 = vmatprep.subr.mxu0 0.0
        %6196 = vmatpush2.msra.mxu0 0.0
        %6197 = vmatprep.subr.mxu0 0.0
        %6198 = vmatpush2.msra.mxu0 0.0
        %6199 = vmatprep.subr.mxu0 0.0
        %6200 = vmatpush2.msra.mxu0 0.0
        %6201 = vmatprep.subr.mxu0 0.0
        %6202 = vmatpush2.msra.mxu0 0.0
        %6203 = vmatprep.subr.mxu0 0.0
        %6204 = vmatpush2.msra.mxu0 0.0
        %6205 = vmatprep.subr.mxu0 0.0
        %6206 = vmatpush2.msra.mxu0 0.0
        %6207 = vmatprep.subr.mxu0 0.0
        %6208 = vmatpush2.msra.mxu0 0.0
        %6209 = vmatprep.subr.mxu0 0.0
        %6210 = vmatpush2.msra.mxu0 0.0
        %6211 = vmatprep.subr.mxu0 0.0
        %6212 = vmatpush2.msra.mxu0 0.0
        %6213 = vmatprep.subr.mxu0 0.0
        %6214 = vmatpush2.msra.mxu0 0.0
        %6215 = vmatprep.mubr.f32.mxu0 0.0
        %6216 = vmatmul.mubr.f32.gmra.mxu0 %v6149
        %v6217 = vpop.f32.mrf.mxu0
        %v6218 = vadd.f32 0.0, %v6217
        %v6219 = vpop.f32.mrf.mxu0
        %6220 = vdwg.mxu0
        %6221 = vrot.lane.b32.xlu0 %v4448, 48
        %v6222 = vpop.permute.xlu0 %6221
        %v6225 = vsel %vm1151, %v6140, 0
        %6227 = vmatprep.subr.mxu0 0.0
        %6228 = vmatpush1.msra.mxu0 0.0
        %6229 = vmatprep.subr.mxu0 0.0
        %6230 = vmatpush1.msra.mxu0 0.0
        %6231 = vmatprep.subr.mxu0 0.0
        %6232 = vmatpush1.msra.mxu0 0.0
        %6233 = vmatprep.subr.mxu0 0.0
        %6234 = vmatpush1.msra.mxu0 0.0
        %6235 = vmatprep.subr.mxu0 0.0
        %6236 = vmatpush1.msra.mxu0 0.0
        %6237 = vmatprep.subr.mxu0 0.0
        %6238 = vmatpush1.msra.mxu0 0.0
        %6239 = vmatprep.subr.mxu0 0.0
        %6240 = vmatpush1.msra.mxu0 0.0
        %6241 = vmatprep.subr.mxu0 0.0
        %6242 = vmatpush1.msra.mxu0 0.0
        %6243 = vmatprep.subr.mxu0 0.0
        %6244 = vmatpush1.msra.mxu0 0.0
        %6245 = vmatprep.subr.mxu0 0.0
        %6246 = vmatpush1.msra.mxu0 0.0
        %6247 = vmatprep.subr.mxu0 0.0
        %6248 = vmatpush1.msra.mxu0 0.0
        %6249 = vmatprep.subr.mxu0 0.0
        %6250 = vmatpush1.msra.mxu0 0.0
        %6251 = vmatprep.subr.mxu0 0.0
        %6252 = vmatpush1.msra.mxu0 0.0
        %6253 = vmatprep.subr.mxu0 0.0
        %6254 = vmatpush1.msra.mxu0 0.0
        %6255 = vmatprep.subr.mxu0 0.0
        %6256 = vmatpush1.msra.mxu0 0.0
        %6257 = vmatprep.subr.mxu0 0.0
        %6258 = vmatpush1.msra.mxu0 %v6222
        %6259 = vmatprep.subr.mxu0 0.0
        %6260 = vmatpush2.msra.mxu0 0.0
        %6261 = vmatprep.subr.mxu0 0.0
        %6262 = vmatpush2.msra.mxu0 0.0
        %6263 = vmatprep.subr.mxu0 0.0
        %6264 = vmatpush2.msra.mxu0 0.0
        %6265 = vmatprep.subr.mxu0 0.0
        %6266 = vmatpush2.msra.mxu0 0.0
        %6267 = vmatprep.subr.mxu0 0.0
        %6268 = vmatpush2.msra.mxu0 0.0
        %6269 = vmatprep.subr.mxu0 0.0
        %6270 = vmatpush2.msra.mxu0 0.0
        %6271 = vmatprep.subr.mxu0 0.0
        %6272 = vmatpush2.msra.mxu0 0.0
        %6273 = vmatprep.subr.mxu0 0.0
        %6274 = vmatpush2.msra.mxu0 0.0
        %6275 = vmatprep.subr.mxu0 0.0
        %6276 = vmatpush2.msra.mxu0 0.0
        %6277 = vmatprep.subr.mxu0 0.0
        %6278 = vmatpush2.msra.mxu0 0.0
        %6279 = vmatprep.subr.mxu0 0.0
        %6280 = vmatpush2.msra.mxu0 0.0
        %6281 = vmatprep.subr.mxu0 0.0
        %6282 = vmatpush2.msra.mxu0 0.0
        %6283 = vmatprep.subr.mxu0 0.0
        %6284 = vmatpush2.msra.mxu0 0.0
        %6285 = vmatprep.subr.mxu0 0.0
        %6286 = vmatpush2.msra.mxu0 0.0
        %6287 = vmatprep.subr.mxu0 0.0
        %6288 = vmatpush2.msra.mxu0 0.0
        %6289 = vmatprep.subr.mxu0 0.0
        %6290 = vmatpush2.msra.mxu0 0.0
        %6291 = vmatprep.mubr.f32.mxu0 0.0
        %6292 = vmatmul.mubr.f32.gmra.mxu0 %v6225
        %v6293 = vpop.f32.mrf.mxu0
        %v6294 = vadd.f32 0.0, %v6293
        %v6295 = vpop.f32.mrf.mxu0
        %6296 = vdwg.mxu0
        %6297 = vrot.lane.b32.xlu0 %v4453, 48
        %v6298 = vpop.permute.xlu0 %6297
        %v6301 = vsel %vm1151, %v6142, 0
        %6303 = vmatprep.subr.mxu0 0.0
        %6304 = vmatpush1.msra.mxu0 0.0
        %6305 = vmatprep.subr.mxu0 0.0
        %6306 = vmatpush1.msra.mxu0 0.0
        %6307 = vmatprep.subr.mxu0 0.0
        %6308 = vmatpush1.msra.mxu0 0.0
        %6309 = vmatprep.subr.mxu0 0.0
        %6310 = vmatpush1.msra.mxu0 0.0
        %6311 = vmatprep.subr.mxu0 0.0
        %6312 = vmatpush1.msra.mxu0 0.0
        %6313 = vmatprep.subr.mxu0 0.0
        %6314 = vmatpush1.msra.mxu0 0.0
        %6315 = vmatprep.subr.mxu0 0.0
        %6316 = vmatpush1.msra.mxu0 0.0
        %6317 = vmatprep.subr.mxu0 0.0
        %6318 = vmatpush1.msra.mxu0 0.0
        %6319 = vmatprep.subr.mxu0 0.0
        %6320 = vmatpush1.msra.mxu0 0.0
        %6321 = vmatprep.subr.mxu0 0.0
        %6322 = vmatpush1.msra.mxu0 0.0
        %6323 = vmatprep.subr.mxu0 0.0
        %6324 = vmatpush1.msra.mxu0 0.0
        %6325 = vmatprep.subr.mxu0 0.0
        %6326 = vmatpush1.msra.mxu0 0.0
        %6327 = vmatprep.subr.mxu0 0.0
        %6328 = vmatpush1.msra.mxu0 0.0
        %6329 = vmatprep.subr.mxu0 0.0
        %6330 = vmatpush1.msra.mxu0 0.0
        %6331 = vmatprep.subr.mxu0 0.0
        %6332 = vmatpush1.msra.mxu0 0.0
        %6333 = vmatprep.subr.mxu0 0.0
        %6334 = vmatpush1.msra.mxu0 %v6298
        %6335 = vmatprep.subr.mxu0 0.0
        %6336 = vmatpush2.msra.mxu0 0.0
        %6337 = vmatprep.subr.mxu0 0.0
        %6338 = vmatpush2.msra.mxu0 0.0
        %6339 = vmatprep.subr.mxu0 0.0
        %6340 = vmatpush2.msra.mxu0 0.0
        %6341 = vmatprep.subr.mxu0 0.0
        %6342 = vmatpush2.msra.mxu0 0.0
        %6343 = vmatprep.subr.mxu0 0.0
        %6344 = vmatpush2.msra.mxu0 0.0
        %6345 = vmatprep.subr.mxu0 0.0
        %6346 = vmatpush2.msra.mxu0 0.0
        %6347 = vmatprep.subr.mxu0 0.0
        %6348 = vmatpush2.msra.mxu0 0.0
        %6349 = vmatprep.subr.mxu0 0.0
        %6350 = vmatpush2.msra.mxu0 0.0
        %6351 = vmatprep.subr.mxu0 0.0
        %6352 = vmatpush2.msra.mxu0 0.0
        %6353 = vmatprep.subr.mxu0 0.0
        %6354 = vmatpush2.msra.mxu0 0.0
        %6355 = vmatprep.subr.mxu0 0.0
        %6356 = vmatpush2.msra.mxu0 0.0
        %6357 = vmatprep.subr.mxu0 0.0
        %6358 = vmatpush2.msra.mxu0 0.0
        %6359 = vmatprep.subr.mxu0 0.0
        %6360 = vmatpush2.msra.mxu0 0.0
        %6361 = vmatprep.subr.mxu0 0.0
        %6362 = vmatpush2.msra.mxu0 0.0
        %6363 = vmatprep.subr.mxu0 0.0
        %6364 = vmatpush2.msra.mxu0 0.0
        %6365 = vmatprep.subr.mxu0 0.0
        %6366 = vmatpush2.msra.mxu0 0.0
        %6367 = vmatprep.mubr.f32.mxu0 0.0
        %6368 = vmatmul.mubr.f32.gmra.mxu0 %v6301
        %v6369 = vpop.f32.mrf.mxu0
        %v6370 = vadd.f32 0.0, %v6369
        %v6371 = vpop.f32.mrf.mxu0
        %6372 = vdwg.mxu0
        %6373 = vrot.lane.b32.xlu0 %v4458, 48
        %v6374 = vpop.permute.xlu0 %6373
        %v6377 = vsel %vm1151, %v6144, 0
        %6379 = vmatprep.subr.mxu0 0.0
        %6380 = vmatpush1.msra.mxu0 0.0
        %6381 = vmatprep.subr.mxu0 0.0
        %6382 = vmatpush1.msra.mxu0 0.0
        %6383 = vmatprep.subr.mxu0 0.0
        %6384 = vmatpush1.msra.mxu0 0.0
        %6385 = vmatprep.subr.mxu0 0.0
        %6386 = vmatpush1.msra.mxu0 0.0
        %6387 = vmatprep.subr.mxu0 0.0
        %6388 = vmatpush1.msra.mxu0 0.0
        %6389 = vmatprep.subr.mxu0 0.0
        %6390 = vmatpush1.msra.mxu0 0.0
        %6391 = vmatprep.subr.mxu0 0.0
        %6392 = vmatpush1.msra.mxu0 0.0
        %6393 = vmatprep.subr.mxu0 0.0
        %6394 = vmatpush1.msra.mxu0 0.0
        %6395 = vmatprep.subr.mxu0 0.0
        %6396 = vmatpush1.msra.mxu0 0.0
        %6397 = vmatprep.subr.mxu0 0.0
        %6398 = vmatpush1.msra.mxu0 0.0
        %6399 = vmatprep.subr.mxu0 0.0
        %6400 = vmatpush1.msra.mxu0 0.0
        %6401 = vmatprep.subr.mxu0 0.0
        %6402 = vmatpush1.msra.mxu0 0.0
        %6403 = vmatprep.subr.mxu0 0.0
        %6404 = vmatpush1.msra.mxu0 0.0
        %6405 = vmatprep.subr.mxu0 0.0
        %6406 = vmatpush1.msra.mxu0 0.0
        %6407 = vmatprep.subr.mxu0 0.0
        %6408 = vmatpush1.msra.mxu0 0.0
        %6409 = vmatprep.subr.mxu0 0.0
        %6410 = vmatpush1.msra.mxu0 %v6374
        %6411 = vmatprep.subr.mxu0 0.0
        %6412 = vmatpush2.msra.mxu0 0.0
        %6413 = vmatprep.subr.mxu0 0.0
        %6414 = vmatpush2.msra.mxu0 0.0
        %6415 = vmatprep.subr.mxu0 0.0
        %6416 = vmatpush2.msra.mxu0 0.0
        %6417 = vmatprep.subr.mxu0 0.0
        %6418 = vmatpush2.msra.mxu0 0.0
        %6419 = vmatprep.subr.mxu0 0.0
        %6420 = vmatpush2.msra.mxu0 0.0
        %6421 = vmatprep.subr.mxu0 0.0
        %6422 = vmatpush2.msra.mxu0 0.0
        %6423 = vmatprep.subr.mxu0 0.0
        %6424 = vmatpush2.msra.mxu0 0.0
        %6425 = vmatprep.subr.mxu0 0.0
        %6426 = vmatpush2.msra.mxu0 0.0
        %6427 = vmatprep.subr.mxu0 0.0
        %6428 = vmatpush2.msra.mxu0 0.0
        %6429 = vmatprep.subr.mxu0 0.0
        %6430 = vmatpush2.msra.mxu0 0.0
        %6431 = vmatprep.subr.mxu0 0.0
        %6432 = vmatpush2.msra.mxu0 0.0
        %6433 = vmatprep.subr.mxu0 0.0
        %6434 = vmatpush2.msra.mxu0 0.0
        %6435 = vmatprep.subr.mxu0 0.0
        %6436 = vmatpush2.msra.mxu0 0.0
        %6437 = vmatprep.subr.mxu0 0.0
        %6438 = vmatpush2.msra.mxu0 0.0
        %6439 = vmatprep.subr.mxu0 0.0
        %6440 = vmatpush2.msra.mxu0 0.0
        %6441 = vmatprep.subr.mxu0 0.0
        %6442 = vmatpush2.msra.mxu0 0.0
        %6443 = vmatprep.mubr.f32.mxu0 0.0
        %6444 = vmatmul.mubr.f32.gmra.mxu0 %v6377
        %v6445 = vpop.f32.mrf.mxu0
        %v6446 = vadd.f32 0.0, %v6445
        %v6447 = vpop.f32.mrf.mxu0
        %6448 = vdwg.mxu0
        %6449 = vrot.lane.b32.xlu0 %v4443, 104
        %v6450 = vpop.permute.xlu0 %6449
        %6451 = vrot.lane.b32.xlu0 %v4443, 72
        %v6452 = vpop.permute.xlu0 %6451
        %v6453 = vsel %vm1151, %v6450, 0
        %v6455 = vsel %vm1151, %v6452, 0
        %6457 = vmatprep.subr.mxu0 0.0
        %6458 = vmatpush1.xpose.msra.mxu0 0.0
        %6459 = vmatprep.subr.mxu0 0.0
        %6460 = vmatpush1.xpose.msra.mxu0 0.0
        %6461 = vmatprep.subr.mxu0 0.0
        %6462 = vmatpush1.xpose.msra.mxu0 0.0
        %6463 = vmatprep.subr.mxu0 0.0
        %6464 = vmatpush1.xpose.msra.mxu0 0.0
        %6465 = vmatprep.subr.mxu0 0.0
        %6466 = vmatpush1.xpose.msra.mxu0 0.0
        %6467 = vmatprep.subr.mxu0 0.0
        %6468 = vmatpush1.xpose.msra.mxu0 0.0
        %6469 = vmatprep.subr.mxu0 0.0
        %6470 = vmatpush1.xpose.msra.mxu0 0.0
        %6471 = vmatprep.subr.mxu0 0.0
        %6472 = vmatpush1.xpose.msra.mxu0 0.0
        %6473 = vmatprep.subr.mxu0 0.0
        %6474 = vmatpush1.xpose.msra.mxu0 0.0
        %6475 = vmatprep.subr.mxu0 0.0
        %6476 = vmatpush1.xpose.msra.mxu0 0.0
        %6477 = vmatprep.subr.mxu0 0.0
        %6478 = vmatpush1.xpose.msra.mxu0 0.0
        %6479 = vmatprep.subr.mxu0 0.0
        %6480 = vmatpush1.xpose.msra.mxu0 0.0
        %6481 = vmatprep.subr.mxu0 0.0
        %6482 = vmatpush1.xpose.msra.mxu0 0.0
        %6483 = vmatprep.subr.mxu0 0.0
        %6484 = vmatpush1.xpose.msra.mxu0 0.0
        %6485 = vmatprep.subr.mxu0 0.0
        %6486 = vmatpush1.xpose.msra.mxu0 0.0
        %6487 = vmatprep.subr.mxu0 0.0
        %6488 = vmatpush1.xpose.msra.mxu0 %v6455
        %6489 = vmatprep.subr.mxu0 0.0
        %6490 = vmatpush2.xpose.msra.mxu0 0.0
        %6491 = vmatprep.subr.mxu0 0.0
        %6492 = vmatpush2.xpose.msra.mxu0 0.0
        %6493 = vmatprep.subr.mxu0 0.0
        %6494 = vmatpush2.xpose.msra.mxu0 0.0
        %6495 = vmatprep.subr.mxu0 0.0
        %6496 = vmatpush2.xpose.msra.mxu0 0.0
        %6497 = vmatprep.subr.mxu0 0.0
        %6498 = vmatpush2.xpose.msra.mxu0 0.0
        %6499 = vmatprep.subr.mxu0 0.0
        %6500 = vmatpush2.xpose.msra.mxu0 0.0
        %6501 = vmatprep.subr.mxu0 0.0
        %6502 = vmatpush2.xpose.msra.mxu0 0.0
        %6503 = vmatprep.subr.mxu0 0.0
        %6504 = vmatpush2.xpose.msra.mxu0 0.0
        %6505 = vmatprep.subr.mxu0 0.0
        %6506 = vmatpush2.xpose.msra.mxu0 0.0
        %6507 = vmatprep.subr.mxu0 0.0
        %6508 = vmatpush2.xpose.msra.mxu0 0.0
        %6509 = vmatprep.subr.mxu0 0.0
        %6510 = vmatpush2.xpose.msra.mxu0 0.0
        %6511 = vmatprep.subr.mxu0 0.0
        %6512 = vmatpush2.xpose.msra.mxu0 0.0
        %6513 = vmatprep.subr.mxu0 0.0
        %6514 = vmatpush2.xpose.msra.mxu0 0.0
        %6515 = vmatprep.subr.mxu0 0.0
        %6516 = vmatpush2.xpose.msra.mxu0 0.0
        %6517 = vmatprep.subr.mxu0 0.0
        %6518 = vmatpush2.xpose.msra.mxu0 0.0
        %6519 = vmatprep.subr.mxu0 0.0
        %6520 = vmatpush2.xpose.msra.mxu0 0.0
        %6521 = vmatprep.mubr.f32.mxu0 0.0
        %6522 = vmatmul.mubr.f32.gmra.mxu0 %v6453
        %v6523 = vpop.f32.mrf.mxu0
        %v6524 = vadd.f32 0.0, %v6523
        %v6525 = vpop.f32.mrf.mxu0
        %6526 = vdwg.mxu0
        %6527 = vrot.lane.b32.xlu0 %v4448, 104
        %v6528 = vpop.permute.xlu0 %6527
        %6529 = vrot.lane.b32.xlu0 %v4448, 72
        %v6530 = vpop.permute.xlu0 %6529
        %v6531 = vsel %vm1151, %v6528, 0
        %v6533 = vsel %vm1151, %v6530, 0
        %6535 = vmatprep.subr.mxu0 0.0
        %6536 = vmatpush1.xpose.msra.mxu0 0.0
        %6537 = vmatprep.subr.mxu0 0.0
        %6538 = vmatpush1.xpose.msra.mxu0 0.0
        %6539 = vmatprep.subr.mxu0 0.0
        %6540 = vmatpush1.xpose.msra.mxu0 0.0
        %6541 = vmatprep.subr.mxu0 0.0
        %6542 = vmatpush1.xpose.msra.mxu0 0.0
        %6543 = vmatprep.subr.mxu0 0.0
        %6544 = vmatpush1.xpose.msra.mxu0 0.0
        %6545 = vmatprep.subr.mxu0 0.0
        %6546 = vmatpush1.xpose.msra.mxu0 0.0
        %6547 = vmatprep.subr.mxu0 0.0
        %6548 = vmatpush1.xpose.msra.mxu0 0.0
        %6549 = vmatprep.subr.mxu0 0.0
        %6550 = vmatpush1.xpose.msra.mxu0 0.0
        %6551 = vmatprep.subr.mxu0 0.0
        %6552 = vmatpush1.xpose.msra.mxu0 0.0
        %6553 = vmatprep.subr.mxu0 0.0
        %6554 = vmatpush1.xpose.msra.mxu0 0.0
        %6555 = vmatprep.subr.mxu0 0.0
        %6556 = vmatpush1.xpose.msra.mxu0 0.0
        %6557 = vmatprep.subr.mxu0 0.0
        %6558 = vmatpush1.xpose.msra.mxu0 0.0
        %6559 = vmatprep.subr.mxu0 0.0
        %6560 = vmatpush1.xpose.msra.mxu0 0.0
        %6561 = vmatprep.subr.mxu0 0.0
        %6562 = vmatpush1.xpose.msra.mxu0 0.0
        %6563 = vmatprep.subr.mxu0 0.0
        %6564 = vmatpush1.xpose.msra.mxu0 0.0
        %6565 = vmatprep.subr.mxu0 0.0
        %6566 = vmatpush1.xpose.msra.mxu0 %v6533
        %6567 = vmatprep.subr.mxu0 0.0
        %6568 = vmatpush2.xpose.msra.mxu0 0.0
        %6569 = vmatprep.subr.mxu0 0.0
        %6570 = vmatpush2.xpose.msra.mxu0 0.0
        %6571 = vmatprep.subr.mxu0 0.0
        %6572 = vmatpush2.xpose.msra.mxu0 0.0
        %6573 = vmatprep.subr.mxu0 0.0
        %6574 = vmatpush2.xpose.msra.mxu0 0.0
        %6575 = vmatprep.subr.mxu0 0.0
        %6576 = vmatpush2.xpose.msra.mxu0 0.0
        %6577 = vmatprep.subr.mxu0 0.0
        %6578 = vmatpush2.xpose.msra.mxu0 0.0
        %6579 = vmatprep.subr.mxu0 0.0
        %6580 = vmatpush2.xpose.msra.mxu0 0.0
        %6581 = vmatprep.subr.mxu0 0.0
        %6582 = vmatpush2.xpose.msra.mxu0 0.0
        %6583 = vmatprep.subr.mxu0 0.0
        %6584 = vmatpush2.xpose.msra.mxu0 0.0
        %6585 = vmatprep.subr.mxu0 0.0
        %6586 = vmatpush2.xpose.msra.mxu0 0.0
        %6587 = vmatprep.subr.mxu0 0.0
        %6588 = vmatpush2.xpose.msra.mxu0 0.0
        %6589 = vmatprep.subr.mxu0 0.0
        %6590 = vmatpush2.xpose.msra.mxu0 0.0
        %6591 = vmatprep.subr.mxu0 0.0
        %6592 = vmatpush2.xpose.msra.mxu0 0.0
        %6593 = vmatprep.subr.mxu0 0.0
        %6594 = vmatpush2.xpose.msra.mxu0 0.0
        %6595 = vmatprep.subr.mxu0 0.0
        %6596 = vmatpush2.xpose.msra.mxu0 0.0
        %6597 = vmatprep.subr.mxu0 0.0
        %6598 = vmatpush2.xpose.msra.mxu0 0.0
        %6599 = vmatprep.mubr.f32.mxu0 0.0
        %6600 = vmatmul.mubr.f32.gmra.mxu0 %v6531
        %v6601 = vpop.f32.mrf.mxu0
        %v6602 = vadd.f32 0.0, %v6601
        %v6603 = vpop.f32.mrf.mxu0
        %6604 = vdwg.mxu0
        %6605 = vrot.lane.b32.xlu0 %v4453, 104
        %v6606 = vpop.permute.xlu0 %6605
        %6607 = vrot.lane.b32.xlu0 %v4453, 72
        %v6608 = vpop.permute.xlu0 %6607
        %v6609 = vsel %vm1151, %v6606, 0
        %v6611 = vsel %vm1151, %v6608, 0
        %6613 = vmatprep.subr.mxu0 0.0
        %6614 = vmatpush1.xpose.msra.mxu0 0.0
        %6615 = vmatprep.subr.mxu0 0.0
        %6616 = vmatpush1.xpose.msra.mxu0 0.0
        %6617 = vmatprep.subr.mxu0 0.0
        %6618 = vmatpush1.xpose.msra.mxu0 0.0
        %6619 = vmatprep.subr.mxu0 0.0
        %6620 = vmatpush1.xpose.msra.mxu0 0.0
        %6621 = vmatprep.subr.mxu0 0.0
        %6622 = vmatpush1.xpose.msra.mxu0 0.0
        %6623 = vmatprep.subr.mxu0 0.0
        %6624 = vmatpush1.xpose.msra.mxu0 0.0
        %6625 = vmatprep.subr.mxu0 0.0
        %6626 = vmatpush1.xpose.msra.mxu0 0.0
        %6627 = vmatprep.subr.mxu0 0.0
        %6628 = vmatpush1.xpose.msra.mxu0 0.0
        %6629 = vmatprep.subr.mxu0 0.0
        %6630 = vmatpush1.xpose.msra.mxu0 0.0
        %6631 = vmatprep.subr.mxu0 0.0
        %6632 = vmatpush1.xpose.msra.mxu0 0.0
        %6633 = vmatprep.subr.mxu0 0.0
        %6634 = vmatpush1.xpose.msra.mxu0 0.0
        %6635 = vmatprep.subr.mxu0 0.0
        %6636 = vmatpush1.xpose.msra.mxu0 0.0
        %6637 = vmatprep.subr.mxu0 0.0
        %6638 = vmatpush1.xpose.msra.mxu0 0.0
        %6639 = vmatprep.subr.mxu0 0.0
        %6640 = vmatpush1.xpose.msra.mxu0 0.0
        %6641 = vmatprep.subr.mxu0 0.0
        %6642 = vmatpush1.xpose.msra.mxu0 0.0
        %6643 = vmatprep.subr.mxu0 0.0
        %6644 = vmatpush1.xpose.msra.mxu0 %v6611
        %6645 = vmatprep.subr.mxu0 0.0
        %6646 = vmatpush2.xpose.msra.mxu0 0.0
        %6647 = vmatprep.subr.mxu0 0.0
        %6648 = vmatpush2.xpose.msra.mxu0 0.0
        %6649 = vmatprep.subr.mxu0 0.0
        %6650 = vmatpush2.xpose.msra.mxu0 0.0
        %6651 = vmatprep.subr.mxu0 0.0
        %6652 = vmatpush2.xpose.msra.mxu0 0.0
        %6653 = vmatprep.subr.mxu0 0.0
        %6654 = vmatpush2.xpose.msra.mxu0 0.0
        %6655 = vmatprep.subr.mxu0 0.0
        %6656 = vmatpush2.xpose.msra.mxu0 0.0
        %6657 = vmatprep.subr.mxu0 0.0
        %6658 = vmatpush2.xpose.msra.mxu0 0.0
        %6659 = vmatprep.subr.mxu0 0.0
        %6660 = vmatpush2.xpose.msra.mxu0 0.0
        %6661 = vmatprep.subr.mxu0 0.0
        %6662 = vmatpush2.xpose.msra.mxu0 0.0
        %6663 = vmatprep.subr.mxu0 0.0
        %6664 = vmatpush2.xpose.msra.mxu0 0.0
        %6665 = vmatprep.subr.mxu0 0.0
        %6666 = vmatpush2.xpose.msra.mxu0 0.0
        %6667 = vmatprep.subr.mxu0 0.0
        %6668 = vmatpush2.xpose.msra.mxu0 0.0
        %6669 = vmatprep.subr.mxu0 0.0
        %6670 = vmatpush2.xpose.msra.mxu0 0.0
        %6671 = vmatprep.subr.mxu0 0.0
        %6672 = vmatpush2.xpose.msra.mxu0 0.0
        %6673 = vmatprep.subr.mxu0 0.0
        %6674 = vmatpush2.xpose.msra.mxu0 0.0
        %6675 = vmatprep.subr.mxu0 0.0
        %6676 = vmatpush2.xpose.msra.mxu0 0.0
        %6677 = vmatprep.mubr.f32.mxu0 0.0
        %6678 = vmatmul.mubr.f32.gmra.mxu0 %v6609
        %v6679 = vpop.f32.mrf.mxu0
        %v6680 = vadd.f32 0.0, %v6679
        %v6681 = vpop.f32.mrf.mxu0
        %6682 = vdwg.mxu0
        %6683 = vrot.lane.b32.xlu0 %v4458, 104
        %v6684 = vpop.permute.xlu0 %6683
        %6685 = vrot.lane.b32.xlu0 %v4458, 72
        %v6686 = vpop.permute.xlu0 %6685
        %v6687 = vsel %vm1151, %v6684, 0
        %v6689 = vsel %vm1151, %v6686, 0
        %6691 = vmatprep.subr.mxu0 0.0
        %6692 = vmatpush1.xpose.msra.mxu0 0.0
        %6693 = vmatprep.subr.mxu0 0.0
        %6694 = vmatpush1.xpose.msra.mxu0 0.0
        %6695 = vmatprep.subr.mxu0 0.0
        %6696 = vmatpush1.xpose.msra.mxu0 0.0
        %6697 = vmatprep.subr.mxu0 0.0
        %6698 = vmatpush1.xpose.msra.mxu0 0.0
        %6699 = vmatprep.subr.mxu0 0.0
        %6700 = vmatpush1.xpose.msra.mxu0 0.0
        %6701 = vmatprep.subr.mxu0 0.0
        %6702 = vmatpush1.xpose.msra.mxu0 0.0
        %6703 = vmatprep.subr.mxu0 0.0
        %6704 = vmatpush1.xpose.msra.mxu0 0.0
        %6705 = vmatprep.subr.mxu0 0.0
        %6706 = vmatpush1.xpose.msra.mxu0 0.0
        %6707 = vmatprep.subr.mxu0 0.0
        %6708 = vmatpush1.xpose.msra.mxu0 0.0
        %6709 = vmatprep.subr.mxu0 0.0
        %6710 = vmatpush1.xpose.msra.mxu0 0.0
        %6711 = vmatprep.subr.mxu0 0.0
        %6712 = vmatpush1.xpose.msra.mxu0 0.0
        %6713 = vmatprep.subr.mxu0 0.0
        %6714 = vmatpush1.xpose.msra.mxu0 0.0
        %6715 = vmatprep.subr.mxu0 0.0
        %6716 = vmatpush1.xpose.msra.mxu0 0.0
        %6717 = vmatprep.subr.mxu0 0.0
        %6718 = vmatpush1.xpose.msra.mxu0 0.0
        %6719 = vmatprep.subr.mxu0 0.0
        %6720 = vmatpush1.xpose.msra.mxu0 0.0
        %6721 = vmatprep.subr.mxu0 0.0
        %6722 = vmatpush1.xpose.msra.mxu0 %v6689
        %6723 = vmatprep.subr.mxu0 0.0
        %6724 = vmatpush2.xpose.msra.mxu0 0.0
        %6725 = vmatprep.subr.mxu0 0.0
        %6726 = vmatpush2.xpose.msra.mxu0 0.0
        %6727 = vmatprep.subr.mxu0 0.0
        %6728 = vmatpush2.xpose.msra.mxu0 0.0
        %6729 = vmatprep.subr.mxu0 0.0
        %6730 = vmatpush2.xpose.msra.mxu0 0.0
        %6731 = vmatprep.subr.mxu0 0.0
        %6732 = vmatpush2.xpose.msra.mxu0 0.0
        %6733 = vmatprep.subr.mxu0 0.0
        %6734 = vmatpush2.xpose.msra.mxu0 0.0
        %6735 = vmatprep.subr.mxu0 0.0
        %6736 = vmatpush2.xpose.msra.mxu0 0.0
        %6737 = vmatprep.subr.mxu0 0.0
        %6738 = vmatpush2.xpose.msra.mxu0 0.0
        %6739 = vmatprep.subr.mxu0 0.0
        %6740 = vmatpush2.xpose.msra.mxu0 0.0
        %6741 = vmatprep.subr.mxu0 0.0
        %6742 = vmatpush2.xpose.msra.mxu0 0.0
        %6743 = vmatprep.subr.mxu0 0.0
        %6744 = vmatpush2.xpose.msra.mxu0 0.0
        %6745 = vmatprep.subr.mxu0 0.0
        %6746 = vmatpush2.xpose.msra.mxu0 0.0
        %6747 = vmatprep.subr.mxu0 0.0
        %6748 = vmatpush2.xpose.msra.mxu0 0.0
        %6749 = vmatprep.subr.mxu0 0.0
        %6750 = vmatpush2.xpose.msra.mxu0 0.0
        %6751 = vmatprep.subr.mxu0 0.0
        %6752 = vmatpush2.xpose.msra.mxu0 0.0
        %6753 = vmatprep.subr.mxu0 0.0
        %6754 = vmatpush2.xpose.msra.mxu0 0.0
        %6755 = vmatprep.mubr.f32.mxu0 0.0
        %6756 = vmatmul.mubr.f32.gmra.mxu0 %v6687
        %v6757 = vpop.f32.mrf.mxu0
        %v6758 = vadd.f32 0.0, %v6757
        %v6759 = vpop.f32.mrf.mxu0
        %6760 = vdwg.mxu0
        %v6761 = vmul.f32 %v6524, 0.35355338
        %v6762 = vmul.f32 %v6602, 0.35355338
        %v6763 = vmul.f32 %v6680, 0.35355338
        %v6764 = vmul.f32 %v6758, 0.35355338
        %v6765 = vsel %vm1151, %v6761, -inf
        %6766 = vmax.xlane.f32.xlu0 %v6765
        %v6767 = vpop.xlane.xlu0 %6766
        %v6768 = vsel %vm1151, %v6762, -inf
        %6769 = vmax.xlane.f32.xlu0 %v6768
        %v6770 = vpop.xlane.xlu0 %6769
        %v6771 = vsel %vm1151, %v6763, -inf
        %6772 = vmax.xlane.f32.xlu0 %v6771
        %v6773 = vpop.xlane.xlu0 %6772
        %v6774 = vsel %vm1151, %v6764, -inf
        %6775 = vmax.xlane.f32.xlu0 %v6774
        %v6776 = vpop.xlane.xlu0 %6775
        %v6777 = vsub.f32 %v6761, %v6767
        %v6778 = vsub.f32 %v6762, %v6770
        %v6779 = vsub.f32 %v6763, %v6773
        %v6780 = vsub.f32 %v6764, %v6776
        %v6781 = vmul.f32 %v6777, 1.442695
        %v6782 = vpow.pop %v6781
        %v6783 = vmul.f32 %v6778, 1.442695
        %v6784 = vpow.pop %v6783
        %v6785 = vmul.f32 %v6779, 1.442695
        %v6786 = vpow.pop %v6785
        %v6787 = vmul.f32 %v6780, 1.442695
        %v6788 = vpow.pop %v6787
        %v6789 = vsel %vm1151, %v6782, 0.0
        %6790 = vadd.xlane.f32.xlu0 %v6789
        %v6791 = vpop.xlane.xlu0 %6790
        %v6792 = vsel %vm1151, %v6784, 0.0
        %6793 = vadd.xlane.f32.xlu0 %v6792
        %v6794 = vpop.xlane.xlu0 %6793
        %v6795 = vsel %vm1151, %v6786, 0.0
        %6796 = vadd.xlane.f32.xlu0 %v6795
        %v6797 = vpop.xlane.xlu0 %6796
        %v6798 = vsel %vm1151, %v6788, 0.0
        %6799 = vadd.xlane.f32.xlu0 %v6798
        %v6800 = vpop.xlane.xlu0 %6799
        %v6801 = vrcp.pop %v6791
        %v6802 = vmul.f32 %v6782, %v6801
        %v6803 = vrcp.pop %v6794
        %v6804 = vmul.f32 %v6784, %v6803
        %v6805 = vrcp.pop %v6797
        %v6806 = vmul.f32 %v6786, %v6805
        %v6807 = vrcp.pop %v6800
        %v6808 = vmul.f32 %v6788, %v6807
        %6809 = vrot.lane.b32.xlu0 %v4443, 40
        %v6810 = vpop.permute.xlu0 %6809
        %v6813 = vsel %vm1151, %v6802, 0
        %6815 = vmatprep.subr.mxu0 0.0
        %6816 = vmatpush1.msra.mxu0 0.0
        %6817 = vmatprep.subr.mxu0 0.0
        %6818 = vmatpush1.msra.mxu0 0.0
        %6819 = vmatprep.subr.mxu0 0.0
        %6820 = vmatpush1.msra.mxu0 0.0
        %6821 = vmatprep.subr.mxu0 0.0
        %6822 = vmatpush1.msra.mxu0 0.0
        %6823 = vmatprep.subr.mxu0 0.0
        %6824 = vmatpush1.msra.mxu0 0.0
        %6825 = vmatprep.subr.mxu0 0.0
        %6826 = vmatpush1.msra.mxu0 0.0
        %6827 = vmatprep.subr.mxu0 0.0
        %6828 = vmatpush1.msra.mxu0 0.0
        %6829 = vmatprep.subr.mxu0 0.0
        %6830 = vmatpush1.msra.mxu0 0.0
        %6831 = vmatprep.subr.mxu0 0.0
        %6832 = vmatpush1.msra.mxu0 0.0
        %6833 = vmatprep.subr.mxu0 0.0
        %6834 = vmatpush1.msra.mxu0 0.0
        %6835 = vmatprep.subr.mxu0 0.0
        %6836 = vmatpush1.msra.mxu0 0.0
        %6837 = vmatprep.subr.mxu0 0.0
        %6838 = vmatpush1.msra.mxu0 0.0
        %6839 = vmatprep.subr.mxu0 0.0
        %6840 = vmatpush1.msra.mxu0 0.0
        %6841 = vmatprep.subr.mxu0 0.0
        %6842 = vmatpush1.msra.mxu0 0.0
        %6843 = vmatprep.subr.mxu0 0.0
        %6844 = vmatpush1.msra.mxu0 0.0
        %6845 = vmatprep.subr.mxu0 0.0
        %6846 = vmatpush1.msra.mxu0 %v6810
        %6847 = vmatprep.subr.mxu0 0.0
        %6848 = vmatpush2.msra.mxu0 0.0
        %6849 = vmatprep.subr.mxu0 0.0
        %6850 = vmatpush2.msra.mxu0 0.0
        %6851 = vmatprep.subr.mxu0 0.0
        %6852 = vmatpush2.msra.mxu0 0.0
        %6853 = vmatprep.subr.mxu0 0.0
        %6854 = vmatpush2.msra.mxu0 0.0
        %6855 = vmatprep.subr.mxu0 0.0
        %6856 = vmatpush2.msra.mxu0 0.0
        %6857 = vmatprep.subr.mxu0 0.0
        %6858 = vmatpush2.msra.mxu0 0.0
        %6859 = vmatprep.subr.mxu0 0.0
        %6860 = vmatpush2.msra.mxu0 0.0
        %6861 = vmatprep.subr.mxu0 0.0
        %6862 = vmatpush2.msra.mxu0 0.0
        %6863 = vmatprep.subr.mxu0 0.0
        %6864 = vmatpush2.msra.mxu0 0.0
        %6865 = vmatprep.subr.mxu0 0.0
        %6866 = vmatpush2.msra.mxu0 0.0
        %6867 = vmatprep.subr.mxu0 0.0
        %6868 = vmatpush2.msra.mxu0 0.0
        %6869 = vmatprep.subr.mxu0 0.0
        %6870 = vmatpush2.msra.mxu0 0.0
        %6871 = vmatprep.subr.mxu0 0.0
        %6872 = vmatpush2.msra.mxu0 0.0
        %6873 = vmatprep.subr.mxu0 0.0
        %6874 = vmatpush2.msra.mxu0 0.0
        %6875 = vmatprep.subr.mxu0 0.0
        %6876 = vmatpush2.msra.mxu0 0.0
        %6877 = vmatprep.subr.mxu0 0.0
        %6878 = vmatpush2.msra.mxu0 0.0
        %6879 = vmatprep.mubr.f32.mxu0 0.0
        %6880 = vmatmul.mubr.f32.gmra.mxu0 %v6813
        %v6881 = vpop.f32.mrf.mxu0
        %v6882 = vadd.f32 0.0, %v6881
        %v6883 = vpop.f32.mrf.mxu0
        %6884 = vdwg.mxu0
        %6885 = vrot.lane.b32.xlu0 %v4448, 40
        %v6886 = vpop.permute.xlu0 %6885
        %v6889 = vsel %vm1151, %v6804, 0
        %6891 = vmatprep.subr.mxu0 0.0
        %6892 = vmatpush1.msra.mxu0 0.0
        %6893 = vmatprep.subr.mxu0 0.0
        %6894 = vmatpush1.msra.mxu0 0.0
        %6895 = vmatprep.subr.mxu0 0.0
        %6896 = vmatpush1.msra.mxu0 0.0
        %6897 = vmatprep.subr.mxu0 0.0
        %6898 = vmatpush1.msra.mxu0 0.0
        %6899 = vmatprep.subr.mxu0 0.0
        %6900 = vmatpush1.msra.mxu0 0.0
        %6901 = vmatprep.subr.mxu0 0.0
        %6902 = vmatpush1.msra.mxu0 0.0
        %6903 = vmatprep.subr.mxu0 0.0
        %6904 = vmatpush1.msra.mxu0 0.0
        %6905 = vmatprep.subr.mxu0 0.0
        %6906 = vmatpush1.msra.mxu0 0.0
        %6907 = vmatprep.subr.mxu0 0.0
        %6908 = vmatpush1.msra.mxu0 0.0
        %6909 = vmatprep.subr.mxu0 0.0
        %6910 = vmatpush1.msra.mxu0 0.0
        %6911 = vmatprep.subr.mxu0 0.0
        %6912 = vmatpush1.msra.mxu0 0.0
        %6913 = vmatprep.subr.mxu0 0.0
        %6914 = vmatpush1.msra.mxu0 0.0
        %6915 = vmatprep.subr.mxu0 0.0
        %6916 = vmatpush1.msra.mxu0 0.0
        %6917 = vmatprep.subr.mxu0 0.0
        %6918 = vmatpush1.msra.mxu0 0.0
        %6919 = vmatprep.subr.mxu0 0.0
        %6920 = vmatpush1.msra.mxu0 0.0
        %6921 = vmatprep.subr.mxu0 0.0
        %6922 = vmatpush1.msra.mxu0 %v6886
        %6923 = vmatprep.subr.mxu0 0.0
        %6924 = vmatpush2.msra.mxu0 0.0
        %6925 = vmatprep.subr.mxu0 0.0
        %6926 = vmatpush2.msra.mxu0 0.0
        %6927 = vmatprep.subr.mxu0 0.0
        %6928 = vmatpush2.msra.mxu0 0.0
        %6929 = vmatprep.subr.mxu0 0.0
        %6930 = vmatpush2.msra.mxu0 0.0
        %6931 = vmatprep.subr.mxu0 0.0
        %6932 = vmatpush2.msra.mxu0 0.0
        %6933 = vmatprep.subr.mxu0 0.0
        %6934 = vmatpush2.msra.mxu0 0.0
        %6935 = vmatprep.subr.mxu0 0.0
        %6936 = vmatpush2.msra.mxu0 0.0
        %6937 = vmatprep.subr.mxu0 0.0
        %6938 = vmatpush2.msra.mxu0 0.0
        %6939 = vmatprep.subr.mxu0 0.0
        %6940 = vmatpush2.msra.mxu0 0.0
        %6941 = vmatprep.subr.mxu0 0.0
        %6942 = vmatpush2.msra.mxu0 0.0
        %6943 = vmatprep.subr.mxu0 0.0
        %6944 = vmatpush2.msra.mxu0 0.0
        %6945 = vmatprep.subr.mxu0 0.0
        %6946 = vmatpush2.msra.mxu0 0.0
        %6947 = vmatprep.subr.mxu0 0.0
        %6948 = vmatpush2.msra.mxu0 0.0
        %6949 = vmatprep.subr.mxu0 0.0
        %6950 = vmatpush2.msra.mxu0 0.0
        %6951 = vmatprep.subr.mxu0 0.0
        %6952 = vmatpush2.msra.mxu0 0.0
        %6953 = vmatprep.subr.mxu0 0.0
        %6954 = vmatpush2.msra.mxu0 0.0
        %6955 = vmatprep.mubr.f32.mxu0 0.0
        %6956 = vmatmul.mubr.f32.gmra.mxu0 %v6889
        %v6957 = vpop.f32.mrf.mxu0
        %v6958 = vadd.f32 0.0, %v6957
        %v6959 = vpop.f32.mrf.mxu0
        %6960 = vdwg.mxu0
        %6961 = vrot.lane.b32.xlu0 %v4453, 40
        %v6962 = vpop.permute.xlu0 %6961
        %v6965 = vsel %vm1151, %v6806, 0
        %6967 = vmatprep.subr.mxu0 0.0
        %6968 = vmatpush1.msra.mxu0 0.0
        %6969 = vmatprep.subr.mxu0 0.0
        %6970 = vmatpush1.msra.mxu0 0.0
        %6971 = vmatprep.subr.mxu0 0.0
        %6972 = vmatpush1.msra.mxu0 0.0
        %6973 = vmatprep.subr.mxu0 0.0
        %6974 = vmatpush1.msra.mxu0 0.0
        %6975 = vmatprep.subr.mxu0 0.0
        %6976 = vmatpush1.msra.mxu0 0.0
        %6977 = vmatprep.subr.mxu0 0.0
        %6978 = vmatpush1.msra.mxu0 0.0
        %6979 = vmatprep.subr.mxu0 0.0
        %6980 = vmatpush1.msra.mxu0 0.0
        %6981 = vmatprep.subr.mxu0 0.0
        %6982 = vmatpush1.msra.mxu0 0.0
        %6983 = vmatprep.subr.mxu0 0.0
        %6984 = vmatpush1.msra.mxu0 0.0
        %6985 = vmatprep.subr.mxu0 0.0
        %6986 = vmatpush1.msra.mxu0 0.0
        %6987 = vmatprep.subr.mxu0 0.0
        %6988 = vmatpush1.msra.mxu0 0.0
        %6989 = vmatprep.subr.mxu0 0.0
        %6990 = vmatpush1.msra.mxu0 0.0
        %6991 = vmatprep.subr.mxu0 0.0
        %6992 = vmatpush1.msra.mxu0 0.0
        %6993 = vmatprep.subr.mxu0 0.0
        %6994 = vmatpush1.msra.mxu0 0.0
        %6995 = vmatprep.subr.mxu0 0.0
        %6996 = vmatpush1.msra.mxu0 0.0
        %6997 = vmatprep.subr.mxu0 0.0
        %6998 = vmatpush1.msra.mxu0 %v6962
        %6999 = vmatprep.subr.mxu0 0.0
        %7000 = vmatpush2.msra.mxu0 0.0
        %7001 = vmatprep.subr.mxu0 0.0
        %7002 = vmatpush2.msra.mxu0 0.0
        %7003 = vmatprep.subr.mxu0 0.0
        %7004 = vmatpush2.msra.mxu0 0.0
        %7005 = vmatprep.subr.mxu0 0.0
        %7006 = vmatpush2.msra.mxu0 0.0
        %7007 = vmatprep.subr.mxu0 0.0
        %7008 = vmatpush2.msra.mxu0 0.0
        %7009 = vmatprep.subr.mxu0 0.0
        %7010 = vmatpush2.msra.mxu0 0.0
        %7011 = vmatprep.subr.mxu0 0.0
        %7012 = vmatpush2.msra.mxu0 0.0
        %7013 = vmatprep.subr.mxu0 0.0
        %7014 = vmatpush2.msra.mxu0 0.0
        %7015 = vmatprep.subr.mxu0 0.0
        %7016 = vmatpush2.msra.mxu0 0.0
        %7017 = vmatprep.subr.mxu0 0.0
        %7018 = vmatpush2.msra.mxu0 0.0
        %7019 = vmatprep.subr.mxu0 0.0
        %7020 = vmatpush2.msra.mxu0 0.0
        %7021 = vmatprep.subr.mxu0 0.0
        %7022 = vmatpush2.msra.mxu0 0.0
        %7023 = vmatprep.subr.mxu0 0.0
        %7024 = vmatpush2.msra.mxu0 0.0
        %7025 = vmatprep.subr.mxu0 0.0
        %7026 = vmatpush2.msra.mxu0 0.0
        %7027 = vmatprep.subr.mxu0 0.0
        %7028 = vmatpush2.msra.mxu0 0.0
        %7029 = vmatprep.subr.mxu0 0.0
        %7030 = vmatpush2.msra.mxu0 0.0
        %7031 = vmatprep.mubr.f32.mxu0 0.0
        %7032 = vmatmul.mubr.f32.gmra.mxu0 %v6965
        %v7033 = vpop.f32.mrf.mxu0
        %v7034 = vadd.f32 0.0, %v7033
        %v7035 = vpop.f32.mrf.mxu0
        %7036 = vdwg.mxu0
        %7037 = vrot.lane.b32.xlu0 %v4458, 40
        %v7038 = vpop.permute.xlu0 %7037
        %v7041 = vsel %vm1151, %v6808, 0
        %7043 = vmatprep.subr.mxu0 0.0
        %7044 = vmatpush1.msra.mxu0 0.0
        %7045 = vmatprep.subr.mxu0 0.0
        %7046 = vmatpush1.msra.mxu0 0.0
        %7047 = vmatprep.subr.mxu0 0.0
        %7048 = vmatpush1.msra.mxu0 0.0
        %7049 = vmatprep.subr.mxu0 0.0
        %7050 = vmatpush1.msra.mxu0 0.0
        %7051 = vmatprep.subr.mxu0 0.0
        %7052 = vmatpush1.msra.mxu0 0.0
        %7053 = vmatprep.subr.mxu0 0.0
        %7054 = vmatpush1.msra.mxu0 0.0
        %7055 = vmatprep.subr.mxu0 0.0
        %7056 = vmatpush1.msra.mxu0 0.0
        %7057 = vmatprep.subr.mxu0 0.0
        %7058 = vmatpush1.msra.mxu0 0.0
        %7059 = vmatprep.subr.mxu0 0.0
        %7060 = vmatpush1.msra.mxu0 0.0
        %7061 = vmatprep.subr.mxu0 0.0
        %7062 = vmatpush1.msra.mxu0 0.0
        %7063 = vmatprep.subr.mxu0 0.0
        %7064 = vmatpush1.msra.mxu0 0.0
        %7065 = vmatprep.subr.mxu0 0.0
        %7066 = vmatpush1.msra.mxu0 0.0
        %7067 = vmatprep.subr.mxu0 0.0
        %7068 = vmatpush1.msra.mxu0 0.0
        %7069 = vmatprep.subr.mxu0 0.0
        %7070 = vmatpush1.msra.mxu0 0.0
        %7071 = vmatprep.subr.mxu0 0.0
        %7072 = vmatpush1.msra.mxu0 0.0
        %7073 = vmatprep.subr.mxu0 0.0
        %7074 = vmatpush1.msra.mxu0 %v7038
        %7075 = vmatprep.subr.mxu0 0.0
        %7076 = vmatpush2.msra.mxu0 0.0
        %7077 = vmatprep.subr.mxu0 0.0
        %7078 = vmatpush2.msra.mxu0 0.0
        %7079 = vmatprep.subr.mxu0 0.0
        %7080 = vmatpush2.msra.mxu0 0.0
        %7081 = vmatprep.subr.mxu0 0.0
        %7082 = vmatpush2.msra.mxu0 0.0
        %7083 = vmatprep.subr.mxu0 0.0
        %7084 = vmatpush2.msra.mxu0 0.0
        %7085 = vmatprep.subr.mxu0 0.0
        %7086 = vmatpush2.msra.mxu0 0.0
        %7087 = vmatprep.subr.mxu0 0.0
        %7088 = vmatpush2.msra.mxu0 0.0
        %7089 = vmatprep.subr.mxu0 0.0
        %7090 = vmatpush2.msra.mxu0 0.0
        %7091 = vmatprep.subr.mxu0 0.0
        %7092 = vmatpush2.msra.mxu0 0.0
        %7093 = vmatprep.subr.mxu0 0.0
        %7094 = vmatpush2.msra.mxu0 0.0
        %7095 = vmatprep.subr.mxu0 0.0
        %7096 = vmatpush2.msra.mxu0 0.0
        %7097 = vmatprep.subr.mxu0 0.0
        %7098 = vmatpush2.msra.mxu0 0.0
        %7099 = vmatprep.subr.mxu0 0.0
        %7100 = vmatpush2.msra.mxu0 0.0
        %7101 = vmatprep.subr.mxu0 0.0
        %7102 = vmatpush2.msra.mxu0 0.0
        %7103 = vmatprep.subr.mxu0 0.0
        %7104 = vmatpush2.msra.mxu0 0.0
        %7105 = vmatprep.subr.mxu0 0.0
        %7106 = vmatpush2.msra.mxu0 0.0
        %7107 = vmatprep.mubr.f32.mxu0 0.0
        %7108 = vmatmul.mubr.f32.gmra.mxu0 %v7041
        %v7109 = vpop.f32.mrf.mxu0
        %v7110 = vadd.f32 0.0, %v7109
        %v7111 = vpop.f32.mrf.mxu0
        %7112 = vdwg.mxu0
        %7117 = vrot.lane.b32.xlu0 %v5554, 8
        %v7118 = vpop.permute.xlu0 %7117
        %7119 = vrot.lane.b32.xlu0 %v5630, 8
        %v7120 = vpop.permute.xlu0 %7119
        %7121 = vrot.lane.b32.xlu0 %v5706, 8
        %v7122 = vpop.permute.xlu0 %7121
        %7123 = vrot.lane.b32.xlu0 %v5782, 8
        %v7124 = vpop.permute.xlu0 %7123
        %7133 = vrot.lane.b32.xlu0 %v6218, 16
        %v7134 = vpop.permute.xlu0 %7133
        %7135 = vrot.lane.b32.xlu0 %v6294, 16
        %v7136 = vpop.permute.xlu0 %7135
        %7137 = vrot.lane.b32.xlu0 %v6370, 16
        %v7138 = vpop.permute.xlu0 %7137
        %7139 = vrot.lane.b32.xlu0 %v6446, 16
        %v7140 = vpop.permute.xlu0 %7139
        %7149 = vrot.lane.b32.xlu0 %v6882, 24
        %v7150 = vpop.permute.xlu0 %7149
        %7151 = vrot.lane.b32.xlu0 %v6958, 24
        %v7152 = vpop.permute.xlu0 %7151
        %7153 = vrot.lane.b32.xlu0 %v7034, 24
        %v7154 = vpop.permute.xlu0 %7153
        %7155 = vrot.lane.b32.xlu0 %v7110, 24
        %v7156 = vpop.permute.xlu0 %7155
        %v7161 = vsel %vm1151, %v4890, %v7118
        %v7162 = vsel %vm1151, %v4966, %v7120
        %v7163 = vsel %vm1151, %v5042, %v7122
        %v7164 = vsel %vm1151, %v5118, %v7124
        %v7165 = vsel %vm3853, %v7161, %v7134
        %v7166 = vsel %vm3853, %v7162, %v7136
        %v7167 = vsel %vm3853, %v7163, %v7138
        %v7168 = vsel %vm3853, %v7164, %v7140
        %v7169 = vsel %vm3858, %v7165, %v7150
        %v7170 = vsel %vm3858, %v7166, %v7152
        %v7171 = vsel %vm3858, %v7167, %v7154
        %v7172 = vsel %vm3858, %v7168, %v7156
        %v7173 = vld [vmem:[%s35] sm:$0xff]
        %v7174 = vld [vmem:[%s35 + $0x8] sm:$0xff]
        %v7175 = vld [vmem:[%s35 + $0x10] sm:$0xff]
        %v7176 = vld [vmem:[%s35 + $0x18] sm:$0xff]
        %v7177 = vld [vmem:[%s37] sm:$0x1]
        %v7179 = vlaneseq
        %v7180 = vshrl.u32 %v7179, 7
        %v7181 = vsub.s32 0, %v7180
        %v7182 = vrot.slane %v7177, %v7181
        %v7185 = vsel %vm1050, %v7169, 0
        %v7188 = vsel %vm1050, %v7170, 0
        %v7191 = vsel %vm1050, %v7171, 0
        %v7194 = vsel %vm1050, %v7172, 0
        %7196 = vmatprep.subr.mxu0 0.0
        %7197 = vmatpush1.msra.mxu0 0.0
        %7198 = vmatprep.subr.mxu0 0.0
        %7199 = vmatpush1.msra.mxu0 0.0
        %7200 = vmatprep.subr.mxu0 0.0
        %7201 = vmatpush1.msra.mxu0 0.0
        %7202 = vmatprep.subr.mxu0 0.0
        %7203 = vmatpush1.msra.mxu0 0.0
        %7204 = vmatprep.subr.mxu0 0.0
        %7205 = vmatpush1.msra.mxu0 0.0
        %7206 = vmatprep.subr.mxu0 0.0
        %7207 = vmatpush1.msra.mxu0 0.0
        %7208 = vmatprep.subr.mxu0 0.0
        %7209 = vmatpush1.msra.mxu0 0.0
        %7210 = vmatprep.subr.mxu0 0.0
        %7211 = vmatpush1.msra.mxu0 0.0
        %7212 = vmatprep.subr.mxu0 0.0
        %7213 = vmatpush1.msra.mxu0 0.0
        %7214 = vmatprep.subr.mxu0 0.0
        %7215 = vmatpush1.msra.mxu0 0.0
        %7216 = vmatprep.subr.mxu0 0.0
        %7217 = vmatpush1.msra.mxu0 0.0
        %7218 = vmatprep.subr.mxu0 0.0
        %7219 = vmatpush1.msra.mxu0 0.0
        %7220 = vmatprep.subr.mxu0 0.0
        %7221 = vmatpush1.msra.mxu0 %v7176
        %7222 = vmatprep.subr.mxu0 0.0
        %7223 = vmatpush1.msra.mxu0 %v7175
        %7224 = vmatprep.subr.mxu0 0.0
        %7225 = vmatpush1.msra.mxu0 %v7174
        %7226 = vmatprep.subr.mxu0 0.0
        %7227 = vmatpush1.msra.mxu0 %v7173
        %7228 = vmatprep.subr.mxu0 0.0
        %7229 = vmatpush2.msra.mxu0 0.0
        %7230 = vmatprep.subr.mxu0 0.0
        %7231 = vmatpush2.msra.mxu0 0.0
        %7232 = vmatprep.subr.mxu0 0.0
        %7233 = vmatpush2.msra.mxu0 0.0
        %7234 = vmatprep.subr.mxu0 0.0
        %7235 = vmatpush2.msra.mxu0 0.0
        %7236 = vmatprep.subr.mxu0 0.0
        %7237 = vmatpush2.msra.mxu0 0.0
        %7238 = vmatprep.subr.mxu0 0.0
        %7239 = vmatpush2.msra.mxu0 0.0
        %7240 = vmatprep.subr.mxu0 0.0
        %7241 = vmatpush2.msra.mxu0 0.0
        %7242 = vmatprep.subr.mxu0 0.0
        %7243 = vmatpush2.msra.mxu0 0.0
        %7244 = vmatprep.subr.mxu0 0.0
        %7245 = vmatpush2.msra.mxu0 0.0
        %7246 = vmatprep.subr.mxu0 0.0
        %7247 = vmatpush2.msra.mxu0 0.0
        %7248 = vmatprep.subr.mxu0 0.0
        %7249 = vmatpush2.msra.mxu0 0.0
        %7250 = vmatprep.subr.mxu0 0.0
        %7251 = vmatpush2.msra.mxu0 0.0
        %7252 = vmatprep.subr.mxu0 0.0
        %7253 = vmatpush2.msra.mxu0 0.0
        %7254 = vmatprep.subr.mxu0 0.0
        %7255 = vmatpush2.msra.mxu0 0.0
        %7256 = vmatprep.subr.mxu0 0.0
        %7257 = vmatpush2.msra.mxu0 0.0
        %7258 = vmatprep.subr.mxu0 0.0
        %7259 = vmatpush2.msra.mxu0 0.0
        %7260 = vmatprep.mubr.f32.mxu0 0.0
        %7261 = vmatmul.mubr.f32.gmra.mxu0 %v7185
        %v7262 = vpop.f32.mrf.mxu0
        %v7263 = vadd.f32 %v7182, %v7262
        %v7264 = vpop.f32.mrf.mxu0
        %7265 = vmatprep.mubr.f32.mxu0 0.0
        %7266 = vmatmul.mubr.f32.gmra.mxu0 %v7188
        %v7267 = vpop.f32.mrf.mxu0
        %v7268 = vadd.f32 %v7182, %v7267
        %v7269 = vpop.f32.mrf.mxu0
        %7270 = vmatprep.mubr.f32.mxu0 0.0
        %7271 = vmatmul.mubr.f32.gmra.mxu0 %v7191
        %v7272 = vpop.f32.mrf.mxu0
        %v7273 = vadd.f32 %v7182, %v7272
        %v7274 = vpop.f32.mrf.mxu0
        %7275 = vmatprep.mubr.f32.mxu0 0.0
        %7276 = vmatmul.mubr.f32.gmra.mxu0 %v7194
        %v7277 = vpop.f32.mrf.mxu0
        %v7278 = vadd.f32 %v7182, %v7277
        %v7279 = vpop.f32.mrf.mxu0
        %7280 = vdwg.mxu0
        %v7281 = vadd.f32 %v4349, %v7263
        %v7282 = vadd.f32 %v4350, %v7268
        %v7283 = vadd.f32 %v4351, %v7273
        %v7284 = vadd.f32 %v4352, %v7278
        %v7285 = vld [vmem:[%s39] sm:$0x1]
        %v7286 = vld [vmem:[%s41] sm:$0x1]
        %v7287 = vsel %vm1050, %v7281, 0.0
        %7288 = vadd.xlane.f32.xlu0 %v7287
        %v7289 = vpop.xlane.xlu0 %7288
        %v7290 = vsel %vm1050, %v7282, 0.0
        %7291 = vadd.xlane.f32.xlu0 %v7290
        %v7292 = vpop.xlane.xlu0 %7291
        %v7293 = vsel %vm1050, %v7283, 0.0
        %7294 = vadd.xlane.f32.xlu0 %v7293
        %v7295 = vpop.xlane.xlu0 %7294
        %v7296 = vsel %vm1050, %v7284, 0.0
        %7297 = vadd.xlane.f32.xlu0 %v7296
        %v7298 = vpop.xlane.xlu0 %7297
        %v7299 = vmul.f32 %v7289, %v3989
        %v7300 = vmul.f32 %v7292, %v3989
        %v7301 = vmul.f32 %v7295, %v3989
        %v7302 = vmul.f32 %v7298, %v3989
        %v7303 = vsub.f32 %v7281, %v7299
        %v7304 = vsub.f32 %v7282, %v7300
        %v7305 = vsub.f32 %v7283, %v7301
        %v7306 = vsub.f32 %v7284, %v7302
        %v7307 = vmul.f32 %v7303, %v7303
        %v7308 = vmul.f32 %v7304, %v7304
        %v7309 = vmul.f32 %v7305, %v7305
        %v7310 = vmul.f32 %v7306, %v7306
        %v7311 = vsel %vm1050, %v7307, 0.0
        %7312 = vadd.xlane.f32.xlu0 %v7311
        %v7313 = vpop.xlane.xlu0 %7312
        %v7314 = vsel %vm1050, %v7308, 0.0
        %7315 = vadd.xlane.f32.xlu0 %v7314
        %v7316 = vpop.xlane.xlu0 %7315
        %v7317 = vsel %vm1050, %v7309, 0.0
        %7318 = vadd.xlane.f32.xlu0 %v7317
        %v7319 = vpop.xlane.xlu0 %7318
        %v7320 = vsel %vm1050, %v7310, 0.0
        %7321 = vadd.xlane.f32.xlu0 %v7320
        %v7322 = vpop.xlane.xlu0 %7321
        %v7323 = vmul.f32 %v7313, %v3989
        %v7324 = vmul.f32 %v7316, %v3989
        %v7325 = vmul.f32 %v7319, %v3989
        %v7326 = vmul.f32 %v7322, %v3989
        %v7327 = vadd.f32 %v7323, 1e-05
        %v7328 = vadd.f32 %v7324, 1e-05
        %v7329 = vadd.f32 %v7325, 1e-05
        %v7330 = vadd.f32 %v7326, 1e-05
        %v7331 = vrsqrt.pop %v7327
        %v7332 = vrsqrt.pop %v7328
        %v7333 = vrsqrt.pop %v7329
        %v7334 = vrsqrt.pop %v7330
        %v7335 = vmul.f32 %v7303, %v7331
        %v7336 = vmul.f32 %v7304, %v7332
        %v7337 = vmul.f32 %v7305, %v7333
        %v7338 = vmul.f32 %v7306, %v7334
        %v7340 = vlaneseq
        %v7341 = vshrl.u32 %v7340, 7
        %v7342 = vsub.s32 0, %v7341
        %v7343 = vrot.slane %v7285, %v7342
        %v7345 = vmul.f32 %v7335, %v7343
        %v7346 = vmul.f32 %v7336, %v7343
        %v7347 = vmul.f32 %v7337, %v7343
        %v7348 = vmul.f32 %v7338, %v7343
        %v7350 = vlaneseq
        %v7351 = vshrl.u32 %v7350, 7
        %v7352 = vsub.s32 0, %v7351
        %v7353 = vrot.slane %v7286, %v7352
        %v7355 = vadd.f32 %v7345, %v7353
        %v7356 = vadd.f32 %v7346, %v7353
        %v7357 = vadd.f32 %v7347, %v7353
        %v7358 = vadd.f32 %v7348, %v7353
        %v7359 = vld [vmem:[%s43] sm:$0xff]
        %v7360 = vld [vmem:[%s43 + $0x8] sm:$0xff]
        %v7361 = vld [vmem:[%s43 + $0x10] sm:$0xff]
        %v7362 = vld [vmem:[%s43 + $0x18] sm:$0xff]
        %v7363 = vld [vmem:[%s45] sm:$0x1]
        %v7365 = vlaneseq
        %v7366 = vshrl.u32 %v7365, 7
        %v7367 = vsub.s32 0, %v7366
        %v7368 = vrot.slane %v7363, %v7367
        %v7371 = vsel %vm1050, %v7355, 0
        %v7374 = vsel %vm1050, %v7356, 0
        %v7377 = vsel %vm1050, %v7357, 0
        %v7380 = vsel %vm1050, %v7358, 0
        %7382 = vmatprep.subr.mxu0 0.0
        %7383 = vmatpush1.msra.mxu0 0.0
        %7384 = vmatprep.subr.mxu0 0.0
        %7385 = vmatpush1.msra.mxu0 0.0
        %7386 = vmatprep.subr.mxu0 0.0
        %7387 = vmatpush1.msra.mxu0 0.0
        %7388 = vmatprep.subr.mxu0 0.0
        %7389 = vmatpush1.msra.mxu0 0.0
        %7390 = vmatprep.subr.mxu0 0.0
        %7391 = vmatpush1.msra.mxu0 0.0
        %7392 = vmatprep.subr.mxu0 0.0
        %7393 = vmatpush1.msra.mxu0 0.0
        %7394 = vmatprep.subr.mxu0 0.0
        %7395 = vmatpush1.msra.mxu0 0.0
        %7396 = vmatprep.subr.mxu0 0.0
        %7397 = vmatpush1.msra.mxu0 0.0
        %7398 = vmatprep.subr.mxu0 0.0
        %7399 = vmatpush1.msra.mxu0 0.0
        %7400 = vmatprep.subr.mxu0 0.0
        %7401 = vmatpush1.msra.mxu0 0.0
        %7402 = vmatprep.subr.mxu0 0.0
        %7403 = vmatpush1.msra.mxu0 0.0
        %7404 = vmatprep.subr.mxu0 0.0
        %7405 = vmatpush1.msra.mxu0 0.0
        %7406 = vmatprep.subr.mxu0 0.0
        %7407 = vmatpush1.msra.mxu0 %v7362
        %7408 = vmatprep.subr.mxu0 0.0
        %7409 = vmatpush1.msra.mxu0 %v7361
        %7410 = vmatprep.subr.mxu0 0.0
        %7411 = vmatpush1.msra.mxu0 %v7360
        %7412 = vmatprep.subr.mxu0 0.0
        %7413 = vmatpush1.msra.mxu0 %v7359
        %7414 = vmatprep.subr.mxu0 0.0
        %7415 = vmatpush2.msra.mxu0 0.0
        %7416 = vmatprep.subr.mxu0 0.0
        %7417 = vmatpush2.msra.mxu0 0.0
        %7418 = vmatprep.subr.mxu0 0.0
        %7419 = vmatpush2.msra.mxu0 0.0
        %7420 = vmatprep.subr.mxu0 0.0
        %7421 = vmatpush2.msra.mxu0 0.0
        %7422 = vmatprep.subr.mxu0 0.0
        %7423 = vmatpush2.msra.mxu0 0.0
        %7424 = vmatprep.subr.mxu0 0.0
        %7425 = vmatpush2.msra.mxu0 0.0
        %7426 = vmatprep.subr.mxu0 0.0
        %7427 = vmatpush2.msra.mxu0 0.0
        %7428 = vmatprep.subr.mxu0 0.0
        %7429 = vmatpush2.msra.mxu0 0.0
        %7430 = vmatprep.subr.mxu0 0.0
        %7431 = vmatpush2.msra.mxu0 0.0
        %7432 = vmatprep.subr.mxu0 0.0
        %7433 = vmatpush2.msra.mxu0 0.0
        %7434 = vmatprep.subr.mxu0 0.0
        %7435 = vmatpush2.msra.mxu0 0.0
        %7436 = vmatprep.subr.mxu0 0.0
        %7437 = vmatpush2.msra.mxu0 0.0
        %7438 = vmatprep.subr.mxu0 0.0
        %7439 = vmatpush2.msra.mxu0 0.0
        %7440 = vmatprep.subr.mxu0 0.0
        %7441 = vmatpush2.msra.mxu0 0.0
        %7442 = vmatprep.subr.mxu0 0.0
        %7443 = vmatpush2.msra.mxu0 0.0
        %7444 = vmatprep.subr.mxu0 0.0
        %7445 = vmatpush2.msra.mxu0 0.0
        %7446 = vmatprep.mubr.f32.mxu0 0.0
        %7447 = vmatmul.mubr.f32.gmra.mxu0 %v7371
        %v7448 = vpop.f32.mrf.mxu0
        %v7449 = vadd.f32 %v7368, %v7448
        %v7450 = vpop.f32.mrf.mxu0
        %7451 = vmatprep.mubr.f32.mxu0 0.0
        %7452 = vmatmul.mubr.f32.gmra.mxu0 %v7374
        %v7453 = vpop.f32.mrf.mxu0
        %v7454 = vadd.f32 %v7368, %v7453
        %v7455 = vpop.f32.mrf.mxu0
        %7456 = vmatprep.mubr.f32.mxu0 0.0
        %7457 = vmatmul.mubr.f32.gmra.mxu0 %v7377
        %v7458 = vpop.f32.mrf.mxu0
        %v7459 = vadd.f32 %v7368, %v7458
        %v7460 = vpop.f32.mrf.mxu0
        %7461 = vmatprep.mubr.f32.mxu0 0.0
        %7462 = vmatmul.mubr.f32.gmra.mxu0 %v7380
        %v7463 = vpop.f32.mrf.mxu0
        %v7464 = vadd.f32 %v7368, %v7463
        %v7465 = vpop.f32.mrf.mxu0
        %7466 = vdwg.mxu0
        %v7467 = vmax.f32 %v7449, 0.0
        %v7468 = vmax.f32 %v7454, 0.0
        %v7469 = vmax.f32 %v7459, 0.0
        %v7470 = vmax.f32 %v7464, 0.0
        %v7471 = vld [vmem:[%s47] sm:$0xff]
        %v7472 = vld [vmem:[%s47 + $0x8] sm:$0xff]
        %v7473 = vld [vmem:[%s47 + $0x10] sm:$0xff]
        %v7474 = vld [vmem:[%s47 + $0x18] sm:$0xff]
        %v7475 = vld [vmem:[%s47 + $0x20] sm:$0xff]
        %v7476 = vld [vmem:[%s47 + $0x28] sm:$0xff]
        %v7477 = vld [vmem:[%s47 + $0x30] sm:$0xff]
        %v7478 = vld [vmem:[%s47 + $0x38] sm:$0xff]
        %v7479 = vld [vmem:[%s49] sm:$0x1]
        %v7481 = vlaneseq
        %v7482 = vshrl.u32 %v7481, 7
        %v7483 = vsub.s32 0, %v7482
        %v7484 = vrot.slane %v7479, %v7483
        %v7487 = vsel %vm4177, %v7467, 0
        %v7490 = vsel %vm4177, %v7468, 0
        %v7493 = vsel %vm4177, %v7469, 0
        %v7496 = vsel %vm4177, %v7470, 0
        %7498 = vmatprep.subr.mxu0 0.0
        %7499 = vmatpush1.msra.mxu0 0.0
        %7500 = vmatprep.subr.mxu0 0.0
        %7501 = vmatpush1.msra.mxu0 0.0
        %7502 = vmatprep.subr.mxu0 0.0
        %7503 = vmatpush1.msra.mxu0 0.0
        %7504 = vmatprep.subr.mxu0 0.0
        %7505 = vmatpush1.msra.mxu0 0.0
        %7506 = vmatprep.subr.mxu0 0.0
        %7507 = vmatpush1.msra.mxu0 0.0
        %7508 = vmatprep.subr.mxu0 0.0
        %7509 = vmatpush1.msra.mxu0 0.0
        %7510 = vmatprep.subr.mxu0 0.0
        %7511 = vmatpush1.msra.mxu0 0.0
        %7512 = vmatprep.subr.mxu0 0.0
        %7513 = vmatpush1.msra.mxu0 0.0
        %7514 = vmatprep.subr.mxu0 0.0
        %7515 = vmatpush1.msra.mxu0 %v7478
        %7516 = vmatprep.subr.mxu0 0.0
        %7517 = vmatpush1.msra.mxu0 %v7477
        %7518 = vmatprep.subr.mxu0 0.0
        %7519 = vmatpush1.msra.mxu0 %v7476
        %7520 = vmatprep.subr.mxu0 0.0
        %7521 = vmatpush1.msra.mxu0 %v7475
        %7522 = vmatprep.subr.mxu0 0.0
        %7523 = vmatpush1.msra.mxu0 %v7474
        %7524 = vmatprep.subr.mxu0 0.0
        %7525 = vmatpush1.msra.mxu0 %v7473
        %7526 = vmatprep.subr.mxu0 0.0
        %7527 = vmatpush1.msra.mxu0 %v7472
        %7528 = vmatprep.subr.mxu0 0.0
        %7529 = vmatpush1.msra.mxu0 %v7471
        %7530 = vmatprep.subr.mxu0 0.0
        %7531 = vmatpush2.msra.mxu0 0.0
        %7532 = vmatprep.subr.mxu0 0.0
        %7533 = vmatpush2.msra.mxu0 0.0
        %7534 = vmatprep.subr.mxu0 0.0
        %7535 = vmatpush2.msra.mxu0 0.0
        %7536 = vmatprep.subr.mxu0 0.0
        %7537 = vmatpush2.msra.mxu0 0.0
        %7538 = vmatprep.subr.mxu0 0.0
        %7539 = vmatpush2.msra.mxu0 0.0
        %7540 = vmatprep.subr.mxu0 0.0
        %7541 = vmatpush2.msra.mxu0 0.0
        %7542 = vmatprep.subr.mxu0 0.0
        %7543 = vmatpush2.msra.mxu0 0.0
        %7544 = vmatprep.subr.mxu0 0.0
        %7545 = vmatpush2.msra.mxu0 0.0
        %7546 = vmatprep.subr.mxu0 0.0
        %7547 = vmatpush2.msra.mxu0 0.0
        %7548 = vmatprep.subr.mxu0 0.0
        %7549 = vmatpush2.msra.mxu0 0.0
        %7550 = vmatprep.subr.mxu0 0.0
        %7551 = vmatpush2.msra.mxu0 0.0
        %7552 = vmatprep.subr.mxu0 0.0
        %7553 = vmatpush2.msra.mxu0 0.0
        %7554 = vmatprep.subr.mxu0 0.0
        %7555 = vmatpush2.msra.mxu0 0.0
        %7556 = vmatprep.subr.mxu0 0.0
        %7557 = vmatpush2.msra.mxu0 0.0
        %7558 = vmatprep.subr.mxu0 0.0
        %7559 = vmatpush2.msra.mxu0 0.0
        %7560 = vmatprep.subr.mxu0 0.0
        %7561 = vmatpush2.msra.mxu0 0.0
        %7562 = vmatprep.mubr.f32.mxu0 0.0
        %7563 = vmatmul.mubr.f32.gmra.mxu0 %v7487
        %v7564 = vpop.f32.mrf.mxu0
        %v7565 = vadd.f32 %v7484, %v7564
        %v7566 = vpop.f32.mrf.mxu0
        %7567 = vmatprep.mubr.f32.mxu0 0.0
        %7568 = vmatmul.mubr.f32.gmra.mxu0 %v7490
        %v7569 = vpop.f32.mrf.mxu0
        %v7570 = vadd.f32 %v7484, %v7569
        %v7571 = vpop.f32.mrf.mxu0
        %7572 = vmatprep.mubr.f32.mxu0 0.0
        %7573 = vmatmul.mubr.f32.gmra.mxu0 %v7493
        %v7574 = vpop.f32.mrf.mxu0
        %v7575 = vadd.f32 %v7484, %v7574
        %v7576 = vpop.f32.mrf.mxu0
        %7577 = vmatprep.mubr.f32.mxu0 0.0
        %7578 = vmatmul.mubr.f32.gmra.mxu0 %v7496
        %v7579 = vpop.f32.mrf.mxu0
        %v7580 = vadd.f32 %v7484, %v7579
        %v7581 = vpop.f32.mrf.mxu0
        %7582 = vdwg.mxu0
        %v7583 = vadd.f32 %v7355, %v7565
        %v7584 = vadd.f32 %v7356, %v7570
        %v7585 = vadd.f32 %v7357, %v7575
        %v7586 = vadd.f32 %v7358, %v7580
        %v7587 = vld [vmem:[%s51] sm:$0x1]
        %v7588 = vld [vmem:[%s53] sm:$0x1]
        %v7589 = vsel %vm1050, %v7583, 0.0
        %7590 = vadd.xlane.f32.xlu0 %v7589
        %v7591 = vpop.xlane.xlu0 %7590
        %v7592 = vsel %vm1050, %v7584, 0.0
        %7593 = vadd.xlane.f32.xlu0 %v7592
        %v7594 = vpop.xlane.xlu0 %7593
        %v7595 = vsel %vm1050, %v7585, 0.0
        %7596 = vadd.xlane.f32.xlu0 %v7595
        %v7597 = vpop.xlane.xlu0 %7596
        %v7598 = vsel %vm1050, %v7586, 0.0
        %7599 = vadd.xlane.f32.xlu0 %v7598
        %v7600 = vpop.xlane.xlu0 %7599
        %v7601 = vmul.f32 %v7591, %v3989
        %v7602 = vmul.f32 %v7594, %v3989
        %v7603 = vmul.f32 %v7597, %v3989
        %v7604 = vmul.f32 %v7600, %v3989
        %v7605 = vsub.f32 %v7583, %v7601
        %v7606 = vsub.f32 %v7584, %v7602
        %v7607 = vsub.f32 %v7585, %v7603
        %v7608 = vsub.f32 %v7586, %v7604
        %v7609 = vmul.f32 %v7605, %v7605
        %v7610 = vmul.f32 %v7606, %v7606
        %v7611 = vmul.f32 %v7607, %v7607
        %v7612 = vmul.f32 %v7608, %v7608
        %v7613 = vsel %vm1050, %v7609, 0.0
        %7614 = vadd.xlane.f32.xlu0 %v7613
        %v7615 = vpop.xlane.xlu0 %7614
        %v7616 = vsel %vm1050, %v7610, 0.0
        %7617 = vadd.xlane.f32.xlu0 %v7616
        %v7618 = vpop.xlane.xlu0 %7617
        %v7619 = vsel %vm1050, %v7611, 0.0
        %7620 = vadd.xlane.f32.xlu0 %v7619
        %v7621 = vpop.xlane.xlu0 %7620
        %v7622 = vsel %vm1050, %v7612, 0.0
        %7623 = vadd.xlane.f32.xlu0 %v7622
        %v7624 = vpop.xlane.xlu0 %7623
        %v7625 = vmul.f32 %v7615, %v3989
        %v7626 = vmul.f32 %v7618, %v3989
        %v7627 = vmul.f32 %v7621, %v3989
        %v7628 = vmul.f32 %v7624, %v3989
        %v7629 = vadd.f32 %v7625, 1e-05
        %v7630 = vadd.f32 %v7626, 1e-05
        %v7631 = vadd.f32 %v7627, 1e-05
        %v7632 = vadd.f32 %v7628, 1e-05
        %v7633 = vrsqrt.pop %v7629
        %v7634 = vrsqrt.pop %v7630
        %v7635 = vrsqrt.pop %v7631
        %v7636 = vrsqrt.pop %v7632
        %v7637 = vmul.f32 %v7605, %v7633
        %v7638 = vmul.f32 %v7606, %v7634
        %v7639 = vmul.f32 %v7607, %v7635
        %v7640 = vmul.f32 %v7608, %v7636
        %v7642 = vlaneseq
        %v7643 = vshrl.u32 %v7642, 7
        %v7644 = vsub.s32 0, %v7643
        %v7645 = vrot.slane %v7587, %v7644
        %v7647 = vmul.f32 %v7637, %v7645
        %v7648 = vmul.f32 %v7638, %v7645
        %v7649 = vmul.f32 %v7639, %v7645
        %v7650 = vmul.f32 %v7640, %v7645
        %v7652 = vlaneseq
        %v7653 = vshrl.u32 %v7652, 7
        %v7654 = vsub.s32 0, %v7653
        %v7655 = vrot.slane %v7588, %v7654
        %v7657 = vadd.f32 %v7647, %v7655
        %v7658 = vadd.f32 %v7648, %v7655
        %v7659 = vadd.f32 %v7649, %v7655
        %v7660 = vadd.f32 %v7650, %v7655
        %v7661 = vsel %vm1050, %v7657, 0.0
        %v7662 = vrot.slane %v7661, 4
        %v7663 = vadd.f32 %v7661, %v7662
        %v7664 = vrot.slane %v7663, 2
        %v7665 = vadd.f32 %v7663, %v7664
        %v7666 = vrot.slane %v7665, 1
        %v7667 = vadd.f32 %v7665, %v7666
        %v7668 = vsel %vm1050, %v7658, 0.0
        %v7669 = vrot.slane %v7668, 4
        %v7670 = vadd.f32 %v7668, %v7669
        %v7671 = vrot.slane %v7670, 2
        %v7672 = vadd.f32 %v7670, %v7671
        %v7673 = vrot.slane %v7672, 1
        %v7674 = vadd.f32 %v7672, %v7673
        %v7675 = vsel %vm1050, %v7659, 0.0
        %v7676 = vrot.slane %v7675, 4
        %v7677 = vadd.f32 %v7675, %v7676
        %v7678 = vrot.slane %v7677, 2
        %v7679 = vadd.f32 %v7677, %v7678
        %v7680 = vrot.slane %v7679, 1
        %v7681 = vadd.f32 %v7679, %v7680
        %v7682 = vsel %vm1050, %v7660, 0.0
        %v7683 = vrot.slane %v7682, 4
        %v7684 = vadd.f32 %v7682, %v7683
        %v7685 = vrot.slane %v7684, 2
        %v7686 = vadd.f32 %v7684, %v7685
        %v7687 = vrot.slane %v7686, 1
        %v7688 = vadd.f32 %v7686, %v7687
        %v7689 = vrcp.pop 8.0
        %v7690 = vmul.f32 %v7667, %v7689
        %v7691 = vmul.f32 %v7674, %v7689
        %v7692 = vmul.f32 %v7681, %v7689
        %v7693 = vmul.f32 %v7688, %v7689
        %v7694 = vld [vmem:[%s55] sm:$0xff]
        %v7695 = vld [vmem:[%s55 + $0x8] sm:$0xff]
        %v7696 = vld [vmem:[%s55 + $0x10] sm:$0xff]
        %v7697 = vld [vmem:[%s55 + $0x18] sm:$0xff]
        %v7698 = vld [vmem:[%s57] sm:$0x1]
        %v7700 = vlaneseq
        %v7701 = vshrl.u32 %v7700, 7
        %v7702 = vsub.s32 0, %v7701
        %v7703 = vrot.slane %v7698, %v7702
        %vm7709 = vcmask 1041409
        %v7710 = vsel %vm7709, %v7691, %v7690
        %vm7711 = vcmask 1042434
        %v7712 = vsel %vm7711, %v7692, %v7710
        %vm7713 = vcmask 1043459
        %v7714 = vsel %vm7713, %v7693, %v7712
        %v7715 = vsel %vm1050, %v7714, 0
        %7717 = vmatprep.subr.mxu0 0.0
        %7718 = vmatpush1.msra.mxu0 0.0
        %7719 = vmatprep.subr.mxu0 0.0
        %7720 = vmatpush1.msra.mxu0 0.0
        %7721 = vmatprep.subr.mxu0 0.0
        %7722 = vmatpush1.msra.mxu0 0.0
        %7723 = vmatprep.subr.mxu0 0.0
        %7724 = vmatpush1.msra.mxu0 0.0
        %7725 = vmatprep.subr.mxu0 0.0
        %7726 = vmatpush1.msra.mxu0 0.0
        %7727 = vmatprep.subr.mxu0 0.0
        %7728 = vmatpush1.msra.mxu0 0.0
        %7729 = vmatprep.subr.mxu0 0.0
        %7730 = vmatpush1.msra.mxu0 0.0
        %7731 = vmatprep.subr.mxu0 0.0
        %7732 = vmatpush1.msra.mxu0 0.0
        %7733 = vmatprep.subr.mxu0 0.0
        %7734 = vmatpush1.msra.mxu0 0.0
        %7735 = vmatprep.subr.mxu0 0.0
        %7736 = vmatpush1.msra.mxu0 0.0
        %7737 = vmatprep.subr.mxu0 0.0
        %7738 = vmatpush1.msra.mxu0 0.0
        %7739 = vmatprep.subr.mxu0 0.0
        %7740 = vmatpush1.msra.mxu0 0.0
        %7741 = vmatprep.subr.mxu0 0.0
        %7742 = vmatpush1.msra.mxu0 %v7697
        %7743 = vmatprep.subr.mxu0 0.0
        %7744 = vmatpush1.msra.mxu0 %v7696
        %7745 = vmatprep.subr.mxu0 0.0
        %7746 = vmatpush1.msra.mxu0 %v7695
        %7747 = vmatprep.subr.mxu0 0.0
        %7748 = vmatpush1.msra.mxu0 %v7694
        %7749 = vmatprep.subr.mxu0 0.0
        %7750 = vmatpush2.msra.mxu0 0.0
        %7751 = vmatprep.subr.mxu0 0.0
        %7752 = vmatpush2.msra.mxu0 0.0
        %7753 = vmatprep.subr.mxu0 0.0
        %7754 = vmatpush2.msra.mxu0 0.0
        %7755 = vmatprep.subr.mxu0 0.0
        %7756 = vmatpush2.msra.mxu0 0.0
        %7757 = vmatprep.subr.mxu0 0.0
        %7758 = vmatpush2.msra.mxu0 0.0
        %7759 = vmatprep.subr.mxu0 0.0
        %7760 = vmatpush2.msra.mxu0 0.0
        %7761 = vmatprep.subr.mxu0 0.0
        %7762 = vmatpush2.msra.mxu0 0.0
        %7763 = vmatprep.subr.mxu0 0.0
        %7764 = vmatpush2.msra.mxu0 0.0
        %7765 = vmatprep.subr.mxu0 0.0
        %7766 = vmatpush2.msra.mxu0 0.0
        %7767 = vmatprep.subr.mxu0 0.0
        %7768 = vmatpush2.msra.mxu0 0.0
        %7769 = vmatprep.subr.mxu0 0.0
        %7770 = vmatpush2.msra.mxu0 0.0
        %7771 = vmatprep.subr.mxu0 0.0
        %7772 = vmatpush2.msra.mxu0 0.0
        %7773 = vmatprep.subr.mxu0 0.0
        %7774 = vmatpush2.msra.mxu0 0.0
        %7775 = vmatprep.subr.mxu0 0.0
        %7776 = vmatpush2.msra.mxu0 0.0
        %7777 = vmatprep.subr.mxu0 0.0
        %7778 = vmatpush2.msra.mxu0 0.0
        %7779 = vmatprep.subr.mxu0 0.0
        %7780 = vmatpush2.msra.mxu0 0.0
        %7781 = vmatprep.mubr.f32.mxu0 0.0
        %7782 = vmatmul.mubr.f32.gmra.mxu0 %v7715
        %v7783 = vpop.f32.mrf.mxu0
        %v7784 = vadd.f32 %v7703, %v7783
        %v7785 = vpop.f32.mrf.mxu0
        %7786 = vdwg.mxu0
        %vm7787 = vcmask 27648
        %7788 = vst.msk [vmem:[%s896] sm:$0xf] %vm7787, %v7784
        %s7789 = sand.u32 %s695, 1
        %s7790 = scalar_lea.sflag [#allocation3], %s7789
        %s7791 = sand.u32 %s695, 1
        %s7792 = smul.addr %s7791, 4
        %s7793 = scalar_lea.vmem [#allocation2], %s7792
        // Predicated region
        $region137: #{tpu_custom_call.1} parent=135 // pred_check
          %p7794 = pneg %p705
        $region138: #{tpu_custom_call.1} parent=135 // pred_check_branch
          %7796 = sbr.rel (%p7794) target = $region140
        $region139: #{tpu_custom_call.1} parent=135 // pred_region
          %s7798 = ssub.s32 64, 64
          %7799 = vsyncadd %s7790, %s7798
          %s7800 = smul.addr %s73, 64
          %s7801 = scalar_lea.hbm %s59, %s7800
          %s7803 = sshll.u32 %s7793, 4
          %s7804 = int_to_ptr.vmem [resolvable:$true] %s7803
          %7806 = dma.vmem_to_hbm [thread:$0]  %s7804, 64, %s7801, %s7790
        $region140: #{tpu_custom_call.1} parent=135 // pred_fallthru
          _
      $region136: #{tpu_custom_call.1} parent=5 // pred_fallthru
        _
      %p7807 = scmp.le.s32.totalorder 2, %s68
      // Predicated region
      $region141: #{tpu_custom_call.1} parent=5 // pred_check
        %p7808 = pneg %p7807
      $region142: #{tpu_custom_call.1} parent=5 // pred_check_branch
        %7810 = sbr.rel (%p7808) target = $region144
      $region143: #{tpu_custom_call.1} parent=5 // pred_region
        %s7811 = ssub.s32 %s68, 2
        // Predicated region
        $region145: #{tpu_custom_call.1} parent=143 // pred_check
          %p7812 = pneg %p711
        $region146: #{tpu_custom_call.1} parent=143 // pred_check_branch
          %7814 = sbr.rel (%p7812) target = $region148
        $region147: #{tpu_custom_call.1} parent=143 // pred_region
          %s7815 = sand.u32 %s696, 1
          %s7816 = scalar_lea.sflag [#allocation3], %s7815
          %s7817 = sand.u32 %s696, 1
          %s7818 = smul.addr %s7817, 4
          %s7819 = scalar_lea.vmem [#allocation2], %s7818
          %7820 = dma.done %s7816, 64
        $region148: #{tpu_custom_call.1} parent=143 // pred_fallthru
          _
      $region144: #{tpu_custom_call.1} parent=5 // pred_fallthru
        _
    $region6: #{tpu_custom_call.1} parent=1 // loop_footer
      %s72 = sadd.s32 1, %s68
    $region7: #{tpu_custom_call.1} parent=1 // loop_footer_branch
      %67 = sbr.rel target = $region3
    $region8: #{tpu_custom_call.1} parent=1 // loop_exit
      _
    %7821 = vsyncpa [#allocation3], 1
    %s7822 = scalar_lea.sflag [#allocation3], 1
    %7823 = vsyncpa %s7822, 1

</llo_original>
